<compile_context>
chip_gen: v7x
topology: tpu7x:2x2x1
jax: 0.10.0
libtpu: 0.0.40
codegen_flags: <defaults>
</compile_context>

<pallas_src>
import functools

import jax
import jax.numpy as jnp
import numpy as np
from jax.experimental import pallas as pl
from jax.experimental.pallas import tpu as pltpu

EPS = 1e-5
LANE = 128


def _round_up(x, m):
    return (x + m - 1) // m * m


def _basic_block_kernel(H, W,
                        patches_ref, xid_ref, xpos_ref, ypos_ref,
                        w1_ref, w2_ref, g1_ref, b1_ref, g2_ref, b2_ref,
                        out_ref):
    """Whole BasicBlock forward, fully lane-dense (channels padded to 128).

    patches_ref : (M, KP)     conv1 im2col patches (9*C zero-padded to KP)
    xid_ref     : (M, PP)     identity branch, channels zero-padded
    xpos_ref    : (M, 1) i32  pixel x coordinate (conv2 border masks)
    ypos_ref    : (M, 1) i32  pixel y coordinate
    w1_ref      : (KP, PP)    conv1 weight, tap-major K, zero-padded
    w2_ref      : (9, PP, PP) conv2 weight per tap, zero-padded
    g*/b*       : (1, PP)     BN affine params, zero-padded
    out_ref     : (M, PP)
    """
    M = out_ref.shape[0]
    inv_m = 1.0 / M

    # ---- conv1: single fused-tap matmul on the MXU (default precision) ----
    acc1 = jnp.dot(patches_ref[...], w1_ref[...],
                   preferred_element_type=jnp.float32)

    # ---- bn1 folded to per-channel scale/shift (one pass: sum & sumsq) ----
    s1 = jnp.sum(acc1, axis=0, keepdims=True)
    ss1 = jnp.sum(acc1 * acc1, axis=0, keepdims=True)
    m1 = s1 * inv_m
    v1 = ss1 * inv_m - m1 * m1
    scale1 = g1_ref[...] * jax.lax.rsqrt(v1 + EPS)
    shift1 = b1_ref[...] - m1 * scale1
    h1 = jnp.maximum(acc1 * scale1 + shift1, 0.0)

    # ---- conv2: 9 taps via sublane roll + border masks (no padded scratch) -
    xpos = xpos_ref[...]
    ypos = ypos_ref[...]
    acc2 = None
    t = 0
    for dy in (-1, 0, 1):
        for dx in (-1, 0, 1):
            off = dy * W + dx
            if off == 0:
                tap = h1
            else:
                shifted = pltpu.roll(h1, shift=(-off) % M, axis=0)
                valid = ((xpos + dx >= 0) & (xpos + dx < W) &
                         (ypos + dy >= 0) & (ypos + dy < H))
                tap = jnp.where(valid, shifted, 0.0)
            contrib = jnp.dot(tap, w2_ref[t],
                              preferred_element_type=jnp.float32)
            acc2 = contrib if acc2 is None else acc2 + contrib
            t += 1

    # ---- bn2 folded + residual add + relu ----------------------------------
    s2 = jnp.sum(acc2, axis=0, keepdims=True)
    ss2 = jnp.sum(acc2 * acc2, axis=0, keepdims=True)
    m2 = s2 * inv_m
    v2 = ss2 * inv_m - m2 * m2
    scale2 = g2_ref[...] * jax.lax.rsqrt(v2 + EPS)
    shift2 = b2_ref[...] - m2 * scale2
    out_ref[...] = jnp.maximum(acc2 * scale2 + shift2 + xid_ref[...], 0.0)


def _full_spec(shape):
    nd = len(shape)
    return pl.BlockSpec(shape, lambda i, nd=nd: (0,) * nd)


@jax.jit
def basic_block_forward(x_nchw, w1, g1, b1, w2, g2, b2):
    """x_nchw: (N, C, H, W) float32; w*: PyTorch OIHW conv weights (P, C, 3, 3)."""
    N, C, H, W = x_nchw.shape
    P = w1.shape[0]
    assert P == C, "default BasicBlock (downsample=None) needs planes == inplanes"

    M = N * H * W
    K1 = 9 * C
    KP = _round_up(K1, LANE)   # lane-dense K for conv1 matmul
    PP = _round_up(P, LANE)    # lane-dense channel dim everywhere else

    # --- layout glue (XLA side): NCHW -> NHWC, im2col for conv1, padding ----
    x = jnp.transpose(x_nchw, (0, 2, 3, 1)).astype(jnp.float32)
    x_pad = jnp.pad(x, ((0, 0), (1, 1), (1, 1), (0, 0)))
    taps = [x_pad[:, dy:dy + H, dx:dx + W, :]
            for dy in range(3) for dx in range(3)]          # tap (dy,dx) major
    patches = jnp.concatenate(taps, axis=-1).reshape(M, K1)
    patches = jnp.pad(patches, ((0, 0), (0, KP - K1)))

    xid = jnp.pad(x.reshape(M, C), ((0, 0), (0, PP - C)))

    # weights: OIHW -> (ky, kx, I, O); zero-pad K and output channels.
    w1_k = jnp.transpose(w1, (2, 3, 1, 0)).reshape(K1, P)
    w1_k = jnp.pad(w1_k, ((0, KP - K1), (0, PP - P)))
    w2_k = jnp.transpose(w2, (2, 3, 1, 0)).reshape(9, P, P)
    w2_k = jnp.pad(w2_k, ((0, 0), (0, PP - P), (0, PP - P)))

    def pad_param(p):
        return jnp.pad(p.reshape(1, P).astype(jnp.float32), ((0, 0), (0, PP - P)))

    g1_k, b1_k, g2_k, b2_k = map(pad_param, (g1, b1, g2, b2))

    # per-pixel coordinates for conv2 border masks
    pix = jnp.arange(M, dtype=jnp.int32)
    xpos = (pix % W).reshape(M, 1)
    ypos = ((pix // W) % H).reshape(M, 1)

    kernel = functools.partial(_basic_block_kernel, H, W)
    args = (patches, xid, xpos, ypos, w1_k, w2_k, g1_k, b1_k, g2_k, b2_k)

    # TODO(synk): v7x dual-TensorCore M-tiling needs a two-pass BN-stat
    # reduction across tiles; not implemented at this toy size (single block).
    out_flat = pl.pallas_call(
        kernel,
        out_shape=jax.ShapeDtypeStruct((M, PP), jnp.float32),
        grid=(1,),
        in_specs=[_full_spec(a.shape) for a in args],
        out_specs=_full_spec((M, PP)),
        compiler_params=pltpu.CompilerParams(
            dimension_semantics=("arbitrary",),
            vmem_limit_bytes=32 * 1024 * 1024),
    )(*args)

    out = out_flat.reshape(N, H, W, PP)[..., :P]
    return jnp.transpose(out, (0, 3, 1, 2))


def _reference(x_nchw, w1, g1, b1, w2, g2, b2):
    """Pure-JAX reference replicating PyTorch BasicBlock (training-mode BN)."""
    def conv(x, w):
        return jax.lax.conv_general_dilated(
            x, w, (1, 1), ((1, 1), (1, 1)),
            dimension_numbers=("NCHW", "OIHW", "NCHW"),
            precision=jax.lax.Precision.HIGHEST)

    def bn(x, g, b):
        m = x.mean(axis=(0, 2, 3), keepdims=True)
        v = ((x - m) ** 2).mean(axis=(0, 2, 3), keepdims=True)
        return (x - m) * jax.lax.rsqrt(v + EPS) * g.reshape(1, -1, 1, 1) \
            + b.reshape(1, -1, 1, 1)

    out = jax.nn.relu(bn(conv(x_nchw, w1), g1, b1))
    out = bn(conv(out, w2), g2, b2)
    return jax.nn.relu(out + x_nchw)


if __name__ == "__main__":
    N, C, H, W = 2, 8, 16, 16   # inplanes = planes = 8 (required for identity add)
    P = C

    key = jax.random.PRNGKey(0)
    k = jax.random.split(key, 7)
    x = jax.random.normal(k[0], (N, C, H, W), jnp.float32)
    w1 = 0.1 * jax.random.normal(k[1], (P, C, 3, 3), jnp.float32)
    w2 = 0.1 * jax.random.normal(k[2], (P, P, 3, 3), jnp.float32)
    g1 = 1.0 + 0.1 * jax.random.normal(k[3], (P,), jnp.float32)
    b1 = 0.1 * jax.random.normal(k[4], (P,), jnp.float32)
    g2 = 1.0 + 0.1 * jax.random.normal(k[5], (P,), jnp.float32)
    b2 = 0.1 * jax.random.normal(k[6], (P,), jnp.float32)

    out = jax.block_until_ready(basic_block_forward(x, w1, g1, b1, w2, g2, b2))
    ref = jax.block_until_ready(_reference(x, w1, g1, b1, w2, g2, b2))

    # Tolerance relaxed vs the f32 reference: matmuls now use the default
    # single-pass bf16 MXU path (deliberate perf tradeoff per review).
    np.testing.assert_allclose(np.asarray(out), np.asarray(ref),
                               rtol=2e-2, atol=2e-2)

    # TODO(synk): stride>1 / downsample path of BasicBlock not exercised by the
    # default constructor and therefore not implemented.
    print("KERNEL_OK")
</pallas_src>

<mosaic_0001>
module attributes {stable_mosaic.version = 11 : i64} {
  func.func @_basic_block_kernel(%arg0: i32, %arg1: memref<512x128xf32, #tpu.memory_space<vmem>>, %arg2: memref<512x128xf32, #tpu.memory_space<vmem>>, %arg3: memref<512x1xi32, #tpu.memory_space<vmem>>, %arg4: memref<512x1xi32, #tpu.memory_space<vmem>>, %arg5: memref<128x128xf32, #tpu.memory_space<vmem>>, %arg6: memref<9x128x128xf32, #tpu.memory_space<vmem>>, %arg7: memref<1x128xf32, #tpu.memory_space<vmem>>, %arg8: memref<1x128xf32, #tpu.memory_space<vmem>>, %arg9: memref<1x128xf32, #tpu.memory_space<vmem>>, %arg10: memref<1x128xf32, #tpu.memory_space<vmem>>, %arg11: memref<512x128xf32, #tpu.memory_space<vmem>>) attributes {dimension_semantics = [#tpu.dimension_semantics<arbitrary>], iteration_bounds = array<i64: 1>, scalar_prefetch = 0 : i64, scratch_operands = 0 : i64, tpu.core_type = #tpu.core_type<tc>, window_params = [{pipeline_mode = #tpu.pipeline_mode<synchronous>, transform_indices = @transform_0, window_bounds = array<i64: 512, 128>}, {pipeline_mode = #tpu.pipeline_mode<synchronous>, transform_indices = @transform_1, window_bounds = array<i64: 512, 128>}, {pipeline_mode = #tpu.pipeline_mode<synchronous>, transform_indices = @transform_2, window_bounds = array<i64: 512, 1>}, {pipeline_mode = #tpu.pipeline_mode<synchronous>, transform_indices = @transform_3, window_bounds = array<i64: 512, 1>}, {pipeline_mode = #tpu.pipeline_mode<synchronous>, transform_indices = @transform_4, window_bounds = array<i64: 128, 128>}, {pipeline_mode = #tpu.pipeline_mode<synchronous>, transform_indices = @transform_5, window_bounds = array<i64: 9, 128, 128>}, {pipeline_mode = #tpu.pipeline_mode<synchronous>, transform_indices = @transform_6, window_bounds = array<i64: 1, 128>}, {pipeline_mode = #tpu.pipeline_mode<synchronous>, transform_indices = @transform_7, window_bounds = array<i64: 1, 128>}, {pipeline_mode = #tpu.pipeline_mode<synchronous>, transform_indices = @transform_8, window_bounds = array<i64: 1, 128>}, {pipeline_mode = #tpu.pipeline_mode<synchronous>, transform_indices = @transform_9, window_bounds = array<i64: 1, 128>}, {pipeline_mode = #tpu.pipeline_mode<synchronous>, transform_indices = @transform_10, window_bounds = array<i64: 512, 128>}]} {
    %c0 = arith.constant 0 : index
    %c0_0 = arith.constant 0 : index
    %0 = vector.load %arg1[%c0, %c0_0] : memref<512x128xf32, #tpu.memory_space<vmem>>, vector<512x128xf32>
    %c0_1 = arith.constant 0 : index
    %c0_2 = arith.constant 0 : index
    %1 = vector.load %arg5[%c0_1, %c0_2] : memref<128x128xf32, #tpu.memory_space<vmem>>, vector<128x128xf32>
    %cst = arith.constant dense<0.000000e+00> : vector<512x128xf32>
    %2 = tpu.matmul %0, %1, %cst {dimension_numbers = #tpu.dot_dimension_numbers<[1], [0], [0], [1], [0, 0, 1, 1], [], []>} : vector<512x128xf32>, vector<128x128xf32>, vector<512x128xf32> -> vector<512x128xf32>
    %cst_3 = arith.constant dense<0.000000e+00> : vector<128xf32>
    %3 = vector.multi_reduction <add>, %2, %cst_3 [0] : vector<512x128xf32> to vector<128xf32>
    %4 = vector.shape_cast %3 : vector<128xf32> to vector<1x128xf32>
    %5 = arith.mulf %2, %2 : vector<512x128xf32>
    %cst_4 = arith.constant dense<0.000000e+00> : vector<128xf32>
    %6 = vector.multi_reduction <add>, %5, %cst_4 [0] : vector<512x128xf32> to vector<128xf32>
    %7 = vector.shape_cast %6 : vector<128xf32> to vector<1x128xf32>
    %cst_5 = arith.constant 0.001953125 : f32
    %8 = vector.broadcast %cst_5 : f32 to vector<1x128xf32>
    %9 = arith.mulf %4, %8 : vector<1x128xf32>
    %cst_6 = arith.constant 0.001953125 : f32
    %10 = vector.broadcast %cst_6 : f32 to vector<1x128xf32>
    %11 = arith.mulf %7, %10 : vector<1x128xf32>
    %12 = arith.mulf %9, %9 : vector<1x128xf32>
    %13 = arith.subf %11, %12 : vector<1x128xf32>
    %c0_7 = arith.constant 0 : index
    %c0_8 = arith.constant 0 : index
    %14 = vector.load %arg7[%c0_7, %c0_8] : memref<1x128xf32, #tpu.memory_space<vmem>>, vector<1x128xf32>
    %cst_9 = arith.constant 9.99999974E-6 : f32
    %15 = vector.broadcast %cst_9 : f32 to vector<1x128xf32>
    %16 = arith.addf %13, %15 : vector<1x128xf32>
    %17 = math.rsqrt %16 : vector<1x128xf32>
    %18 = arith.mulf %14, %17 : vector<1x128xf32>
    %c0_10 = arith.constant 0 : index
    %c0_11 = arith.constant 0 : index
    %19 = vector.load %arg8[%c0_10, %c0_11] : memref<1x128xf32, #tpu.memory_space<vmem>>, vector<1x128xf32>
    %20 = arith.mulf %9, %18 : vector<1x128xf32>
    %21 = arith.subf %19, %20 : vector<1x128xf32>
    %22 = vector.broadcast %18 : vector<1x128xf32> to vector<512x128xf32>
    %23 = arith.mulf %2, %22 : vector<512x128xf32>
    %24 = vector.broadcast %21 : vector<1x128xf32> to vector<512x128xf32>
    %25 = arith.addf %23, %24 : vector<512x128xf32>
    %cst_12 = arith.constant 0.000000e+00 : f32
    %26 = vector.broadcast %cst_12 : f32 to vector<512x128xf32>
    %27 = arith.maximumf %25, %26 : vector<512x128xf32>
    %c0_13 = arith.constant 0 : index
    %c0_14 = arith.constant 0 : index
    %28 = vector.load %arg3[%c0_13, %c0_14] : memref<512x1xi32, #tpu.memory_space<vmem>>, vector<512x1xi32>
    %c0_15 = arith.constant 0 : index
    %c0_16 = arith.constant 0 : index
    %29 = vector.load %arg4[%c0_15, %c0_16] : memref<512x1xi32, #tpu.memory_space<vmem>>, vector<512x1xi32>
    %c17_i32 = arith.constant 17 : i32
    %30 = tpu.dynamic_rotate %27 by %c17_i32 dim 0 : vector<512x128xf32>, i32 -> vector<512x128xf32>
    %c-1_i32 = arith.constant -1 : i32
    %31 = vector.broadcast %c-1_i32 : i32 to vector<512x1xi32>
    %32 = arith.addi %28, %31 : vector<512x1xi32>
    %c0_i32 = arith.constant 0 : i32
    %33 = vector.broadcast %c0_i32 : i32 to vector<512x1xi32>
    %34 = arith.cmpi sge, %32, %33 : vector<512x1xi32>
    %c-1_i32_17 = arith.constant -1 : i32
    %35 = vector.broadcast %c-1_i32_17 : i32 to vector<512x1xi32>
    %36 = arith.addi %28, %35 : vector<512x1xi32>
    %c16_i32 = arith.constant 16 : i32
    %37 = vector.broadcast %c16_i32 : i32 to vector<512x1xi32>
    %38 = arith.cmpi slt, %36, %37 : vector<512x1xi32>
    %39 = arith.andi %34, %38 : vector<512x1xi1>
    %c-1_i32_18 = arith.constant -1 : i32
    %40 = vector.broadcast %c-1_i32_18 : i32 to vector<512x1xi32>
    %41 = arith.addi %29, %40 : vector<512x1xi32>
    %c0_i32_19 = arith.constant 0 : i32
    %42 = vector.broadcast %c0_i32_19 : i32 to vector<512x1xi32>
    %43 = arith.cmpi sge, %41, %42 : vector<512x1xi32>
    %44 = arith.andi %39, %43 : vector<512x1xi1>
    %c-1_i32_20 = arith.constant -1 : i32
    %45 = vector.broadcast %c-1_i32_20 : i32 to vector<512x1xi32>
    %46 = arith.addi %29, %45 : vector<512x1xi32>
    %c16_i32_21 = arith.constant 16 : i32
    %47 = vector.broadcast %c16_i32_21 : i32 to vector<512x1xi32>
    %48 = arith.cmpi slt, %46, %47 : vector<512x1xi32>
    %49 = arith.andi %44, %48 : vector<512x1xi1>
    %cst_22 = arith.constant 0.000000e+00 : f32
    %50 = vector.shape_cast %49 : vector<512x1xi1> to vector<512x1xi1>
    %51 = vector.broadcast %50 : vector<512x1xi1> to vector<512x128xi1>
    %52 = vector.broadcast %cst_22 : f32 to vector<512x128xf32>
    %53 = arith.select %51, %30, %52 : vector<512x128xi1>, vector<512x128xf32>
    %c0_23 = arith.constant 0 : index
    %c0_24 = arith.constant 0 : index
    %c0_25 = arith.constant 0 : index
    %54 = vector.load %arg6[%c0_23, %c0_24, %c0_25] : memref<9x128x128xf32, #tpu.memory_space<vmem>>, vector<1x128x128xf32>
    %55 = vector.shape_cast %54 : vector<1x128x128xf32> to vector<128x128xf32>
    %cst_26 = arith.constant dense<0.000000e+00> : vector<512x128xf32>
    %56 = tpu.matmul %53, %55, %cst_26 {dimension_numbers = #tpu.dot_dimension_numbers<[1], [0], [0], [1], [0, 0, 1, 1], [], []>} : vector<512x128xf32>, vector<128x128xf32>, vector<512x128xf32> -> vector<512x128xf32>
    %c16_i32_27 = arith.constant 16 : i32
    %57 = tpu.dynamic_rotate %27 by %c16_i32_27 dim 0 : vector<512x128xf32>, i32 -> vector<512x128xf32>
    %c0_i32_28 = arith.constant 0 : i32
    %58 = vector.broadcast %c0_i32_28 : i32 to vector<512x1xi32>
    %59 = arith.addi %28, %58 : vector<512x1xi32>
    %c0_i32_29 = arith.constant 0 : i32
    %60 = vector.broadcast %c0_i32_29 : i32 to vector<512x1xi32>
    %61 = arith.cmpi sge, %59, %60 : vector<512x1xi32>
    %c0_i32_30 = arith.constant 0 : i32
    %62 = vector.broadcast %c0_i32_30 : i32 to vector<512x1xi32>
    %63 = arith.addi %28, %62 : vector<512x1xi32>
    %c16_i32_31 = arith.constant 16 : i32
    %64 = vector.broadcast %c16_i32_31 : i32 to vector<512x1xi32>
    %65 = arith.cmpi slt, %63, %64 : vector<512x1xi32>
    %66 = arith.andi %61, %65 : vector<512x1xi1>
    %c-1_i32_32 = arith.constant -1 : i32
    %67 = vector.broadcast %c-1_i32_32 : i32 to vector<512x1xi32>
    %68 = arith.addi %29, %67 : vector<512x1xi32>
    %c0_i32_33 = arith.constant 0 : i32
    %69 = vector.broadcast %c0_i32_33 : i32 to vector<512x1xi32>
    %70 = arith.cmpi sge, %68, %69 : vector<512x1xi32>
    %71 = arith.andi %66, %70 : vector<512x1xi1>
    %c-1_i32_34 = arith.constant -1 : i32
    %72 = vector.broadcast %c-1_i32_34 : i32 to vector<512x1xi32>
    %73 = arith.addi %29, %72 : vector<512x1xi32>
    %c16_i32_35 = arith.constant 16 : i32
    %74 = vector.broadcast %c16_i32_35 : i32 to vector<512x1xi32>
    %75 = arith.cmpi slt, %73, %74 : vector<512x1xi32>
    %76 = arith.andi %71, %75 : vector<512x1xi1>
    %cst_36 = arith.constant 0.000000e+00 : f32
    %77 = vector.shape_cast %76 : vector<512x1xi1> to vector<512x1xi1>
    %78 = vector.broadcast %77 : vector<512x1xi1> to vector<512x128xi1>
    %79 = vector.broadcast %cst_36 : f32 to vector<512x128xf32>
    %80 = arith.select %78, %57, %79 : vector<512x128xi1>, vector<512x128xf32>
    %c1 = arith.constant 1 : index
    %c0_37 = arith.constant 0 : index
    %c0_38 = arith.constant 0 : index
    %81 = vector.load %arg6[%c1, %c0_37, %c0_38] : memref<9x128x128xf32, #tpu.memory_space<vmem>>, vector<1x128x128xf32>
    %82 = vector.shape_cast %81 : vector<1x128x128xf32> to vector<128x128xf32>
    %cst_39 = arith.constant dense<0.000000e+00> : vector<512x128xf32>
    %83 = tpu.matmul %80, %82, %cst_39 {dimension_numbers = #tpu.dot_dimension_numbers<[1], [0], [0], [1], [0, 0, 1, 1], [], []>} : vector<512x128xf32>, vector<128x128xf32>, vector<512x128xf32> -> vector<512x128xf32>
    %84 = arith.addf %56, %83 : vector<512x128xf32>
    %c15_i32 = arith.constant 15 : i32
    %85 = tpu.dynamic_rotate %27 by %c15_i32 dim 0 : vector<512x128xf32>, i32 -> vector<512x128xf32>
    %c1_i32 = arith.constant 1 : i32
    %86 = vector.broadcast %c1_i32 : i32 to vector<512x1xi32>
    %87 = arith.addi %28, %86 : vector<512x1xi32>
    %c0_i32_40 = arith.constant 0 : i32
    %88 = vector.broadcast %c0_i32_40 : i32 to vector<512x1xi32>
    %89 = arith.cmpi sge, %87, %88 : vector<512x1xi32>
    %c1_i32_41 = arith.constant 1 : i32
    %90 = vector.broadcast %c1_i32_41 : i32 to vector<512x1xi32>
    %91 = arith.addi %28, %90 : vector<512x1xi32>
    %c16_i32_42 = arith.constant 16 : i32
    %92 = vector.broadcast %c16_i32_42 : i32 to vector<512x1xi32>
    %93 = arith.cmpi slt, %91, %92 : vector<512x1xi32>
    %94 = arith.andi %89, %93 : vector<512x1xi1>
    %c-1_i32_43 = arith.constant -1 : i32
    %95 = vector.broadcast %c-1_i32_43 : i32 to vector<512x1xi32>
    %96 = arith.addi %29, %95 : vector<512x1xi32>
    %c0_i32_44 = arith.constant 0 : i32
    %97 = vector.broadcast %c0_i32_44 : i32 to vector<512x1xi32>
    %98 = arith.cmpi sge, %96, %97 : vector<512x1xi32>
    %99 = arith.andi %94, %98 : vector<512x1xi1>
    %c-1_i32_45 = arith.constant -1 : i32
    %100 = vector.broadcast %c-1_i32_45 : i32 to vector<512x1xi32>
    %101 = arith.addi %29, %100 : vector<512x1xi32>
    %c16_i32_46 = arith.constant 16 : i32
    %102 = vector.broadcast %c16_i32_46 : i32 to vector<512x1xi32>
    %103 = arith.cmpi slt, %101, %102 : vector<512x1xi32>
    %104 = arith.andi %99, %103 : vector<512x1xi1>
    %cst_47 = arith.constant 0.000000e+00 : f32
    %105 = vector.shape_cast %104 : vector<512x1xi1> to vector<512x1xi1>
    %106 = vector.broadcast %105 : vector<512x1xi1> to vector<512x128xi1>
    %107 = vector.broadcast %cst_47 : f32 to vector<512x128xf32>
    %108 = arith.select %106, %85, %107 : vector<512x128xi1>, vector<512x128xf32>
    %c2 = arith.constant 2 : index
    %c0_48 = arith.constant 0 : index
    %c0_49 = arith.constant 0 : index
    %109 = vector.load %arg6[%c2, %c0_48, %c0_49] : memref<9x128x128xf32, #tpu.memory_space<vmem>>, vector<1x128x128xf32>
    %110 = vector.shape_cast %109 : vector<1x128x128xf32> to vector<128x128xf32>
    %cst_50 = arith.constant dense<0.000000e+00> : vector<512x128xf32>
    %111 = tpu.matmul %108, %110, %cst_50 {dimension_numbers = #tpu.dot_dimension_numbers<[1], [0], [0], [1], [0, 0, 1, 1], [], []>} : vector<512x128xf32>, vector<128x128xf32>, vector<512x128xf32> -> vector<512x128xf32>
    %112 = arith.addf %84, %111 : vector<512x128xf32>
    %c1_i32_51 = arith.constant 1 : i32
    %113 = tpu.dynamic_rotate %27 by %c1_i32_51 dim 0 : vector<512x128xf32>, i32 -> vector<512x128xf32>
    %c-1_i32_52 = arith.constant -1 : i32
    %114 = vector.broadcast %c-1_i32_52 : i32 to vector<512x1xi32>
    %115 = arith.addi %28, %114 : vector<512x1xi32>
    %c0_i32_53 = arith.constant 0 : i32
    %116 = vector.broadcast %c0_i32_53 : i32 to vector<512x1xi32>
    %117 = arith.cmpi sge, %115, %116 : vector<512x1xi32>
    %c-1_i32_54 = arith.constant -1 : i32
    %118 = vector.broadcast %c-1_i32_54 : i32 to vector<512x1xi32>
    %119 = arith.addi %28, %118 : vector<512x1xi32>
    %c16_i32_55 = arith.constant 16 : i32
    %120 = vector.broadcast %c16_i32_55 : i32 to vector<512x1xi32>
    %121 = arith.cmpi slt, %119, %120 : vector<512x1xi32>
    %122 = arith.andi %117, %121 : vector<512x1xi1>
    %c0_i32_56 = arith.constant 0 : i32
    %123 = vector.broadcast %c0_i32_56 : i32 to vector<512x1xi32>
    %124 = arith.addi %29, %123 : vector<512x1xi32>
    %c0_i32_57 = arith.constant 0 : i32
    %125 = vector.broadcast %c0_i32_57 : i32 to vector<512x1xi32>
    %126 = arith.cmpi sge, %124, %125 : vector<512x1xi32>
    %127 = arith.andi %122, %126 : vector<512x1xi1>
    %c0_i32_58 = arith.constant 0 : i32
    %128 = vector.broadcast %c0_i32_58 : i32 to vector<512x1xi32>
    %129 = arith.addi %29, %128 : vector<512x1xi32>
    %c16_i32_59 = arith.constant 16 : i32
    %130 = vector.broadcast %c16_i32_59 : i32 to vector<512x1xi32>
    %131 = arith.cmpi slt, %129, %130 : vector<512x1xi32>
    %132 = arith.andi %127, %131 : vector<512x1xi1>
    %cst_60 = arith.constant 0.000000e+00 : f32
    %133 = vector.shape_cast %132 : vector<512x1xi1> to vector<512x1xi1>
    %134 = vector.broadcast %133 : vector<512x1xi1> to vector<512x128xi1>
    %135 = vector.broadcast %cst_60 : f32 to vector<512x128xf32>
    %136 = arith.select %134, %113, %135 : vector<512x128xi1>, vector<512x128xf32>
    %c3 = arith.constant 3 : index
    %c0_61 = arith.constant 0 : index
    %c0_62 = arith.constant 0 : index
    %137 = vector.load %arg6[%c3, %c0_61, %c0_62] : memref<9x128x128xf32, #tpu.memory_space<vmem>>, vector<1x128x128xf32>
    %138 = vector.shape_cast %137 : vector<1x128x128xf32> to vector<128x128xf32>
    %cst_63 = arith.constant dense<0.000000e+00> : vector<512x128xf32>
    %139 = tpu.matmul %136, %138, %cst_63 {dimension_numbers = #tpu.dot_dimension_numbers<[1], [0], [0], [1], [0, 0, 1, 1], [], []>} : vector<512x128xf32>, vector<128x128xf32>, vector<512x128xf32> -> vector<512x128xf32>
    %140 = arith.addf %112, %139 : vector<512x128xf32>
    %c4 = arith.constant 4 : index
    %c0_64 = arith.constant 0 : index
    %c0_65 = arith.constant 0 : index
    %141 = vector.load %arg6[%c4, %c0_64, %c0_65] : memref<9x128x128xf32, #tpu.memory_space<vmem>>, vector<1x128x128xf32>
    %142 = vector.shape_cast %141 : vector<1x128x128xf32> to vector<128x128xf32>
    %cst_66 = arith.constant dense<0.000000e+00> : vector<512x128xf32>
    %143 = tpu.matmul %27, %142, %cst_66 {dimension_numbers = #tpu.dot_dimension_numbers<[1], [0], [0], [1], [0, 0, 1, 1], [], []>} : vector<512x128xf32>, vector<128x128xf32>, vector<512x128xf32> -> vector<512x128xf32>
    %144 = arith.addf %140, %143 : vector<512x128xf32>
    %c511_i32 = arith.constant 511 : i32
    %145 = tpu.dynamic_rotate %27 by %c511_i32 dim 0 : vector<512x128xf32>, i32 -> vector<512x128xf32>
    %c1_i32_67 = arith.constant 1 : i32
    %146 = vector.broadcast %c1_i32_67 : i32 to vector<512x1xi32>
    %147 = arith.addi %28, %146 : vector<512x1xi32>
    %c0_i32_68 = arith.constant 0 : i32
    %148 = vector.broadcast %c0_i32_68 : i32 to vector<512x1xi32>
    %149 = arith.cmpi sge, %147, %148 : vector<512x1xi32>
    %c1_i32_69 = arith.constant 1 : i32
    %150 = vector.broadcast %c1_i32_69 : i32 to vector<512x1xi32>
    %151 = arith.addi %28, %150 : vector<512x1xi32>
    %c16_i32_70 = arith.constant 16 : i32
    %152 = vector.broadcast %c16_i32_70 : i32 to vector<512x1xi32>
    %153 = arith.cmpi slt, %151, %152 : vector<512x1xi32>
    %154 = arith.andi %149, %153 : vector<512x1xi1>
    %c0_i32_71 = arith.constant 0 : i32
    %155 = vector.broadcast %c0_i32_71 : i32 to vector<512x1xi32>
    %156 = arith.addi %29, %155 : vector<512x1xi32>
    %c0_i32_72 = arith.constant 0 : i32
    %157 = vector.broadcast %c0_i32_72 : i32 to vector<512x1xi32>
    %158 = arith.cmpi sge, %156, %157 : vector<512x1xi32>
    %159 = arith.andi %154, %158 : vector<512x1xi1>
    %c0_i32_73 = arith.constant 0 : i32
    %160 = vector.broadcast %c0_i32_73 : i32 to vector<512x1xi32>
    %161 = arith.addi %29, %160 : vector<512x1xi32>
    %c16_i32_74 = arith.constant 16 : i32
    %162 = vector.broadcast %c16_i32_74 : i32 to vector<512x1xi32>
    %163 = arith.cmpi slt, %161, %162 : vector<512x1xi32>
    %164 = arith.andi %159, %163 : vector<512x1xi1>
    %cst_75 = arith.constant 0.000000e+00 : f32
    %165 = vector.shape_cast %164 : vector<512x1xi1> to vector<512x1xi1>
    %166 = vector.broadcast %165 : vector<512x1xi1> to vector<512x128xi1>
    %167 = vector.broadcast %cst_75 : f32 to vector<512x128xf32>
    %168 = arith.select %166, %145, %167 : vector<512x128xi1>, vector<512x128xf32>
    %c5 = arith.constant 5 : index
    %c0_76 = arith.constant 0 : index
    %c0_77 = arith.constant 0 : index
    %169 = vector.load %arg6[%c5, %c0_76, %c0_77] : memref<9x128x128xf32, #tpu.memory_space<vmem>>, vector<1x128x128xf32>
    %170 = vector.shape_cast %169 : vector<1x128x128xf32> to vector<128x128xf32>
    %cst_78 = arith.constant dense<0.000000e+00> : vector<512x128xf32>
    %171 = tpu.matmul %168, %170, %cst_78 {dimension_numbers = #tpu.dot_dimension_numbers<[1], [0], [0], [1], [0, 0, 1, 1], [], []>} : vector<512x128xf32>, vector<128x128xf32>, vector<512x128xf32> -> vector<512x128xf32>
    %172 = arith.addf %144, %171 : vector<512x128xf32>
    %c497_i32 = arith.constant 497 : i32
    %173 = tpu.dynamic_rotate %27 by %c497_i32 dim 0 : vector<512x128xf32>, i32 -> vector<512x128xf32>
    %c-1_i32_79 = arith.constant -1 : i32
    %174 = vector.broadcast %c-1_i32_79 : i32 to vector<512x1xi32>
    %175 = arith.addi %28, %174 : vector<512x1xi32>
    %c0_i32_80 = arith.constant 0 : i32
    %176 = vector.broadcast %c0_i32_80 : i32 to vector<512x1xi32>
    %177 = arith.cmpi sge, %175, %176 : vector<512x1xi32>
    %c-1_i32_81 = arith.constant -1 : i32
    %178 = vector.broadcast %c-1_i32_81 : i32 to vector<512x1xi32>
    %179 = arith.addi %28, %178 : vector<512x1xi32>
    %c16_i32_82 = arith.constant 16 : i32
    %180 = vector.broadcast %c16_i32_82 : i32 to vector<512x1xi32>
    %181 = arith.cmpi slt, %179, %180 : vector<512x1xi32>
    %182 = arith.andi %177, %181 : vector<512x1xi1>
    %c1_i32_83 = arith.constant 1 : i32
    %183 = vector.broadcast %c1_i32_83 : i32 to vector<512x1xi32>
    %184 = arith.addi %29, %183 : vector<512x1xi32>
    %c0_i32_84 = arith.constant 0 : i32
    %185 = vector.broadcast %c0_i32_84 : i32 to vector<512x1xi32>
    %186 = arith.cmpi sge, %184, %185 : vector<512x1xi32>
    %187 = arith.andi %182, %186 : vector<512x1xi1>
    %c1_i32_85 = arith.constant 1 : i32
    %188 = vector.broadcast %c1_i32_85 : i32 to vector<512x1xi32>
    %189 = arith.addi %29, %188 : vector<512x1xi32>
    %c16_i32_86 = arith.constant 16 : i32
    %190 = vector.broadcast %c16_i32_86 : i32 to vector<512x1xi32>
    %191 = arith.cmpi slt, %189, %190 : vector<512x1xi32>
    %192 = arith.andi %187, %191 : vector<512x1xi1>
    %cst_87 = arith.constant 0.000000e+00 : f32
    %193 = vector.shape_cast %192 : vector<512x1xi1> to vector<512x1xi1>
    %194 = vector.broadcast %193 : vector<512x1xi1> to vector<512x128xi1>
    %195 = vector.broadcast %cst_87 : f32 to vector<512x128xf32>
    %196 = arith.select %194, %173, %195 : vector<512x128xi1>, vector<512x128xf32>
    %c6 = arith.constant 6 : index
    %c0_88 = arith.constant 0 : index
    %c0_89 = arith.constant 0 : index
    %197 = vector.load %arg6[%c6, %c0_88, %c0_89] : memref<9x128x128xf32, #tpu.memory_space<vmem>>, vector<1x128x128xf32>
    %198 = vector.shape_cast %197 : vector<1x128x128xf32> to vector<128x128xf32>
    %cst_90 = arith.constant dense<0.000000e+00> : vector<512x128xf32>
    %199 = tpu.matmul %196, %198, %cst_90 {dimension_numbers = #tpu.dot_dimension_numbers<[1], [0], [0], [1], [0, 0, 1, 1], [], []>} : vector<512x128xf32>, vector<128x128xf32>, vector<512x128xf32> -> vector<512x128xf32>
    %200 = arith.addf %172, %199 : vector<512x128xf32>
    %c496_i32 = arith.constant 496 : i32
    %201 = tpu.dynamic_rotate %27 by %c496_i32 dim 0 : vector<512x128xf32>, i32 -> vector<512x128xf32>
    %c0_i32_91 = arith.constant 0 : i32
    %202 = vector.broadcast %c0_i32_91 : i32 to vector<512x1xi32>
    %203 = arith.addi %28, %202 : vector<512x1xi32>
    %c0_i32_92 = arith.constant 0 : i32
    %204 = vector.broadcast %c0_i32_92 : i32 to vector<512x1xi32>
    %205 = arith.cmpi sge, %203, %204 : vector<512x1xi32>
    %c0_i32_93 = arith.constant 0 : i32
    %206 = vector.broadcast %c0_i32_93 : i32 to vector<512x1xi32>
    %207 = arith.addi %28, %206 : vector<512x1xi32>
    %c16_i32_94 = arith.constant 16 : i32
    %208 = vector.broadcast %c16_i32_94 : i32 to vector<512x1xi32>
    %209 = arith.cmpi slt, %207, %208 : vector<512x1xi32>
    %210 = arith.andi %205, %209 : vector<512x1xi1>
    %c1_i32_95 = arith.constant 1 : i32
    %211 = vector.broadcast %c1_i32_95 : i32 to vector<512x1xi32>
    %212 = arith.addi %29, %211 : vector<512x1xi32>
    %c0_i32_96 = arith.constant 0 : i32
    %213 = vector.broadcast %c0_i32_96 : i32 to vector<512x1xi32>
    %214 = arith.cmpi sge, %212, %213 : vector<512x1xi32>
    %215 = arith.andi %210, %214 : vector<512x1xi1>
    %c1_i32_97 = arith.constant 1 : i32
    %216 = vector.broadcast %c1_i32_97 : i32 to vector<512x1xi32>
    %217 = arith.addi %29, %216 : vector<512x1xi32>
    %c16_i32_98 = arith.constant 16 : i32
    %218 = vector.broadcast %c16_i32_98 : i32 to vector<512x1xi32>
    %219 = arith.cmpi slt, %217, %218 : vector<512x1xi32>
    %220 = arith.andi %215, %219 : vector<512x1xi1>
    %cst_99 = arith.constant 0.000000e+00 : f32
    %221 = vector.shape_cast %220 : vector<512x1xi1> to vector<512x1xi1>
    %222 = vector.broadcast %221 : vector<512x1xi1> to vector<512x128xi1>
    %223 = vector.broadcast %cst_99 : f32 to vector<512x128xf32>
    %224 = arith.select %222, %201, %223 : vector<512x128xi1>, vector<512x128xf32>
    %c7 = arith.constant 7 : index
    %c0_100 = arith.constant 0 : index
    %c0_101 = arith.constant 0 : index
    %225 = vector.load %arg6[%c7, %c0_100, %c0_101] : memref<9x128x128xf32, #tpu.memory_space<vmem>>, vector<1x128x128xf32>
    %226 = vector.shape_cast %225 : vector<1x128x128xf32> to vector<128x128xf32>
    %cst_102 = arith.constant dense<0.000000e+00> : vector<512x128xf32>
    %227 = tpu.matmul %224, %226, %cst_102 {dimension_numbers = #tpu.dot_dimension_numbers<[1], [0], [0], [1], [0, 0, 1, 1], [], []>} : vector<512x128xf32>, vector<128x128xf32>, vector<512x128xf32> -> vector<512x128xf32>
    %228 = arith.addf %200, %227 : vector<512x128xf32>
    %c495_i32 = arith.constant 495 : i32
    %229 = tpu.dynamic_rotate %27 by %c495_i32 dim 0 : vector<512x128xf32>, i32 -> vector<512x128xf32>
    %c1_i32_103 = arith.constant 1 : i32
    %230 = vector.broadcast %c1_i32_103 : i32 to vector<512x1xi32>
    %231 = arith.addi %28, %230 : vector<512x1xi32>
    %c0_i32_104 = arith.constant 0 : i32
    %232 = vector.broadcast %c0_i32_104 : i32 to vector<512x1xi32>
    %233 = arith.cmpi sge, %231, %232 : vector<512x1xi32>
    %c1_i32_105 = arith.constant 1 : i32
    %234 = vector.broadcast %c1_i32_105 : i32 to vector<512x1xi32>
    %235 = arith.addi %28, %234 : vector<512x1xi32>
    %c16_i32_106 = arith.constant 16 : i32
    %236 = vector.broadcast %c16_i32_106 : i32 to vector<512x1xi32>
    %237 = arith.cmpi slt, %235, %236 : vector<512x1xi32>
    %238 = arith.andi %233, %237 : vector<512x1xi1>
    %c1_i32_107 = arith.constant 1 : i32
    %239 = vector.broadcast %c1_i32_107 : i32 to vector<512x1xi32>
    %240 = arith.addi %29, %239 : vector<512x1xi32>
    %c0_i32_108 = arith.constant 0 : i32
    %241 = vector.broadcast %c0_i32_108 : i32 to vector<512x1xi32>
    %242 = arith.cmpi sge, %240, %241 : vector<512x1xi32>
    %243 = arith.andi %238, %242 : vector<512x1xi1>
    %c1_i32_109 = arith.constant 1 : i32
    %244 = vector.broadcast %c1_i32_109 : i32 to vector<512x1xi32>
    %245 = arith.addi %29, %244 : vector<512x1xi32>
    %c16_i32_110 = arith.constant 16 : i32
    %246 = vector.broadcast %c16_i32_110 : i32 to vector<512x1xi32>
    %247 = arith.cmpi slt, %245, %246 : vector<512x1xi32>
    %248 = arith.andi %243, %247 : vector<512x1xi1>
    %cst_111 = arith.constant 0.000000e+00 : f32
    %249 = vector.shape_cast %248 : vector<512x1xi1> to vector<512x1xi1>
    %250 = vector.broadcast %249 : vector<512x1xi1> to vector<512x128xi1>
    %251 = vector.broadcast %cst_111 : f32 to vector<512x128xf32>
    %252 = arith.select %250, %229, %251 : vector<512x128xi1>, vector<512x128xf32>
    %c8 = arith.constant 8 : index
    %c0_112 = arith.constant 0 : index
    %c0_113 = arith.constant 0 : index
    %253 = vector.load %arg6[%c8, %c0_112, %c0_113] : memref<9x128x128xf32, #tpu.memory_space<vmem>>, vector<1x128x128xf32>
    %254 = vector.shape_cast %253 : vector<1x128x128xf32> to vector<128x128xf32>
    %cst_114 = arith.constant dense<0.000000e+00> : vector<512x128xf32>
    %255 = tpu.matmul %252, %254, %cst_114 {dimension_numbers = #tpu.dot_dimension_numbers<[1], [0], [0], [1], [0, 0, 1, 1], [], []>} : vector<512x128xf32>, vector<128x128xf32>, vector<512x128xf32> -> vector<512x128xf32>
    %256 = arith.addf %228, %255 : vector<512x128xf32>
    %cst_115 = arith.constant dense<0.000000e+00> : vector<128xf32>
    %257 = vector.multi_reduction <add>, %256, %cst_115 [0] : vector<512x128xf32> to vector<128xf32>
    %258 = vector.shape_cast %257 : vector<128xf32> to vector<1x128xf32>
    %259 = arith.mulf %256, %256 : vector<512x128xf32>
    %cst_116 = arith.constant dense<0.000000e+00> : vector<128xf32>
    %260 = vector.multi_reduction <add>, %259, %cst_116 [0] : vector<512x128xf32> to vector<128xf32>
    %261 = vector.shape_cast %260 : vector<128xf32> to vector<1x128xf32>
    %cst_117 = arith.constant 0.001953125 : f32
    %262 = vector.broadcast %cst_117 : f32 to vector<1x128xf32>
    %263 = arith.mulf %258, %262 : vector<1x128xf32>
    %cst_118 = arith.constant 0.001953125 : f32
    %264 = vector.broadcast %cst_118 : f32 to vector<1x128xf32>
    %265 = arith.mulf %261, %264 : vector<1x128xf32>
    %266 = arith.mulf %263, %263 : vector<1x128xf32>
    %267 = arith.subf %265, %266 : vector<1x128xf32>
    %c0_119 = arith.constant 0 : index
    %c0_120 = arith.constant 0 : index
    %268 = vector.load %arg9[%c0_119, %c0_120] : memref<1x128xf32, #tpu.memory_space<vmem>>, vector<1x128xf32>
    %cst_121 = arith.constant 9.99999974E-6 : f32
    %269 = vector.broadcast %cst_121 : f32 to vector<1x128xf32>
    %270 = arith.addf %267, %269 : vector<1x128xf32>
    %271 = math.rsqrt %270 : vector<1x128xf32>
    %272 = arith.mulf %268, %271 : vector<1x128xf32>
    %c0_122 = arith.constant 0 : index
    %c0_123 = arith.constant 0 : index
    %273 = vector.load %arg10[%c0_122, %c0_123] : memref<1x128xf32, #tpu.memory_space<vmem>>, vector<1x128xf32>
    %274 = arith.mulf %263, %272 : vector<1x128xf32>
    %275 = arith.subf %273, %274 : vector<1x128xf32>
    %276 = vector.broadcast %272 : vector<1x128xf32> to vector<512x128xf32>
    %277 = arith.mulf %256, %276 : vector<512x128xf32>
    %278 = vector.broadcast %275 : vector<1x128xf32> to vector<512x128xf32>
    %279 = arith.addf %277, %278 : vector<512x128xf32>
    %c0_124 = arith.constant 0 : index
    %c0_125 = arith.constant 0 : index
    %280 = vector.load %arg2[%c0_124, %c0_125] : memref<512x128xf32, #tpu.memory_space<vmem>>, vector<512x128xf32>
    %281 = arith.addf %279, %280 : vector<512x128xf32>
    %cst_126 = arith.constant 0.000000e+00 : f32
    %282 = vector.broadcast %cst_126 : f32 to vector<512x128xf32>
    %283 = arith.maximumf %281, %282 : vector<512x128xf32>
    %c0_127 = arith.constant 0 : index
    %c0_128 = arith.constant 0 : index
    %284 = vector.load %arg11[%c0_127, %c0_128] : memref<512x128xf32, #tpu.memory_space<vmem>>, vector<512x128xf32>
    tpu.vector_store %arg11[%c0_127, %c0_128], %283 {strides = array<i32>} : memref<512x128xf32, #tpu.memory_space<vmem>>, vector<512x128xf32>,
    return
  }
  func.func @transform_0(%arg0: i32) -> (i32, i32) {
    %c0_i32 = arith.constant 0 : i32
    %c0_i32_0 = arith.constant 0 : i32
    %c0_i32_1 = arith.constant 0 : i32
    return %c0_i32, %c0_i32_0 : i32, i32
  }
  func.func @transform_1(%arg0: i32) -> (i32, i32) {
    %c0_i32 = arith.constant 0 : i32
    %c0_i32_0 = arith.constant 0 : i32
    %c0_i32_1 = arith.constant 0 : i32
    return %c0_i32, %c0_i32_0 : i32, i32
  }
  func.func @transform_2(%arg0: i32) -> (i32, i32) {
    %c0_i32 = arith.constant 0 : i32
    %c0_i32_0 = arith.constant 0 : i32
    %c0_i32_1 = arith.constant 0 : i32
    return %c0_i32, %c0_i32_0 : i32, i32
  }
  func.func @transform_3(%arg0: i32) -> (i32, i32) {
    %c0_i32 = arith.constant 0 : i32
    %c0_i32_0 = arith.constant 0 : i32
    %c0_i32_1 = arith.constant 0 : i32
    return %c0_i32, %c0_i32_0 : i32, i32
  }
  func.func @transform_4(%arg0: i32) -> (i32, i32) {
    %c0_i32 = arith.constant 0 : i32
    %c0_i32_0 = arith.constant 0 : i32
    %c0_i32_1 = arith.constant 0 : i32
    return %c0_i32, %c0_i32_0 : i32, i32
  }
  func.func @transform_5(%arg0: i32) -> (i32, i32, i32) {
    %c0_i32 = arith.constant 0 : i32
    %c0_i32_0 = arith.constant 0 : i32
    %c0_i32_1 = arith.constant 0 : i32
    %c0_i32_2 = arith.constant 0 : i32
    return %c0_i32, %c0_i32_0, %c0_i32_1 : i32, i32, i32
  }
  func.func @transform_6(%arg0: i32) -> (i32, i32) {
    %c0_i32 = arith.constant 0 : i32
    %c0_i32_0 = arith.constant 0 : i32
    %c0_i32_1 = arith.constant 0 : i32
    return %c0_i32, %c0_i32_0 : i32, i32
  }
  func.func @transform_7(%arg0: i32) -> (i32, i32) {
    %c0_i32 = arith.constant 0 : i32
    %c0_i32_0 = arith.constant 0 : i32
    %c0_i32_1 = arith.constant 0 : i32
    return %c0_i32, %c0_i32_0 : i32, i32
  }
  func.func @transform_8(%arg0: i32) -> (i32, i32) {
    %c0_i32 = arith.constant 0 : i32
    %c0_i32_0 = arith.constant 0 : i32
    %c0_i32_1 = arith.constant 0 : i32
    return %c0_i32, %c0_i32_0 : i32, i32
  }
  func.func @transform_9(%arg0: i32) -> (i32, i32) {
    %c0_i32 = arith.constant 0 : i32
    %c0_i32_0 = arith.constant 0 : i32
    %c0_i32_1 = arith.constant 0 : i32
    return %c0_i32, %c0_i32_0 : i32, i32
  }
  func.func @transform_10(%arg0: i32) -> (i32, i32) {
    %c0_i32 = arith.constant 0 : i32
    %c0_i32_0 = arith.constant 0 : i32
    %c0_i32_1 = arith.constant 0 : i32
    return %c0_i32, %c0_i32_0 : i32, i32
  }
}

</mosaic_0001>

<llo_original>
// kernel: basic_block_forward.1
$region0: #{basic_block_forward.1}
  #allocation0 [shape = 'u32[]', space=smem, size = 0x4, offset = 0x4, fixed_abs, tag = 'smem constant byte address 0x4 - core index']
  #allocation1 [shape = 'u32[144,128]{1,0:T(1,128)}', space=vmem, size = 0x12000, scoped, tag = 'internal scratch']
  %s0 = inlined_call_operand.vmem [shape: f32[512,128], index: 0, kind: input, shape index: {}]
  %s1 = inlined_call_operand.vmem [shape: f32[512,128], index: 1, kind: input, shape index: {}]
  %s2 = inlined_call_operand.vmem [shape: s32[512,1], index: 2, kind: input, shape index: {}]
  %s3 = inlined_call_operand.vmem [shape: s32[512,1], index: 3, kind: input, shape index: {}]
  %s4 = inlined_call_operand.vmem [shape: f32[128,128], index: 4, kind: input, shape index: {}]
  %s5 = inlined_call_operand.vmem [shape: f32[9,128,128], index: 5, kind: input, shape index: {}]
  %s6 = inlined_call_operand.vmem [shape: f32[1,128], index: 6, kind: input, shape index: {}]
  %s7 = inlined_call_operand.vmem [shape: f32[1,128], index: 7, kind: input, shape index: {}]
  %s8 = inlined_call_operand.vmem [shape: f32[1,128], index: 8, kind: input, shape index: {}]
  %s9 = inlined_call_operand.vmem [shape: f32[1,128], index: 9, kind: input, shape index: {}]
  %s10 = inlined_call_operand.vmem [shape: f32[512,128], index: 10, kind: output, shape index: {}]
  %s11 = sld [smem:[#allocation0]]
  $region50: #{basic_block_forward.1} parent=0
    _
  %s13 = ssub.s32 1, %s11
  %s14 = scalar_select 0, %s13, %s11
  // Predicated region
  $region2: #{basic_block_forward.1} parent=0 // pred_check
    _
  $region3: #{basic_block_forward.1} parent=0 // pred_check_branch
    %16 = sbr.rel (0) target = $region5
  $region4: #{basic_block_forward.1} parent=0 // pred_region
    _
  $region5: #{basic_block_forward.1} parent=0 // pred_fallthru
    _
  // Predicated region
  $region6: #{basic_block_forward.1} parent=0 // pred_check
    _
  $region7: #{basic_block_forward.1} parent=0 // pred_check_branch
    %18 = sbr.rel (0) target = $region9
  $region8: #{basic_block_forward.1} parent=0 // pred_region
    _
  $region9: #{basic_block_forward.1} parent=0 // pred_fallthru
    _
  // Predicated region
  $region10: #{basic_block_forward.1} parent=0 // pred_check
    _
  $region11: #{basic_block_forward.1} parent=0 // pred_check_branch
    %20 = sbr.rel (0) target = $region13
  $region12: #{basic_block_forward.1} parent=0 // pred_region
    _
  $region13: #{basic_block_forward.1} parent=0 // pred_fallthru
    _
  // Predicated region
  $region14: #{basic_block_forward.1} parent=0 // pred_check
    _
  $region15: #{basic_block_forward.1} parent=0 // pred_check_branch
    %22 = sbr.rel (0) target = $region17
  $region16: #{basic_block_forward.1} parent=0 // pred_region
    _
  $region17: #{basic_block_forward.1} parent=0 // pred_fallthru
    _
  // Predicated region
  $region18: #{basic_block_forward.1} parent=0 // pred_check
    _
  $region19: #{basic_block_forward.1} parent=0 // pred_check_branch
    %24 = sbr.rel (0) target = $region21
  $region20: #{basic_block_forward.1} parent=0 // pred_region
    _
  $region21: #{basic_block_forward.1} parent=0 // pred_fallthru
    _
  // Predicated region
  $region22: #{basic_block_forward.1} parent=0 // pred_check
    _
  $region23: #{basic_block_forward.1} parent=0 // pred_check_branch
    %26 = sbr.rel (0) target = $region25
  $region24: #{basic_block_forward.1} parent=0 // pred_region
    _
  $region25: #{basic_block_forward.1} parent=0 // pred_fallthru
    _
  // Predicated region
  $region26: #{basic_block_forward.1} parent=0 // pred_check
    _
  $region27: #{basic_block_forward.1} parent=0 // pred_check_branch
    %28 = sbr.rel (0) target = $region29
  $region28: #{basic_block_forward.1} parent=0 // pred_region
    _
  $region29: #{basic_block_forward.1} parent=0 // pred_fallthru
    _
  // Predicated region
  $region30: #{basic_block_forward.1} parent=0 // pred_check
    _
  $region31: #{basic_block_forward.1} parent=0 // pred_check_branch
    %30 = sbr.rel (0) target = $region33
  $region32: #{basic_block_forward.1} parent=0 // pred_region
    _
  $region33: #{basic_block_forward.1} parent=0 // pred_fallthru
    _
  // Predicated region
  $region34: #{basic_block_forward.1} parent=0 // pred_check
    _
  $region35: #{basic_block_forward.1} parent=0 // pred_check_branch
    %32 = sbr.rel (0) target = $region37
  $region36: #{basic_block_forward.1} parent=0 // pred_region
    _
  $region37: #{basic_block_forward.1} parent=0 // pred_fallthru
    _
  // Predicated region
  $region38: #{basic_block_forward.1} parent=0 // pred_check
    _
  $region39: #{basic_block_forward.1} parent=0 // pred_check_branch
    %34 = sbr.rel (0) target = $region41
  $region40: #{basic_block_forward.1} parent=0 // pred_region
    _
  $region41: #{basic_block_forward.1} parent=0 // pred_fallthru
    _
  %v35 = vld [vmem:[%s0] sm:$0xff]
  %v36 = vld [vmem:[%s0 + $0x8] sm:$0xff]
  %v37 = vld [vmem:[%s0 + $0x10] sm:$0xff]
  %v38 = vld [vmem:[%s0 + $0x18] sm:$0xff]
  %v39 = vld [vmem:[%s0 + $0x20] sm:$0xff]
  %v40 = vld [vmem:[%s0 + $0x28] sm:$0xff]
  %v41 = vld [vmem:[%s0 + $0x30] sm:$0xff]
  %v42 = vld [vmem:[%s0 + $0x38] sm:$0xff]
  %v43 = vld [vmem:[%s0 + $0x40] sm:$0xff]
  %v44 = vld [vmem:[%s0 + $0x48] sm:$0xff]
  %v45 = vld [vmem:[%s0 + $0x50] sm:$0xff]
  %v46 = vld [vmem:[%s0 + $0x58] sm:$0xff]
  %v47 = vld [vmem:[%s0 + $0x60] sm:$0xff]
  %v48 = vld [vmem:[%s0 + $0x68] sm:$0xff]
  %v49 = vld [vmem:[%s0 + $0x70] sm:$0xff]
  %v50 = vld [vmem:[%s0 + $0x78] sm:$0xff]
  %v51 = vld [vmem:[%s0 + $0x80] sm:$0xff]
  %v52 = vld [vmem:[%s0 + $0x88] sm:$0xff]
  %v53 = vld [vmem:[%s0 + $0x90] sm:$0xff]
  %v54 = vld [vmem:[%s0 + $0x98] sm:$0xff]
  %v55 = vld [vmem:[%s0 + $0xa0] sm:$0xff]
  %v56 = vld [vmem:[%s0 + $0xa8] sm:$0xff]
  %v57 = vld [vmem:[%s0 + $0xb0] sm:$0xff]
  %v58 = vld [vmem:[%s0 + $0xb8] sm:$0xff]
  %v59 = vld [vmem:[%s0 + $0xc0] sm:$0xff]
  %v60 = vld [vmem:[%s0 + $0xc8] sm:$0xff]
  %v61 = vld [vmem:[%s0 + $0xd0] sm:$0xff]
  %v62 = vld [vmem:[%s0 + $0xd8] sm:$0xff]
  %v63 = vld [vmem:[%s0 + $0xe0] sm:$0xff]
  %v64 = vld [vmem:[%s0 + $0xe8] sm:$0xff]
  %v65 = vld [vmem:[%s0 + $0xf0] sm:$0xff]
  %v66 = vld [vmem:[%s0 + $0xf8] sm:$0xff]
  %v67 = vld [vmem:[%s0 + $0x100] sm:$0xff]
  %v68 = vld [vmem:[%s0 + $0x108] sm:$0xff]
  %v69 = vld [vmem:[%s0 + $0x110] sm:$0xff]
  %v70 = vld [vmem:[%s0 + $0x118] sm:$0xff]
  %v71 = vld [vmem:[%s0 + $0x120] sm:$0xff]
  %v72 = vld [vmem:[%s0 + $0x128] sm:$0xff]
  %v73 = vld [vmem:[%s0 + $0x130] sm:$0xff]
  %v74 = vld [vmem:[%s0 + $0x138] sm:$0xff]
  %v75 = vld [vmem:[%s0 + $0x140] sm:$0xff]
  %v76 = vld [vmem:[%s0 + $0x148] sm:$0xff]
  %v77 = vld [vmem:[%s0 + $0x150] sm:$0xff]
  %v78 = vld [vmem:[%s0 + $0x158] sm:$0xff]
  %v79 = vld [vmem:[%s0 + $0x160] sm:$0xff]
  %v80 = vld [vmem:[%s0 + $0x168] sm:$0xff]
  %v81 = vld [vmem:[%s0 + $0x170] sm:$0xff]
  %v82 = vld [vmem:[%s0 + $0x178] sm:$0xff]
  %v83 = vld [vmem:[%s0 + $0x180] sm:$0xff]
  %v84 = vld [vmem:[%s0 + $0x188] sm:$0xff]
  %v85 = vld [vmem:[%s0 + $0x190] sm:$0xff]
  %v86 = vld [vmem:[%s0 + $0x198] sm:$0xff]
  %v87 = vld [vmem:[%s0 + $0x1a0] sm:$0xff]
  %v88 = vld [vmem:[%s0 + $0x1a8] sm:$0xff]
  %v89 = vld [vmem:[%s0 + $0x1b0] sm:$0xff]
  %v90 = vld [vmem:[%s0 + $0x1b8] sm:$0xff]
  %v91 = vld [vmem:[%s0 + $0x1c0] sm:$0xff]
  %v92 = vld [vmem:[%s0 + $0x1c8] sm:$0xff]
  %v93 = vld [vmem:[%s0 + $0x1d0] sm:$0xff]
  %v94 = vld [vmem:[%s0 + $0x1d8] sm:$0xff]
  %v95 = vld [vmem:[%s0 + $0x1e0] sm:$0xff]
  %v96 = vld [vmem:[%s0 + $0x1e8] sm:$0xff]
  %v97 = vld [vmem:[%s0 + $0x1f0] sm:$0xff]
  %v98 = vld [vmem:[%s0 + $0x1f8] sm:$0xff]
  %v99 = vld [vmem:[%s4] sm:$0xff]
  %v100 = vld [vmem:[%s4 + $0x8] sm:$0xff]
  %v101 = vld [vmem:[%s4 + $0x10] sm:$0xff]
  %v102 = vld [vmem:[%s4 + $0x18] sm:$0xff]
  %v103 = vld [vmem:[%s4 + $0x20] sm:$0xff]
  %v104 = vld [vmem:[%s4 + $0x28] sm:$0xff]
  %v105 = vld [vmem:[%s4 + $0x30] sm:$0xff]
  %v106 = vld [vmem:[%s4 + $0x38] sm:$0xff]
  %v107 = vld [vmem:[%s4 + $0x40] sm:$0xff]
  %v108 = vld [vmem:[%s4 + $0x48] sm:$0xff]
  %v109 = vld [vmem:[%s4 + $0x50] sm:$0xff]
  %v110 = vld [vmem:[%s4 + $0x58] sm:$0xff]
  %v111 = vld [vmem:[%s4 + $0x60] sm:$0xff]
  %v112 = vld [vmem:[%s4 + $0x68] sm:$0xff]
  %v113 = vld [vmem:[%s4 + $0x70] sm:$0xff]
  %v114 = vld [vmem:[%s4 + $0x78] sm:$0xff]
  %115 = vmatprep.subr.mxu0 0.0
  %116 = vmatpush1.msra.mxu0 %v99
  %117 = vmatprep.subr.mxu0 0.0
  %118 = vmatpush1.msra.mxu0 %v100
  %119 = vmatprep.subr.mxu0 0.0
  %120 = vmatpush1.msra.mxu0 %v101
  %121 = vmatprep.subr.mxu0 0.0
  %122 = vmatpush1.msra.mxu0 %v102
  %123 = vmatprep.subr.mxu0 0.0
  %124 = vmatpush1.msra.mxu0 %v103
  %125 = vmatprep.subr.mxu0 0.0
  %126 = vmatpush1.msra.mxu0 %v104
  %127 = vmatprep.subr.mxu0 0.0
  %128 = vmatpush1.msra.mxu0 %v105
  %129 = vmatprep.subr.mxu0 0.0
  %130 = vmatpush1.msra.mxu0 %v106
  %131 = vmatprep.subr.mxu0 0.0
  %132 = vmatpush1.msra.mxu0 %v107
  %133 = vmatprep.subr.mxu0 0.0
  %134 = vmatpush1.msra.mxu0 %v108
  %135 = vmatprep.subr.mxu0 0.0
  %136 = vmatpush1.msra.mxu0 %v109
  %137 = vmatprep.subr.mxu0 0.0
  %138 = vmatpush1.msra.mxu0 %v110
  %139 = vmatprep.subr.mxu0 0.0
  %140 = vmatpush1.msra.mxu0 %v111
  %141 = vmatprep.subr.mxu0 0.0
  %142 = vmatpush1.msra.mxu0 %v112
  %143 = vmatprep.subr.mxu0 0.0
  %144 = vmatpush1.msra.mxu0 %v113
  %145 = vmatprep.subr.mxu0 0.0
  %146 = vmatpush1.msra.mxu0 %v114
  %147 = vmatprep.subr.mxu0 0.0
  %148 = vmatpush1.msra.mxu0 0.0
  %149 = vmatprep.subr.mxu0 0.0
  %150 = vmatpush1.msra.mxu0 0.0
  %151 = vmatprep.subr.mxu0 0.0
  %152 = vmatpush1.msra.mxu0 0.0
  %153 = vmatprep.subr.mxu0 0.0
  %154 = vmatpush1.msra.mxu0 0.0
  %155 = vmatprep.subr.mxu0 0.0
  %156 = vmatpush1.msra.mxu0 0.0
  %157 = vmatprep.subr.mxu0 0.0
  %158 = vmatpush1.msra.mxu0 0.0
  %159 = vmatprep.subr.mxu0 0.0
  %160 = vmatpush1.msra.mxu0 0.0
  %161 = vmatprep.subr.mxu0 0.0
  %162 = vmatpush1.msra.mxu0 0.0
  %163 = vmatprep.subr.mxu0 0.0
  %164 = vmatpush1.msra.mxu0 0.0
  %165 = vmatprep.subr.mxu0 0.0
  %166 = vmatpush1.msra.mxu0 0.0
  %167 = vmatprep.subr.mxu0 0.0
  %168 = vmatpush1.msra.mxu0 0.0
  %169 = vmatprep.subr.mxu0 0.0
  %170 = vmatpush1.msra.mxu0 0.0
  %171 = vmatprep.subr.mxu0 0.0
  %172 = vmatpush1.msra.mxu0 0.0
  %173 = vmatprep.subr.mxu0 0.0
  %174 = vmatpush1.msra.mxu0 0.0
  %175 = vmatprep.subr.mxu0 0.0
  %176 = vmatpush1.msra.mxu0 0.0
  %177 = vmatprep.subr.mxu0 0.0
  %178 = vmatpush1.msra.mxu0 0.0
  %179 = vmatprep.mubr.f32.mxu0 0.0
  %180 = vmatmul.mubr.f32.gmra.mrb[0].mxu0 %v35
  %v181 = vpop.f32.mrb[0].mxu0
  %v182 = vadd.f32 0.0, %v181
  %v183 = vpop.f32.mrb[0].mxu0
  %184 = vmatprep.mubr.f32.mxu0 0.0
  %185 = vmatmul.mubr.f32.gmra.mrb[0].mxu0 %v36
  %v186 = vpop.f32.mrb[0].mxu0
  %v187 = vadd.f32 0.0, %v186
  %v188 = vpop.f32.mrb[0].mxu0
  %189 = vmatprep.mubr.f32.mxu0 0.0
  %190 = vmatmul.mubr.f32.gmra.mrb[0].mxu0 %v37
  %v191 = vpop.f32.mrb[0].mxu0
  %v192 = vadd.f32 0.0, %v191
  %v193 = vpop.f32.mrb[0].mxu0
  %194 = vmatprep.mubr.f32.mxu0 0.0
  %195 = vmatmul.mubr.f32.gmra.mrb[0].mxu0 %v38
  %v196 = vpop.f32.mrb[0].mxu0
  %v197 = vadd.f32 0.0, %v196
  %v198 = vpop.f32.mrb[0].mxu0
  %199 = vmatprep.mubr.f32.mxu0 0.0
  %200 = vmatmul.mubr.f32.gmra.mrb[0].mxu0 %v39
  %v201 = vpop.f32.mrb[0].mxu0
  %v202 = vadd.f32 0.0, %v201
  %v203 = vpop.f32.mrb[0].mxu0
  %204 = vmatprep.mubr.f32.mxu0 0.0
  %205 = vmatmul.mubr.f32.gmra.mrb[0].mxu0 %v40
  %v206 = vpop.f32.mrb[0].mxu0
  %v207 = vadd.f32 0.0, %v206
  %v208 = vpop.f32.mrb[0].mxu0
  %209 = vmatprep.mubr.f32.mxu0 0.0
  %210 = vmatmul.mubr.f32.gmra.mrb[0].mxu0 %v41
  %v211 = vpop.f32.mrb[0].mxu0
  %v212 = vadd.f32 0.0, %v211
  %v213 = vpop.f32.mrb[0].mxu0
  %214 = vmatprep.mubr.f32.mxu0 0.0
  %215 = vmatmul.mubr.f32.gmra.mrb[0].mxu0 %v42
  %v216 = vpop.f32.mrb[0].mxu0
  %v217 = vadd.f32 0.0, %v216
  %v218 = vpop.f32.mrb[0].mxu0
  %219 = vmatprep.mubr.f32.mxu0 0.0
  %220 = vmatmul.mubr.f32.gmra.mrb[0].mxu0 %v43
  %v221 = vpop.f32.mrb[0].mxu0
  %v222 = vadd.f32 0.0, %v221
  %v223 = vpop.f32.mrb[0].mxu0
  %224 = vmatprep.mubr.f32.mxu0 0.0
  %225 = vmatmul.mubr.f32.gmra.mrb[0].mxu0 %v44
  %v226 = vpop.f32.mrb[0].mxu0
  %v227 = vadd.f32 0.0, %v226
  %v228 = vpop.f32.mrb[0].mxu0
  %229 = vmatprep.mubr.f32.mxu0 0.0
  %230 = vmatmul.mubr.f32.gmra.mrb[0].mxu0 %v45
  %v231 = vpop.f32.mrb[0].mxu0
  %v232 = vadd.f32 0.0, %v231
  %v233 = vpop.f32.mrb[0].mxu0
  %234 = vmatprep.mubr.f32.mxu0 0.0
  %235 = vmatmul.mubr.f32.gmra.mrb[0].mxu0 %v46
  %v236 = vpop.f32.mrb[0].mxu0
  %v237 = vadd.f32 0.0, %v236
  %v238 = vpop.f32.mrb[0].mxu0
  %239 = vmatprep.mubr.f32.mxu0 0.0
  %240 = vmatmul.mubr.f32.gmra.mrb[0].mxu0 %v47
  %v241 = vpop.f32.mrb[0].mxu0
  %v242 = vadd.f32 0.0, %v241
  %v243 = vpop.f32.mrb[0].mxu0
  %244 = vmatprep.mubr.f32.mxu0 0.0
  %245 = vmatmul.mubr.f32.gmra.mrb[0].mxu0 %v48
  %v246 = vpop.f32.mrb[0].mxu0
  %v247 = vadd.f32 0.0, %v246
  %v248 = vpop.f32.mrb[0].mxu0
  %249 = vmatprep.mubr.f32.mxu0 0.0
  %250 = vmatmul.mubr.f32.gmra.mrb[0].mxu0 %v49
  %v251 = vpop.f32.mrb[0].mxu0
  %v252 = vadd.f32 0.0, %v251
  %v253 = vpop.f32.mrb[0].mxu0
  %254 = vmatprep.mubr.f32.mxu0 0.0
  %255 = vmatmul.mubr.f32.gmra.mrb[0].mxu0 %v50
  %v256 = vpop.f32.mrb[0].mxu0
  %v257 = vadd.f32 0.0, %v256
  %v258 = vpop.f32.mrb[0].mxu0
  %259 = vmatprep.mubr.f32.mxu0 0.0
  %260 = vmatmul.mubr.f32.gmra.mrb[0].mxu0 %v51
  %v261 = vpop.f32.mrb[0].mxu0
  %v262 = vadd.f32 0.0, %v261
  %v263 = vpop.f32.mrb[0].mxu0
  %264 = vmatprep.mubr.f32.mxu0 0.0
  %265 = vmatmul.mubr.f32.gmra.mrb[0].mxu0 %v52
  %v266 = vpop.f32.mrb[0].mxu0
  %v267 = vadd.f32 0.0, %v266
  %v268 = vpop.f32.mrb[0].mxu0
  %269 = vmatprep.mubr.f32.mxu0 0.0
  %270 = vmatmul.mubr.f32.gmra.mrb[0].mxu0 %v53
  %v271 = vpop.f32.mrb[0].mxu0
  %v272 = vadd.f32 0.0, %v271
  %v273 = vpop.f32.mrb[0].mxu0
  %274 = vmatprep.mubr.f32.mxu0 0.0
  %275 = vmatmul.mubr.f32.gmra.mrb[0].mxu0 %v54
  %v276 = vpop.f32.mrb[0].mxu0
  %v277 = vadd.f32 0.0, %v276
  %v278 = vpop.f32.mrb[0].mxu0
  %279 = vmatprep.mubr.f32.mxu0 0.0
  %280 = vmatmul.mubr.f32.gmra.mrb[0].mxu0 %v55
  %v281 = vpop.f32.mrb[0].mxu0
  %v282 = vadd.f32 0.0, %v281
  %v283 = vpop.f32.mrb[0].mxu0
  %284 = vmatprep.mubr.f32.mxu0 0.0
  %285 = vmatmul.mubr.f32.gmra.mrb[0].mxu0 %v56
  %v286 = vpop.f32.mrb[0].mxu0
  %v287 = vadd.f32 0.0, %v286
  %v288 = vpop.f32.mrb[0].mxu0
  %289 = vmatprep.mubr.f32.mxu0 0.0
  %290 = vmatmul.mubr.f32.gmra.mrb[0].mxu0 %v57
  %v291 = vpop.f32.mrb[0].mxu0
  %v292 = vadd.f32 0.0, %v291
  %v293 = vpop.f32.mrb[0].mxu0
  %294 = vmatprep.mubr.f32.mxu0 0.0
  %295 = vmatmul.mubr.f32.gmra.mrb[0].mxu0 %v58
  %v296 = vpop.f32.mrb[0].mxu0
  %v297 = vadd.f32 0.0, %v296
  %v298 = vpop.f32.mrb[0].mxu0
  %299 = vmatprep.mubr.f32.mxu0 0.0
  %300 = vmatmul.mubr.f32.gmra.mrb[0].mxu0 %v59
  %v301 = vpop.f32.mrb[0].mxu0
  %v302 = vadd.f32 0.0, %v301
  %v303 = vpop.f32.mrb[0].mxu0
  %304 = vmatprep.mubr.f32.mxu0 0.0
  %305 = vmatmul.mubr.f32.gmra.mrb[0].mxu0 %v60
  %v306 = vpop.f32.mrb[0].mxu0
  %v307 = vadd.f32 0.0, %v306
  %v308 = vpop.f32.mrb[0].mxu0
  %309 = vmatprep.mubr.f32.mxu0 0.0
  %310 = vmatmul.mubr.f32.gmra.mrb[0].mxu0 %v61
  %v311 = vpop.f32.mrb[0].mxu0
  %v312 = vadd.f32 0.0, %v311
  %v313 = vpop.f32.mrb[0].mxu0
  %314 = vmatprep.mubr.f32.mxu0 0.0
  %315 = vmatmul.mubr.f32.gmra.mrb[0].mxu0 %v62
  %v316 = vpop.f32.mrb[0].mxu0
  %v317 = vadd.f32 0.0, %v316
  %v318 = vpop.f32.mrb[0].mxu0
  %319 = vmatprep.mubr.f32.mxu0 0.0
  %320 = vmatmul.mubr.f32.gmra.mrb[0].mxu0 %v63
  %v321 = vpop.f32.mrb[0].mxu0
  %v322 = vadd.f32 0.0, %v321
  %v323 = vpop.f32.mrb[0].mxu0
  %324 = vmatprep.mubr.f32.mxu0 0.0
  %325 = vmatmul.mubr.f32.gmra.mrb[0].mxu0 %v64
  %v326 = vpop.f32.mrb[0].mxu0
  %v327 = vadd.f32 0.0, %v326
  %v328 = vpop.f32.mrb[0].mxu0
  %329 = vmatprep.mubr.f32.mxu0 0.0
  %330 = vmatmul.mubr.f32.gmra.mrb[0].mxu0 %v65
  %v331 = vpop.f32.mrb[0].mxu0
  %v332 = vadd.f32 0.0, %v331
  %v333 = vpop.f32.mrb[0].mxu0
  %334 = vmatprep.mubr.f32.mxu0 0.0
  %335 = vmatmul.mubr.f32.gmra.mrb[0].mxu0 %v66
  %v336 = vpop.f32.mrb[0].mxu0
  %v337 = vadd.f32 0.0, %v336
  %v338 = vpop.f32.mrb[0].mxu0
  %339 = vmatprep.mubr.f32.mxu0 0.0
  %340 = vmatmul.mubr.f32.gmra.mrb[0].mxu0 %v67
  %v341 = vpop.f32.mrb[0].mxu0
  %v342 = vadd.f32 0.0, %v341
  %v343 = vpop.f32.mrb[0].mxu0
  %344 = vmatprep.mubr.f32.mxu0 0.0
  %345 = vmatmul.mubr.f32.gmra.mrb[0].mxu0 %v68
  %v346 = vpop.f32.mrb[0].mxu0
  %v347 = vadd.f32 0.0, %v346
  %v348 = vpop.f32.mrb[0].mxu0
  %349 = vmatprep.mubr.f32.mxu0 0.0
  %350 = vmatmul.mubr.f32.gmra.mrb[0].mxu0 %v69
  %v351 = vpop.f32.mrb[0].mxu0
  %v352 = vadd.f32 0.0, %v351
  %v353 = vpop.f32.mrb[0].mxu0
  %354 = vmatprep.mubr.f32.mxu0 0.0
  %355 = vmatmul.mubr.f32.gmra.mrb[0].mxu0 %v70
  %v356 = vpop.f32.mrb[0].mxu0
  %v357 = vadd.f32 0.0, %v356
  %v358 = vpop.f32.mrb[0].mxu0
  %359 = vmatprep.mubr.f32.mxu0 0.0
  %360 = vmatmul.mubr.f32.gmra.mrb[0].mxu0 %v71
  %v361 = vpop.f32.mrb[0].mxu0
  %v362 = vadd.f32 0.0, %v361
  %v363 = vpop.f32.mrb[0].mxu0
  %364 = vmatprep.mubr.f32.mxu0 0.0
  %365 = vmatmul.mubr.f32.gmra.mrb[0].mxu0 %v72
  %v366 = vpop.f32.mrb[0].mxu0
  %v367 = vadd.f32 0.0, %v366
  %v368 = vpop.f32.mrb[0].mxu0
  %369 = vmatprep.mubr.f32.mxu0 0.0
  %370 = vmatmul.mubr.f32.gmra.mrb[0].mxu0 %v73
  %v371 = vpop.f32.mrb[0].mxu0
  %v372 = vadd.f32 0.0, %v371
  %v373 = vpop.f32.mrb[0].mxu0
  %374 = vmatprep.mubr.f32.mxu0 0.0
  %375 = vmatmul.mubr.f32.gmra.mrb[0].mxu0 %v74
  %v376 = vpop.f32.mrb[0].mxu0
  %v377 = vadd.f32 0.0, %v376
  %v378 = vpop.f32.mrb[0].mxu0
  %379 = vmatprep.mubr.f32.mxu0 0.0
  %380 = vmatmul.mubr.f32.gmra.mrb[0].mxu0 %v75
  %v381 = vpop.f32.mrb[0].mxu0
  %v382 = vadd.f32 0.0, %v381
  %v383 = vpop.f32.mrb[0].mxu0
  %384 = vmatprep.mubr.f32.mxu0 0.0
  %385 = vmatmul.mubr.f32.gmra.mrb[0].mxu0 %v76
  %v386 = vpop.f32.mrb[0].mxu0
  %v387 = vadd.f32 0.0, %v386
  %v388 = vpop.f32.mrb[0].mxu0
  %389 = vmatprep.mubr.f32.mxu0 0.0
  %390 = vmatmul.mubr.f32.gmra.mrb[0].mxu0 %v77
  %v391 = vpop.f32.mrb[0].mxu0
  %v392 = vadd.f32 0.0, %v391
  %v393 = vpop.f32.mrb[0].mxu0
  %394 = vmatprep.mubr.f32.mxu0 0.0
  %395 = vmatmul.mubr.f32.gmra.mrb[0].mxu0 %v78
  %v396 = vpop.f32.mrb[0].mxu0
  %v397 = vadd.f32 0.0, %v396
  %v398 = vpop.f32.mrb[0].mxu0
  %399 = vmatprep.mubr.f32.mxu0 0.0
  %400 = vmatmul.mubr.f32.gmra.mrb[0].mxu0 %v79
  %v401 = vpop.f32.mrb[0].mxu0
  %v402 = vadd.f32 0.0, %v401
  %v403 = vpop.f32.mrb[0].mxu0
  %404 = vmatprep.mubr.f32.mxu0 0.0
  %405 = vmatmul.mubr.f32.gmra.mrb[0].mxu0 %v80
  %v406 = vpop.f32.mrb[0].mxu0
  %v407 = vadd.f32 0.0, %v406
  %v408 = vpop.f32.mrb[0].mxu0
  %409 = vmatprep.mubr.f32.mxu0 0.0
  %410 = vmatmul.mubr.f32.gmra.mrb[0].mxu0 %v81
  %v411 = vpop.f32.mrb[0].mxu0
  %v412 = vadd.f32 0.0, %v411
  %v413 = vpop.f32.mrb[0].mxu0
  %414 = vmatprep.mubr.f32.mxu0 0.0
  %415 = vmatmul.mubr.f32.gmra.mrb[0].mxu0 %v82
  %v416 = vpop.f32.mrb[0].mxu0
  %v417 = vadd.f32 0.0, %v416
  %v418 = vpop.f32.mrb[0].mxu0
  %419 = vmatprep.mubr.f32.mxu0 0.0
  %420 = vmatmul.mubr.f32.gmra.mrb[0].mxu0 %v83
  %v421 = vpop.f32.mrb[0].mxu0
  %v422 = vadd.f32 0.0, %v421
  %v423 = vpop.f32.mrb[0].mxu0
  %424 = vmatprep.mubr.f32.mxu0 0.0
  %425 = vmatmul.mubr.f32.gmra.mrb[0].mxu0 %v84
  %v426 = vpop.f32.mrb[0].mxu0
  %v427 = vadd.f32 0.0, %v426
  %v428 = vpop.f32.mrb[0].mxu0
  %429 = vmatprep.mubr.f32.mxu0 0.0
  %430 = vmatmul.mubr.f32.gmra.mrb[0].mxu0 %v85
  %v431 = vpop.f32.mrb[0].mxu0
  %v432 = vadd.f32 0.0, %v431
  %v433 = vpop.f32.mrb[0].mxu0
  %434 = vmatprep.mubr.f32.mxu0 0.0
  %435 = vmatmul.mubr.f32.gmra.mrb[0].mxu0 %v86
  %v436 = vpop.f32.mrb[0].mxu0
  %v437 = vadd.f32 0.0, %v436
  %v438 = vpop.f32.mrb[0].mxu0
  %439 = vmatprep.mubr.f32.mxu0 0.0
  %440 = vmatmul.mubr.f32.gmra.mrb[0].mxu0 %v87
  %v441 = vpop.f32.mrb[0].mxu0
  %v442 = vadd.f32 0.0, %v441
  %v443 = vpop.f32.mrb[0].mxu0
  %444 = vmatprep.mubr.f32.mxu0 0.0
  %445 = vmatmul.mubr.f32.gmra.mrb[0].mxu0 %v88
  %v446 = vpop.f32.mrb[0].mxu0
  %v447 = vadd.f32 0.0, %v446
  %v448 = vpop.f32.mrb[0].mxu0
  %449 = vmatprep.mubr.f32.mxu0 0.0
  %450 = vmatmul.mubr.f32.gmra.mrb[0].mxu0 %v89
  %v451 = vpop.f32.mrb[0].mxu0
  %v452 = vadd.f32 0.0, %v451
  %v453 = vpop.f32.mrb[0].mxu0
  %454 = vmatprep.mubr.f32.mxu0 0.0
  %455 = vmatmul.mubr.f32.gmra.mrb[0].mxu0 %v90
  %v456 = vpop.f32.mrb[0].mxu0
  %v457 = vadd.f32 0.0, %v456
  %v458 = vpop.f32.mrb[0].mxu0
  %459 = vmatprep.mubr.f32.mxu0 0.0
  %460 = vmatmul.mubr.f32.gmra.mrb[0].mxu0 %v91
  %v461 = vpop.f32.mrb[0].mxu0
  %v462 = vadd.f32 0.0, %v461
  %v463 = vpop.f32.mrb[0].mxu0
  %464 = vmatprep.mubr.f32.mxu0 0.0
  %465 = vmatmul.mubr.f32.gmra.mrb[0].mxu0 %v92
  %v466 = vpop.f32.mrb[0].mxu0
  %v467 = vadd.f32 0.0, %v466
  %v468 = vpop.f32.mrb[0].mxu0
  %469 = vmatprep.mubr.f32.mxu0 0.0
  %470 = vmatmul.mubr.f32.gmra.mrb[0].mxu0 %v93
  %v471 = vpop.f32.mrb[0].mxu0
  %v472 = vadd.f32 0.0, %v471
  %v473 = vpop.f32.mrb[0].mxu0
  %474 = vmatprep.mubr.f32.mxu0 0.0
  %475 = vmatmul.mubr.f32.gmra.mrb[0].mxu0 %v94
  %v476 = vpop.f32.mrb[0].mxu0
  %v477 = vadd.f32 0.0, %v476
  %v478 = vpop.f32.mrb[0].mxu0
  %479 = vmatprep.mubr.f32.mxu0 0.0
  %480 = vmatmul.mubr.f32.gmra.mrb[0].mxu0 %v95
  %v481 = vpop.f32.mrb[0].mxu0
  %v482 = vadd.f32 0.0, %v481
  %v483 = vpop.f32.mrb[0].mxu0
  %484 = vmatprep.mubr.f32.mxu0 0.0
  %485 = vmatmul.mubr.f32.gmra.mrb[0].mxu0 %v96
  %v486 = vpop.f32.mrb[0].mxu0
  %v487 = vadd.f32 0.0, %v486
  %v488 = vpop.f32.mrb[0].mxu0
  %489 = vmatprep.mubr.f32.mxu0 0.0
  %490 = vmatmul.mubr.f32.gmra.mrb[0].mxu0 %v97
  %v491 = vpop.f32.mrb[0].mxu0
  %v492 = vadd.f32 0.0, %v491
  %v493 = vpop.f32.mrb[0].mxu0
  %494 = vmatprep.mubr.f32.mxu0 0.0
  %495 = vmatmul.mubr.f32.gmra.mrb[0].mxu0 %v98
  %v496 = vpop.f32.mrb[0].mxu0
  %v497 = vadd.f32 0.0, %v496
  %v498 = vpop.f32.mrb[0].mxu0
  %499 = vdwg.mxu0
  %v500 = vadd.f32 %v182, %v187
  %v501 = vadd.f32 %v500, %v192
  %v502 = vadd.f32 %v501, %v197
  %v503 = vadd.f32 %v502, %v202
  %v504 = vadd.f32 %v503, %v207
  %v505 = vadd.f32 %v504, %v212
  %v506 = vadd.f32 %v505, %v217
  %v507 = vadd.f32 %v506, %v222
  %v508 = vadd.f32 %v507, %v227
  %v509 = vadd.f32 %v508, %v232
  %v510 = vadd.f32 %v509, %v237
  %v511 = vadd.f32 %v510, %v242
  %v512 = vadd.f32 %v511, %v247
  %v513 = vadd.f32 %v512, %v252
  %v514 = vadd.f32 %v513, %v257
  %v515 = vadd.f32 %v514, %v262
  %v516 = vadd.f32 %v515, %v267
  %v517 = vadd.f32 %v516, %v272
  %v518 = vadd.f32 %v517, %v277
  %v519 = vadd.f32 %v518, %v282
  %v520 = vadd.f32 %v519, %v287
  %v521 = vadd.f32 %v520, %v292
  %v522 = vadd.f32 %v521, %v297
  %v523 = vadd.f32 %v522, %v302
  %v524 = vadd.f32 %v523, %v307
  %v525 = vadd.f32 %v524, %v312
  %v526 = vadd.f32 %v525, %v317
  %v527 = vadd.f32 %v526, %v322
  %v528 = vadd.f32 %v527, %v327
  %v529 = vadd.f32 %v528, %v332
  %v530 = vadd.f32 %v529, %v337
  %v531 = vadd.f32 %v530, %v342
  %v532 = vadd.f32 %v531, %v347
  %v533 = vadd.f32 %v532, %v352
  %v534 = vadd.f32 %v533, %v357
  %v535 = vadd.f32 %v534, %v362
  %v536 = vadd.f32 %v535, %v367
  %v537 = vadd.f32 %v536, %v372
  %v538 = vadd.f32 %v537, %v377
  %v539 = vadd.f32 %v538, %v382
  %v540 = vadd.f32 %v539, %v387
  %v541 = vadd.f32 %v540, %v392
  %v542 = vadd.f32 %v541, %v397
  %v543 = vadd.f32 %v542, %v402
  %v544 = vadd.f32 %v543, %v407
  %v545 = vadd.f32 %v544, %v412
  %v546 = vadd.f32 %v545, %v417
  %v547 = vadd.f32 %v546, %v422
  %v548 = vadd.f32 %v547, %v427
  %v549 = vadd.f32 %v548, %v432
  %v550 = vadd.f32 %v549, %v437
  %v551 = vadd.f32 %v550, %v442
  %v552 = vadd.f32 %v551, %v447
  %v553 = vadd.f32 %v552, %v452
  %v554 = vadd.f32 %v553, %v457
  %v555 = vadd.f32 %v554, %v462
  %v556 = vadd.f32 %v555, %v467
  %v557 = vadd.f32 %v556, %v472
  %v558 = vadd.f32 %v557, %v477
  %v559 = vadd.f32 %v558, %v482
  %v560 = vadd.f32 %v559, %v487
  %v561 = vadd.f32 %v560, %v492
  %v562 = vadd.f32 %v561, %v497
  %v563 = vrot.slane %v562, 4
  %v564 = vadd.f32 %v562, %v563
  %v565 = vrot.slane %v564, 2
  %v566 = vadd.f32 %v564, %v565
  %v567 = vrot.slane %v566, 1
  %v568 = vadd.f32 %v566, %v567
  %v569 = vmul.f32 %v182, %v182
  %v570 = vmul.f32 %v187, %v187
  %v571 = vmul.f32 %v192, %v192
  %v572 = vmul.f32 %v197, %v197
  %v573 = vmul.f32 %v202, %v202
  %v574 = vmul.f32 %v207, %v207
  %v575 = vmul.f32 %v212, %v212
  %v576 = vmul.f32 %v217, %v217
  %v577 = vmul.f32 %v222, %v222
  %v578 = vmul.f32 %v227, %v227
  %v579 = vmul.f32 %v232, %v232
  %v580 = vmul.f32 %v237, %v237
  %v581 = vmul.f32 %v242, %v242
  %v582 = vmul.f32 %v247, %v247
  %v583 = vmul.f32 %v252, %v252
  %v584 = vmul.f32 %v257, %v257
  %v585 = vmul.f32 %v262, %v262
  %v586 = vmul.f32 %v267, %v267
  %v587 = vmul.f32 %v272, %v272
  %v588 = vmul.f32 %v277, %v277
  %v589 = vmul.f32 %v282, %v282
  %v590 = vmul.f32 %v287, %v287
  %v591 = vmul.f32 %v292, %v292
  %v592 = vmul.f32 %v297, %v297
  %v593 = vmul.f32 %v302, %v302
  %v594 = vmul.f32 %v307, %v307
  %v595 = vmul.f32 %v312, %v312
  %v596 = vmul.f32 %v317, %v317
  %v597 = vmul.f32 %v322, %v322
  %v598 = vmul.f32 %v327, %v327
  %v599 = vmul.f32 %v332, %v332
  %v600 = vmul.f32 %v337, %v337
  %v601 = vmul.f32 %v342, %v342
  %v602 = vmul.f32 %v347, %v347
  %v603 = vmul.f32 %v352, %v352
  %v604 = vmul.f32 %v357, %v357
  %v605 = vmul.f32 %v362, %v362
  %v606 = vmul.f32 %v367, %v367
  %v607 = vmul.f32 %v372, %v372
  %v608 = vmul.f32 %v377, %v377
  %v609 = vmul.f32 %v382, %v382
  %v610 = vmul.f32 %v387, %v387
  %v611 = vmul.f32 %v392, %v392
  %v612 = vmul.f32 %v397, %v397
  %v613 = vmul.f32 %v402, %v402
  %v614 = vmul.f32 %v407, %v407
  %v615 = vmul.f32 %v412, %v412
  %v616 = vmul.f32 %v417, %v417
  %v617 = vmul.f32 %v422, %v422
  %v618 = vmul.f32 %v427, %v427
  %v619 = vmul.f32 %v432, %v432
  %v620 = vmul.f32 %v437, %v437
  %v621 = vmul.f32 %v442, %v442
  %v622 = vmul.f32 %v447, %v447
  %v623 = vmul.f32 %v452, %v452
  %v624 = vmul.f32 %v457, %v457
  %v625 = vmul.f32 %v462, %v462
  %v626 = vmul.f32 %v467, %v467
  %v627 = vmul.f32 %v472, %v472
  %v628 = vmul.f32 %v477, %v477
  %v629 = vmul.f32 %v482, %v482
  %v630 = vmul.f32 %v487, %v487
  %v631 = vmul.f32 %v492, %v492
  %v632 = vmul.f32 %v497, %v497
  %v633 = vadd.f32 %v569, %v570
  %v634 = vadd.f32 %v633, %v571
  %v635 = vadd.f32 %v634, %v572
  %v636 = vadd.f32 %v635, %v573
  %v637 = vadd.f32 %v636, %v574
  %v638 = vadd.f32 %v637, %v575
  %v639 = vadd.f32 %v638, %v576
  %v640 = vadd.f32 %v639, %v577
  %v641 = vadd.f32 %v640, %v578
  %v642 = vadd.f32 %v641, %v579
  %v643 = vadd.f32 %v642, %v580
  %v644 = vadd.f32 %v643, %v581
  %v645 = vadd.f32 %v644, %v582
  %v646 = vadd.f32 %v645, %v583
  %v647 = vadd.f32 %v646, %v584
  %v648 = vadd.f32 %v647, %v585
  %v649 = vadd.f32 %v648, %v586
  %v650 = vadd.f32 %v649, %v587
  %v651 = vadd.f32 %v650, %v588
  %v652 = vadd.f32 %v651, %v589
  %v653 = vadd.f32 %v652, %v590
  %v654 = vadd.f32 %v653, %v591
  %v655 = vadd.f32 %v654, %v592
  %v656 = vadd.f32 %v655, %v593
  %v657 = vadd.f32 %v656, %v594
  %v658 = vadd.f32 %v657, %v595
  %v659 = vadd.f32 %v658, %v596
  %v660 = vadd.f32 %v659, %v597
  %v661 = vadd.f32 %v660, %v598
  %v662 = vadd.f32 %v661, %v599
  %v663 = vadd.f32 %v662, %v600
  %v664 = vadd.f32 %v663, %v601
  %v665 = vadd.f32 %v664, %v602
  %v666 = vadd.f32 %v665, %v603
  %v667 = vadd.f32 %v666, %v604
  %v668 = vadd.f32 %v667, %v605
  %v669 = vadd.f32 %v668, %v606
  %v670 = vadd.f32 %v669, %v607
  %v671 = vadd.f32 %v670, %v608
  %v672 = vadd.f32 %v671, %v609
  %v673 = vadd.f32 %v672, %v610
  %v674 = vadd.f32 %v673, %v611
  %v675 = vadd.f32 %v674, %v612
  %v676 = vadd.f32 %v675, %v613
  %v677 = vadd.f32 %v676, %v614
  %v678 = vadd.f32 %v677, %v615
  %v679 = vadd.f32 %v678, %v616
  %v680 = vadd.f32 %v679, %v617
  %v681 = vadd.f32 %v680, %v618
  %v682 = vadd.f32 %v681, %v619
  %v683 = vadd.f32 %v682, %v620
  %v684 = vadd.f32 %v683, %v621
  %v685 = vadd.f32 %v684, %v622
  %v686 = vadd.f32 %v685, %v623
  %v687 = vadd.f32 %v686, %v624
  %v688 = vadd.f32 %v687, %v625
  %v689 = vadd.f32 %v688, %v626
  %v690 = vadd.f32 %v689, %v627
  %v691 = vadd.f32 %v690, %v628
  %v692 = vadd.f32 %v691, %v629
  %v693 = vadd.f32 %v692, %v630
  %v694 = vadd.f32 %v693, %v631
  %v695 = vadd.f32 %v694, %v632
  %v696 = vrot.slane %v695, 4
  %v697 = vadd.f32 %v695, %v696
  %v698 = vrot.slane %v697, 2
  %v699 = vadd.f32 %v697, %v698
  %v700 = vrot.slane %v699, 1
  %v701 = vadd.f32 %v699, %v700
  %v702 = vmul.f32 %v568, 0.001953125
  %v703 = vmul.f32 %v701, 0.001953125
  %v704 = vmul.f32 %v702, %v702
  %v705 = vsub.f32 %v703, %v704
  %v706 = vld [vmem:[%s6] sm:$0x1]
  %v707 = vadd.f32 %v705, 1e-05
  %v708 = vrsqrt.pop %v707
  %v709 = vmul.f32 %v706, %v708
  %v710 = vld [vmem:[%s7] sm:$0x1]
  %v711 = vmul.f32 %v702, %v709
  %v712 = vsub.f32 %v710, %v711
  %v714 = vlaneseq
  %v715 = vshrl.u32 %v714, 7
  %v716 = vsub.s32 0, %v715
  %v717 = vrot.slane %v709, %v716
  %v719 = vmul.f32 %v182, %v717
  %v720 = vmul.f32 %v187, %v717
  %v721 = vmul.f32 %v192, %v717
  %v722 = vmul.f32 %v197, %v717
  %v723 = vmul.f32 %v202, %v717
  %v724 = vmul.f32 %v207, %v717
  %v725 = vmul.f32 %v212, %v717
  %v726 = vmul.f32 %v217, %v717
  %v727 = vmul.f32 %v222, %v717
  %v728 = vmul.f32 %v227, %v717
  %v729 = vmul.f32 %v232, %v717
  %v730 = vmul.f32 %v237, %v717
  %v731 = vmul.f32 %v242, %v717
  %v732 = vmul.f32 %v247, %v717
  %v733 = vmul.f32 %v252, %v717
  %v734 = vmul.f32 %v257, %v717
  %v735 = vmul.f32 %v262, %v717
  %v736 = vmul.f32 %v267, %v717
  %v737 = vmul.f32 %v272, %v717
  %v738 = vmul.f32 %v277, %v717
  %v739 = vmul.f32 %v282, %v717
  %v740 = vmul.f32 %v287, %v717
  %v741 = vmul.f32 %v292, %v717
  %v742 = vmul.f32 %v297, %v717
  %v743 = vmul.f32 %v302, %v717
  %v744 = vmul.f32 %v307, %v717
  %v745 = vmul.f32 %v312, %v717
  %v746 = vmul.f32 %v317, %v717
  %v747 = vmul.f32 %v322, %v717
  %v748 = vmul.f32 %v327, %v717
  %v749 = vmul.f32 %v332, %v717
  %v750 = vmul.f32 %v337, %v717
  %v751 = vmul.f32 %v342, %v717
  %v752 = vmul.f32 %v347, %v717
  %v753 = vmul.f32 %v352, %v717
  %v754 = vmul.f32 %v357, %v717
  %v755 = vmul.f32 %v362, %v717
  %v756 = vmul.f32 %v367, %v717
  %v757 = vmul.f32 %v372, %v717
  %v758 = vmul.f32 %v377, %v717
  %v759 = vmul.f32 %v382, %v717
  %v760 = vmul.f32 %v387, %v717
  %v761 = vmul.f32 %v392, %v717
  %v762 = vmul.f32 %v397, %v717
  %v763 = vmul.f32 %v402, %v717
  %v764 = vmul.f32 %v407, %v717
  %v765 = vmul.f32 %v412, %v717
  %v766 = vmul.f32 %v417, %v717
  %v767 = vmul.f32 %v422, %v717
  %v768 = vmul.f32 %v427, %v717
  %v769 = vmul.f32 %v432, %v717
  %v770 = vmul.f32 %v437, %v717
  %v771 = vmul.f32 %v442, %v717
  %v772 = vmul.f32 %v447, %v717
  %v773 = vmul.f32 %v452, %v717
  %v774 = vmul.f32 %v457, %v717
  %v775 = vmul.f32 %v462, %v717
  %v776 = vmul.f32 %v467, %v717
  %v777 = vmul.f32 %v472, %v717
  %v778 = vmul.f32 %v477, %v717
  %v779 = vmul.f32 %v482, %v717
  %v780 = vmul.f32 %v487, %v717
  %v781 = vmul.f32 %v492, %v717
  %v782 = vmul.f32 %v497, %v717
  %v784 = vlaneseq
  %v785 = vshrl.u32 %v784, 7
  %v786 = vsub.s32 0, %v785
  %v787 = vrot.slane %v712, %v786
  %v789 = vadd.f32 %v719, %v787
  %v790 = vadd.f32 %v720, %v787
  %v791 = vadd.f32 %v721, %v787
  %v792 = vadd.f32 %v722, %v787
  %v793 = vadd.f32 %v723, %v787
  %v794 = vadd.f32 %v724, %v787
  %v795 = vadd.f32 %v725, %v787
  %v796 = vadd.f32 %v726, %v787
  %v797 = vadd.f32 %v727, %v787
  %v798 = vadd.f32 %v728, %v787
  %v799 = vadd.f32 %v729, %v787
  %v800 = vadd.f32 %v730, %v787
  %v801 = vadd.f32 %v731, %v787
  %v802 = vadd.f32 %v732, %v787
  %v803 = vadd.f32 %v733, %v787
  %v804 = vadd.f32 %v734, %v787
  %v805 = vadd.f32 %v735, %v787
  %v806 = vadd.f32 %v736, %v787
  %v807 = vadd.f32 %v737, %v787
  %v808 = vadd.f32 %v738, %v787
  %v809 = vadd.f32 %v739, %v787
  %v810 = vadd.f32 %v740, %v787
  %v811 = vadd.f32 %v741, %v787
  %v812 = vadd.f32 %v742, %v787
  %v813 = vadd.f32 %v743, %v787
  %v814 = vadd.f32 %v744, %v787
  %v815 = vadd.f32 %v745, %v787
  %v816 = vadd.f32 %v746, %v787
  %v817 = vadd.f32 %v747, %v787
  %v818 = vadd.f32 %v748, %v787
  %v819 = vadd.f32 %v749, %v787
  %v820 = vadd.f32 %v750, %v787
  %v821 = vadd.f32 %v751, %v787
  %v822 = vadd.f32 %v752, %v787
  %v823 = vadd.f32 %v753, %v787
  %v824 = vadd.f32 %v754, %v787
  %v825 = vadd.f32 %v755, %v787
  %v826 = vadd.f32 %v756, %v787
  %v827 = vadd.f32 %v757, %v787
  %v828 = vadd.f32 %v758, %v787
  %v829 = vadd.f32 %v759, %v787
  %v830 = vadd.f32 %v760, %v787
  %v831 = vadd.f32 %v761, %v787
  %v832 = vadd.f32 %v762, %v787
  %v833 = vadd.f32 %v763, %v787
  %v834 = vadd.f32 %v764, %v787
  %v835 = vadd.f32 %v765, %v787
  %v836 = vadd.f32 %v766, %v787
  %v837 = vadd.f32 %v767, %v787
  %v838 = vadd.f32 %v768, %v787
  %v839 = vadd.f32 %v769, %v787
  %v840 = vadd.f32 %v770, %v787
  %v841 = vadd.f32 %v771, %v787
  %v842 = vadd.f32 %v772, %v787
  %v843 = vadd.f32 %v773, %v787
  %v844 = vadd.f32 %v774, %v787
  %v845 = vadd.f32 %v775, %v787
  %v846 = vadd.f32 %v776, %v787
  %v847 = vadd.f32 %v777, %v787
  %v848 = vadd.f32 %v778, %v787
  %v849 = vadd.f32 %v779, %v787
  %v850 = vadd.f32 %v780, %v787
  %v851 = vadd.f32 %v781, %v787
  %v852 = vadd.f32 %v782, %v787
  %v853 = vmax.f32 %v789, 0.0
  %v854 = vmax.f32 %v790, 0.0
  %v855 = vmax.f32 %v791, 0.0
  %v856 = vmax.f32 %v792, 0.0
  %v857 = vmax.f32 %v793, 0.0
  %v858 = vmax.f32 %v794, 0.0
  %v859 = vmax.f32 %v795, 0.0
  %v860 = vmax.f32 %v796, 0.0
  %v861 = vmax.f32 %v797, 0.0
  %v862 = vmax.f32 %v798, 0.0
  %v863 = vmax.f32 %v799, 0.0
  %v864 = vmax.f32 %v800, 0.0
  %v865 = vmax.f32 %v801, 0.0
  %v866 = vmax.f32 %v802, 0.0
  %v867 = vmax.f32 %v803, 0.0
  %v868 = vmax.f32 %v804, 0.0
  %v869 = vmax.f32 %v805, 0.0
  %v870 = vmax.f32 %v806, 0.0
  %v871 = vmax.f32 %v807, 0.0
  %v872 = vmax.f32 %v808, 0.0
  %v873 = vmax.f32 %v809, 0.0
  %v874 = vmax.f32 %v810, 0.0
  %v875 = vmax.f32 %v811, 0.0
  %v876 = vmax.f32 %v812, 0.0
  %v877 = vmax.f32 %v813, 0.0
  %v878 = vmax.f32 %v814, 0.0
  %v879 = vmax.f32 %v815, 0.0
  %v880 = vmax.f32 %v816, 0.0
  %v881 = vmax.f32 %v817, 0.0
  %v882 = vmax.f32 %v818, 0.0
  %v883 = vmax.f32 %v819, 0.0
  %v884 = vmax.f32 %v820, 0.0
  %v885 = vmax.f32 %v821, 0.0
  %v886 = vmax.f32 %v822, 0.0
  %v887 = vmax.f32 %v823, 0.0
  %v888 = vmax.f32 %v824, 0.0
  %v889 = vmax.f32 %v825, 0.0
  %v890 = vmax.f32 %v826, 0.0
  %v891 = vmax.f32 %v827, 0.0
  %v892 = vmax.f32 %v828, 0.0
  %v893 = vmax.f32 %v829, 0.0
  %v894 = vmax.f32 %v830, 0.0
  %v895 = vmax.f32 %v831, 0.0
  %v896 = vmax.f32 %v832, 0.0
  %v897 = vmax.f32 %v833, 0.0
  %v898 = vmax.f32 %v834, 0.0
  %v899 = vmax.f32 %v835, 0.0
  %v900 = vmax.f32 %v836, 0.0
  %v901 = vmax.f32 %v837, 0.0
  %v902 = vmax.f32 %v838, 0.0
  %v903 = vmax.f32 %v839, 0.0
  %v904 = vmax.f32 %v840, 0.0
  %v905 = vmax.f32 %v841, 0.0
  %v906 = vmax.f32 %v842, 0.0
  %v907 = vmax.f32 %v843, 0.0
  %v908 = vmax.f32 %v844, 0.0
  %v909 = vmax.f32 %v845, 0.0
  %v910 = vmax.f32 %v846, 0.0
  %v911 = vmax.f32 %v847, 0.0
  %v912 = vmax.f32 %v848, 0.0
  %v913 = vmax.f32 %v849, 0.0
  %v914 = vmax.f32 %v850, 0.0
  %v915 = vmax.f32 %v851, 0.0
  %v916 = vmax.f32 %v852, 0.0
  %v917 = vld [vmem:[%s2] sm:$0xff]
  %v918 = vld [vmem:[%s2 + $0x8] sm:$0xff]
  %v919 = vld [vmem:[%s2 + $0x10] sm:$0xff]
  %v920 = vld [vmem:[%s2 + $0x18] sm:$0xff]
  %v921 = vld [vmem:[%s2 + $0x20] sm:$0xff]
  %v922 = vld [vmem:[%s2 + $0x28] sm:$0xff]
  %v923 = vld [vmem:[%s2 + $0x30] sm:$0xff]
  %v924 = vld [vmem:[%s2 + $0x38] sm:$0xff]
  %v925 = vld [vmem:[%s2 + $0x40] sm:$0xff]
  %v926 = vld [vmem:[%s2 + $0x48] sm:$0xff]
  %v927 = vld [vmem:[%s2 + $0x50] sm:$0xff]
  %v928 = vld [vmem:[%s2 + $0x58] sm:$0xff]
  %v929 = vld [vmem:[%s2 + $0x60] sm:$0xff]
  %v930 = vld [vmem:[%s2 + $0x68] sm:$0xff]
  %v931 = vld [vmem:[%s2 + $0x70] sm:$0xff]
  %v932 = vld [vmem:[%s2 + $0x78] sm:$0xff]
  %v933 = vld [vmem:[%s2 + $0x80] sm:$0xff]
  %v934 = vld [vmem:[%s2 + $0x88] sm:$0xff]
  %v935 = vld [vmem:[%s2 + $0x90] sm:$0xff]
  %v936 = vld [vmem:[%s2 + $0x98] sm:$0xff]
  %v937 = vld [vmem:[%s2 + $0xa0] sm:$0xff]
  %v938 = vld [vmem:[%s2 + $0xa8] sm:$0xff]
  %v939 = vld [vmem:[%s2 + $0xb0] sm:$0xff]
  %v940 = vld [vmem:[%s2 + $0xb8] sm:$0xff]
  %v941 = vld [vmem:[%s2 + $0xc0] sm:$0xff]
  %v942 = vld [vmem:[%s2 + $0xc8] sm:$0xff]
  %v943 = vld [vmem:[%s2 + $0xd0] sm:$0xff]
  %v944 = vld [vmem:[%s2 + $0xd8] sm:$0xff]
  %v945 = vld [vmem:[%s2 + $0xe0] sm:$0xff]
  %v946 = vld [vmem:[%s2 + $0xe8] sm:$0xff]
  %v947 = vld [vmem:[%s2 + $0xf0] sm:$0xff]
  %v948 = vld [vmem:[%s2 + $0xf8] sm:$0xff]
  %v949 = vld [vmem:[%s2 + $0x100] sm:$0xff]
  %v950 = vld [vmem:[%s2 + $0x108] sm:$0xff]
  %v951 = vld [vmem:[%s2 + $0x110] sm:$0xff]
  %v952 = vld [vmem:[%s2 + $0x118] sm:$0xff]
  %v953 = vld [vmem:[%s2 + $0x120] sm:$0xff]
  %v954 = vld [vmem:[%s2 + $0x128] sm:$0xff]
  %v955 = vld [vmem:[%s2 + $0x130] sm:$0xff]
  %v956 = vld [vmem:[%s2 + $0x138] sm:$0xff]
  %v957 = vld [vmem:[%s2 + $0x140] sm:$0xff]
  %v958 = vld [vmem:[%s2 + $0x148] sm:$0xff]
  %v959 = vld [vmem:[%s2 + $0x150] sm:$0xff]
  %v960 = vld [vmem:[%s2 + $0x158] sm:$0xff]
  %v961 = vld [vmem:[%s2 + $0x160] sm:$0xff]
  %v962 = vld [vmem:[%s2 + $0x168] sm:$0xff]
  %v963 = vld [vmem:[%s2 + $0x170] sm:$0xff]
  %v964 = vld [vmem:[%s2 + $0x178] sm:$0xff]
  %v965 = vld [vmem:[%s2 + $0x180] sm:$0xff]
  %v966 = vld [vmem:[%s2 + $0x188] sm:$0xff]
  %v967 = vld [vmem:[%s2 + $0x190] sm:$0xff]
  %v968 = vld [vmem:[%s2 + $0x198] sm:$0xff]
  %v969 = vld [vmem:[%s2 + $0x1a0] sm:$0xff]
  %v970 = vld [vmem:[%s2 + $0x1a8] sm:$0xff]
  %v971 = vld [vmem:[%s2 + $0x1b0] sm:$0xff]
  %v972 = vld [vmem:[%s2 + $0x1b8] sm:$0xff]
  %v973 = vld [vmem:[%s2 + $0x1c0] sm:$0xff]
  %v974 = vld [vmem:[%s2 + $0x1c8] sm:$0xff]
  %v975 = vld [vmem:[%s2 + $0x1d0] sm:$0xff]
  %v976 = vld [vmem:[%s2 + $0x1d8] sm:$0xff]
  %v977 = vld [vmem:[%s2 + $0x1e0] sm:$0xff]
  %v978 = vld [vmem:[%s2 + $0x1e8] sm:$0xff]
  %v979 = vld [vmem:[%s2 + $0x1f0] sm:$0xff]
  %v980 = vld [vmem:[%s2 + $0x1f8] sm:$0xff]
  %v981 = vld [vmem:[%s3] sm:$0xff]
  %v982 = vld [vmem:[%s3 + $0x8] sm:$0xff]
  %v983 = vld [vmem:[%s3 + $0x10] sm:$0xff]
  %v984 = vld [vmem:[%s3 + $0x18] sm:$0xff]
  %v985 = vld [vmem:[%s3 + $0x20] sm:$0xff]
  %v986 = vld [vmem:[%s3 + $0x28] sm:$0xff]
  %v987 = vld [vmem:[%s3 + $0x30] sm:$0xff]
  %v988 = vld [vmem:[%s3 + $0x38] sm:$0xff]
  %v989 = vld [vmem:[%s3 + $0x40] sm:$0xff]
  %v990 = vld [vmem:[%s3 + $0x48] sm:$0xff]
  %v991 = vld [vmem:[%s3 + $0x50] sm:$0xff]
  %v992 = vld [vmem:[%s3 + $0x58] sm:$0xff]
  %v993 = vld [vmem:[%s3 + $0x60] sm:$0xff]
  %v994 = vld [vmem:[%s3 + $0x68] sm:$0xff]
  %v995 = vld [vmem:[%s3 + $0x70] sm:$0xff]
  %v996 = vld [vmem:[%s3 + $0x78] sm:$0xff]
  %v997 = vld [vmem:[%s3 + $0x80] sm:$0xff]
  %v998 = vld [vmem:[%s3 + $0x88] sm:$0xff]
  %v999 = vld [vmem:[%s3 + $0x90] sm:$0xff]
  %v1000 = vld [vmem:[%s3 + $0x98] sm:$0xff]
  %v1001 = vld [vmem:[%s3 + $0xa0] sm:$0xff]
  %v1002 = vld [vmem:[%s3 + $0xa8] sm:$0xff]
  %v1003 = vld [vmem:[%s3 + $0xb0] sm:$0xff]
  %v1004 = vld [vmem:[%s3 + $0xb8] sm:$0xff]
  %v1005 = vld [vmem:[%s3 + $0xc0] sm:$0xff]
  %v1006 = vld [vmem:[%s3 + $0xc8] sm:$0xff]
  %v1007 = vld [vmem:[%s3 + $0xd0] sm:$0xff]
  %v1008 = vld [vmem:[%s3 + $0xd8] sm:$0xff]
  %v1009 = vld [vmem:[%s3 + $0xe0] sm:$0xff]
  %v1010 = vld [vmem:[%s3 + $0xe8] sm:$0xff]
  %v1011 = vld [vmem:[%s3 + $0xf0] sm:$0xff]
  %v1012 = vld [vmem:[%s3 + $0xf8] sm:$0xff]
  %v1013 = vld [vmem:[%s3 + $0x100] sm:$0xff]
  %v1014 = vld [vmem:[%s3 + $0x108] sm:$0xff]
  %v1015 = vld [vmem:[%s3 + $0x110] sm:$0xff]
  %v1016 = vld [vmem:[%s3 + $0x118] sm:$0xff]
  %v1017 = vld [vmem:[%s3 + $0x120] sm:$0xff]
  %v1018 = vld [vmem:[%s3 + $0x128] sm:$0xff]
  %v1019 = vld [vmem:[%s3 + $0x130] sm:$0xff]
  %v1020 = vld [vmem:[%s3 + $0x138] sm:$0xff]
  %v1021 = vld [vmem:[%s3 + $0x140] sm:$0xff]
  %v1022 = vld [vmem:[%s3 + $0x148] sm:$0xff]
  %v1023 = vld [vmem:[%s3 + $0x150] sm:$0xff]
  %v1024 = vld [vmem:[%s3 + $0x158] sm:$0xff]
  %v1025 = vld [vmem:[%s3 + $0x160] sm:$0xff]
  %v1026 = vld [vmem:[%s3 + $0x168] sm:$0xff]
  %v1027 = vld [vmem:[%s3 + $0x170] sm:$0xff]
  %v1028 = vld [vmem:[%s3 + $0x178] sm:$0xff]
  %v1029 = vld [vmem:[%s3 + $0x180] sm:$0xff]
  %v1030 = vld [vmem:[%s3 + $0x188] sm:$0xff]
  %v1031 = vld [vmem:[%s3 + $0x190] sm:$0xff]
  %v1032 = vld [vmem:[%s3 + $0x198] sm:$0xff]
  %v1033 = vld [vmem:[%s3 + $0x1a0] sm:$0xff]
  %v1034 = vld [vmem:[%s3 + $0x1a8] sm:$0xff]
  %v1035 = vld [vmem:[%s3 + $0x1b0] sm:$0xff]
  %v1036 = vld [vmem:[%s3 + $0x1b8] sm:$0xff]
  %v1037 = vld [vmem:[%s3 + $0x1c0] sm:$0xff]
  %v1038 = vld [vmem:[%s3 + $0x1c8] sm:$0xff]
  %v1039 = vld [vmem:[%s3 + $0x1d0] sm:$0xff]
  %v1040 = vld [vmem:[%s3 + $0x1d8] sm:$0xff]
  %v1041 = vld [vmem:[%s3 + $0x1e0] sm:$0xff]
  %v1042 = vld [vmem:[%s3 + $0x1e8] sm:$0xff]
  %v1043 = vld [vmem:[%s3 + $0x1f0] sm:$0xff]
  %v1044 = vld [vmem:[%s3 + $0x1f8] sm:$0xff]
  %v1045 = vrot.slane %v853, 7
  %v1046 = vrot.slane %v854, 7
  %v1047 = vrot.slane %v855, 7
  %v1048 = vrot.slane %v856, 7
  %v1049 = vrot.slane %v857, 7
  %v1050 = vrot.slane %v858, 7
  %v1051 = vrot.slane %v859, 7
  %v1052 = vrot.slane %v860, 7
  %v1053 = vrot.slane %v861, 7
  %v1054 = vrot.slane %v862, 7
  %v1055 = vrot.slane %v863, 7
  %v1056 = vrot.slane %v864, 7
  %v1057 = vrot.slane %v865, 7
  %v1058 = vrot.slane %v866, 7
  %v1059 = vrot.slane %v867, 7
  %v1060 = vrot.slane %v868, 7
  %v1061 = vrot.slane %v869, 7
  %v1062 = vrot.slane %v870, 7
  %v1063 = vrot.slane %v871, 7
  %v1064 = vrot.slane %v872, 7
  %v1065 = vrot.slane %v873, 7
  %v1066 = vrot.slane %v874, 7
  %v1067 = vrot.slane %v875, 7
  %v1068 = vrot.slane %v876, 7
  %v1069 = vrot.slane %v877, 7
  %v1070 = vrot.slane %v878, 7
  %v1071 = vrot.slane %v879, 7
  %v1072 = vrot.slane %v880, 7
  %v1073 = vrot.slane %v881, 7
  %v1074 = vrot.slane %v882, 7
  %v1075 = vrot.slane %v883, 7
  %v1076 = vrot.slane %v884, 7
  %v1077 = vrot.slane %v885, 7
  %v1078 = vrot.slane %v886, 7
  %v1079 = vrot.slane %v887, 7
  %v1080 = vrot.slane %v888, 7
  %v1081 = vrot.slane %v889, 7
  %v1082 = vrot.slane %v890, 7
  %v1083 = vrot.slane %v891, 7
  %v1084 = vrot.slane %v892, 7
  %v1085 = vrot.slane %v893, 7
  %v1086 = vrot.slane %v894, 7
  %v1087 = vrot.slane %v895, 7
  %v1088 = vrot.slane %v896, 7
  %v1089 = vrot.slane %v897, 7
  %v1090 = vrot.slane %v898, 7
  %v1091 = vrot.slane %v899, 7
  %v1092 = vrot.slane %v900, 7
  %v1093 = vrot.slane %v901, 7
  %v1094 = vrot.slane %v902, 7
  %v1095 = vrot.slane %v903, 7
  %v1096 = vrot.slane %v904, 7
  %v1097 = vrot.slane %v905, 7
  %v1098 = vrot.slane %v906, 7
  %v1099 = vrot.slane %v907, 7
  %v1100 = vrot.slane %v908, 7
  %v1101 = vrot.slane %v909, 7
  %v1102 = vrot.slane %v910, 7
  %v1103 = vrot.slane %v911, 7
  %v1104 = vrot.slane %v912, 7
  %v1105 = vrot.slane %v913, 7
  %v1106 = vrot.slane %v914, 7
  %v1107 = vrot.slane %v915, 7
  %v1108 = vrot.slane %v916, 7
  %v1109 = vlaneseq
  %v1110 = vshrl.u32 %v1109, 7
  %vm1111 = vcmp.lt.s32.totalorder %v1110, 1
  %v1112 = vsel %vm1111, %v1107, %v1108
  %v1113 = vsel %vm1111, %v1106, %v1107
  %v1114 = vsel %vm1111, %v1105, %v1106
  %v1115 = vsel %vm1111, %v1104, %v1105
  %v1116 = vsel %vm1111, %v1103, %v1104
  %v1117 = vsel %vm1111, %v1102, %v1103
  %v1118 = vsel %vm1111, %v1101, %v1102
  %v1119 = vsel %vm1111, %v1100, %v1101
  %v1120 = vsel %vm1111, %v1099, %v1100
  %v1121 = vsel %vm1111, %v1098, %v1099
  %v1122 = vsel %vm1111, %v1097, %v1098
  %v1123 = vsel %vm1111, %v1096, %v1097
  %v1124 = vsel %vm1111, %v1095, %v1096
  %v1125 = vsel %vm1111, %v1094, %v1095
  %v1126 = vsel %vm1111, %v1093, %v1094
  %v1127 = vsel %vm1111, %v1092, %v1093
  %v1128 = vsel %vm1111, %v1091, %v1092
  %v1129 = vsel %vm1111, %v1090, %v1091
  %v1130 = vsel %vm1111, %v1089, %v1090
  %v1131 = vsel %vm1111, %v1088, %v1089
  %v1132 = vsel %vm1111, %v1087, %v1088
  %v1133 = vsel %vm1111, %v1086, %v1087
  %v1134 = vsel %vm1111, %v1085, %v1086
  %v1135 = vsel %vm1111, %v1084, %v1085
  %v1136 = vsel %vm1111, %v1083, %v1084
  %v1137 = vsel %vm1111, %v1082, %v1083
  %v1138 = vsel %vm1111, %v1081, %v1082
  %v1139 = vsel %vm1111, %v1080, %v1081
  %v1140 = vsel %vm1111, %v1079, %v1080
  %v1141 = vsel %vm1111, %v1078, %v1079
  %v1142 = vsel %vm1111, %v1077, %v1078
  %v1143 = vsel %vm1111, %v1076, %v1077
  %v1144 = vsel %vm1111, %v1075, %v1076
  %v1145 = vsel %vm1111, %v1074, %v1075
  %v1146 = vsel %vm1111, %v1073, %v1074
  %v1147 = vsel %vm1111, %v1072, %v1073
  %v1148 = vsel %vm1111, %v1071, %v1072
  %v1149 = vsel %vm1111, %v1070, %v1071
  %v1150 = vsel %vm1111, %v1069, %v1070
  %v1151 = vsel %vm1111, %v1068, %v1069
  %v1152 = vsel %vm1111, %v1067, %v1068
  %v1153 = vsel %vm1111, %v1066, %v1067
  %v1154 = vsel %vm1111, %v1065, %v1066
  %v1155 = vsel %vm1111, %v1064, %v1065
  %v1156 = vsel %vm1111, %v1063, %v1064
  %v1157 = vsel %vm1111, %v1062, %v1063
  %v1158 = vsel %vm1111, %v1061, %v1062
  %v1159 = vsel %vm1111, %v1060, %v1061
  %v1160 = vsel %vm1111, %v1059, %v1060
  %v1161 = vsel %vm1111, %v1058, %v1059
  %v1162 = vsel %vm1111, %v1057, %v1058
  %v1163 = vsel %vm1111, %v1056, %v1057
  %v1164 = vsel %vm1111, %v1055, %v1056
  %v1165 = vsel %vm1111, %v1054, %v1055
  %v1166 = vsel %vm1111, %v1053, %v1054
  %v1167 = vsel %vm1111, %v1052, %v1053
  %v1168 = vsel %vm1111, %v1051, %v1052
  %v1169 = vsel %vm1111, %v1050, %v1051
  %v1170 = vsel %vm1111, %v1049, %v1050
  %v1171 = vsel %vm1111, %v1048, %v1049
  %v1172 = vsel %vm1111, %v1047, %v1048
  %v1173 = vsel %vm1111, %v1046, %v1047
  %v1174 = vsel %vm1111, %v1045, %v1046
  %v1175 = vsel %vm1111, %v1108, %v1045
  %v1176 = vadd.s32 %v917, 4294967295
  %v1177 = vadd.s32 %v918, 4294967295
  %v1178 = vadd.s32 %v919, 4294967295
  %v1179 = vadd.s32 %v920, 4294967295
  %v1180 = vadd.s32 %v921, 4294967295
  %v1181 = vadd.s32 %v922, 4294967295
  %v1182 = vadd.s32 %v923, 4294967295
  %v1183 = vadd.s32 %v924, 4294967295
  %v1184 = vadd.s32 %v925, 4294967295
  %v1185 = vadd.s32 %v926, 4294967295
  %v1186 = vadd.s32 %v927, 4294967295
  %v1187 = vadd.s32 %v928, 4294967295
  %v1188 = vadd.s32 %v929, 4294967295
  %v1189 = vadd.s32 %v930, 4294967295
  %v1190 = vadd.s32 %v931, 4294967295
  %v1191 = vadd.s32 %v932, 4294967295
  %v1192 = vadd.s32 %v933, 4294967295
  %v1193 = vadd.s32 %v934, 4294967295
  %v1194 = vadd.s32 %v935, 4294967295
  %v1195 = vadd.s32 %v936, 4294967295
  %v1196 = vadd.s32 %v937, 4294967295
  %v1197 = vadd.s32 %v938, 4294967295
  %v1198 = vadd.s32 %v939, 4294967295
  %v1199 = vadd.s32 %v940, 4294967295
  %v1200 = vadd.s32 %v941, 4294967295
  %v1201 = vadd.s32 %v942, 4294967295
  %v1202 = vadd.s32 %v943, 4294967295
  %v1203 = vadd.s32 %v944, 4294967295
  %v1204 = vadd.s32 %v945, 4294967295
  %v1205 = vadd.s32 %v946, 4294967295
  %v1206 = vadd.s32 %v947, 4294967295
  %v1207 = vadd.s32 %v948, 4294967295
  %v1208 = vadd.s32 %v949, 4294967295
  %v1209 = vadd.s32 %v950, 4294967295
  %v1210 = vadd.s32 %v951, 4294967295
  %v1211 = vadd.s32 %v952, 4294967295
  %v1212 = vadd.s32 %v953, 4294967295
  %v1213 = vadd.s32 %v954, 4294967295
  %v1214 = vadd.s32 %v955, 4294967295
  %v1215 = vadd.s32 %v956, 4294967295
  %v1216 = vadd.s32 %v957, 4294967295
  %v1217 = vadd.s32 %v958, 4294967295
  %v1218 = vadd.s32 %v959, 4294967295
  %v1219 = vadd.s32 %v960, 4294967295
  %v1220 = vadd.s32 %v961, 4294967295
  %v1221 = vadd.s32 %v962, 4294967295
  %v1222 = vadd.s32 %v963, 4294967295
  %v1223 = vadd.s32 %v964, 4294967295
  %v1224 = vadd.s32 %v965, 4294967295
  %v1225 = vadd.s32 %v966, 4294967295
  %v1226 = vadd.s32 %v967, 4294967295
  %v1227 = vadd.s32 %v968, 4294967295
  %v1228 = vadd.s32 %v969, 4294967295
  %v1229 = vadd.s32 %v970, 4294967295
  %v1230 = vadd.s32 %v971, 4294967295
  %v1231 = vadd.s32 %v972, 4294967295
  %v1232 = vadd.s32 %v973, 4294967295
  %v1233 = vadd.s32 %v974, 4294967295
  %v1234 = vadd.s32 %v975, 4294967295
  %v1235 = vadd.s32 %v976, 4294967295
  %v1236 = vadd.s32 %v977, 4294967295
  %v1237 = vadd.s32 %v978, 4294967295
  %v1238 = vadd.s32 %v979, 4294967295
  %v1239 = vadd.s32 %v980, 4294967295
  %vm1240 = vcmp.ge.s32.totalorder %v1176, 0
  %vm1241 = vcmp.ge.s32.totalorder %v1177, 0
  %vm1242 = vcmp.ge.s32.totalorder %v1178, 0
  %vm1243 = vcmp.ge.s32.totalorder %v1179, 0
  %vm1244 = vcmp.ge.s32.totalorder %v1180, 0
  %vm1245 = vcmp.ge.s32.totalorder %v1181, 0
  %vm1246 = vcmp.ge.s32.totalorder %v1182, 0
  %vm1247 = vcmp.ge.s32.totalorder %v1183, 0
  %vm1248 = vcmp.ge.s32.totalorder %v1184, 0
  %vm1249 = vcmp.ge.s32.totalorder %v1185, 0
  %vm1250 = vcmp.ge.s32.totalorder %v1186, 0
  %vm1251 = vcmp.ge.s32.totalorder %v1187, 0
  %vm1252 = vcmp.ge.s32.totalorder %v1188, 0
  %vm1253 = vcmp.ge.s32.totalorder %v1189, 0
  %vm1254 = vcmp.ge.s32.totalorder %v1190, 0
  %vm1255 = vcmp.ge.s32.totalorder %v1191, 0
  %vm1256 = vcmp.ge.s32.totalorder %v1192, 0
  %vm1257 = vcmp.ge.s32.totalorder %v1193, 0
  %vm1258 = vcmp.ge.s32.totalorder %v1194, 0
  %vm1259 = vcmp.ge.s32.totalorder %v1195, 0
  %vm1260 = vcmp.ge.s32.totalorder %v1196, 0
  %vm1261 = vcmp.ge.s32.totalorder %v1197, 0
  %vm1262 = vcmp.ge.s32.totalorder %v1198, 0
  %vm1263 = vcmp.ge.s32.totalorder %v1199, 0
  %vm1264 = vcmp.ge.s32.totalorder %v1200, 0
  %vm1265 = vcmp.ge.s32.totalorder %v1201, 0
  %vm1266 = vcmp.ge.s32.totalorder %v1202, 0
  %vm1267 = vcmp.ge.s32.totalorder %v1203, 0
  %vm1268 = vcmp.ge.s32.totalorder %v1204, 0
  %vm1269 = vcmp.ge.s32.totalorder %v1205, 0
  %vm1270 = vcmp.ge.s32.totalorder %v1206, 0
  %vm1271 = vcmp.ge.s32.totalorder %v1207, 0
  %vm1272 = vcmp.ge.s32.totalorder %v1208, 0
  %vm1273 = vcmp.ge.s32.totalorder %v1209, 0
  %vm1274 = vcmp.ge.s32.totalorder %v1210, 0
  %vm1275 = vcmp.ge.s32.totalorder %v1211, 0
  %vm1276 = vcmp.ge.s32.totalorder %v1212, 0
  %vm1277 = vcmp.ge.s32.totalorder %v1213, 0
  %vm1278 = vcmp.ge.s32.totalorder %v1214, 0
  %vm1279 = vcmp.ge.s32.totalorder %v1215, 0
  %vm1280 = vcmp.ge.s32.totalorder %v1216, 0
  %vm1281 = vcmp.ge.s32.totalorder %v1217, 0
  %vm1282 = vcmp.ge.s32.totalorder %v1218, 0
  %vm1283 = vcmp.ge.s32.totalorder %v1219, 0
  %vm1284 = vcmp.ge.s32.totalorder %v1220, 0
  %vm1285 = vcmp.ge.s32.totalorder %v1221, 0
  %vm1286 = vcmp.ge.s32.totalorder %v1222, 0
  %vm1287 = vcmp.ge.s32.totalorder %v1223, 0
  %vm1288 = vcmp.ge.s32.totalorder %v1224, 0
  %vm1289 = vcmp.ge.s32.totalorder %v1225, 0
  %vm1290 = vcmp.ge.s32.totalorder %v1226, 0
  %vm1291 = vcmp.ge.s32.totalorder %v1227, 0
  %vm1292 = vcmp.ge.s32.totalorder %v1228, 0
  %vm1293 = vcmp.ge.s32.totalorder %v1229, 0
  %vm1294 = vcmp.ge.s32.totalorder %v1230, 0
  %vm1295 = vcmp.ge.s32.totalorder %v1231, 0
  %vm1296 = vcmp.ge.s32.totalorder %v1232, 0
  %vm1297 = vcmp.ge.s32.totalorder %v1233, 0
  %vm1298 = vcmp.ge.s32.totalorder %v1234, 0
  %vm1299 = vcmp.ge.s32.totalorder %v1235, 0
  %vm1300 = vcmp.ge.s32.totalorder %v1236, 0
  %vm1301 = vcmp.ge.s32.totalorder %v1237, 0
  %vm1302 = vcmp.ge.s32.totalorder %v1238, 0
  %vm1303 = vcmp.ge.s32.totalorder %v1239, 0
  %vm1304 = vcmp.lt.s32.totalorder %v1176, 16
  %vm1305 = vcmp.lt.s32.totalorder %v1177, 16
  %vm1306 = vcmp.lt.s32.totalorder %v1178, 16
  %vm1307 = vcmp.lt.s32.totalorder %v1179, 16
  %vm1308 = vcmp.lt.s32.totalorder %v1180, 16
  %vm1309 = vcmp.lt.s32.totalorder %v1181, 16
  %vm1310 = vcmp.lt.s32.totalorder %v1182, 16
  %vm1311 = vcmp.lt.s32.totalorder %v1183, 16
  %vm1312 = vcmp.lt.s32.totalorder %v1184, 16
  %vm1313 = vcmp.lt.s32.totalorder %v1185, 16
  %vm1314 = vcmp.lt.s32.totalorder %v1186, 16
  %vm1315 = vcmp.lt.s32.totalorder %v1187, 16
  %vm1316 = vcmp.lt.s32.totalorder %v1188, 16
  %vm1317 = vcmp.lt.s32.totalorder %v1189, 16
  %vm1318 = vcmp.lt.s32.totalorder %v1190, 16
  %vm1319 = vcmp.lt.s32.totalorder %v1191, 16
  %vm1320 = vcmp.lt.s32.totalorder %v1192, 16
  %vm1321 = vcmp.lt.s32.totalorder %v1193, 16
  %vm1322 = vcmp.lt.s32.totalorder %v1194, 16
  %vm1323 = vcmp.lt.s32.totalorder %v1195, 16
  %vm1324 = vcmp.lt.s32.totalorder %v1196, 16
  %vm1325 = vcmp.lt.s32.totalorder %v1197, 16
  %vm1326 = vcmp.lt.s32.totalorder %v1198, 16
  %vm1327 = vcmp.lt.s32.totalorder %v1199, 16
  %vm1328 = vcmp.lt.s32.totalorder %v1200, 16
  %vm1329 = vcmp.lt.s32.totalorder %v1201, 16
  %vm1330 = vcmp.lt.s32.totalorder %v1202, 16
  %vm1331 = vcmp.lt.s32.totalorder %v1203, 16
  %vm1332 = vcmp.lt.s32.totalorder %v1204, 16
  %vm1333 = vcmp.lt.s32.totalorder %v1205, 16
  %vm1334 = vcmp.lt.s32.totalorder %v1206, 16
  %vm1335 = vcmp.lt.s32.totalorder %v1207, 16
  %vm1336 = vcmp.lt.s32.totalorder %v1208, 16
  %vm1337 = vcmp.lt.s32.totalorder %v1209, 16
  %vm1338 = vcmp.lt.s32.totalorder %v1210, 16
  %vm1339 = vcmp.lt.s32.totalorder %v1211, 16
  %vm1340 = vcmp.lt.s32.totalorder %v1212, 16
  %vm1341 = vcmp.lt.s32.totalorder %v1213, 16
  %vm1342 = vcmp.lt.s32.totalorder %v1214, 16
  %vm1343 = vcmp.lt.s32.totalorder %v1215, 16
  %vm1344 = vcmp.lt.s32.totalorder %v1216, 16
  %vm1345 = vcmp.lt.s32.totalorder %v1217, 16
  %vm1346 = vcmp.lt.s32.totalorder %v1218, 16
  %vm1347 = vcmp.lt.s32.totalorder %v1219, 16
  %vm1348 = vcmp.lt.s32.totalorder %v1220, 16
  %vm1349 = vcmp.lt.s32.totalorder %v1221, 16
  %vm1350 = vcmp.lt.s32.totalorder %v1222, 16
  %vm1351 = vcmp.lt.s32.totalorder %v1223, 16
  %vm1352 = vcmp.lt.s32.totalorder %v1224, 16
  %vm1353 = vcmp.lt.s32.totalorder %v1225, 16
  %vm1354 = vcmp.lt.s32.totalorder %v1226, 16
  %vm1355 = vcmp.lt.s32.totalorder %v1227, 16
  %vm1356 = vcmp.lt.s32.totalorder %v1228, 16
  %vm1357 = vcmp.lt.s32.totalorder %v1229, 16
  %vm1358 = vcmp.lt.s32.totalorder %v1230, 16
  %vm1359 = vcmp.lt.s32.totalorder %v1231, 16
  %vm1360 = vcmp.lt.s32.totalorder %v1232, 16
  %vm1361 = vcmp.lt.s32.totalorder %v1233, 16
  %vm1362 = vcmp.lt.s32.totalorder %v1234, 16
  %vm1363 = vcmp.lt.s32.totalorder %v1235, 16
  %vm1364 = vcmp.lt.s32.totalorder %v1236, 16
  %vm1365 = vcmp.lt.s32.totalorder %v1237, 16
  %vm1366 = vcmp.lt.s32.totalorder %v1238, 16
  %vm1367 = vcmp.lt.s32.totalorder %v1239, 16
  %vm1368 = vmand %vm1240, %vm1304
  %vm1369 = vmand %vm1241, %vm1305
  %vm1370 = vmand %vm1242, %vm1306
  %vm1371 = vmand %vm1243, %vm1307
  %vm1372 = vmand %vm1244, %vm1308
  %vm1373 = vmand %vm1245, %vm1309
  %vm1374 = vmand %vm1246, %vm1310
  %vm1375 = vmand %vm1247, %vm1311
  %vm1376 = vmand %vm1248, %vm1312
  %vm1377 = vmand %vm1249, %vm1313
  %vm1378 = vmand %vm1250, %vm1314
  %vm1379 = vmand %vm1251, %vm1315
  %vm1380 = vmand %vm1252, %vm1316
  %vm1381 = vmand %vm1253, %vm1317
  %vm1382 = vmand %vm1254, %vm1318
  %vm1383 = vmand %vm1255, %vm1319
  %vm1384 = vmand %vm1256, %vm1320
  %vm1385 = vmand %vm1257, %vm1321
  %vm1386 = vmand %vm1258, %vm1322
  %vm1387 = vmand %vm1259, %vm1323
  %vm1388 = vmand %vm1260, %vm1324
  %vm1389 = vmand %vm1261, %vm1325
  %vm1390 = vmand %vm1262, %vm1326
  %vm1391 = vmand %vm1263, %vm1327
  %vm1392 = vmand %vm1264, %vm1328
  %vm1393 = vmand %vm1265, %vm1329
  %vm1394 = vmand %vm1266, %vm1330
  %vm1395 = vmand %vm1267, %vm1331
  %vm1396 = vmand %vm1268, %vm1332
  %vm1397 = vmand %vm1269, %vm1333
  %vm1398 = vmand %vm1270, %vm1334
  %vm1399 = vmand %vm1271, %vm1335
  %vm1400 = vmand %vm1272, %vm1336
  %vm1401 = vmand %vm1273, %vm1337
  %vm1402 = vmand %vm1274, %vm1338
  %vm1403 = vmand %vm1275, %vm1339
  %vm1404 = vmand %vm1276, %vm1340
  %vm1405 = vmand %vm1277, %vm1341
  %vm1406 = vmand %vm1278, %vm1342
  %vm1407 = vmand %vm1279, %vm1343
  %vm1408 = vmand %vm1280, %vm1344
  %vm1409 = vmand %vm1281, %vm1345
  %vm1410 = vmand %vm1282, %vm1346
  %vm1411 = vmand %vm1283, %vm1347
  %vm1412 = vmand %vm1284, %vm1348
  %vm1413 = vmand %vm1285, %vm1349
  %vm1414 = vmand %vm1286, %vm1350
  %vm1415 = vmand %vm1287, %vm1351
  %vm1416 = vmand %vm1288, %vm1352
  %vm1417 = vmand %vm1289, %vm1353
  %vm1418 = vmand %vm1290, %vm1354
  %vm1419 = vmand %vm1291, %vm1355
  %vm1420 = vmand %vm1292, %vm1356
  %vm1421 = vmand %vm1293, %vm1357
  %vm1422 = vmand %vm1294, %vm1358
  %vm1423 = vmand %vm1295, %vm1359
  %vm1424 = vmand %vm1296, %vm1360
  %vm1425 = vmand %vm1297, %vm1361
  %vm1426 = vmand %vm1298, %vm1362
  %vm1427 = vmand %vm1299, %vm1363
  %vm1428 = vmand %vm1300, %vm1364
  %vm1429 = vmand %vm1301, %vm1365
  %vm1430 = vmand %vm1302, %vm1366
  %vm1431 = vmand %vm1303, %vm1367
  %v1432 = vadd.s32 %v981, 4294967295
  %v1433 = vadd.s32 %v982, 4294967295
  %v1434 = vadd.s32 %v983, 4294967295
  %v1435 = vadd.s32 %v984, 4294967295
  %v1436 = vadd.s32 %v985, 4294967295
  %v1437 = vadd.s32 %v986, 4294967295
  %v1438 = vadd.s32 %v987, 4294967295
  %v1439 = vadd.s32 %v988, 4294967295
  %v1440 = vadd.s32 %v989, 4294967295
  %v1441 = vadd.s32 %v990, 4294967295
  %v1442 = vadd.s32 %v991, 4294967295
  %v1443 = vadd.s32 %v992, 4294967295
  %v1444 = vadd.s32 %v993, 4294967295
  %v1445 = vadd.s32 %v994, 4294967295
  %v1446 = vadd.s32 %v995, 4294967295
  %v1447 = vadd.s32 %v996, 4294967295
  %v1448 = vadd.s32 %v997, 4294967295
  %v1449 = vadd.s32 %v998, 4294967295
  %v1450 = vadd.s32 %v999, 4294967295
  %v1451 = vadd.s32 %v1000, 4294967295
  %v1452 = vadd.s32 %v1001, 4294967295
  %v1453 = vadd.s32 %v1002, 4294967295
  %v1454 = vadd.s32 %v1003, 4294967295
  %v1455 = vadd.s32 %v1004, 4294967295
  %v1456 = vadd.s32 %v1005, 4294967295
  %v1457 = vadd.s32 %v1006, 4294967295
  %v1458 = vadd.s32 %v1007, 4294967295
  %v1459 = vadd.s32 %v1008, 4294967295
  %v1460 = vadd.s32 %v1009, 4294967295
  %v1461 = vadd.s32 %v1010, 4294967295
  %v1462 = vadd.s32 %v1011, 4294967295
  %v1463 = vadd.s32 %v1012, 4294967295
  %v1464 = vadd.s32 %v1013, 4294967295
  %v1465 = vadd.s32 %v1014, 4294967295
  %v1466 = vadd.s32 %v1015, 4294967295
  %v1467 = vadd.s32 %v1016, 4294967295
  %v1468 = vadd.s32 %v1017, 4294967295
  %v1469 = vadd.s32 %v1018, 4294967295
  %v1470 = vadd.s32 %v1019, 4294967295
  %v1471 = vadd.s32 %v1020, 4294967295
  %v1472 = vadd.s32 %v1021, 4294967295
  %v1473 = vadd.s32 %v1022, 4294967295
  %v1474 = vadd.s32 %v1023, 4294967295
  %v1475 = vadd.s32 %v1024, 4294967295
  %v1476 = vadd.s32 %v1025, 4294967295
  %v1477 = vadd.s32 %v1026, 4294967295
  %v1478 = vadd.s32 %v1027, 4294967295
  %v1479 = vadd.s32 %v1028, 4294967295
  %v1480 = vadd.s32 %v1029, 4294967295
  %v1481 = vadd.s32 %v1030, 4294967295
  %v1482 = vadd.s32 %v1031, 4294967295
  %v1483 = vadd.s32 %v1032, 4294967295
  %v1484 = vadd.s32 %v1033, 4294967295
  %v1485 = vadd.s32 %v1034, 4294967295
  %v1486 = vadd.s32 %v1035, 4294967295
  %v1487 = vadd.s32 %v1036, 4294967295
  %v1488 = vadd.s32 %v1037, 4294967295
  %v1489 = vadd.s32 %v1038, 4294967295
  %v1490 = vadd.s32 %v1039, 4294967295
  %v1491 = vadd.s32 %v1040, 4294967295
  %v1492 = vadd.s32 %v1041, 4294967295
  %v1493 = vadd.s32 %v1042, 4294967295
  %v1494 = vadd.s32 %v1043, 4294967295
  %v1495 = vadd.s32 %v1044, 4294967295
  %vm1496 = vcmp.ge.s32.totalorder %v1432, 0
  %vm1497 = vcmp.ge.s32.totalorder %v1433, 0
  %vm1498 = vcmp.ge.s32.totalorder %v1434, 0
  %vm1499 = vcmp.ge.s32.totalorder %v1435, 0
  %vm1500 = vcmp.ge.s32.totalorder %v1436, 0
  %vm1501 = vcmp.ge.s32.totalorder %v1437, 0
  %vm1502 = vcmp.ge.s32.totalorder %v1438, 0
  %vm1503 = vcmp.ge.s32.totalorder %v1439, 0
  %vm1504 = vcmp.ge.s32.totalorder %v1440, 0
  %vm1505 = vcmp.ge.s32.totalorder %v1441, 0
  %vm1506 = vcmp.ge.s32.totalorder %v1442, 0
  %vm1507 = vcmp.ge.s32.totalorder %v1443, 0
  %vm1508 = vcmp.ge.s32.totalorder %v1444, 0
  %vm1509 = vcmp.ge.s32.totalorder %v1445, 0
  %vm1510 = vcmp.ge.s32.totalorder %v1446, 0
  %vm1511 = vcmp.ge.s32.totalorder %v1447, 0
  %vm1512 = vcmp.ge.s32.totalorder %v1448, 0
  %vm1513 = vcmp.ge.s32.totalorder %v1449, 0
  %vm1514 = vcmp.ge.s32.totalorder %v1450, 0
  %vm1515 = vcmp.ge.s32.totalorder %v1451, 0
  %vm1516 = vcmp.ge.s32.totalorder %v1452, 0
  %vm1517 = vcmp.ge.s32.totalorder %v1453, 0
  %vm1518 = vcmp.ge.s32.totalorder %v1454, 0
  %vm1519 = vcmp.ge.s32.totalorder %v1455, 0
  %vm1520 = vcmp.ge.s32.totalorder %v1456, 0
  %vm1521 = vcmp.ge.s32.totalorder %v1457, 0
  %vm1522 = vcmp.ge.s32.totalorder %v1458, 0
  %vm1523 = vcmp.ge.s32.totalorder %v1459, 0
  %vm1524 = vcmp.ge.s32.totalorder %v1460, 0
  %vm1525 = vcmp.ge.s32.totalorder %v1461, 0
  %vm1526 = vcmp.ge.s32.totalorder %v1462, 0
  %vm1527 = vcmp.ge.s32.totalorder %v1463, 0
  %vm1528 = vcmp.ge.s32.totalorder %v1464, 0
  %vm1529 = vcmp.ge.s32.totalorder %v1465, 0
  %vm1530 = vcmp.ge.s32.totalorder %v1466, 0
  %vm1531 = vcmp.ge.s32.totalorder %v1467, 0
  %vm1532 = vcmp.ge.s32.totalorder %v1468, 0
  %vm1533 = vcmp.ge.s32.totalorder %v1469, 0
  %vm1534 = vcmp.ge.s32.totalorder %v1470, 0
  %vm1535 = vcmp.ge.s32.totalorder %v1471, 0
  %vm1536 = vcmp.ge.s32.totalorder %v1472, 0
  %vm1537 = vcmp.ge.s32.totalorder %v1473, 0
  %vm1538 = vcmp.ge.s32.totalorder %v1474, 0
  %vm1539 = vcmp.ge.s32.totalorder %v1475, 0
  %vm1540 = vcmp.ge.s32.totalorder %v1476, 0
  %vm1541 = vcmp.ge.s32.totalorder %v1477, 0
  %vm1542 = vcmp.ge.s32.totalorder %v1478, 0
  %vm1543 = vcmp.ge.s32.totalorder %v1479, 0
  %vm1544 = vcmp.ge.s32.totalorder %v1480, 0
  %vm1545 = vcmp.ge.s32.totalorder %v1481, 0
  %vm1546 = vcmp.ge.s32.totalorder %v1482, 0
  %vm1547 = vcmp.ge.s32.totalorder %v1483, 0
  %vm1548 = vcmp.ge.s32.totalorder %v1484, 0
  %vm1549 = vcmp.ge.s32.totalorder %v1485, 0
  %vm1550 = vcmp.ge.s32.totalorder %v1486, 0
  %vm1551 = vcmp.ge.s32.totalorder %v1487, 0
  %vm1552 = vcmp.ge.s32.totalorder %v1488, 0
  %vm1553 = vcmp.ge.s32.totalorder %v1489, 0
  %vm1554 = vcmp.ge.s32.totalorder %v1490, 0
  %vm1555 = vcmp.ge.s32.totalorder %v1491, 0
  %vm1556 = vcmp.ge.s32.totalorder %v1492, 0
  %vm1557 = vcmp.ge.s32.totalorder %v1493, 0
  %vm1558 = vcmp.ge.s32.totalorder %v1494, 0
  %vm1559 = vcmp.ge.s32.totalorder %v1495, 0
  %vm1560 = vmand %vm1368, %vm1496
  %vm1561 = vmand %vm1369, %vm1497
  %vm1562 = vmand %vm1370, %vm1498
  %vm1563 = vmand %vm1371, %vm1499
  %vm1564 = vmand %vm1372, %vm1500
  %vm1565 = vmand %vm1373, %vm1501
  %vm1566 = vmand %vm1374, %vm1502
  %vm1567 = vmand %vm1375, %vm1503
  %vm1568 = vmand %vm1376, %vm1504
  %vm1569 = vmand %vm1377, %vm1505
  %vm1570 = vmand %vm1378, %vm1506
  %vm1571 = vmand %vm1379, %vm1507
  %vm1572 = vmand %vm1380, %vm1508
  %vm1573 = vmand %vm1381, %vm1509
  %vm1574 = vmand %vm1382, %vm1510
  %vm1575 = vmand %vm1383, %vm1511
  %vm1576 = vmand %vm1384, %vm1512
  %vm1577 = vmand %vm1385, %vm1513
  %vm1578 = vmand %vm1386, %vm1514
  %vm1579 = vmand %vm1387, %vm1515
  %vm1580 = vmand %vm1388, %vm1516
  %vm1581 = vmand %vm1389, %vm1517
  %vm1582 = vmand %vm1390, %vm1518
  %vm1583 = vmand %vm1391, %vm1519
  %vm1584 = vmand %vm1392, %vm1520
  %vm1585 = vmand %vm1393, %vm1521
  %vm1586 = vmand %vm1394, %vm1522
  %vm1587 = vmand %vm1395, %vm1523
  %vm1588 = vmand %vm1396, %vm1524
  %vm1589 = vmand %vm1397, %vm1525
  %vm1590 = vmand %vm1398, %vm1526
  %vm1591 = vmand %vm1399, %vm1527
  %vm1592 = vmand %vm1400, %vm1528
  %vm1593 = vmand %vm1401, %vm1529
  %vm1594 = vmand %vm1402, %vm1530
  %vm1595 = vmand %vm1403, %vm1531
  %vm1596 = vmand %vm1404, %vm1532
  %vm1597 = vmand %vm1405, %vm1533
  %vm1598 = vmand %vm1406, %vm1534
  %vm1599 = vmand %vm1407, %vm1535
  %vm1600 = vmand %vm1408, %vm1536
  %vm1601 = vmand %vm1409, %vm1537
  %vm1602 = vmand %vm1410, %vm1538
  %vm1603 = vmand %vm1411, %vm1539
  %vm1604 = vmand %vm1412, %vm1540
  %vm1605 = vmand %vm1413, %vm1541
  %vm1606 = vmand %vm1414, %vm1542
  %vm1607 = vmand %vm1415, %vm1543
  %vm1608 = vmand %vm1416, %vm1544
  %vm1609 = vmand %vm1417, %vm1545
  %vm1610 = vmand %vm1418, %vm1546
  %vm1611 = vmand %vm1419, %vm1547
  %vm1612 = vmand %vm1420, %vm1548
  %vm1613 = vmand %vm1421, %vm1549
  %vm1614 = vmand %vm1422, %vm1550
  %vm1615 = vmand %vm1423, %vm1551
  %vm1616 = vmand %vm1424, %vm1552
  %vm1617 = vmand %vm1425, %vm1553
  %vm1618 = vmand %vm1426, %vm1554
  %vm1619 = vmand %vm1427, %vm1555
  %vm1620 = vmand %vm1428, %vm1556
  %vm1621 = vmand %vm1429, %vm1557
  %vm1622 = vmand %vm1430, %vm1558
  %vm1623 = vmand %vm1431, %vm1559
  %vm1624 = vcmp.lt.s32.totalorder %v1432, 16
  %vm1625 = vcmp.lt.s32.totalorder %v1433, 16
  %vm1626 = vcmp.lt.s32.totalorder %v1434, 16
  %vm1627 = vcmp.lt.s32.totalorder %v1435, 16
  %vm1628 = vcmp.lt.s32.totalorder %v1436, 16
  %vm1629 = vcmp.lt.s32.totalorder %v1437, 16
  %vm1630 = vcmp.lt.s32.totalorder %v1438, 16
  %vm1631 = vcmp.lt.s32.totalorder %v1439, 16
  %vm1632 = vcmp.lt.s32.totalorder %v1440, 16
  %vm1633 = vcmp.lt.s32.totalorder %v1441, 16
  %vm1634 = vcmp.lt.s32.totalorder %v1442, 16
  %vm1635 = vcmp.lt.s32.totalorder %v1443, 16
  %vm1636 = vcmp.lt.s32.totalorder %v1444, 16
  %vm1637 = vcmp.lt.s32.totalorder %v1445, 16
  %vm1638 = vcmp.lt.s32.totalorder %v1446, 16
  %vm1639 = vcmp.lt.s32.totalorder %v1447, 16
  %vm1640 = vcmp.lt.s32.totalorder %v1448, 16
  %vm1641 = vcmp.lt.s32.totalorder %v1449, 16
  %vm1642 = vcmp.lt.s32.totalorder %v1450, 16
  %vm1643 = vcmp.lt.s32.totalorder %v1451, 16
  %vm1644 = vcmp.lt.s32.totalorder %v1452, 16
  %vm1645 = vcmp.lt.s32.totalorder %v1453, 16
  %vm1646 = vcmp.lt.s32.totalorder %v1454, 16
  %vm1647 = vcmp.lt.s32.totalorder %v1455, 16
  %vm1648 = vcmp.lt.s32.totalorder %v1456, 16
  %vm1649 = vcmp.lt.s32.totalorder %v1457, 16
  %vm1650 = vcmp.lt.s32.totalorder %v1458, 16
  %vm1651 = vcmp.lt.s32.totalorder %v1459, 16
  %vm1652 = vcmp.lt.s32.totalorder %v1460, 16
  %vm1653 = vcmp.lt.s32.totalorder %v1461, 16
  %vm1654 = vcmp.lt.s32.totalorder %v1462, 16
  %vm1655 = vcmp.lt.s32.totalorder %v1463, 16
  %vm1656 = vcmp.lt.s32.totalorder %v1464, 16
  %vm1657 = vcmp.lt.s32.totalorder %v1465, 16
  %vm1658 = vcmp.lt.s32.totalorder %v1466, 16
  %vm1659 = vcmp.lt.s32.totalorder %v1467, 16
  %vm1660 = vcmp.lt.s32.totalorder %v1468, 16
  %vm1661 = vcmp.lt.s32.totalorder %v1469, 16
  %vm1662 = vcmp.lt.s32.totalorder %v1470, 16
  %vm1663 = vcmp.lt.s32.totalorder %v1471, 16
  %vm1664 = vcmp.lt.s32.totalorder %v1472, 16
  %vm1665 = vcmp.lt.s32.totalorder %v1473, 16
  %vm1666 = vcmp.lt.s32.totalorder %v1474, 16
  %vm1667 = vcmp.lt.s32.totalorder %v1475, 16
  %vm1668 = vcmp.lt.s32.totalorder %v1476, 16
  %vm1669 = vcmp.lt.s32.totalorder %v1477, 16
  %vm1670 = vcmp.lt.s32.totalorder %v1478, 16
  %vm1671 = vcmp.lt.s32.totalorder %v1479, 16
  %vm1672 = vcmp.lt.s32.totalorder %v1480, 16
  %vm1673 = vcmp.lt.s32.totalorder %v1481, 16
  %vm1674 = vcmp.lt.s32.totalorder %v1482, 16
  %vm1675 = vcmp.lt.s32.totalorder %v1483, 16
  %vm1676 = vcmp.lt.s32.totalorder %v1484, 16
  %vm1677 = vcmp.lt.s32.totalorder %v1485, 16
  %vm1678 = vcmp.lt.s32.totalorder %v1486, 16
  %vm1679 = vcmp.lt.s32.totalorder %v1487, 16
  %vm1680 = vcmp.lt.s32.totalorder %v1488, 16
  %vm1681 = vcmp.lt.s32.totalorder %v1489, 16
  %vm1682 = vcmp.lt.s32.totalorder %v1490, 16
  %vm1683 = vcmp.lt.s32.totalorder %v1491, 16
  %vm1684 = vcmp.lt.s32.totalorder %v1492, 16
  %vm1685 = vcmp.lt.s32.totalorder %v1493, 16
  %vm1686 = vcmp.lt.s32.totalorder %v1494, 16
  %vm1687 = vcmp.lt.s32.totalorder %v1495, 16
  %vm1688 = vmand %vm1560, %vm1624
  %vm1689 = vmand %vm1561, %vm1625
  %vm1690 = vmand %vm1562, %vm1626
  %vm1691 = vmand %vm1563, %vm1627
  %vm1692 = vmand %vm1564, %vm1628
  %vm1693 = vmand %vm1565, %vm1629
  %vm1694 = vmand %vm1566, %vm1630
  %vm1695 = vmand %vm1567, %vm1631
  %vm1696 = vmand %vm1568, %vm1632
  %vm1697 = vmand %vm1569, %vm1633
  %vm1698 = vmand %vm1570, %vm1634
  %vm1699 = vmand %vm1571, %vm1635
  %vm1700 = vmand %vm1572, %vm1636
  %vm1701 = vmand %vm1573, %vm1637
  %vm1702 = vmand %vm1574, %vm1638
  %vm1703 = vmand %vm1575, %vm1639
  %vm1704 = vmand %vm1576, %vm1640
  %vm1705 = vmand %vm1577, %vm1641
  %vm1706 = vmand %vm1578, %vm1642
  %vm1707 = vmand %vm1579, %vm1643
  %vm1708 = vmand %vm1580, %vm1644
  %vm1709 = vmand %vm1581, %vm1645
  %vm1710 = vmand %vm1582, %vm1646
  %vm1711 = vmand %vm1583, %vm1647
  %vm1712 = vmand %vm1584, %vm1648
  %vm1713 = vmand %vm1585, %vm1649
  %vm1714 = vmand %vm1586, %vm1650
  %vm1715 = vmand %vm1587, %vm1651
  %vm1716 = vmand %vm1588, %vm1652
  %vm1717 = vmand %vm1589, %vm1653
  %vm1718 = vmand %vm1590, %vm1654
  %vm1719 = vmand %vm1591, %vm1655
  %vm1720 = vmand %vm1592, %vm1656
  %vm1721 = vmand %vm1593, %vm1657
  %vm1722 = vmand %vm1594, %vm1658
  %vm1723 = vmand %vm1595, %vm1659
  %vm1724 = vmand %vm1596, %vm1660
  %vm1725 = vmand %vm1597, %vm1661
  %vm1726 = vmand %vm1598, %vm1662
  %vm1727 = vmand %vm1599, %vm1663
  %vm1728 = vmand %vm1600, %vm1664
  %vm1729 = vmand %vm1601, %vm1665
  %vm1730 = vmand %vm1602, %vm1666
  %vm1731 = vmand %vm1603, %vm1667
  %vm1732 = vmand %vm1604, %vm1668
  %vm1733 = vmand %vm1605, %vm1669
  %vm1734 = vmand %vm1606, %vm1670
  %vm1735 = vmand %vm1607, %vm1671
  %vm1736 = vmand %vm1608, %vm1672
  %vm1737 = vmand %vm1609, %vm1673
  %vm1738 = vmand %vm1610, %vm1674
  %vm1739 = vmand %vm1611, %vm1675
  %vm1740 = vmand %vm1612, %vm1676
  %vm1741 = vmand %vm1613, %vm1677
  %vm1742 = vmand %vm1614, %vm1678
  %vm1743 = vmand %vm1615, %vm1679
  %vm1744 = vmand %vm1616, %vm1680
  %vm1745 = vmand %vm1617, %vm1681
  %vm1746 = vmand %vm1618, %vm1682
  %vm1747 = vmand %vm1619, %vm1683
  %vm1748 = vmand %vm1620, %vm1684
  %vm1749 = vmand %vm1621, %vm1685
  %vm1750 = vmand %vm1622, %vm1686
  %vm1751 = vmand %vm1623, %vm1687
  %v1752 = vsel %vm1688, 1, 0
  %v1753 = vsel %vm1689, 1, 0
  %v1754 = vsel %vm1690, 1, 0
  %v1755 = vsel %vm1691, 1, 0
  %v1756 = vsel %vm1692, 1, 0
  %v1757 = vsel %vm1693, 1, 0
  %v1758 = vsel %vm1694, 1, 0
  %v1759 = vsel %vm1695, 1, 0
  %v1760 = vsel %vm1696, 1, 0
  %v1761 = vsel %vm1697, 1, 0
  %v1762 = vsel %vm1698, 1, 0
  %v1763 = vsel %vm1699, 1, 0
  %v1764 = vsel %vm1700, 1, 0
  %v1765 = vsel %vm1701, 1, 0
  %v1766 = vsel %vm1702, 1, 0
  %v1767 = vsel %vm1703, 1, 0
  %v1768 = vsel %vm1704, 1, 0
  %v1769 = vsel %vm1705, 1, 0
  %v1770 = vsel %vm1706, 1, 0
  %v1771 = vsel %vm1707, 1, 0
  %v1772 = vsel %vm1708, 1, 0
  %v1773 = vsel %vm1709, 1, 0
  %v1774 = vsel %vm1710, 1, 0
  %v1775 = vsel %vm1711, 1, 0
  %v1776 = vsel %vm1712, 1, 0
  %v1777 = vsel %vm1713, 1, 0
  %v1778 = vsel %vm1714, 1, 0
  %v1779 = vsel %vm1715, 1, 0
  %v1780 = vsel %vm1716, 1, 0
  %v1781 = vsel %vm1717, 1, 0
  %v1782 = vsel %vm1718, 1, 0
  %v1783 = vsel %vm1719, 1, 0
  %v1784 = vsel %vm1720, 1, 0
  %v1785 = vsel %vm1721, 1, 0
  %v1786 = vsel %vm1722, 1, 0
  %v1787 = vsel %vm1723, 1, 0
  %v1788 = vsel %vm1724, 1, 0
  %v1789 = vsel %vm1725, 1, 0
  %v1790 = vsel %vm1726, 1, 0
  %v1791 = vsel %vm1727, 1, 0
  %v1792 = vsel %vm1728, 1, 0
  %v1793 = vsel %vm1729, 1, 0
  %v1794 = vsel %vm1730, 1, 0
  %v1795 = vsel %vm1731, 1, 0
  %v1796 = vsel %vm1732, 1, 0
  %v1797 = vsel %vm1733, 1, 0
  %v1798 = vsel %vm1734, 1, 0
  %v1799 = vsel %vm1735, 1, 0
  %v1800 = vsel %vm1736, 1, 0
  %v1801 = vsel %vm1737, 1, 0
  %v1802 = vsel %vm1738, 1, 0
  %v1803 = vsel %vm1739, 1, 0
  %v1804 = vsel %vm1740, 1, 0
  %v1805 = vsel %vm1741, 1, 0
  %v1806 = vsel %vm1742, 1, 0
  %v1807 = vsel %vm1743, 1, 0
  %v1808 = vsel %vm1744, 1, 0
  %v1809 = vsel %vm1745, 1, 0
  %v1810 = vsel %vm1746, 1, 0
  %v1811 = vsel %vm1747, 1, 0
  %v1812 = vsel %vm1748, 1, 0
  %v1813 = vsel %vm1749, 1, 0
  %v1814 = vsel %vm1750, 1, 0
  %v1815 = vsel %vm1751, 1, 0
  %1816 = vset.pattern.permute.xlu0 0
  %1817 = vperm.xlu0 %1816, %v1752
  %v1818 = vpop.permute.xlu0 %1817
  %1819 = vset.pattern.permute.xlu0 0
  %1820 = vperm.xlu0 %1819, %v1753
  %v1821 = vpop.permute.xlu0 %1820
  %1822 = vset.pattern.permute.xlu0 0
  %1823 = vperm.xlu0 %1822, %v1754
  %v1824 = vpop.permute.xlu0 %1823
  %1825 = vset.pattern.permute.xlu0 0
  %1826 = vperm.xlu0 %1825, %v1755
  %v1827 = vpop.permute.xlu0 %1826
  %1828 = vset.pattern.permute.xlu0 0
  %1829 = vperm.xlu0 %1828, %v1756
  %v1830 = vpop.permute.xlu0 %1829
  %1831 = vset.pattern.permute.xlu0 0
  %1832 = vperm.xlu0 %1831, %v1757
  %v1833 = vpop.permute.xlu0 %1832
  %1834 = vset.pattern.permute.xlu0 0
  %1835 = vperm.xlu0 %1834, %v1758
  %v1836 = vpop.permute.xlu0 %1835
  %1837 = vset.pattern.permute.xlu0 0
  %1838 = vperm.xlu0 %1837, %v1759
  %v1839 = vpop.permute.xlu0 %1838
  %1840 = vset.pattern.permute.xlu0 0
  %1841 = vperm.xlu0 %1840, %v1760
  %v1842 = vpop.permute.xlu0 %1841
  %1843 = vset.pattern.permute.xlu0 0
  %1844 = vperm.xlu0 %1843, %v1761
  %v1845 = vpop.permute.xlu0 %1844
  %1846 = vset.pattern.permute.xlu0 0
  %1847 = vperm.xlu0 %1846, %v1762
  %v1848 = vpop.permute.xlu0 %1847
  %1849 = vset.pattern.permute.xlu0 0
  %1850 = vperm.xlu0 %1849, %v1763
  %v1851 = vpop.permute.xlu0 %1850
  %1852 = vset.pattern.permute.xlu0 0
  %1853 = vperm.xlu0 %1852, %v1764
  %v1854 = vpop.permute.xlu0 %1853
  %1855 = vset.pattern.permute.xlu0 0
  %1856 = vperm.xlu0 %1855, %v1765
  %v1857 = vpop.permute.xlu0 %1856
  %1858 = vset.pattern.permute.xlu0 0
  %1859 = vperm.xlu0 %1858, %v1766
  %v1860 = vpop.permute.xlu0 %1859
  %1861 = vset.pattern.permute.xlu0 0
  %1862 = vperm.xlu0 %1861, %v1767
  %v1863 = vpop.permute.xlu0 %1862
  %1864 = vset.pattern.permute.xlu0 0
  %1865 = vperm.xlu0 %1864, %v1768
  %v1866 = vpop.permute.xlu0 %1865
  %1867 = vset.pattern.permute.xlu0 0
  %1868 = vperm.xlu0 %1867, %v1769
  %v1869 = vpop.permute.xlu0 %1868
  %1870 = vset.pattern.permute.xlu0 0
  %1871 = vperm.xlu0 %1870, %v1770
  %v1872 = vpop.permute.xlu0 %1871
  %1873 = vset.pattern.permute.xlu0 0
  %1874 = vperm.xlu0 %1873, %v1771
  %v1875 = vpop.permute.xlu0 %1874
  %1876 = vset.pattern.permute.xlu0 0
  %1877 = vperm.xlu0 %1876, %v1772
  %v1878 = vpop.permute.xlu0 %1877
  %1879 = vset.pattern.permute.xlu0 0
  %1880 = vperm.xlu0 %1879, %v1773
  %v1881 = vpop.permute.xlu0 %1880
  %1882 = vset.pattern.permute.xlu0 0
  %1883 = vperm.xlu0 %1882, %v1774
  %v1884 = vpop.permute.xlu0 %1883
  %1885 = vset.pattern.permute.xlu0 0
  %1886 = vperm.xlu0 %1885, %v1775
  %v1887 = vpop.permute.xlu0 %1886
  %1888 = vset.pattern.permute.xlu0 0
  %1889 = vperm.xlu0 %1888, %v1776
  %v1890 = vpop.permute.xlu0 %1889
  %1891 = vset.pattern.permute.xlu0 0
  %1892 = vperm.xlu0 %1891, %v1777
  %v1893 = vpop.permute.xlu0 %1892
  %1894 = vset.pattern.permute.xlu0 0
  %1895 = vperm.xlu0 %1894, %v1778
  %v1896 = vpop.permute.xlu0 %1895
  %1897 = vset.pattern.permute.xlu0 0
  %1898 = vperm.xlu0 %1897, %v1779
  %v1899 = vpop.permute.xlu0 %1898
  %1900 = vset.pattern.permute.xlu0 0
  %1901 = vperm.xlu0 %1900, %v1780
  %v1902 = vpop.permute.xlu0 %1901
  %1903 = vset.pattern.permute.xlu0 0
  %1904 = vperm.xlu0 %1903, %v1781
  %v1905 = vpop.permute.xlu0 %1904
  %1906 = vset.pattern.permute.xlu0 0
  %1907 = vperm.xlu0 %1906, %v1782
  %v1908 = vpop.permute.xlu0 %1907
  %1909 = vset.pattern.permute.xlu0 0
  %1910 = vperm.xlu0 %1909, %v1783
  %v1911 = vpop.permute.xlu0 %1910
  %1912 = vset.pattern.permute.xlu0 0
  %1913 = vperm.xlu0 %1912, %v1784
  %v1914 = vpop.permute.xlu0 %1913
  %1915 = vset.pattern.permute.xlu0 0
  %1916 = vperm.xlu0 %1915, %v1785
  %v1917 = vpop.permute.xlu0 %1916
  %1918 = vset.pattern.permute.xlu0 0
  %1919 = vperm.xlu0 %1918, %v1786
  %v1920 = vpop.permute.xlu0 %1919
  %1921 = vset.pattern.permute.xlu0 0
  %1922 = vperm.xlu0 %1921, %v1787
  %v1923 = vpop.permute.xlu0 %1922
  %1924 = vset.pattern.permute.xlu0 0
  %1925 = vperm.xlu0 %1924, %v1788
  %v1926 = vpop.permute.xlu0 %1925
  %1927 = vset.pattern.permute.xlu0 0
  %1928 = vperm.xlu0 %1927, %v1789
  %v1929 = vpop.permute.xlu0 %1928
  %1930 = vset.pattern.permute.xlu0 0
  %1931 = vperm.xlu0 %1930, %v1790
  %v1932 = vpop.permute.xlu0 %1931
  %1933 = vset.pattern.permute.xlu0 0
  %1934 = vperm.xlu0 %1933, %v1791
  %v1935 = vpop.permute.xlu0 %1934
  %1936 = vset.pattern.permute.xlu0 0
  %1937 = vperm.xlu0 %1936, %v1792
  %v1938 = vpop.permute.xlu0 %1937
  %1939 = vset.pattern.permute.xlu0 0
  %1940 = vperm.xlu0 %1939, %v1793
  %v1941 = vpop.permute.xlu0 %1940
  %1942 = vset.pattern.permute.xlu0 0
  %1943 = vperm.xlu0 %1942, %v1794
  %v1944 = vpop.permute.xlu0 %1943
  %1945 = vset.pattern.permute.xlu0 0
  %1946 = vperm.xlu0 %1945, %v1795
  %v1947 = vpop.permute.xlu0 %1946
  %1948 = vset.pattern.permute.xlu0 0
  %1949 = vperm.xlu0 %1948, %v1796
  %v1950 = vpop.permute.xlu0 %1949
  %1951 = vset.pattern.permute.xlu0 0
  %1952 = vperm.xlu0 %1951, %v1797
  %v1953 = vpop.permute.xlu0 %1952
  %1954 = vset.pattern.permute.xlu0 0
  %1955 = vperm.xlu0 %1954, %v1798
  %v1956 = vpop.permute.xlu0 %1955
  %1957 = vset.pattern.permute.xlu0 0
  %1958 = vperm.xlu0 %1957, %v1799
  %v1959 = vpop.permute.xlu0 %1958
  %1960 = vset.pattern.permute.xlu0 0
  %1961 = vperm.xlu0 %1960, %v1800
  %v1962 = vpop.permute.xlu0 %1961
  %1963 = vset.pattern.permute.xlu0 0
  %1964 = vperm.xlu0 %1963, %v1801
  %v1965 = vpop.permute.xlu0 %1964
  %1966 = vset.pattern.permute.xlu0 0
  %1967 = vperm.xlu0 %1966, %v1802
  %v1968 = vpop.permute.xlu0 %1967
  %1969 = vset.pattern.permute.xlu0 0
  %1970 = vperm.xlu0 %1969, %v1803
  %v1971 = vpop.permute.xlu0 %1970
  %1972 = vset.pattern.permute.xlu0 0
  %1973 = vperm.xlu0 %1972, %v1804
  %v1974 = vpop.permute.xlu0 %1973
  %1975 = vset.pattern.permute.xlu0 0
  %1976 = vperm.xlu0 %1975, %v1805
  %v1977 = vpop.permute.xlu0 %1976
  %1978 = vset.pattern.permute.xlu0 0
  %1979 = vperm.xlu0 %1978, %v1806
  %v1980 = vpop.permute.xlu0 %1979
  %1981 = vset.pattern.permute.xlu0 0
  %1982 = vperm.xlu0 %1981, %v1807
  %v1983 = vpop.permute.xlu0 %1982
  %1984 = vset.pattern.permute.xlu0 0
  %1985 = vperm.xlu0 %1984, %v1808
  %v1986 = vpop.permute.xlu0 %1985
  %1987 = vset.pattern.permute.xlu0 0
  %1988 = vperm.xlu0 %1987, %v1809
  %v1989 = vpop.permute.xlu0 %1988
  %1990 = vset.pattern.permute.xlu0 0
  %1991 = vperm.xlu0 %1990, %v1810
  %v1992 = vpop.permute.xlu0 %1991
  %1993 = vset.pattern.permute.xlu0 0
  %1994 = vperm.xlu0 %1993, %v1811
  %v1995 = vpop.permute.xlu0 %1994
  %1996 = vset.pattern.permute.xlu0 0
  %1997 = vperm.xlu0 %1996, %v1812
  %v1998 = vpop.permute.xlu0 %1997
  %1999 = vset.pattern.permute.xlu0 0
  %2000 = vperm.xlu0 %1999, %v1813
  %v2001 = vpop.permute.xlu0 %2000
  %2002 = vset.pattern.permute.xlu0 0
  %2003 = vperm.xlu0 %2002, %v1814
  %v2004 = vpop.permute.xlu0 %2003
  %2005 = vset.pattern.permute.xlu0 0
  %2006 = vperm.xlu0 %2005, %v1815
  %v2007 = vpop.permute.xlu0 %2006
  %vm2008 = vcmp.eq.s32.totalorder %v1818, 1
  %vm2009 = vcmp.eq.s32.totalorder %v1821, 1
  %vm2010 = vcmp.eq.s32.totalorder %v1824, 1
  %vm2011 = vcmp.eq.s32.totalorder %v1827, 1
  %vm2012 = vcmp.eq.s32.totalorder %v1830, 1
  %vm2013 = vcmp.eq.s32.totalorder %v1833, 1
  %vm2014 = vcmp.eq.s32.totalorder %v1836, 1
  %vm2015 = vcmp.eq.s32.totalorder %v1839, 1
  %vm2016 = vcmp.eq.s32.totalorder %v1842, 1
  %vm2017 = vcmp.eq.s32.totalorder %v1845, 1
  %vm2018 = vcmp.eq.s32.totalorder %v1848, 1
  %vm2019 = vcmp.eq.s32.totalorder %v1851, 1
  %vm2020 = vcmp.eq.s32.totalorder %v1854, 1
  %vm2021 = vcmp.eq.s32.totalorder %v1857, 1
  %vm2022 = vcmp.eq.s32.totalorder %v1860, 1
  %vm2023 = vcmp.eq.s32.totalorder %v1863, 1
  %vm2024 = vcmp.eq.s32.totalorder %v1866, 1
  %vm2025 = vcmp.eq.s32.totalorder %v1869, 1
  %vm2026 = vcmp.eq.s32.totalorder %v1872, 1
  %vm2027 = vcmp.eq.s32.totalorder %v1875, 1
  %vm2028 = vcmp.eq.s32.totalorder %v1878, 1
  %vm2029 = vcmp.eq.s32.totalorder %v1881, 1
  %vm2030 = vcmp.eq.s32.totalorder %v1884, 1
  %vm2031 = vcmp.eq.s32.totalorder %v1887, 1
  %vm2032 = vcmp.eq.s32.totalorder %v1890, 1
  %vm2033 = vcmp.eq.s32.totalorder %v1893, 1
  %vm2034 = vcmp.eq.s32.totalorder %v1896, 1
  %vm2035 = vcmp.eq.s32.totalorder %v1899, 1
  %vm2036 = vcmp.eq.s32.totalorder %v1902, 1
  %vm2037 = vcmp.eq.s32.totalorder %v1905, 1
  %vm2038 = vcmp.eq.s32.totalorder %v1908, 1
  %vm2039 = vcmp.eq.s32.totalorder %v1911, 1
  %vm2040 = vcmp.eq.s32.totalorder %v1914, 1
  %vm2041 = vcmp.eq.s32.totalorder %v1917, 1
  %vm2042 = vcmp.eq.s32.totalorder %v1920, 1
  %vm2043 = vcmp.eq.s32.totalorder %v1923, 1
  %vm2044 = vcmp.eq.s32.totalorder %v1926, 1
  %vm2045 = vcmp.eq.s32.totalorder %v1929, 1
  %vm2046 = vcmp.eq.s32.totalorder %v1932, 1
  %vm2047 = vcmp.eq.s32.totalorder %v1935, 1
  %vm2048 = vcmp.eq.s32.totalorder %v1938, 1
  %vm2049 = vcmp.eq.s32.totalorder %v1941, 1
  %vm2050 = vcmp.eq.s32.totalorder %v1944, 1
  %vm2051 = vcmp.eq.s32.totalorder %v1947, 1
  %vm2052 = vcmp.eq.s32.totalorder %v1950, 1
  %vm2053 = vcmp.eq.s32.totalorder %v1953, 1
  %vm2054 = vcmp.eq.s32.totalorder %v1956, 1
  %vm2055 = vcmp.eq.s32.totalorder %v1959, 1
  %vm2056 = vcmp.eq.s32.totalorder %v1962, 1
  %vm2057 = vcmp.eq.s32.totalorder %v1965, 1
  %vm2058 = vcmp.eq.s32.totalorder %v1968, 1
  %vm2059 = vcmp.eq.s32.totalorder %v1971, 1
  %vm2060 = vcmp.eq.s32.totalorder %v1974, 1
  %vm2061 = vcmp.eq.s32.totalorder %v1977, 1
  %vm2062 = vcmp.eq.s32.totalorder %v1980, 1
  %vm2063 = vcmp.eq.s32.totalorder %v1983, 1
  %vm2064 = vcmp.eq.s32.totalorder %v1986, 1
  %vm2065 = vcmp.eq.s32.totalorder %v1989, 1
  %vm2066 = vcmp.eq.s32.totalorder %v1992, 1
  %vm2067 = vcmp.eq.s32.totalorder %v1995, 1
  %vm2068 = vcmp.eq.s32.totalorder %v1998, 1
  %vm2069 = vcmp.eq.s32.totalorder %v2001, 1
  %vm2070 = vcmp.eq.s32.totalorder %v2004, 1
  %vm2071 = vcmp.eq.s32.totalorder %v2007, 1
  %v2072 = vsel %vm2008, %v1113, 0.0
  %v2073 = vsel %vm2009, %v1112, 0.0
  %v2074 = vsel %vm2010, %v1175, 0.0
  %v2075 = vsel %vm2011, %v1174, 0.0
  %v2076 = vsel %vm2012, %v1173, 0.0
  %v2077 = vsel %vm2013, %v1172, 0.0
  %v2078 = vsel %vm2014, %v1171, 0.0
  %v2079 = vsel %vm2015, %v1170, 0.0
  %v2080 = vsel %vm2016, %v1169, 0.0
  %v2081 = vsel %vm2017, %v1168, 0.0
  %v2082 = vsel %vm2018, %v1167, 0.0
  %v2083 = vsel %vm2019, %v1166, 0.0
  %v2084 = vsel %vm2020, %v1165, 0.0
  %v2085 = vsel %vm2021, %v1164, 0.0
  %v2086 = vsel %vm2022, %v1163, 0.0
  %v2087 = vsel %vm2023, %v1162, 0.0
  %v2088 = vsel %vm2024, %v1161, 0.0
  %v2089 = vsel %vm2025, %v1160, 0.0
  %v2090 = vsel %vm2026, %v1159, 0.0
  %v2091 = vsel %vm2027, %v1158, 0.0
  %v2092 = vsel %vm2028, %v1157, 0.0
  %v2093 = vsel %vm2029, %v1156, 0.0
  %v2094 = vsel %vm2030, %v1155, 0.0
  %v2095 = vsel %vm2031, %v1154, 0.0
  %v2096 = vsel %vm2032, %v1153, 0.0
  %v2097 = vsel %vm2033, %v1152, 0.0
  %v2098 = vsel %vm2034, %v1151, 0.0
  %v2099 = vsel %vm2035, %v1150, 0.0
  %v2100 = vsel %vm2036, %v1149, 0.0
  %v2101 = vsel %vm2037, %v1148, 0.0
  %v2102 = vsel %vm2038, %v1147, 0.0
  %v2103 = vsel %vm2039, %v1146, 0.0
  %v2104 = vsel %vm2040, %v1145, 0.0
  %v2105 = vsel %vm2041, %v1144, 0.0
  %v2106 = vsel %vm2042, %v1143, 0.0
  %v2107 = vsel %vm2043, %v1142, 0.0
  %v2108 = vsel %vm2044, %v1141, 0.0
  %v2109 = vsel %vm2045, %v1140, 0.0
  %v2110 = vsel %vm2046, %v1139, 0.0
  %v2111 = vsel %vm2047, %v1138, 0.0
  %v2112 = vsel %vm2048, %v1137, 0.0
  %v2113 = vsel %vm2049, %v1136, 0.0
  %v2114 = vsel %vm2050, %v1135, 0.0
  %v2115 = vsel %vm2051, %v1134, 0.0
  %v2116 = vsel %vm2052, %v1133, 0.0
  %v2117 = vsel %vm2053, %v1132, 0.0
  %v2118 = vsel %vm2054, %v1131, 0.0
  %v2119 = vsel %vm2055, %v1130, 0.0
  %v2120 = vsel %vm2056, %v1129, 0.0
  %v2121 = vsel %vm2057, %v1128, 0.0
  %v2122 = vsel %vm2058, %v1127, 0.0
  %v2123 = vsel %vm2059, %v1126, 0.0
  %v2124 = vsel %vm2060, %v1125, 0.0
  %v2125 = vsel %vm2061, %v1124, 0.0
  %v2126 = vsel %vm2062, %v1123, 0.0
  %v2127 = vsel %vm2063, %v1122, 0.0
  %v2128 = vsel %vm2064, %v1121, 0.0
  %v2129 = vsel %vm2065, %v1120, 0.0
  %v2130 = vsel %vm2066, %v1119, 0.0
  %v2131 = vsel %vm2067, %v1118, 0.0
  %v2132 = vsel %vm2068, %v1117, 0.0
  %v2133 = vsel %vm2069, %v1116, 0.0
  %v2134 = vsel %vm2070, %v1115, 0.0
  %v2135 = vsel %vm2071, %v1114, 0.0
  %v2136 = vld [vmem:[%s5] sm:$0xff]
  %v2137 = vld [vmem:[%s5 + $0x8] sm:$0xff]
  %v2138 = vld [vmem:[%s5 + $0x10] sm:$0xff]
  %v2139 = vld [vmem:[%s5 + $0x18] sm:$0xff]
  %v2140 = vld [vmem:[%s5 + $0x20] sm:$0xff]
  %v2141 = vld [vmem:[%s5 + $0x28] sm:$0xff]
  %v2142 = vld [vmem:[%s5 + $0x30] sm:$0xff]
  %v2143 = vld [vmem:[%s5 + $0x38] sm:$0xff]
  %v2144 = vld [vmem:[%s5 + $0x40] sm:$0xff]
  %v2145 = vld [vmem:[%s5 + $0x48] sm:$0xff]
  %v2146 = vld [vmem:[%s5 + $0x50] sm:$0xff]
  %v2147 = vld [vmem:[%s5 + $0x58] sm:$0xff]
  %v2148 = vld [vmem:[%s5 + $0x60] sm:$0xff]
  %v2149 = vld [vmem:[%s5 + $0x68] sm:$0xff]
  %v2150 = vld [vmem:[%s5 + $0x70] sm:$0xff]
  %v2151 = vld [vmem:[%s5 + $0x78] sm:$0xff]
  %vm2152 = vcmp.ge.s32.totalorder %v917, 0
  %vm2153 = vcmp.ge.s32.totalorder %v918, 0
  %vm2154 = vcmp.ge.s32.totalorder %v919, 0
  %vm2155 = vcmp.ge.s32.totalorder %v920, 0
  %vm2156 = vcmp.ge.s32.totalorder %v921, 0
  %vm2157 = vcmp.ge.s32.totalorder %v922, 0
  %vm2158 = vcmp.ge.s32.totalorder %v923, 0
  %vm2159 = vcmp.ge.s32.totalorder %v924, 0
  %vm2160 = vcmp.ge.s32.totalorder %v925, 0
  %vm2161 = vcmp.ge.s32.totalorder %v926, 0
  %vm2162 = vcmp.ge.s32.totalorder %v927, 0
  %vm2163 = vcmp.ge.s32.totalorder %v928, 0
  %vm2164 = vcmp.ge.s32.totalorder %v929, 0
  %vm2165 = vcmp.ge.s32.totalorder %v930, 0
  %vm2166 = vcmp.ge.s32.totalorder %v931, 0
  %vm2167 = vcmp.ge.s32.totalorder %v932, 0
  %vm2168 = vcmp.ge.s32.totalorder %v933, 0
  %vm2169 = vcmp.ge.s32.totalorder %v934, 0
  %vm2170 = vcmp.ge.s32.totalorder %v935, 0
  %vm2171 = vcmp.ge.s32.totalorder %v936, 0
  %vm2172 = vcmp.ge.s32.totalorder %v937, 0
  %vm2173 = vcmp.ge.s32.totalorder %v938, 0
  %vm2174 = vcmp.ge.s32.totalorder %v939, 0
  %vm2175 = vcmp.ge.s32.totalorder %v940, 0
  %vm2176 = vcmp.ge.s32.totalorder %v941, 0
  %vm2177 = vcmp.ge.s32.totalorder %v942, 0
  %vm2178 = vcmp.ge.s32.totalorder %v943, 0
  %vm2179 = vcmp.ge.s32.totalorder %v944, 0
  %vm2180 = vcmp.ge.s32.totalorder %v945, 0
  %vm2181 = vcmp.ge.s32.totalorder %v946, 0
  %vm2182 = vcmp.ge.s32.totalorder %v947, 0
  %vm2183 = vcmp.ge.s32.totalorder %v948, 0
  %vm2184 = vcmp.ge.s32.totalorder %v949, 0
  %vm2185 = vcmp.ge.s32.totalorder %v950, 0
  %vm2186 = vcmp.ge.s32.totalorder %v951, 0
  %vm2187 = vcmp.ge.s32.totalorder %v952, 0
  %vm2188 = vcmp.ge.s32.totalorder %v953, 0
  %vm2189 = vcmp.ge.s32.totalorder %v954, 0
  %vm2190 = vcmp.ge.s32.totalorder %v955, 0
  %vm2191 = vcmp.ge.s32.totalorder %v956, 0
  %vm2192 = vcmp.ge.s32.totalorder %v957, 0
  %vm2193 = vcmp.ge.s32.totalorder %v958, 0
  %vm2194 = vcmp.ge.s32.totalorder %v959, 0
  %vm2195 = vcmp.ge.s32.totalorder %v960, 0
  %vm2196 = vcmp.ge.s32.totalorder %v961, 0
  %vm2197 = vcmp.ge.s32.totalorder %v962, 0
  %vm2198 = vcmp.ge.s32.totalorder %v963, 0
  %vm2199 = vcmp.ge.s32.totalorder %v964, 0
  %vm2200 = vcmp.ge.s32.totalorder %v965, 0
  %vm2201 = vcmp.ge.s32.totalorder %v966, 0
  %vm2202 = vcmp.ge.s32.totalorder %v967, 0
  %vm2203 = vcmp.ge.s32.totalorder %v968, 0
  %vm2204 = vcmp.ge.s32.totalorder %v969, 0
  %vm2205 = vcmp.ge.s32.totalorder %v970, 0
  %vm2206 = vcmp.ge.s32.totalorder %v971, 0
  %vm2207 = vcmp.ge.s32.totalorder %v972, 0
  %vm2208 = vcmp.ge.s32.totalorder %v973, 0
  %vm2209 = vcmp.ge.s32.totalorder %v974, 0
  %vm2210 = vcmp.ge.s32.totalorder %v975, 0
  %vm2211 = vcmp.ge.s32.totalorder %v976, 0
  %vm2212 = vcmp.ge.s32.totalorder %v977, 0
  %vm2213 = vcmp.ge.s32.totalorder %v978, 0
  %vm2214 = vcmp.ge.s32.totalorder %v979, 0
  %vm2215 = vcmp.ge.s32.totalorder %v980, 0
  %vm2216 = vcmp.lt.s32.totalorder %v917, 16
  %vm2217 = vcmp.lt.s32.totalorder %v918, 16
  %vm2218 = vcmp.lt.s32.totalorder %v919, 16
  %vm2219 = vcmp.lt.s32.totalorder %v920, 16
  %vm2220 = vcmp.lt.s32.totalorder %v921, 16
  %vm2221 = vcmp.lt.s32.totalorder %v922, 16
  %vm2222 = vcmp.lt.s32.totalorder %v923, 16
  %vm2223 = vcmp.lt.s32.totalorder %v924, 16
  %vm2224 = vcmp.lt.s32.totalorder %v925, 16
  %vm2225 = vcmp.lt.s32.totalorder %v926, 16
  %vm2226 = vcmp.lt.s32.totalorder %v927, 16
  %vm2227 = vcmp.lt.s32.totalorder %v928, 16
  %vm2228 = vcmp.lt.s32.totalorder %v929, 16
  %vm2229 = vcmp.lt.s32.totalorder %v930, 16
  %vm2230 = vcmp.lt.s32.totalorder %v931, 16
  %vm2231 = vcmp.lt.s32.totalorder %v932, 16
  %vm2232 = vcmp.lt.s32.totalorder %v933, 16
  %vm2233 = vcmp.lt.s32.totalorder %v934, 16
  %vm2234 = vcmp.lt.s32.totalorder %v935, 16
  %vm2235 = vcmp.lt.s32.totalorder %v936, 16
  %vm2236 = vcmp.lt.s32.totalorder %v937, 16
  %vm2237 = vcmp.lt.s32.totalorder %v938, 16
  %vm2238 = vcmp.lt.s32.totalorder %v939, 16
  %vm2239 = vcmp.lt.s32.totalorder %v940, 16
  %vm2240 = vcmp.lt.s32.totalorder %v941, 16
  %vm2241 = vcmp.lt.s32.totalorder %v942, 16
  %vm2242 = vcmp.lt.s32.totalorder %v943, 16
  %vm2243 = vcmp.lt.s32.totalorder %v944, 16
  %vm2244 = vcmp.lt.s32.totalorder %v945, 16
  %vm2245 = vcmp.lt.s32.totalorder %v946, 16
  %vm2246 = vcmp.lt.s32.totalorder %v947, 16
  %vm2247 = vcmp.lt.s32.totalorder %v948, 16
  %vm2248 = vcmp.lt.s32.totalorder %v949, 16
  %vm2249 = vcmp.lt.s32.totalorder %v950, 16
  %vm2250 = vcmp.lt.s32.totalorder %v951, 16
  %vm2251 = vcmp.lt.s32.totalorder %v952, 16
  %vm2252 = vcmp.lt.s32.totalorder %v953, 16
  %vm2253 = vcmp.lt.s32.totalorder %v954, 16
  %vm2254 = vcmp.lt.s32.totalorder %v955, 16
  %vm2255 = vcmp.lt.s32.totalorder %v956, 16
  %vm2256 = vcmp.lt.s32.totalorder %v957, 16
  %vm2257 = vcmp.lt.s32.totalorder %v958, 16
  %vm2258 = vcmp.lt.s32.totalorder %v959, 16
  %vm2259 = vcmp.lt.s32.totalorder %v960, 16
  %vm2260 = vcmp.lt.s32.totalorder %v961, 16
  %vm2261 = vcmp.lt.s32.totalorder %v962, 16
  %vm2262 = vcmp.lt.s32.totalorder %v963, 16
  %vm2263 = vcmp.lt.s32.totalorder %v964, 16
  %vm2264 = vcmp.lt.s32.totalorder %v965, 16
  %vm2265 = vcmp.lt.s32.totalorder %v966, 16
  %vm2266 = vcmp.lt.s32.totalorder %v967, 16
  %vm2267 = vcmp.lt.s32.totalorder %v968, 16
  %vm2268 = vcmp.lt.s32.totalorder %v969, 16
  %vm2269 = vcmp.lt.s32.totalorder %v970, 16
  %vm2270 = vcmp.lt.s32.totalorder %v971, 16
  %vm2271 = vcmp.lt.s32.totalorder %v972, 16
  %vm2272 = vcmp.lt.s32.totalorder %v973, 16
  %vm2273 = vcmp.lt.s32.totalorder %v974, 16
  %vm2274 = vcmp.lt.s32.totalorder %v975, 16
  %vm2275 = vcmp.lt.s32.totalorder %v976, 16
  %vm2276 = vcmp.lt.s32.totalorder %v977, 16
  %vm2277 = vcmp.lt.s32.totalorder %v978, 16
  %vm2278 = vcmp.lt.s32.totalorder %v979, 16
  %vm2279 = vcmp.lt.s32.totalorder %v980, 16
  %vm2280 = vmand %vm2152, %vm2216
  %vm2281 = vmand %vm2153, %vm2217
  %vm2282 = vmand %vm2154, %vm2218
  %vm2283 = vmand %vm2155, %vm2219
  %vm2284 = vmand %vm2156, %vm2220
  %vm2285 = vmand %vm2157, %vm2221
  %vm2286 = vmand %vm2158, %vm2222
  %vm2287 = vmand %vm2159, %vm2223
  %vm2288 = vmand %vm2160, %vm2224
  %vm2289 = vmand %vm2161, %vm2225
  %vm2290 = vmand %vm2162, %vm2226
  %vm2291 = vmand %vm2163, %vm2227
  %vm2292 = vmand %vm2164, %vm2228
  %vm2293 = vmand %vm2165, %vm2229
  %vm2294 = vmand %vm2166, %vm2230
  %vm2295 = vmand %vm2167, %vm2231
  %vm2296 = vmand %vm2168, %vm2232
  %vm2297 = vmand %vm2169, %vm2233
  %vm2298 = vmand %vm2170, %vm2234
  %vm2299 = vmand %vm2171, %vm2235
  %vm2300 = vmand %vm2172, %vm2236
  %vm2301 = vmand %vm2173, %vm2237
  %vm2302 = vmand %vm2174, %vm2238
  %vm2303 = vmand %vm2175, %vm2239
  %vm2304 = vmand %vm2176, %vm2240
  %vm2305 = vmand %vm2177, %vm2241
  %vm2306 = vmand %vm2178, %vm2242
  %vm2307 = vmand %vm2179, %vm2243
  %vm2308 = vmand %vm2180, %vm2244
  %vm2309 = vmand %vm2181, %vm2245
  %vm2310 = vmand %vm2182, %vm2246
  %vm2311 = vmand %vm2183, %vm2247
  %vm2312 = vmand %vm2184, %vm2248
  %vm2313 = vmand %vm2185, %vm2249
  %vm2314 = vmand %vm2186, %vm2250
  %vm2315 = vmand %vm2187, %vm2251
  %vm2316 = vmand %vm2188, %vm2252
  %vm2317 = vmand %vm2189, %vm2253
  %vm2318 = vmand %vm2190, %vm2254
  %vm2319 = vmand %vm2191, %vm2255
  %vm2320 = vmand %vm2192, %vm2256
  %vm2321 = vmand %vm2193, %vm2257
  %vm2322 = vmand %vm2194, %vm2258
  %vm2323 = vmand %vm2195, %vm2259
  %vm2324 = vmand %vm2196, %vm2260
  %vm2325 = vmand %vm2197, %vm2261
  %vm2326 = vmand %vm2198, %vm2262
  %vm2327 = vmand %vm2199, %vm2263
  %vm2328 = vmand %vm2200, %vm2264
  %vm2329 = vmand %vm2201, %vm2265
  %vm2330 = vmand %vm2202, %vm2266
  %vm2331 = vmand %vm2203, %vm2267
  %vm2332 = vmand %vm2204, %vm2268
  %vm2333 = vmand %vm2205, %vm2269
  %vm2334 = vmand %vm2206, %vm2270
  %vm2335 = vmand %vm2207, %vm2271
  %vm2336 = vmand %vm2208, %vm2272
  %vm2337 = vmand %vm2209, %vm2273
  %vm2338 = vmand %vm2210, %vm2274
  %vm2339 = vmand %vm2211, %vm2275
  %vm2340 = vmand %vm2212, %vm2276
  %vm2341 = vmand %vm2213, %vm2277
  %vm2342 = vmand %vm2214, %vm2278
  %vm2343 = vmand %vm2215, %vm2279
  %vm2344 = vmand %vm2280, %vm1496
  %vm2345 = vmand %vm2281, %vm1497
  %vm2346 = vmand %vm2282, %vm1498
  %vm2347 = vmand %vm2283, %vm1499
  %vm2348 = vmand %vm2284, %vm1500
  %vm2349 = vmand %vm2285, %vm1501
  %vm2350 = vmand %vm2286, %vm1502
  %vm2351 = vmand %vm2287, %vm1503
  %vm2352 = vmand %vm2288, %vm1504
  %vm2353 = vmand %vm2289, %vm1505
  %vm2354 = vmand %vm2290, %vm1506
  %vm2355 = vmand %vm2291, %vm1507
  %vm2356 = vmand %vm2292, %vm1508
  %vm2357 = vmand %vm2293, %vm1509
  %vm2358 = vmand %vm2294, %vm1510
  %vm2359 = vmand %vm2295, %vm1511
  %vm2360 = vmand %vm2296, %vm1512
  %vm2361 = vmand %vm2297, %vm1513
  %vm2362 = vmand %vm2298, %vm1514
  %vm2363 = vmand %vm2299, %vm1515
  %vm2364 = vmand %vm2300, %vm1516
  %vm2365 = vmand %vm2301, %vm1517
  %vm2366 = vmand %vm2302, %vm1518
  %vm2367 = vmand %vm2303, %vm1519
  %vm2368 = vmand %vm2304, %vm1520
  %vm2369 = vmand %vm2305, %vm1521
  %vm2370 = vmand %vm2306, %vm1522
  %vm2371 = vmand %vm2307, %vm1523
  %vm2372 = vmand %vm2308, %vm1524
  %vm2373 = vmand %vm2309, %vm1525
  %vm2374 = vmand %vm2310, %vm1526
  %vm2375 = vmand %vm2311, %vm1527
  %vm2376 = vmand %vm2312, %vm1528
  %vm2377 = vmand %vm2313, %vm1529
  %vm2378 = vmand %vm2314, %vm1530
  %vm2379 = vmand %vm2315, %vm1531
  %vm2380 = vmand %vm2316, %vm1532
  %vm2381 = vmand %vm2317, %vm1533
  %vm2382 = vmand %vm2318, %vm1534
  %vm2383 = vmand %vm2319, %vm1535
  %vm2384 = vmand %vm2320, %vm1536
  %vm2385 = vmand %vm2321, %vm1537
  %vm2386 = vmand %vm2322, %vm1538
  %vm2387 = vmand %vm2323, %vm1539
  %vm2388 = vmand %vm2324, %vm1540
  %vm2389 = vmand %vm2325, %vm1541
  %vm2390 = vmand %vm2326, %vm1542
  %vm2391 = vmand %vm2327, %vm1543
  %vm2392 = vmand %vm2328, %vm1544
  %vm2393 = vmand %vm2329, %vm1545
  %vm2394 = vmand %vm2330, %vm1546
  %vm2395 = vmand %vm2331, %vm1547
  %vm2396 = vmand %vm2332, %vm1548
  %vm2397 = vmand %vm2333, %vm1549
  %vm2398 = vmand %vm2334, %vm1550
  %vm2399 = vmand %vm2335, %vm1551
  %vm2400 = vmand %vm2336, %vm1552
  %vm2401 = vmand %vm2337, %vm1553
  %vm2402 = vmand %vm2338, %vm1554
  %vm2403 = vmand %vm2339, %vm1555
  %vm2404 = vmand %vm2340, %vm1556
  %vm2405 = vmand %vm2341, %vm1557
  %vm2406 = vmand %vm2342, %vm1558
  %vm2407 = vmand %vm2343, %vm1559
  %vm2408 = vmand %vm2344, %vm1624
  %vm2409 = vmand %vm2345, %vm1625
  %vm2410 = vmand %vm2346, %vm1626
  %vm2411 = vmand %vm2347, %vm1627
  %vm2412 = vmand %vm2348, %vm1628
  %vm2413 = vmand %vm2349, %vm1629
  %vm2414 = vmand %vm2350, %vm1630
  %vm2415 = vmand %vm2351, %vm1631
  %vm2416 = vmand %vm2352, %vm1632
  %vm2417 = vmand %vm2353, %vm1633
  %vm2418 = vmand %vm2354, %vm1634
  %vm2419 = vmand %vm2355, %vm1635
  %vm2420 = vmand %vm2356, %vm1636
  %vm2421 = vmand %vm2357, %vm1637
  %vm2422 = vmand %vm2358, %vm1638
  %vm2423 = vmand %vm2359, %vm1639
  %vm2424 = vmand %vm2360, %vm1640
  %vm2425 = vmand %vm2361, %vm1641
  %vm2426 = vmand %vm2362, %vm1642
  %vm2427 = vmand %vm2363, %vm1643
  %vm2428 = vmand %vm2364, %vm1644
  %vm2429 = vmand %vm2365, %vm1645
  %vm2430 = vmand %vm2366, %vm1646
  %vm2431 = vmand %vm2367, %vm1647
  %vm2432 = vmand %vm2368, %vm1648
  %vm2433 = vmand %vm2369, %vm1649
  %vm2434 = vmand %vm2370, %vm1650
  %vm2435 = vmand %vm2371, %vm1651
  %vm2436 = vmand %vm2372, %vm1652
  %vm2437 = vmand %vm2373, %vm1653
  %vm2438 = vmand %vm2374, %vm1654
  %vm2439 = vmand %vm2375, %vm1655
  %vm2440 = vmand %vm2376, %vm1656
  %vm2441 = vmand %vm2377, %vm1657
  %vm2442 = vmand %vm2378, %vm1658
  %vm2443 = vmand %vm2379, %vm1659
  %vm2444 = vmand %vm2380, %vm1660
  %vm2445 = vmand %vm2381, %vm1661
  %vm2446 = vmand %vm2382, %vm1662
  %vm2447 = vmand %vm2383, %vm1663
  %vm2448 = vmand %vm2384, %vm1664
  %vm2449 = vmand %vm2385, %vm1665
  %vm2450 = vmand %vm2386, %vm1666
  %vm2451 = vmand %vm2387, %vm1667
  %vm2452 = vmand %vm2388, %vm1668
  %vm2453 = vmand %vm2389, %vm1669
  %vm2454 = vmand %vm2390, %vm1670
  %vm2455 = vmand %vm2391, %vm1671
  %vm2456 = vmand %vm2392, %vm1672
  %vm2457 = vmand %vm2393, %vm1673
  %vm2458 = vmand %vm2394, %vm1674
  %vm2459 = vmand %vm2395, %vm1675
  %vm2460 = vmand %vm2396, %vm1676
  %vm2461 = vmand %vm2397, %vm1677
  %vm2462 = vmand %vm2398, %vm1678
  %vm2463 = vmand %vm2399, %vm1679
  %vm2464 = vmand %vm2400, %vm1680
  %vm2465 = vmand %vm2401, %vm1681
  %vm2466 = vmand %vm2402, %vm1682
  %vm2467 = vmand %vm2403, %vm1683
  %vm2468 = vmand %vm2404, %vm1684
  %vm2469 = vmand %vm2405, %vm1685
  %vm2470 = vmand %vm2406, %vm1686
  %vm2471 = vmand %vm2407, %vm1687
  %v2472 = vsel %vm2408, 1, 0
  %v2473 = vsel %vm2409, 1, 0
  %v2474 = vsel %vm2410, 1, 0
  %v2475 = vsel %vm2411, 1, 0
  %v2476 = vsel %vm2412, 1, 0
  %v2477 = vsel %vm2413, 1, 0
  %v2478 = vsel %vm2414, 1, 0
  %v2479 = vsel %vm2415, 1, 0
  %v2480 = vsel %vm2416, 1, 0
  %v2481 = vsel %vm2417, 1, 0
  %v2482 = vsel %vm2418, 1, 0
  %v2483 = vsel %vm2419, 1, 0
  %v2484 = vsel %vm2420, 1, 0
  %v2485 = vsel %vm2421, 1, 0
  %v2486 = vsel %vm2422, 1, 0
  %v2487 = vsel %vm2423, 1, 0
  %v2488 = vsel %vm2424, 1, 0
  %v2489 = vsel %vm2425, 1, 0
  %v2490 = vsel %vm2426, 1, 0
  %v2491 = vsel %vm2427, 1, 0
  %v2492 = vsel %vm2428, 1, 0
  %v2493 = vsel %vm2429, 1, 0
  %v2494 = vsel %vm2430, 1, 0
  %v2495 = vsel %vm2431, 1, 0
  %v2496 = vsel %vm2432, 1, 0
  %v2497 = vsel %vm2433, 1, 0
  %v2498 = vsel %vm2434, 1, 0
  %v2499 = vsel %vm2435, 1, 0
  %v2500 = vsel %vm2436, 1, 0
  %v2501 = vsel %vm2437, 1, 0
  %v2502 = vsel %vm2438, 1, 0
  %v2503 = vsel %vm2439, 1, 0
  %v2504 = vsel %vm2440, 1, 0
  %v2505 = vsel %vm2441, 1, 0
  %v2506 = vsel %vm2442, 1, 0
  %v2507 = vsel %vm2443, 1, 0
  %v2508 = vsel %vm2444, 1, 0
  %v2509 = vsel %vm2445, 1, 0
  %v2510 = vsel %vm2446, 1, 0
  %v2511 = vsel %vm2447, 1, 0
  %v2512 = vsel %vm2448, 1, 0
  %v2513 = vsel %vm2449, 1, 0
  %v2514 = vsel %vm2450, 1, 0
  %v2515 = vsel %vm2451, 1, 0
  %v2516 = vsel %vm2452, 1, 0
  %v2517 = vsel %vm2453, 1, 0
  %v2518 = vsel %vm2454, 1, 0
  %v2519 = vsel %vm2455, 1, 0
  %v2520 = vsel %vm2456, 1, 0
  %v2521 = vsel %vm2457, 1, 0
  %v2522 = vsel %vm2458, 1, 0
  %v2523 = vsel %vm2459, 1, 0
  %v2524 = vsel %vm2460, 1, 0
  %v2525 = vsel %vm2461, 1, 0
  %v2526 = vsel %vm2462, 1, 0
  %v2527 = vsel %vm2463, 1, 0
  %v2528 = vsel %vm2464, 1, 0
  %v2529 = vsel %vm2465, 1, 0
  %v2530 = vsel %vm2466, 1, 0
  %v2531 = vsel %vm2467, 1, 0
  %v2532 = vsel %vm2468, 1, 0
  %v2533 = vsel %vm2469, 1, 0
  %v2534 = vsel %vm2470, 1, 0
  %v2535 = vsel %vm2471, 1, 0
  %2536 = vset.pattern.permute.xlu0 0
  %2537 = vperm.xlu0 %2536, %v2472
  %v2538 = vpop.permute.xlu0 %2537
  %2539 = vset.pattern.permute.xlu0 0
  %2540 = vperm.xlu0 %2539, %v2473
  %v2541 = vpop.permute.xlu0 %2540
  %2542 = vset.pattern.permute.xlu0 0
  %2543 = vperm.xlu0 %2542, %v2474
  %v2544 = vpop.permute.xlu0 %2543
  %2545 = vset.pattern.permute.xlu0 0
  %2546 = vperm.xlu0 %2545, %v2475
  %v2547 = vpop.permute.xlu0 %2546
  %2548 = vset.pattern.permute.xlu0 0
  %2549 = vperm.xlu0 %2548, %v2476
  %v2550 = vpop.permute.xlu0 %2549
  %2551 = vset.pattern.permute.xlu0 0
  %2552 = vperm.xlu0 %2551, %v2477
  %v2553 = vpop.permute.xlu0 %2552
  %2554 = vset.pattern.permute.xlu0 0
  %2555 = vperm.xlu0 %2554, %v2478
  %v2556 = vpop.permute.xlu0 %2555
  %2557 = vset.pattern.permute.xlu0 0
  %2558 = vperm.xlu0 %2557, %v2479
  %v2559 = vpop.permute.xlu0 %2558
  %2560 = vset.pattern.permute.xlu0 0
  %2561 = vperm.xlu0 %2560, %v2480
  %v2562 = vpop.permute.xlu0 %2561
  %2563 = vset.pattern.permute.xlu0 0
  %2564 = vperm.xlu0 %2563, %v2481
  %v2565 = vpop.permute.xlu0 %2564
  %2566 = vset.pattern.permute.xlu0 0
  %2567 = vperm.xlu0 %2566, %v2482
  %v2568 = vpop.permute.xlu0 %2567
  %2569 = vset.pattern.permute.xlu0 0
  %2570 = vperm.xlu0 %2569, %v2483
  %v2571 = vpop.permute.xlu0 %2570
  %2572 = vset.pattern.permute.xlu0 0
  %2573 = vperm.xlu0 %2572, %v2484
  %v2574 = vpop.permute.xlu0 %2573
  %2575 = vset.pattern.permute.xlu0 0
  %2576 = vperm.xlu0 %2575, %v2485
  %v2577 = vpop.permute.xlu0 %2576
  %2578 = vset.pattern.permute.xlu0 0
  %2579 = vperm.xlu0 %2578, %v2486
  %v2580 = vpop.permute.xlu0 %2579
  %2581 = vset.pattern.permute.xlu0 0
  %2582 = vperm.xlu0 %2581, %v2487
  %v2583 = vpop.permute.xlu0 %2582
  %2584 = vset.pattern.permute.xlu0 0
  %2585 = vperm.xlu0 %2584, %v2488
  %v2586 = vpop.permute.xlu0 %2585
  %2587 = vset.pattern.permute.xlu0 0
  %2588 = vperm.xlu0 %2587, %v2489
  %v2589 = vpop.permute.xlu0 %2588
  %2590 = vset.pattern.permute.xlu0 0
  %2591 = vperm.xlu0 %2590, %v2490
  %v2592 = vpop.permute.xlu0 %2591
  %2593 = vset.pattern.permute.xlu0 0
  %2594 = vperm.xlu0 %2593, %v2491
  %v2595 = vpop.permute.xlu0 %2594
  %2596 = vset.pattern.permute.xlu0 0
  %2597 = vperm.xlu0 %2596, %v2492
  %v2598 = vpop.permute.xlu0 %2597
  %2599 = vset.pattern.permute.xlu0 0
  %2600 = vperm.xlu0 %2599, %v2493
  %v2601 = vpop.permute.xlu0 %2600
  %2602 = vset.pattern.permute.xlu0 0
  %2603 = vperm.xlu0 %2602, %v2494
  %v2604 = vpop.permute.xlu0 %2603
  %2605 = vset.pattern.permute.xlu0 0
  %2606 = vperm.xlu0 %2605, %v2495
  %v2607 = vpop.permute.xlu0 %2606
  %2608 = vset.pattern.permute.xlu0 0
  %2609 = vperm.xlu0 %2608, %v2496
  %v2610 = vpop.permute.xlu0 %2609
  %2611 = vset.pattern.permute.xlu0 0
  %2612 = vperm.xlu0 %2611, %v2497
  %v2613 = vpop.permute.xlu0 %2612
  %2614 = vset.pattern.permute.xlu0 0
  %2615 = vperm.xlu0 %2614, %v2498
  %v2616 = vpop.permute.xlu0 %2615
  %2617 = vset.pattern.permute.xlu0 0
  %2618 = vperm.xlu0 %2617, %v2499
  %v2619 = vpop.permute.xlu0 %2618
  %2620 = vset.pattern.permute.xlu0 0
  %2621 = vperm.xlu0 %2620, %v2500
  %v2622 = vpop.permute.xlu0 %2621
  %2623 = vset.pattern.permute.xlu0 0
  %2624 = vperm.xlu0 %2623, %v2501
  %v2625 = vpop.permute.xlu0 %2624
  %2626 = vset.pattern.permute.xlu0 0
  %2627 = vperm.xlu0 %2626, %v2502
  %v2628 = vpop.permute.xlu0 %2627
  %2629 = vset.pattern.permute.xlu0 0
  %2630 = vperm.xlu0 %2629, %v2503
  %v2631 = vpop.permute.xlu0 %2630
  %2632 = vset.pattern.permute.xlu0 0
  %2633 = vperm.xlu0 %2632, %v2504
  %v2634 = vpop.permute.xlu0 %2633
  %2635 = vset.pattern.permute.xlu0 0
  %2636 = vperm.xlu0 %2635, %v2505
  %v2637 = vpop.permute.xlu0 %2636
  %2638 = vset.pattern.permute.xlu0 0
  %2639 = vperm.xlu0 %2638, %v2506
  %v2640 = vpop.permute.xlu0 %2639
  %2641 = vset.pattern.permute.xlu0 0
  %2642 = vperm.xlu0 %2641, %v2507
  %v2643 = vpop.permute.xlu0 %2642
  %2644 = vset.pattern.permute.xlu0 0
  %2645 = vperm.xlu0 %2644, %v2508
  %v2646 = vpop.permute.xlu0 %2645
  %2647 = vset.pattern.permute.xlu0 0
  %2648 = vperm.xlu0 %2647, %v2509
  %v2649 = vpop.permute.xlu0 %2648
  %2650 = vset.pattern.permute.xlu0 0
  %2651 = vperm.xlu0 %2650, %v2510
  %v2652 = vpop.permute.xlu0 %2651
  %2653 = vset.pattern.permute.xlu0 0
  %2654 = vperm.xlu0 %2653, %v2511
  %v2655 = vpop.permute.xlu0 %2654
  %2656 = vset.pattern.permute.xlu0 0
  %2657 = vperm.xlu0 %2656, %v2512
  %v2658 = vpop.permute.xlu0 %2657
  %2659 = vset.pattern.permute.xlu0 0
  %2660 = vperm.xlu0 %2659, %v2513
  %v2661 = vpop.permute.xlu0 %2660
  %2662 = vset.pattern.permute.xlu0 0
  %2663 = vperm.xlu0 %2662, %v2514
  %v2664 = vpop.permute.xlu0 %2663
  %2665 = vset.pattern.permute.xlu0 0
  %2666 = vperm.xlu0 %2665, %v2515
  %v2667 = vpop.permute.xlu0 %2666
  %2668 = vset.pattern.permute.xlu0 0
  %2669 = vperm.xlu0 %2668, %v2516
  %v2670 = vpop.permute.xlu0 %2669
  %2671 = vset.pattern.permute.xlu0 0
  %2672 = vperm.xlu0 %2671, %v2517
  %v2673 = vpop.permute.xlu0 %2672
  %2674 = vset.pattern.permute.xlu0 0
  %2675 = vperm.xlu0 %2674, %v2518
  %v2676 = vpop.permute.xlu0 %2675
  %2677 = vset.pattern.permute.xlu0 0
  %2678 = vperm.xlu0 %2677, %v2519
  %v2679 = vpop.permute.xlu0 %2678
  %2680 = vset.pattern.permute.xlu0 0
  %2681 = vperm.xlu0 %2680, %v2520
  %v2682 = vpop.permute.xlu0 %2681
  %2683 = vset.pattern.permute.xlu0 0
  %2684 = vperm.xlu0 %2683, %v2521
  %v2685 = vpop.permute.xlu0 %2684
  %2686 = vset.pattern.permute.xlu0 0
  %2687 = vperm.xlu0 %2686, %v2522
  %v2688 = vpop.permute.xlu0 %2687
  %2689 = vset.pattern.permute.xlu0 0
  %2690 = vperm.xlu0 %2689, %v2523
  %v2691 = vpop.permute.xlu0 %2690
  %2692 = vset.pattern.permute.xlu0 0
  %2693 = vperm.xlu0 %2692, %v2524
  %v2694 = vpop.permute.xlu0 %2693
  %2695 = vset.pattern.permute.xlu0 0
  %2696 = vperm.xlu0 %2695, %v2525
  %v2697 = vpop.permute.xlu0 %2696
  %2698 = vset.pattern.permute.xlu0 0
  %2699 = vperm.xlu0 %2698, %v2526
  %v2700 = vpop.permute.xlu0 %2699
  %2701 = vset.pattern.permute.xlu0 0
  %2702 = vperm.xlu0 %2701, %v2527
  %v2703 = vpop.permute.xlu0 %2702
  %2704 = vset.pattern.permute.xlu0 0
  %2705 = vperm.xlu0 %2704, %v2528
  %v2706 = vpop.permute.xlu0 %2705
  %2707 = vset.pattern.permute.xlu0 0
  %2708 = vperm.xlu0 %2707, %v2529
  %v2709 = vpop.permute.xlu0 %2708
  %2710 = vset.pattern.permute.xlu0 0
  %2711 = vperm.xlu0 %2710, %v2530
  %v2712 = vpop.permute.xlu0 %2711
  %2713 = vset.pattern.permute.xlu0 0
  %2714 = vperm.xlu0 %2713, %v2531
  %v2715 = vpop.permute.xlu0 %2714
  %2716 = vset.pattern.permute.xlu0 0
  %2717 = vperm.xlu0 %2716, %v2532
  %v2718 = vpop.permute.xlu0 %2717
  %2719 = vset.pattern.permute.xlu0 0
  %2720 = vperm.xlu0 %2719, %v2533
  %v2721 = vpop.permute.xlu0 %2720
  %2722 = vset.pattern.permute.xlu0 0
  %2723 = vperm.xlu0 %2722, %v2534
  %v2724 = vpop.permute.xlu0 %2723
  %2725 = vset.pattern.permute.xlu0 0
  %2726 = vperm.xlu0 %2725, %v2535
  %v2727 = vpop.permute.xlu0 %2726
  %vm2728 = vcmp.eq.s32.totalorder %v2538, 1
  %vm2729 = vcmp.eq.s32.totalorder %v2541, 1
  %vm2730 = vcmp.eq.s32.totalorder %v2544, 1
  %vm2731 = vcmp.eq.s32.totalorder %v2547, 1
  %vm2732 = vcmp.eq.s32.totalorder %v2550, 1
  %vm2733 = vcmp.eq.s32.totalorder %v2553, 1
  %vm2734 = vcmp.eq.s32.totalorder %v2556, 1
  %vm2735 = vcmp.eq.s32.totalorder %v2559, 1
  %vm2736 = vcmp.eq.s32.totalorder %v2562, 1
  %vm2737 = vcmp.eq.s32.totalorder %v2565, 1
  %vm2738 = vcmp.eq.s32.totalorder %v2568, 1
  %vm2739 = vcmp.eq.s32.totalorder %v2571, 1
  %vm2740 = vcmp.eq.s32.totalorder %v2574, 1
  %vm2741 = vcmp.eq.s32.totalorder %v2577, 1
  %vm2742 = vcmp.eq.s32.totalorder %v2580, 1
  %vm2743 = vcmp.eq.s32.totalorder %v2583, 1
  %vm2744 = vcmp.eq.s32.totalorder %v2586, 1
  %vm2745 = vcmp.eq.s32.totalorder %v2589, 1
  %vm2746 = vcmp.eq.s32.totalorder %v2592, 1
  %vm2747 = vcmp.eq.s32.totalorder %v2595, 1
  %vm2748 = vcmp.eq.s32.totalorder %v2598, 1
  %vm2749 = vcmp.eq.s32.totalorder %v2601, 1
  %vm2750 = vcmp.eq.s32.totalorder %v2604, 1
  %vm2751 = vcmp.eq.s32.totalorder %v2607, 1
  %vm2752 = vcmp.eq.s32.totalorder %v2610, 1
  %vm2753 = vcmp.eq.s32.totalorder %v2613, 1
  %vm2754 = vcmp.eq.s32.totalorder %v2616, 1
  %vm2755 = vcmp.eq.s32.totalorder %v2619, 1
  %vm2756 = vcmp.eq.s32.totalorder %v2622, 1
  %vm2757 = vcmp.eq.s32.totalorder %v2625, 1
  %vm2758 = vcmp.eq.s32.totalorder %v2628, 1
  %vm2759 = vcmp.eq.s32.totalorder %v2631, 1
  %vm2760 = vcmp.eq.s32.totalorder %v2634, 1
  %vm2761 = vcmp.eq.s32.totalorder %v2637, 1
  %vm2762 = vcmp.eq.s32.totalorder %v2640, 1
  %vm2763 = vcmp.eq.s32.totalorder %v2643, 1
  %vm2764 = vcmp.eq.s32.totalorder %v2646, 1
  %vm2765 = vcmp.eq.s32.totalorder %v2649, 1
  %vm2766 = vcmp.eq.s32.totalorder %v2652, 1
  %vm2767 = vcmp.eq.s32.totalorder %v2655, 1
  %vm2768 = vcmp.eq.s32.totalorder %v2658, 1
  %vm2769 = vcmp.eq.s32.totalorder %v2661, 1
  %vm2770 = vcmp.eq.s32.totalorder %v2664, 1
  %vm2771 = vcmp.eq.s32.totalorder %v2667, 1
  %vm2772 = vcmp.eq.s32.totalorder %v2670, 1
  %vm2773 = vcmp.eq.s32.totalorder %v2673, 1
  %vm2774 = vcmp.eq.s32.totalorder %v2676, 1
  %vm2775 = vcmp.eq.s32.totalorder %v2679, 1
  %vm2776 = vcmp.eq.s32.totalorder %v2682, 1
  %vm2777 = vcmp.eq.s32.totalorder %v2685, 1
  %vm2778 = vcmp.eq.s32.totalorder %v2688, 1
  %vm2779 = vcmp.eq.s32.totalorder %v2691, 1
  %vm2780 = vcmp.eq.s32.totalorder %v2694, 1
  %vm2781 = vcmp.eq.s32.totalorder %v2697, 1
  %vm2782 = vcmp.eq.s32.totalorder %v2700, 1
  %vm2783 = vcmp.eq.s32.totalorder %v2703, 1
  %vm2784 = vcmp.eq.s32.totalorder %v2706, 1
  %vm2785 = vcmp.eq.s32.totalorder %v2709, 1
  %vm2786 = vcmp.eq.s32.totalorder %v2712, 1
  %vm2787 = vcmp.eq.s32.totalorder %v2715, 1
  %vm2788 = vcmp.eq.s32.totalorder %v2718, 1
  %vm2789 = vcmp.eq.s32.totalorder %v2721, 1
  %vm2790 = vcmp.eq.s32.totalorder %v2724, 1
  %vm2791 = vcmp.eq.s32.totalorder %v2727, 1
  %v2792 = vsel %vm2728, %v915, 0.0
  %v2793 = vsel %vm2729, %v916, 0.0
  %v2794 = vsel %vm2730, %v853, 0.0
  %v2795 = vsel %vm2731, %v854, 0.0
  %v2796 = vsel %vm2732, %v855, 0.0
  %v2797 = vsel %vm2733, %v856, 0.0
  %v2798 = vsel %vm2734, %v857, 0.0
  %v2799 = vsel %vm2735, %v858, 0.0
  %v2800 = vsel %vm2736, %v859, 0.0
  %v2801 = vsel %vm2737, %v860, 0.0
  %v2802 = vsel %vm2738, %v861, 0.0
  %v2803 = vsel %vm2739, %v862, 0.0
  %v2804 = vsel %vm2740, %v863, 0.0
  %v2805 = vsel %vm2741, %v864, 0.0
  %v2806 = vsel %vm2742, %v865, 0.0
  %v2807 = vsel %vm2743, %v866, 0.0
  %v2808 = vsel %vm2744, %v867, 0.0
  %v2809 = vsel %vm2745, %v868, 0.0
  %v2810 = vsel %vm2746, %v869, 0.0
  %v2811 = vsel %vm2747, %v870, 0.0
  %v2812 = vsel %vm2748, %v871, 0.0
  %v2813 = vsel %vm2749, %v872, 0.0
  %v2814 = vsel %vm2750, %v873, 0.0
  %v2815 = vsel %vm2751, %v874, 0.0
  %v2816 = vsel %vm2752, %v875, 0.0
  %v2817 = vsel %vm2753, %v876, 0.0
  %v2818 = vsel %vm2754, %v877, 0.0
  %v2819 = vsel %vm2755, %v878, 0.0
  %v2820 = vsel %vm2756, %v879, 0.0
  %v2821 = vsel %vm2757, %v880, 0.0
  %v2822 = vsel %vm2758, %v881, 0.0
  %v2823 = vsel %vm2759, %v882, 0.0
  %v2824 = vsel %vm2760, %v883, 0.0
  %v2825 = vsel %vm2761, %v884, 0.0
  %v2826 = vsel %vm2762, %v885, 0.0
  %v2827 = vsel %vm2763, %v886, 0.0
  %v2828 = vsel %vm2764, %v887, 0.0
  %v2829 = vsel %vm2765, %v888, 0.0
  %v2830 = vsel %vm2766, %v889, 0.0
  %v2831 = vsel %vm2767, %v890, 0.0
  %v2832 = vsel %vm2768, %v891, 0.0
  %v2833 = vsel %vm2769, %v892, 0.0
  %v2834 = vsel %vm2770, %v893, 0.0
  %v2835 = vsel %vm2771, %v894, 0.0
  %v2836 = vsel %vm2772, %v895, 0.0
  %v2837 = vsel %vm2773, %v896, 0.0
  %v2838 = vsel %vm2774, %v897, 0.0
  %v2839 = vsel %vm2775, %v898, 0.0
  %v2840 = vsel %vm2776, %v899, 0.0
  %v2841 = vsel %vm2777, %v900, 0.0
  %v2842 = vsel %vm2778, %v901, 0.0
  %v2843 = vsel %vm2779, %v902, 0.0
  %v2844 = vsel %vm2780, %v903, 0.0
  %v2845 = vsel %vm2781, %v904, 0.0
  %v2846 = vsel %vm2782, %v905, 0.0
  %v2847 = vsel %vm2783, %v906, 0.0
  %v2848 = vsel %vm2784, %v907, 0.0
  %v2849 = vsel %vm2785, %v908, 0.0
  %v2850 = vsel %vm2786, %v909, 0.0
  %v2851 = vsel %vm2787, %v910, 0.0
  %v2852 = vsel %vm2788, %v911, 0.0
  %v2853 = vsel %vm2789, %v912, 0.0
  %v2854 = vsel %vm2790, %v913, 0.0
  %v2855 = vsel %vm2791, %v914, 0.0
  %s2856 = scalar_lea.vmem %s5, 128
  %v2857 = vld [vmem:[%s2856] sm:$0xff]
  %v2858 = vld [vmem:[%s2856 + $0x8] sm:$0xff]
  %v2859 = vld [vmem:[%s2856 + $0x10] sm:$0xff]
  %v2860 = vld [vmem:[%s2856 + $0x18] sm:$0xff]
  %v2861 = vld [vmem:[%s2856 + $0x20] sm:$0xff]
  %v2862 = vld [vmem:[%s2856 + $0x28] sm:$0xff]
  %v2863 = vld [vmem:[%s2856 + $0x30] sm:$0xff]
  %v2864 = vld [vmem:[%s2856 + $0x38] sm:$0xff]
  %v2865 = vld [vmem:[%s2856 + $0x40] sm:$0xff]
  %v2866 = vld [vmem:[%s2856 + $0x48] sm:$0xff]
  %v2867 = vld [vmem:[%s2856 + $0x50] sm:$0xff]
  %v2868 = vld [vmem:[%s2856 + $0x58] sm:$0xff]
  %v2869 = vld [vmem:[%s2856 + $0x60] sm:$0xff]
  %v2870 = vld [vmem:[%s2856 + $0x68] sm:$0xff]
  %v2871 = vld [vmem:[%s2856 + $0x70] sm:$0xff]
  %v2872 = vld [vmem:[%s2856 + $0x78] sm:$0xff]
  %2873 = vmatprep.subr.mxu0 0.0
  %2874 = vmatpush1.msra.mxu0 %v2857
  %2875 = vmatprep.subr.mxu0 0.0
  %2876 = vmatpush1.msra.mxu0 %v2858
  %2877 = vmatprep.subr.mxu0 0.0
  %2878 = vmatpush1.msra.mxu0 %v2859
  %2879 = vmatprep.subr.mxu0 0.0
  %2880 = vmatpush1.msra.mxu0 %v2860
  %2881 = vmatprep.subr.mxu0 0.0
  %2882 = vmatpush1.msra.mxu0 %v2861
  %2883 = vmatprep.subr.mxu0 0.0
  %2884 = vmatpush1.msra.mxu0 %v2862
  %2885 = vmatprep.subr.mxu0 0.0
  %2886 = vmatpush1.msra.mxu0 %v2863
  %2887 = vmatprep.subr.mxu0 0.0
  %2888 = vmatpush1.msra.mxu0 %v2864
  %2889 = vmatprep.subr.mxu0 0.0
  %2890 = vmatpush1.msra.mxu0 %v2865
  %2891 = vmatprep.subr.mxu0 0.0
  %2892 = vmatpush1.msra.mxu0 %v2866
  %2893 = vmatprep.subr.mxu0 0.0
  %2894 = vmatpush1.msra.mxu0 %v2867
  %2895 = vmatprep.subr.mxu0 0.0
  %2896 = vmatpush1.msra.mxu0 %v2868
  %2897 = vmatprep.subr.mxu0 0.0
  %2898 = vmatpush1.msra.mxu0 %v2869
  %2899 = vmatprep.subr.mxu0 0.0
  %2900 = vmatpush1.msra.mxu0 %v2870
  %2901 = vmatprep.subr.mxu0 0.0
  %2902 = vmatpush1.msra.mxu0 %v2871
  %2903 = vmatprep.subr.mxu0 0.0
  %2904 = vmatpush1.msra.mxu0 %v2872
  %2905 = vmatprep.subr.mxu0 0.0
  %2906 = vmatpush1.msra.mxu0 0.0
  %2907 = vmatprep.subr.mxu0 0.0
  %2908 = vmatpush1.msra.mxu0 0.0
  %2909 = vmatprep.subr.mxu0 0.0
  %2910 = vmatpush1.msra.mxu0 0.0
  %2911 = vmatprep.subr.mxu0 0.0
  %2912 = vmatpush1.msra.mxu0 0.0
  %2913 = vmatprep.subr.mxu0 0.0
  %2914 = vmatpush1.msra.mxu0 0.0
  %2915 = vmatprep.subr.mxu0 0.0
  %2916 = vmatpush1.msra.mxu0 0.0
  %2917 = vmatprep.subr.mxu0 0.0
  %2918 = vmatpush1.msra.mxu0 0.0
  %2919 = vmatprep.subr.mxu0 0.0
  %2920 = vmatpush1.msra.mxu0 0.0
  %2921 = vmatprep.subr.mxu0 0.0
  %2922 = vmatpush1.msra.mxu0 0.0
  %2923 = vmatprep.subr.mxu0 0.0
  %2924 = vmatpush1.msra.mxu0 0.0
  %2925 = vmatprep.subr.mxu0 0.0
  %2926 = vmatpush1.msra.mxu0 0.0
  %2927 = vmatprep.subr.mxu0 0.0
  %2928 = vmatpush1.msra.mxu0 0.0
  %2929 = vmatprep.subr.mxu0 0.0
  %2930 = vmatpush1.msra.mxu0 0.0
  %2931 = vmatprep.subr.mxu0 0.0
  %2932 = vmatpush1.msra.mxu0 0.0
  %2933 = vmatprep.subr.mxu0 0.0
  %2934 = vmatpush1.msra.mxu0 0.0
  %2935 = vmatprep.subr.mxu0 0.0
  %2936 = vmatpush1.msra.mxu0 0.0
  %2937 = vmatprep.mubr.f32.mxu0 0.0
  %2938 = vmatmul.mubr.f32.gmra.mrb[0].mxu0 %v2792
  %v2939 = vpop.f32.mrb[0].mxu0
  %v2940 = vadd.f32 0.0, %v2939
  %v2941 = vpop.f32.mrb[0].mxu0
  %2942 = vmatprep.mubr.f32.mxu0 0.0
  %2943 = vmatmul.mubr.f32.gmra.mrb[0].mxu0 %v2793
  %v2944 = vpop.f32.mrb[0].mxu0
  %v2945 = vadd.f32 0.0, %v2944
  %v2946 = vpop.f32.mrb[0].mxu0
  %2947 = vmatprep.mubr.f32.mxu0 0.0
  %2948 = vmatmul.mubr.f32.gmra.mrb[0].mxu0 %v2794
  %v2949 = vpop.f32.mrb[0].mxu0
  %v2950 = vadd.f32 0.0, %v2949
  %v2951 = vpop.f32.mrb[0].mxu0
  %2952 = vmatprep.mubr.f32.mxu0 0.0
  %2953 = vmatmul.mubr.f32.gmra.mrb[0].mxu0 %v2795
  %v2954 = vpop.f32.mrb[0].mxu0
  %v2955 = vadd.f32 0.0, %v2954
  %v2956 = vpop.f32.mrb[0].mxu0
  %2957 = vmatprep.mubr.f32.mxu0 0.0
  %2958 = vmatmul.mubr.f32.gmra.mrb[0].mxu0 %v2796
  %v2959 = vpop.f32.mrb[0].mxu0
  %v2960 = vadd.f32 0.0, %v2959
  %v2961 = vpop.f32.mrb[0].mxu0
  %2962 = vmatprep.mubr.f32.mxu0 0.0
  %2963 = vmatmul.mubr.f32.gmra.mrb[0].mxu0 %v2797
  %v2964 = vpop.f32.mrb[0].mxu0
  %v2965 = vadd.f32 0.0, %v2964
  %v2966 = vpop.f32.mrb[0].mxu0
  %2967 = vmatprep.mubr.f32.mxu0 0.0
  %2968 = vmatmul.mubr.f32.gmra.mrb[0].mxu0 %v2798
  %v2969 = vpop.f32.mrb[0].mxu0
  %v2970 = vadd.f32 0.0, %v2969
  %v2971 = vpop.f32.mrb[0].mxu0
  %2972 = vmatprep.mubr.f32.mxu0 0.0
  %2973 = vmatmul.mubr.f32.gmra.mrb[0].mxu0 %v2799
  %v2974 = vpop.f32.mrb[0].mxu0
  %v2975 = vadd.f32 0.0, %v2974
  %v2976 = vpop.f32.mrb[0].mxu0
  %2977 = vmatprep.mubr.f32.mxu0 0.0
  %2978 = vmatmul.mubr.f32.gmra.mrb[0].mxu0 %v2800
  %v2979 = vpop.f32.mrb[0].mxu0
  %v2980 = vadd.f32 0.0, %v2979
  %v2981 = vpop.f32.mrb[0].mxu0
  %2982 = vmatprep.mubr.f32.mxu0 0.0
  %2983 = vmatmul.mubr.f32.gmra.mrb[0].mxu0 %v2801
  %v2984 = vpop.f32.mrb[0].mxu0
  %v2985 = vadd.f32 0.0, %v2984
  %v2986 = vpop.f32.mrb[0].mxu0
  %2987 = vmatprep.mubr.f32.mxu0 0.0
  %2988 = vmatmul.mubr.f32.gmra.mrb[0].mxu0 %v2802
  %v2989 = vpop.f32.mrb[0].mxu0
  %v2990 = vadd.f32 0.0, %v2989
  %v2991 = vpop.f32.mrb[0].mxu0
  %2992 = vmatprep.mubr.f32.mxu0 0.0
  %2993 = vmatmul.mubr.f32.gmra.mrb[0].mxu0 %v2803
  %v2994 = vpop.f32.mrb[0].mxu0
  %v2995 = vadd.f32 0.0, %v2994
  %v2996 = vpop.f32.mrb[0].mxu0
  %2997 = vmatprep.mubr.f32.mxu0 0.0
  %2998 = vmatmul.mubr.f32.gmra.mrb[0].mxu0 %v2804
  %v2999 = vpop.f32.mrb[0].mxu0
  %v3000 = vadd.f32 0.0, %v2999
  %v3001 = vpop.f32.mrb[0].mxu0
  %3002 = vmatprep.mubr.f32.mxu0 0.0
  %3003 = vmatmul.mubr.f32.gmra.mrb[0].mxu0 %v2805
  %v3004 = vpop.f32.mrb[0].mxu0
  %v3005 = vadd.f32 0.0, %v3004
  %v3006 = vpop.f32.mrb[0].mxu0
  %3007 = vmatprep.mubr.f32.mxu0 0.0
  %3008 = vmatmul.mubr.f32.gmra.mrb[0].mxu0 %v2806
  %v3009 = vpop.f32.mrb[0].mxu0
  %v3010 = vadd.f32 0.0, %v3009
  %v3011 = vpop.f32.mrb[0].mxu0
  %3012 = vmatprep.mubr.f32.mxu0 0.0
  %3013 = vmatmul.mubr.f32.gmra.mrb[0].mxu0 %v2807
  %v3014 = vpop.f32.mrb[0].mxu0
  %v3015 = vadd.f32 0.0, %v3014
  %v3016 = vpop.f32.mrb[0].mxu0
  %3017 = vmatprep.mubr.f32.mxu0 0.0
  %3018 = vmatmul.mubr.f32.gmra.mrb[0].mxu0 %v2808
  %v3019 = vpop.f32.mrb[0].mxu0
  %v3020 = vadd.f32 0.0, %v3019
  %v3021 = vpop.f32.mrb[0].mxu0
  %3022 = vmatprep.mubr.f32.mxu0 0.0
  %3023 = vmatmul.mubr.f32.gmra.mrb[0].mxu0 %v2809
  %v3024 = vpop.f32.mrb[0].mxu0
  %v3025 = vadd.f32 0.0, %v3024
  %v3026 = vpop.f32.mrb[0].mxu0
  %3027 = vmatprep.mubr.f32.mxu0 0.0
  %3028 = vmatmul.mubr.f32.gmra.mrb[0].mxu0 %v2810
  %v3029 = vpop.f32.mrb[0].mxu0
  %v3030 = vadd.f32 0.0, %v3029
  %v3031 = vpop.f32.mrb[0].mxu0
  %3032 = vmatprep.mubr.f32.mxu0 0.0
  %3033 = vmatmul.mubr.f32.gmra.mrb[0].mxu0 %v2811
  %v3034 = vpop.f32.mrb[0].mxu0
  %v3035 = vadd.f32 0.0, %v3034
  %v3036 = vpop.f32.mrb[0].mxu0
  %3037 = vmatprep.mubr.f32.mxu0 0.0
  %3038 = vmatmul.mubr.f32.gmra.mrb[0].mxu0 %v2812
  %v3039 = vpop.f32.mrb[0].mxu0
  %v3040 = vadd.f32 0.0, %v3039
  %v3041 = vpop.f32.mrb[0].mxu0
  %3042 = vmatprep.mubr.f32.mxu0 0.0
  %3043 = vmatmul.mubr.f32.gmra.mrb[0].mxu0 %v2813
  %v3044 = vpop.f32.mrb[0].mxu0
  %v3045 = vadd.f32 0.0, %v3044
  %v3046 = vpop.f32.mrb[0].mxu0
  %3047 = vmatprep.mubr.f32.mxu0 0.0
  %3048 = vmatmul.mubr.f32.gmra.mrb[0].mxu0 %v2814
  %v3049 = vpop.f32.mrb[0].mxu0
  %v3050 = vadd.f32 0.0, %v3049
  %v3051 = vpop.f32.mrb[0].mxu0
  %3052 = vmatprep.mubr.f32.mxu0 0.0
  %3053 = vmatmul.mubr.f32.gmra.mrb[0].mxu0 %v2815
  %v3054 = vpop.f32.mrb[0].mxu0
  %v3055 = vadd.f32 0.0, %v3054
  %v3056 = vpop.f32.mrb[0].mxu0
  %3057 = vmatprep.mubr.f32.mxu0 0.0
  %3058 = vmatmul.mubr.f32.gmra.mrb[0].mxu0 %v2816
  %v3059 = vpop.f32.mrb[0].mxu0
  %v3060 = vadd.f32 0.0, %v3059
  %v3061 = vpop.f32.mrb[0].mxu0
  %3062 = vmatprep.mubr.f32.mxu0 0.0
  %3063 = vmatmul.mubr.f32.gmra.mrb[0].mxu0 %v2817
  %v3064 = vpop.f32.mrb[0].mxu0
  %v3065 = vadd.f32 0.0, %v3064
  %v3066 = vpop.f32.mrb[0].mxu0
  %3067 = vmatprep.mubr.f32.mxu0 0.0
  %3068 = vmatmul.mubr.f32.gmra.mrb[0].mxu0 %v2818
  %v3069 = vpop.f32.mrb[0].mxu0
  %v3070 = vadd.f32 0.0, %v3069
  %v3071 = vpop.f32.mrb[0].mxu0
  %3072 = vmatprep.mubr.f32.mxu0 0.0
  %3073 = vmatmul.mubr.f32.gmra.mrb[0].mxu0 %v2819
  %v3074 = vpop.f32.mrb[0].mxu0
  %v3075 = vadd.f32 0.0, %v3074
  %v3076 = vpop.f32.mrb[0].mxu0
  %3077 = vmatprep.mubr.f32.mxu0 0.0
  %3078 = vmatmul.mubr.f32.gmra.mrb[0].mxu0 %v2820
  %v3079 = vpop.f32.mrb[0].mxu0
  %v3080 = vadd.f32 0.0, %v3079
  %v3081 = vpop.f32.mrb[0].mxu0
  %3082 = vmatprep.mubr.f32.mxu0 0.0
  %3083 = vmatmul.mubr.f32.gmra.mrb[0].mxu0 %v2821
  %v3084 = vpop.f32.mrb[0].mxu0
  %v3085 = vadd.f32 0.0, %v3084
  %v3086 = vpop.f32.mrb[0].mxu0
  %3087 = vmatprep.mubr.f32.mxu0 0.0
  %3088 = vmatmul.mubr.f32.gmra.mrb[0].mxu0 %v2822
  %v3089 = vpop.f32.mrb[0].mxu0
  %v3090 = vadd.f32 0.0, %v3089
  %v3091 = vpop.f32.mrb[0].mxu0
  %3092 = vmatprep.mubr.f32.mxu0 0.0
  %3093 = vmatmul.mubr.f32.gmra.mrb[0].mxu0 %v2823
  %v3094 = vpop.f32.mrb[0].mxu0
  %v3095 = vadd.f32 0.0, %v3094
  %v3096 = vpop.f32.mrb[0].mxu0
  %3097 = vmatprep.mubr.f32.mxu0 0.0
  %3098 = vmatmul.mubr.f32.gmra.mrb[0].mxu0 %v2824
  %v3099 = vpop.f32.mrb[0].mxu0
  %v3100 = vadd.f32 0.0, %v3099
  %v3101 = vpop.f32.mrb[0].mxu0
  %3102 = vmatprep.mubr.f32.mxu0 0.0
  %3103 = vmatmul.mubr.f32.gmra.mrb[0].mxu0 %v2825
  %v3104 = vpop.f32.mrb[0].mxu0
  %v3105 = vadd.f32 0.0, %v3104
  %v3106 = vpop.f32.mrb[0].mxu0
  %3107 = vmatprep.mubr.f32.mxu0 0.0
  %3108 = vmatmul.mubr.f32.gmra.mrb[0].mxu0 %v2826
  %v3109 = vpop.f32.mrb[0].mxu0
  %v3110 = vadd.f32 0.0, %v3109
  %v3111 = vpop.f32.mrb[0].mxu0
  %3112 = vmatprep.mubr.f32.mxu0 0.0
  %3113 = vmatmul.mubr.f32.gmra.mrb[0].mxu0 %v2827
  %v3114 = vpop.f32.mrb[0].mxu0
  %v3115 = vadd.f32 0.0, %v3114
  %v3116 = vpop.f32.mrb[0].mxu0
  %3117 = vmatprep.mubr.f32.mxu0 0.0
  %3118 = vmatmul.mubr.f32.gmra.mrb[0].mxu0 %v2828
  %v3119 = vpop.f32.mrb[0].mxu0
  %v3120 = vadd.f32 0.0, %v3119
  %v3121 = vpop.f32.mrb[0].mxu0
  %3122 = vmatprep.mubr.f32.mxu0 0.0
  %3123 = vmatmul.mubr.f32.gmra.mrb[0].mxu0 %v2829
  %v3124 = vpop.f32.mrb[0].mxu0
  %v3125 = vadd.f32 0.0, %v3124
  %v3126 = vpop.f32.mrb[0].mxu0
  %3127 = vmatprep.mubr.f32.mxu0 0.0
  %3128 = vmatmul.mubr.f32.gmra.mrb[0].mxu0 %v2830
  %v3129 = vpop.f32.mrb[0].mxu0
  %v3130 = vadd.f32 0.0, %v3129
  %v3131 = vpop.f32.mrb[0].mxu0
  %3132 = vmatprep.mubr.f32.mxu0 0.0
  %3133 = vmatmul.mubr.f32.gmra.mrb[0].mxu0 %v2831
  %v3134 = vpop.f32.mrb[0].mxu0
  %v3135 = vadd.f32 0.0, %v3134
  %v3136 = vpop.f32.mrb[0].mxu0
  %3137 = vmatprep.mubr.f32.mxu0 0.0
  %3138 = vmatmul.mubr.f32.gmra.mrb[0].mxu0 %v2832
  %v3139 = vpop.f32.mrb[0].mxu0
  %v3140 = vadd.f32 0.0, %v3139
  %v3141 = vpop.f32.mrb[0].mxu0
  %3142 = vmatprep.mubr.f32.mxu0 0.0
  %3143 = vmatmul.mubr.f32.gmra.mrb[0].mxu0 %v2833
  %v3144 = vpop.f32.mrb[0].mxu0
  %v3145 = vadd.f32 0.0, %v3144
  %v3146 = vpop.f32.mrb[0].mxu0
  %3147 = vmatprep.mubr.f32.mxu0 0.0
  %3148 = vmatmul.mubr.f32.gmra.mrb[0].mxu0 %v2834
  %v3149 = vpop.f32.mrb[0].mxu0
  %v3150 = vadd.f32 0.0, %v3149
  %v3151 = vpop.f32.mrb[0].mxu0
  %3152 = vmatprep.mubr.f32.mxu0 0.0
  %3153 = vmatmul.mubr.f32.gmra.mrb[0].mxu0 %v2835
  %v3154 = vpop.f32.mrb[0].mxu0
  %v3155 = vadd.f32 0.0, %v3154
  %v3156 = vpop.f32.mrb[0].mxu0
  %3157 = vmatprep.mubr.f32.mxu0 0.0
  %3158 = vmatmul.mubr.f32.gmra.mrb[0].mxu0 %v2836
  %v3159 = vpop.f32.mrb[0].mxu0
  %v3160 = vadd.f32 0.0, %v3159
  %v3161 = vpop.f32.mrb[0].mxu0
  %3162 = vmatprep.mubr.f32.mxu0 0.0
  %3163 = vmatmul.mubr.f32.gmra.mrb[0].mxu0 %v2837
  %v3164 = vpop.f32.mrb[0].mxu0
  %v3165 = vadd.f32 0.0, %v3164
  %v3166 = vpop.f32.mrb[0].mxu0
  %3167 = vmatprep.mubr.f32.mxu0 0.0
  %3168 = vmatmul.mubr.f32.gmra.mrb[0].mxu0 %v2838
  %v3169 = vpop.f32.mrb[0].mxu0
  %v3170 = vadd.f32 0.0, %v3169
  %v3171 = vpop.f32.mrb[0].mxu0
  %3172 = vmatprep.mubr.f32.mxu0 0.0
  %3173 = vmatmul.mubr.f32.gmra.mrb[0].mxu0 %v2839
  %v3174 = vpop.f32.mrb[0].mxu0
  %v3175 = vadd.f32 0.0, %v3174
  %v3176 = vpop.f32.mrb[0].mxu0
  %3177 = vmatprep.mubr.f32.mxu0 0.0
  %3178 = vmatmul.mubr.f32.gmra.mrb[0].mxu0 %v2840
  %v3179 = vpop.f32.mrb[0].mxu0
  %v3180 = vadd.f32 0.0, %v3179
  %v3181 = vpop.f32.mrb[0].mxu0
  %3182 = vmatprep.mubr.f32.mxu0 0.0
  %3183 = vmatmul.mubr.f32.gmra.mrb[0].mxu0 %v2841
  %v3184 = vpop.f32.mrb[0].mxu0
  %v3185 = vadd.f32 0.0, %v3184
  %v3186 = vpop.f32.mrb[0].mxu0
  %3187 = vmatprep.mubr.f32.mxu0 0.0
  %3188 = vmatmul.mubr.f32.gmra.mrb[0].mxu0 %v2842
  %v3189 = vpop.f32.mrb[0].mxu0
  %v3190 = vadd.f32 0.0, %v3189
  %v3191 = vpop.f32.mrb[0].mxu0
  %3192 = vmatprep.mubr.f32.mxu0 0.0
  %3193 = vmatmul.mubr.f32.gmra.mrb[0].mxu0 %v2843
  %v3194 = vpop.f32.mrb[0].mxu0
  %v3195 = vadd.f32 0.0, %v3194
  %v3196 = vpop.f32.mrb[0].mxu0
  %3197 = vmatprep.mubr.f32.mxu0 0.0
  %3198 = vmatmul.mubr.f32.gmra.mrb[0].mxu0 %v2844
  %v3199 = vpop.f32.mrb[0].mxu0
  %v3200 = vadd.f32 0.0, %v3199
  %v3201 = vpop.f32.mrb[0].mxu0
  %3202 = vmatprep.mubr.f32.mxu0 0.0
  %3203 = vmatmul.mubr.f32.gmra.mrb[0].mxu0 %v2845
  %v3204 = vpop.f32.mrb[0].mxu0
  %v3205 = vadd.f32 0.0, %v3204
  %v3206 = vpop.f32.mrb[0].mxu0
  %3207 = vmatprep.mubr.f32.mxu0 0.0
  %3208 = vmatmul.mubr.f32.gmra.mrb[0].mxu0 %v2846
  %v3209 = vpop.f32.mrb[0].mxu0
  %v3210 = vadd.f32 0.0, %v3209
  %v3211 = vpop.f32.mrb[0].mxu0
  %3212 = vmatprep.mubr.f32.mxu0 0.0
  %3213 = vmatmul.mubr.f32.gmra.mrb[0].mxu0 %v2847
  %v3214 = vpop.f32.mrb[0].mxu0
  %v3215 = vadd.f32 0.0, %v3214
  %v3216 = vpop.f32.mrb[0].mxu0
  %3217 = vmatprep.mubr.f32.mxu0 0.0
  %3218 = vmatmul.mubr.f32.gmra.mrb[0].mxu0 %v2848
  %v3219 = vpop.f32.mrb[0].mxu0
  %v3220 = vadd.f32 0.0, %v3219
  %v3221 = vpop.f32.mrb[0].mxu0
  %3222 = vmatprep.mubr.f32.mxu0 0.0
  %3223 = vmatmul.mubr.f32.gmra.mrb[0].mxu0 %v2849
  %v3224 = vpop.f32.mrb[0].mxu0
  %v3225 = vadd.f32 0.0, %v3224
  %v3226 = vpop.f32.mrb[0].mxu0
  %3227 = vmatprep.mubr.f32.mxu0 0.0
  %3228 = vmatmul.mubr.f32.gmra.mrb[0].mxu0 %v2850
  %v3229 = vpop.f32.mrb[0].mxu0
  %v3230 = vadd.f32 0.0, %v3229
  %v3231 = vpop.f32.mrb[0].mxu0
  %3232 = vmatprep.mubr.f32.mxu0 0.0
  %3233 = vmatmul.mubr.f32.gmra.mrb[0].mxu0 %v2851
  %v3234 = vpop.f32.mrb[0].mxu0
  %v3235 = vadd.f32 0.0, %v3234
  %v3236 = vpop.f32.mrb[0].mxu0
  %3237 = vmatprep.mubr.f32.mxu0 0.0
  %3238 = vmatmul.mubr.f32.gmra.mrb[0].mxu0 %v2852
  %v3239 = vpop.f32.mrb[0].mxu0
  %v3240 = vadd.f32 0.0, %v3239
  %v3241 = vpop.f32.mrb[0].mxu0
  %3242 = vmatprep.mubr.f32.mxu0 0.0
  %3243 = vmatmul.mubr.f32.gmra.mrb[0].mxu0 %v2853
  %v3244 = vpop.f32.mrb[0].mxu0
  %v3245 = vadd.f32 0.0, %v3244
  %v3246 = vpop.f32.mrb[0].mxu0
  %3247 = vmatprep.mubr.f32.mxu0 0.0
  %3248 = vmatmul.mubr.f32.gmra.mrb[0].mxu0 %v2854
  %v3249 = vpop.f32.mrb[0].mxu0
  %v3250 = vadd.f32 0.0, %v3249
  %v3251 = vpop.f32.mrb[0].mxu0
  %3252 = vmatprep.mubr.f32.mxu0 0.0
  %3253 = vmatmul.mubr.f32.gmra.mrb[0].mxu0 %v2855
  %v3254 = vpop.f32.mrb[0].mxu0
  %v3255 = vadd.f32 0.0, %v3254
  %v3256 = vpop.f32.mrb[0].mxu0
  %3257 = vdwg.mxu0
  %3258 = vmatprep.subr.mxu0 0.0
  %3259 = vmatpush1.msra.mxu0 %v2136
  %3260 = vmatprep.subr.mxu0 0.0
  %3261 = vmatpush1.msra.mxu0 %v2137
  %3262 = vmatprep.subr.mxu0 0.0
  %3263 = vmatpush1.msra.mxu0 %v2138
  %3264 = vmatprep.subr.mxu0 0.0
  %3265 = vmatpush1.msra.mxu0 %v2139
  %3266 = vmatprep.subr.mxu0 0.0
  %3267 = vmatpush1.msra.mxu0 %v2140
  %3268 = vmatprep.subr.mxu0 0.0
  %3269 = vmatpush1.msra.mxu0 %v2141
  %3270 = vmatprep.subr.mxu0 0.0
  %3271 = vmatpush1.msra.mxu0 %v2142
  %3272 = vmatprep.subr.mxu0 0.0
  %3273 = vmatpush1.msra.mxu0 %v2143
  %3274 = vmatprep.subr.mxu0 0.0
  %3275 = vmatpush1.msra.mxu0 %v2144
  %3276 = vmatprep.subr.mxu0 0.0
  %3277 = vmatpush1.msra.mxu0 %v2145
  %3278 = vmatprep.subr.mxu0 0.0
  %3279 = vmatpush1.msra.mxu0 %v2146
  %3280 = vmatprep.subr.mxu0 0.0
  %3281 = vmatpush1.msra.mxu0 %v2147
  %3282 = vmatprep.subr.mxu0 0.0
  %3283 = vmatpush1.msra.mxu0 %v2148
  %3284 = vmatprep.subr.mxu0 0.0
  %3285 = vmatpush1.msra.mxu0 %v2149
  %3286 = vmatprep.subr.mxu0 0.0
  %3287 = vmatpush1.msra.mxu0 %v2150
  %3288 = vmatprep.subr.mxu0 0.0
  %3289 = vmatpush1.msra.mxu0 %v2151
  %3290 = vmatprep.subr.mxu0 0.0
  %3291 = vmatpush1.msra.mxu0 0.0
  %3292 = vmatprep.subr.mxu0 0.0
  %3293 = vmatpush1.msra.mxu0 0.0
  %3294 = vmatprep.subr.mxu0 0.0
  %3295 = vmatpush1.msra.mxu0 0.0
  %3296 = vmatprep.subr.mxu0 0.0
  %3297 = vmatpush1.msra.mxu0 0.0
  %3298 = vmatprep.subr.mxu0 0.0
  %3299 = vmatpush1.msra.mxu0 0.0
  %3300 = vmatprep.subr.mxu0 0.0
  %3301 = vmatpush1.msra.mxu0 0.0
  %3302 = vmatprep.subr.mxu0 0.0
  %3303 = vmatpush1.msra.mxu0 0.0
  %3304 = vmatprep.subr.mxu0 0.0
  %3305 = vmatpush1.msra.mxu0 0.0
  %3306 = vmatprep.subr.mxu0 0.0
  %3307 = vmatpush1.msra.mxu0 0.0
  %3308 = vmatprep.subr.mxu0 0.0
  %3309 = vmatpush1.msra.mxu0 0.0
  %3310 = vmatprep.subr.mxu0 0.0
  %3311 = vmatpush1.msra.mxu0 0.0
  %3312 = vmatprep.subr.mxu0 0.0
  %3313 = vmatpush1.msra.mxu0 0.0
  %3314 = vmatprep.subr.mxu0 0.0
  %3315 = vmatpush1.msra.mxu0 0.0
  %3316 = vmatprep.subr.mxu0 0.0
  %3317 = vmatpush1.msra.mxu0 0.0
  %3318 = vmatprep.subr.mxu0 0.0
  %3319 = vmatpush1.msra.mxu0 0.0
  %3320 = vmatprep.subr.mxu0 0.0
  %3321 = vmatpush1.msra.mxu0 0.0
  %3322 = vmatprep.mubr.f32.mxu0 0.0
  %3323 = vmatmul.mubr.f32.gmra.mrb[0].mxu0 %v2072
  %v3324 = vpop.f32.mrb[0].mxu0
  %v3325 = vadd.f32 %v2940, %v3324
  %v3326 = vpop.f32.mrb[0].mxu0
  %3327 = vmatprep.mubr.f32.mxu0 0.0
  %3328 = vmatmul.mubr.f32.gmra.mrb[0].mxu0 %v2073
  %v3329 = vpop.f32.mrb[0].mxu0
  %v3330 = vadd.f32 %v2945, %v3329
  %v3331 = vpop.f32.mrb[0].mxu0
  %3332 = vmatprep.mubr.f32.mxu0 0.0
  %3333 = vmatmul.mubr.f32.gmra.mrb[0].mxu0 %v2074
  %v3334 = vpop.f32.mrb[0].mxu0
  %v3335 = vadd.f32 %v2950, %v3334
  %v3336 = vpop.f32.mrb[0].mxu0
  %3337 = vmatprep.mubr.f32.mxu0 0.0
  %3338 = vmatmul.mubr.f32.gmra.mrb[0].mxu0 %v2075
  %v3339 = vpop.f32.mrb[0].mxu0
  %v3340 = vadd.f32 %v2955, %v3339
  %v3341 = vpop.f32.mrb[0].mxu0
  %3342 = vmatprep.mubr.f32.mxu0 0.0
  %3343 = vmatmul.mubr.f32.gmra.mrb[0].mxu0 %v2076
  %v3344 = vpop.f32.mrb[0].mxu0
  %v3345 = vadd.f32 %v2960, %v3344
  %v3346 = vpop.f32.mrb[0].mxu0
  %3347 = vmatprep.mubr.f32.mxu0 0.0
  %3348 = vmatmul.mubr.f32.gmra.mrb[0].mxu0 %v2077
  %v3349 = vpop.f32.mrb[0].mxu0
  %v3350 = vadd.f32 %v2965, %v3349
  %v3351 = vpop.f32.mrb[0].mxu0
  %3352 = vmatprep.mubr.f32.mxu0 0.0
  %3353 = vmatmul.mubr.f32.gmra.mrb[0].mxu0 %v2078
  %v3354 = vpop.f32.mrb[0].mxu0
  %v3355 = vadd.f32 %v2970, %v3354
  %v3356 = vpop.f32.mrb[0].mxu0
  %3357 = vmatprep.mubr.f32.mxu0 0.0
  %3358 = vmatmul.mubr.f32.gmra.mrb[0].mxu0 %v2079
  %v3359 = vpop.f32.mrb[0].mxu0
  %v3360 = vadd.f32 %v2975, %v3359
  %v3361 = vpop.f32.mrb[0].mxu0
  %3362 = vmatprep.mubr.f32.mxu0 0.0
  %3363 = vmatmul.mubr.f32.gmra.mrb[0].mxu0 %v2080
  %v3364 = vpop.f32.mrb[0].mxu0
  %v3365 = vadd.f32 %v2980, %v3364
  %v3366 = vpop.f32.mrb[0].mxu0
  %3367 = vmatprep.mubr.f32.mxu0 0.0
  %3368 = vmatmul.mubr.f32.gmra.mrb[0].mxu0 %v2081
  %v3369 = vpop.f32.mrb[0].mxu0
  %v3370 = vadd.f32 %v2985, %v3369
  %v3371 = vpop.f32.mrb[0].mxu0
  %3372 = vmatprep.mubr.f32.mxu0 0.0
  %3373 = vmatmul.mubr.f32.gmra.mrb[0].mxu0 %v2082
  %v3374 = vpop.f32.mrb[0].mxu0
  %v3375 = vadd.f32 %v2990, %v3374
  %v3376 = vpop.f32.mrb[0].mxu0
  %3377 = vmatprep.mubr.f32.mxu0 0.0
  %3378 = vmatmul.mubr.f32.gmra.mrb[0].mxu0 %v2083
  %v3379 = vpop.f32.mrb[0].mxu0
  %v3380 = vadd.f32 %v2995, %v3379
  %v3381 = vpop.f32.mrb[0].mxu0
  %3382 = vmatprep.mubr.f32.mxu0 0.0
  %3383 = vmatmul.mubr.f32.gmra.mrb[0].mxu0 %v2084
  %v3384 = vpop.f32.mrb[0].mxu0
  %v3385 = vadd.f32 %v3000, %v3384
  %v3386 = vpop.f32.mrb[0].mxu0
  %3387 = vmatprep.mubr.f32.mxu0 0.0
  %3388 = vmatmul.mubr.f32.gmra.mrb[0].mxu0 %v2085
  %v3389 = vpop.f32.mrb[0].mxu0
  %v3390 = vadd.f32 %v3005, %v3389
  %v3391 = vpop.f32.mrb[0].mxu0
  %3392 = vmatprep.mubr.f32.mxu0 0.0
  %3393 = vmatmul.mubr.f32.gmra.mrb[0].mxu0 %v2086
  %v3394 = vpop.f32.mrb[0].mxu0
  %v3395 = vadd.f32 %v3010, %v3394
  %v3396 = vpop.f32.mrb[0].mxu0
  %3397 = vmatprep.mubr.f32.mxu0 0.0
  %3398 = vmatmul.mubr.f32.gmra.mrb[0].mxu0 %v2087
  %v3399 = vpop.f32.mrb[0].mxu0
  %v3400 = vadd.f32 %v3015, %v3399
  %v3401 = vpop.f32.mrb[0].mxu0
  %3402 = vmatprep.mubr.f32.mxu0 0.0
  %3403 = vmatmul.mubr.f32.gmra.mrb[0].mxu0 %v2088
  %v3404 = vpop.f32.mrb[0].mxu0
  %v3405 = vadd.f32 %v3020, %v3404
  %v3406 = vpop.f32.mrb[0].mxu0
  %3407 = vmatprep.mubr.f32.mxu0 0.0
  %3408 = vmatmul.mubr.f32.gmra.mrb[0].mxu0 %v2089
  %v3409 = vpop.f32.mrb[0].mxu0
  %v3410 = vadd.f32 %v3025, %v3409
  %v3411 = vpop.f32.mrb[0].mxu0
  %3412 = vmatprep.mubr.f32.mxu0 0.0
  %3413 = vmatmul.mubr.f32.gmra.mrb[0].mxu0 %v2090
  %v3414 = vpop.f32.mrb[0].mxu0
  %v3415 = vadd.f32 %v3030, %v3414
  %v3416 = vpop.f32.mrb[0].mxu0
  %3417 = vmatprep.mubr.f32.mxu0 0.0
  %3418 = vmatmul.mubr.f32.gmra.mrb[0].mxu0 %v2091
  %v3419 = vpop.f32.mrb[0].mxu0
  %v3420 = vadd.f32 %v3035, %v3419
  %v3421 = vpop.f32.mrb[0].mxu0
  %3422 = vmatprep.mubr.f32.mxu0 0.0
  %3423 = vmatmul.mubr.f32.gmra.mrb[0].mxu0 %v2092
  %v3424 = vpop.f32.mrb[0].mxu0
  %v3425 = vadd.f32 %v3040, %v3424
  %v3426 = vpop.f32.mrb[0].mxu0
  %3427 = vmatprep.mubr.f32.mxu0 0.0
  %3428 = vmatmul.mubr.f32.gmra.mrb[0].mxu0 %v2093
  %v3429 = vpop.f32.mrb[0].mxu0
  %v3430 = vadd.f32 %v3045, %v3429
  %v3431 = vpop.f32.mrb[0].mxu0
  %3432 = vmatprep.mubr.f32.mxu0 0.0
  %3433 = vmatmul.mubr.f32.gmra.mrb[0].mxu0 %v2094
  %v3434 = vpop.f32.mrb[0].mxu0
  %v3435 = vadd.f32 %v3050, %v3434
  %v3436 = vpop.f32.mrb[0].mxu0
  %3437 = vmatprep.mubr.f32.mxu0 0.0
  %3438 = vmatmul.mubr.f32.gmra.mrb[0].mxu0 %v2095
  %v3439 = vpop.f32.mrb[0].mxu0
  %v3440 = vadd.f32 %v3055, %v3439
  %v3441 = vpop.f32.mrb[0].mxu0
  %3442 = vmatprep.mubr.f32.mxu0 0.0
  %3443 = vmatmul.mubr.f32.gmra.mrb[0].mxu0 %v2096
  %v3444 = vpop.f32.mrb[0].mxu0
  %v3445 = vadd.f32 %v3060, %v3444
  %v3446 = vpop.f32.mrb[0].mxu0
  %3447 = vmatprep.mubr.f32.mxu0 0.0
  %3448 = vmatmul.mubr.f32.gmra.mrb[0].mxu0 %v2097
  %v3449 = vpop.f32.mrb[0].mxu0
  %v3450 = vadd.f32 %v3065, %v3449
  %v3451 = vpop.f32.mrb[0].mxu0
  %3452 = vmatprep.mubr.f32.mxu0 0.0
  %3453 = vmatmul.mubr.f32.gmra.mrb[0].mxu0 %v2098
  %v3454 = vpop.f32.mrb[0].mxu0
  %v3455 = vadd.f32 %v3070, %v3454
  %v3456 = vpop.f32.mrb[0].mxu0
  %3457 = vmatprep.mubr.f32.mxu0 0.0
  %3458 = vmatmul.mubr.f32.gmra.mrb[0].mxu0 %v2099
  %v3459 = vpop.f32.mrb[0].mxu0
  %v3460 = vadd.f32 %v3075, %v3459
  %v3461 = vpop.f32.mrb[0].mxu0
  %3462 = vmatprep.mubr.f32.mxu0 0.0
  %3463 = vmatmul.mubr.f32.gmra.mrb[0].mxu0 %v2100
  %v3464 = vpop.f32.mrb[0].mxu0
  %v3465 = vadd.f32 %v3080, %v3464
  %v3466 = vpop.f32.mrb[0].mxu0
  %3467 = vmatprep.mubr.f32.mxu0 0.0
  %3468 = vmatmul.mubr.f32.gmra.mrb[0].mxu0 %v2101
  %v3469 = vpop.f32.mrb[0].mxu0
  %v3470 = vadd.f32 %v3085, %v3469
  %v3471 = vpop.f32.mrb[0].mxu0
  %3472 = vmatprep.mubr.f32.mxu0 0.0
  %3473 = vmatmul.mubr.f32.gmra.mrb[0].mxu0 %v2102
  %v3474 = vpop.f32.mrb[0].mxu0
  %v3475 = vadd.f32 %v3090, %v3474
  %v3476 = vpop.f32.mrb[0].mxu0
  %3477 = vmatprep.mubr.f32.mxu0 0.0
  %3478 = vmatmul.mubr.f32.gmra.mrb[0].mxu0 %v2103
  %v3479 = vpop.f32.mrb[0].mxu0
  %v3480 = vadd.f32 %v3095, %v3479
  %v3481 = vpop.f32.mrb[0].mxu0
  %3482 = vmatprep.mubr.f32.mxu0 0.0
  %3483 = vmatmul.mubr.f32.gmra.mrb[0].mxu0 %v2104
  %v3484 = vpop.f32.mrb[0].mxu0
  %v3485 = vadd.f32 %v3100, %v3484
  %v3486 = vpop.f32.mrb[0].mxu0
  %3487 = vmatprep.mubr.f32.mxu0 0.0
  %3488 = vmatmul.mubr.f32.gmra.mrb[0].mxu0 %v2105
  %v3489 = vpop.f32.mrb[0].mxu0
  %v3490 = vadd.f32 %v3105, %v3489
  %v3491 = vpop.f32.mrb[0].mxu0
  %3492 = vmatprep.mubr.f32.mxu0 0.0
  %3493 = vmatmul.mubr.f32.gmra.mrb[0].mxu0 %v2106
  %v3494 = vpop.f32.mrb[0].mxu0
  %v3495 = vadd.f32 %v3110, %v3494
  %v3496 = vpop.f32.mrb[0].mxu0
  %3497 = vmatprep.mubr.f32.mxu0 0.0
  %3498 = vmatmul.mubr.f32.gmra.mrb[0].mxu0 %v2107
  %v3499 = vpop.f32.mrb[0].mxu0
  %v3500 = vadd.f32 %v3115, %v3499
  %v3501 = vpop.f32.mrb[0].mxu0
  %3502 = vmatprep.mubr.f32.mxu0 0.0
  %3503 = vmatmul.mubr.f32.gmra.mrb[0].mxu0 %v2108
  %v3504 = vpop.f32.mrb[0].mxu0
  %v3505 = vadd.f32 %v3120, %v3504
  %v3506 = vpop.f32.mrb[0].mxu0
  %3507 = vmatprep.mubr.f32.mxu0 0.0
  %3508 = vmatmul.mubr.f32.gmra.mrb[0].mxu0 %v2109
  %v3509 = vpop.f32.mrb[0].mxu0
  %v3510 = vadd.f32 %v3125, %v3509
  %v3511 = vpop.f32.mrb[0].mxu0
  %3512 = vmatprep.mubr.f32.mxu0 0.0
  %3513 = vmatmul.mubr.f32.gmra.mrb[0].mxu0 %v2110
  %v3514 = vpop.f32.mrb[0].mxu0
  %v3515 = vadd.f32 %v3130, %v3514
  %v3516 = vpop.f32.mrb[0].mxu0
  %3517 = vmatprep.mubr.f32.mxu0 0.0
  %3518 = vmatmul.mubr.f32.gmra.mrb[0].mxu0 %v2111
  %v3519 = vpop.f32.mrb[0].mxu0
  %v3520 = vadd.f32 %v3135, %v3519
  %v3521 = vpop.f32.mrb[0].mxu0
  %3522 = vmatprep.mubr.f32.mxu0 0.0
  %3523 = vmatmul.mubr.f32.gmra.mrb[0].mxu0 %v2112
  %v3524 = vpop.f32.mrb[0].mxu0
  %v3525 = vadd.f32 %v3140, %v3524
  %v3526 = vpop.f32.mrb[0].mxu0
  %3527 = vmatprep.mubr.f32.mxu0 0.0
  %3528 = vmatmul.mubr.f32.gmra.mrb[0].mxu0 %v2113
  %v3529 = vpop.f32.mrb[0].mxu0
  %v3530 = vadd.f32 %v3145, %v3529
  %v3531 = vpop.f32.mrb[0].mxu0
  %3532 = vmatprep.mubr.f32.mxu0 0.0
  %3533 = vmatmul.mubr.f32.gmra.mrb[0].mxu0 %v2114
  %v3534 = vpop.f32.mrb[0].mxu0
  %v3535 = vadd.f32 %v3150, %v3534
  %v3536 = vpop.f32.mrb[0].mxu0
  %3537 = vmatprep.mubr.f32.mxu0 0.0
  %3538 = vmatmul.mubr.f32.gmra.mrb[0].mxu0 %v2115
  %v3539 = vpop.f32.mrb[0].mxu0
  %v3540 = vadd.f32 %v3155, %v3539
  %v3541 = vpop.f32.mrb[0].mxu0
  %3542 = vmatprep.mubr.f32.mxu0 0.0
  %3543 = vmatmul.mubr.f32.gmra.mrb[0].mxu0 %v2116
  %v3544 = vpop.f32.mrb[0].mxu0
  %v3545 = vadd.f32 %v3160, %v3544
  %v3546 = vpop.f32.mrb[0].mxu0
  %3547 = vmatprep.mubr.f32.mxu0 0.0
  %3548 = vmatmul.mubr.f32.gmra.mrb[0].mxu0 %v2117
  %v3549 = vpop.f32.mrb[0].mxu0
  %v3550 = vadd.f32 %v3165, %v3549
  %v3551 = vpop.f32.mrb[0].mxu0
  %3552 = vmatprep.mubr.f32.mxu0 0.0
  %3553 = vmatmul.mubr.f32.gmra.mrb[0].mxu0 %v2118
  %v3554 = vpop.f32.mrb[0].mxu0
  %v3555 = vadd.f32 %v3170, %v3554
  %v3556 = vpop.f32.mrb[0].mxu0
  %3557 = vmatprep.mubr.f32.mxu0 0.0
  %3558 = vmatmul.mubr.f32.gmra.mrb[0].mxu0 %v2119
  %v3559 = vpop.f32.mrb[0].mxu0
  %v3560 = vadd.f32 %v3175, %v3559
  %v3561 = vpop.f32.mrb[0].mxu0
  %3562 = vmatprep.mubr.f32.mxu0 0.0
  %3563 = vmatmul.mubr.f32.gmra.mrb[0].mxu0 %v2120
  %v3564 = vpop.f32.mrb[0].mxu0
  %v3565 = vadd.f32 %v3180, %v3564
  %v3566 = vpop.f32.mrb[0].mxu0
  %3567 = vmatprep.mubr.f32.mxu0 0.0
  %3568 = vmatmul.mubr.f32.gmra.mrb[0].mxu0 %v2121
  %v3569 = vpop.f32.mrb[0].mxu0
  %v3570 = vadd.f32 %v3185, %v3569
  %v3571 = vpop.f32.mrb[0].mxu0
  %3572 = vmatprep.mubr.f32.mxu0 0.0
  %3573 = vmatmul.mubr.f32.gmra.mrb[0].mxu0 %v2122
  %v3574 = vpop.f32.mrb[0].mxu0
  %v3575 = vadd.f32 %v3190, %v3574
  %v3576 = vpop.f32.mrb[0].mxu0
  %3577 = vmatprep.mubr.f32.mxu0 0.0
  %3578 = vmatmul.mubr.f32.gmra.mrb[0].mxu0 %v2123
  %v3579 = vpop.f32.mrb[0].mxu0
  %v3580 = vadd.f32 %v3195, %v3579
  %v3581 = vpop.f32.mrb[0].mxu0
  %3582 = vmatprep.mubr.f32.mxu0 0.0
  %3583 = vmatmul.mubr.f32.gmra.mrb[0].mxu0 %v2124
  %v3584 = vpop.f32.mrb[0].mxu0
  %v3585 = vadd.f32 %v3200, %v3584
  %v3586 = vpop.f32.mrb[0].mxu0
  %3587 = vmatprep.mubr.f32.mxu0 0.0
  %3588 = vmatmul.mubr.f32.gmra.mrb[0].mxu0 %v2125
  %v3589 = vpop.f32.mrb[0].mxu0
  %v3590 = vadd.f32 %v3205, %v3589
  %v3591 = vpop.f32.mrb[0].mxu0
  %3592 = vmatprep.mubr.f32.mxu0 0.0
  %3593 = vmatmul.mubr.f32.gmra.mrb[0].mxu0 %v2126
  %v3594 = vpop.f32.mrb[0].mxu0
  %v3595 = vadd.f32 %v3210, %v3594
  %v3596 = vpop.f32.mrb[0].mxu0
  %3597 = vmatprep.mubr.f32.mxu0 0.0
  %3598 = vmatmul.mubr.f32.gmra.mrb[0].mxu0 %v2127
  %v3599 = vpop.f32.mrb[0].mxu0
  %v3600 = vadd.f32 %v3215, %v3599
  %v3601 = vpop.f32.mrb[0].mxu0
  %3602 = vmatprep.mubr.f32.mxu0 0.0
  %3603 = vmatmul.mubr.f32.gmra.mrb[0].mxu0 %v2128
  %v3604 = vpop.f32.mrb[0].mxu0
  %v3605 = vadd.f32 %v3220, %v3604
  %v3606 = vpop.f32.mrb[0].mxu0
  %3607 = vmatprep.mubr.f32.mxu0 0.0
  %3608 = vmatmul.mubr.f32.gmra.mrb[0].mxu0 %v2129
  %v3609 = vpop.f32.mrb[0].mxu0
  %v3610 = vadd.f32 %v3225, %v3609
  %v3611 = vpop.f32.mrb[0].mxu0
  %3612 = vmatprep.mubr.f32.mxu0 0.0
  %3613 = vmatmul.mubr.f32.gmra.mrb[0].mxu0 %v2130
  %v3614 = vpop.f32.mrb[0].mxu0
  %v3615 = vadd.f32 %v3230, %v3614
  %v3616 = vpop.f32.mrb[0].mxu0
  %3617 = vmatprep.mubr.f32.mxu0 0.0
  %3618 = vmatmul.mubr.f32.gmra.mrb[0].mxu0 %v2131
  %v3619 = vpop.f32.mrb[0].mxu0
  %v3620 = vadd.f32 %v3235, %v3619
  %v3621 = vpop.f32.mrb[0].mxu0
  %3622 = vmatprep.mubr.f32.mxu0 0.0
  %3623 = vmatmul.mubr.f32.gmra.mrb[0].mxu0 %v2132
  %v3624 = vpop.f32.mrb[0].mxu0
  %v3625 = vadd.f32 %v3240, %v3624
  %v3626 = vpop.f32.mrb[0].mxu0
  %3627 = vmatprep.mubr.f32.mxu0 0.0
  %3628 = vmatmul.mubr.f32.gmra.mrb[0].mxu0 %v2133
  %v3629 = vpop.f32.mrb[0].mxu0
  %v3630 = vadd.f32 %v3245, %v3629
  %v3631 = vpop.f32.mrb[0].mxu0
  %3632 = vmatprep.mubr.f32.mxu0 0.0
  %3633 = vmatmul.mubr.f32.gmra.mrb[0].mxu0 %v2134
  %v3634 = vpop.f32.mrb[0].mxu0
  %v3635 = vadd.f32 %v3250, %v3634
  %v3636 = vpop.f32.mrb[0].mxu0
  %3637 = vmatprep.mubr.f32.mxu0 0.0
  %3638 = vmatmul.mubr.f32.gmra.mrb[0].mxu0 %v2135
  %v3639 = vpop.f32.mrb[0].mxu0
  %v3640 = vadd.f32 %v3255, %v3639
  %v3641 = vpop.f32.mrb[0].mxu0
  %3642 = vdwg.mxu0
  %v3643 = vrot.slane %v853, 1
  %v3644 = vrot.slane %v854, 1
  %v3645 = vrot.slane %v855, 1
  %v3646 = vrot.slane %v856, 1
  %v3647 = vrot.slane %v857, 1
  %v3648 = vrot.slane %v858, 1
  %v3649 = vrot.slane %v859, 1
  %v3650 = vrot.slane %v860, 1
  %v3651 = vrot.slane %v861, 1
  %v3652 = vrot.slane %v862, 1
  %v3653 = vrot.slane %v863, 1
  %v3654 = vrot.slane %v864, 1
  %v3655 = vrot.slane %v865, 1
  %v3656 = vrot.slane %v866, 1
  %v3657 = vrot.slane %v867, 1
  %v3658 = vrot.slane %v868, 1
  %v3659 = vrot.slane %v869, 1
  %v3660 = vrot.slane %v870, 1
  %v3661 = vrot.slane %v871, 1
  %v3662 = vrot.slane %v872, 1
  %v3663 = vrot.slane %v873, 1
  %v3664 = vrot.slane %v874, 1
  %v3665 = vrot.slane %v875, 1
  %v3666 = vrot.slane %v876, 1
  %v3667 = vrot.slane %v877, 1
  %v3668 = vrot.slane %v878, 1
  %v3669 = vrot.slane %v879, 1
  %v3670 = vrot.slane %v880, 1
  %v3671 = vrot.slane %v881, 1
  %v3672 = vrot.slane %v882, 1
  %v3673 = vrot.slane %v883, 1
  %v3674 = vrot.slane %v884, 1
  %v3675 = vrot.slane %v885, 1
  %v3676 = vrot.slane %v886, 1
  %v3677 = vrot.slane %v887, 1
  %v3678 = vrot.slane %v888, 1
  %v3679 = vrot.slane %v889, 1
  %v3680 = vrot.slane %v890, 1
  %v3681 = vrot.slane %v891, 1
  %v3682 = vrot.slane %v892, 1
  %v3683 = vrot.slane %v893, 1
  %v3684 = vrot.slane %v894, 1
  %v3685 = vrot.slane %v895, 1
  %v3686 = vrot.slane %v896, 1
  %v3687 = vrot.slane %v897, 1
  %v3688 = vrot.slane %v898, 1
  %v3689 = vrot.slane %v899, 1
  %v3690 = vrot.slane %v900, 1
  %v3691 = vrot.slane %v901, 1
  %v3692 = vrot.slane %v902, 1
  %v3693 = vrot.slane %v903, 1
  %v3694 = vrot.slane %v904, 1
  %v3695 = vrot.slane %v905, 1
  %v3696 = vrot.slane %v906, 1
  %v3697 = vrot.slane %v907, 1
  %v3698 = vrot.slane %v908, 1
  %v3699 = vrot.slane %v909, 1
  %v3700 = vrot.slane %v910, 1
  %v3701 = vrot.slane %v911, 1
  %v3702 = vrot.slane %v912, 1
  %v3703 = vrot.slane %v913, 1
  %v3704 = vrot.slane %v914, 1
  %v3705 = vrot.slane %v915, 1
  %v3706 = vrot.slane %v916, 1
  %vm3707 = vcmp.lt.s32.totalorder %v1110, 7
  %v3708 = vsel %vm3707, %v3705, %v3706
  %v3709 = vsel %vm3707, %v3704, %v3705
  %v3710 = vsel %vm3707, %v3703, %v3704
  %v3711 = vsel %vm3707, %v3702, %v3703
  %v3712 = vsel %vm3707, %v3701, %v3702
  %v3713 = vsel %vm3707, %v3700, %v3701
  %v3714 = vsel %vm3707, %v3699, %v3700
  %v3715 = vsel %vm3707, %v3698, %v3699
  %v3716 = vsel %vm3707, %v3697, %v3698
  %v3717 = vsel %vm3707, %v3696, %v3697
  %v3718 = vsel %vm3707, %v3695, %v3696
  %v3719 = vsel %vm3707, %v3694, %v3695
  %v3720 = vsel %vm3707, %v3693, %v3694
  %v3721 = vsel %vm3707, %v3692, %v3693
  %v3722 = vsel %vm3707, %v3691, %v3692
  %v3723 = vsel %vm3707, %v3690, %v3691
  %v3724 = vsel %vm3707, %v3689, %v3690
  %v3725 = vsel %vm3707, %v3688, %v3689
  %v3726 = vsel %vm3707, %v3687, %v3688
  %v3727 = vsel %vm3707, %v3686, %v3687
  %v3728 = vsel %vm3707, %v3685, %v3686
  %v3729 = vsel %vm3707, %v3684, %v3685
  %v3730 = vsel %vm3707, %v3683, %v3684
  %v3731 = vsel %vm3707, %v3682, %v3683
  %v3732 = vsel %vm3707, %v3681, %v3682
  %v3733 = vsel %vm3707, %v3680, %v3681
  %v3734 = vsel %vm3707, %v3679, %v3680
  %v3735 = vsel %vm3707, %v3678, %v3679
  %v3736 = vsel %vm3707, %v3677, %v3678
  %v3737 = vsel %vm3707, %v3676, %v3677
  %v3738 = vsel %vm3707, %v3675, %v3676
  %v3739 = vsel %vm3707, %v3674, %v3675
  %v3740 = vsel %vm3707, %v3673, %v3674
  %v3741 = vsel %vm3707, %v3672, %v3673
  %v3742 = vsel %vm3707, %v3671, %v3672
  %v3743 = vsel %vm3707, %v3670, %v3671
  %v3744 = vsel %vm3707, %v3669, %v3670
  %v3745 = vsel %vm3707, %v3668, %v3669
  %v3746 = vsel %vm3707, %v3667, %v3668
  %v3747 = vsel %vm3707, %v3666, %v3667
  %v3748 = vsel %vm3707, %v3665, %v3666
  %v3749 = vsel %vm3707, %v3664, %v3665
  %v3750 = vsel %vm3707, %v3663, %v3664
  %v3751 = vsel %vm3707, %v3662, %v3663
  %v3752 = vsel %vm3707, %v3661, %v3662
  %v3753 = vsel %vm3707, %v3660, %v3661
  %v3754 = vsel %vm3707, %v3659, %v3660
  %v3755 = vsel %vm3707, %v3658, %v3659
  %v3756 = vsel %vm3707, %v3657, %v3658
  %v3757 = vsel %vm3707, %v3656, %v3657
  %v3758 = vsel %vm3707, %v3655, %v3656
  %v3759 = vsel %vm3707, %v3654, %v3655
  %v3760 = vsel %vm3707, %v3653, %v3654
  %v3761 = vsel %vm3707, %v3652, %v3653
  %v3762 = vsel %vm3707, %v3651, %v3652
  %v3763 = vsel %vm3707, %v3650, %v3651
  %v3764 = vsel %vm3707, %v3649, %v3650
  %v3765 = vsel %vm3707, %v3648, %v3649
  %v3766 = vsel %vm3707, %v3647, %v3648
  %v3767 = vsel %vm3707, %v3646, %v3647
  %v3768 = vsel %vm3707, %v3645, %v3646
  %v3769 = vsel %vm3707, %v3644, %v3645
  %v3770 = vsel %vm3707, %v3643, %v3644
  %v3771 = vsel %vm3707, %v3706, %v3643
  %v3772 = vadd.s32 %v917, 1
  %v3773 = vadd.s32 %v918, 1
  %v3774 = vadd.s32 %v919, 1
  %v3775 = vadd.s32 %v920, 1
  %v3776 = vadd.s32 %v921, 1
  %v3777 = vadd.s32 %v922, 1
  %v3778 = vadd.s32 %v923, 1
  %v3779 = vadd.s32 %v924, 1
  %v3780 = vadd.s32 %v925, 1
  %v3781 = vadd.s32 %v926, 1
  %v3782 = vadd.s32 %v927, 1
  %v3783 = vadd.s32 %v928, 1
  %v3784 = vadd.s32 %v929, 1
  %v3785 = vadd.s32 %v930, 1
  %v3786 = vadd.s32 %v931, 1
  %v3787 = vadd.s32 %v932, 1
  %v3788 = vadd.s32 %v933, 1
  %v3789 = vadd.s32 %v934, 1
  %v3790 = vadd.s32 %v935, 1
  %v3791 = vadd.s32 %v936, 1
  %v3792 = vadd.s32 %v937, 1
  %v3793 = vadd.s32 %v938, 1
  %v3794 = vadd.s32 %v939, 1
  %v3795 = vadd.s32 %v940, 1
  %v3796 = vadd.s32 %v941, 1
  %v3797 = vadd.s32 %v942, 1
  %v3798 = vadd.s32 %v943, 1
  %v3799 = vadd.s32 %v944, 1
  %v3800 = vadd.s32 %v945, 1
  %v3801 = vadd.s32 %v946, 1
  %v3802 = vadd.s32 %v947, 1
  %v3803 = vadd.s32 %v948, 1
  %v3804 = vadd.s32 %v949, 1
  %v3805 = vadd.s32 %v950, 1
  %v3806 = vadd.s32 %v951, 1
  %v3807 = vadd.s32 %v952, 1
  %v3808 = vadd.s32 %v953, 1
  %v3809 = vadd.s32 %v954, 1
  %v3810 = vadd.s32 %v955, 1
  %v3811 = vadd.s32 %v956, 1
  %v3812 = vadd.s32 %v957, 1
  %v3813 = vadd.s32 %v958, 1
  %v3814 = vadd.s32 %v959, 1
  %v3815 = vadd.s32 %v960, 1
  %v3816 = vadd.s32 %v961, 1
  %v3817 = vadd.s32 %v962, 1
  %v3818 = vadd.s32 %v963, 1
  %v3819 = vadd.s32 %v964, 1
  %v3820 = vadd.s32 %v965, 1
  %v3821 = vadd.s32 %v966, 1
  %v3822 = vadd.s32 %v967, 1
  %v3823 = vadd.s32 %v968, 1
  %v3824 = vadd.s32 %v969, 1
  %v3825 = vadd.s32 %v970, 1
  %v3826 = vadd.s32 %v971, 1
  %v3827 = vadd.s32 %v972, 1
  %v3828 = vadd.s32 %v973, 1
  %v3829 = vadd.s32 %v974, 1
  %v3830 = vadd.s32 %v975, 1
  %v3831 = vadd.s32 %v976, 1
  %v3832 = vadd.s32 %v977, 1
  %v3833 = vadd.s32 %v978, 1
  %v3834 = vadd.s32 %v979, 1
  %v3835 = vadd.s32 %v980, 1
  %vm3836 = vcmp.ge.s32.totalorder %v3772, 0
  %vm3837 = vcmp.ge.s32.totalorder %v3773, 0
  %vm3838 = vcmp.ge.s32.totalorder %v3774, 0
  %vm3839 = vcmp.ge.s32.totalorder %v3775, 0
  %vm3840 = vcmp.ge.s32.totalorder %v3776, 0
  %vm3841 = vcmp.ge.s32.totalorder %v3777, 0
  %vm3842 = vcmp.ge.s32.totalorder %v3778, 0
  %vm3843 = vcmp.ge.s32.totalorder %v3779, 0
  %vm3844 = vcmp.ge.s32.totalorder %v3780, 0
  %vm3845 = vcmp.ge.s32.totalorder %v3781, 0
  %vm3846 = vcmp.ge.s32.totalorder %v3782, 0
  %vm3847 = vcmp.ge.s32.totalorder %v3783, 0
  %vm3848 = vcmp.ge.s32.totalorder %v3784, 0
  %vm3849 = vcmp.ge.s32.totalorder %v3785, 0
  %vm3850 = vcmp.ge.s32.totalorder %v3786, 0
  %vm3851 = vcmp.ge.s32.totalorder %v3787, 0
  %vm3852 = vcmp.ge.s32.totalorder %v3788, 0
  %vm3853 = vcmp.ge.s32.totalorder %v3789, 0
  %vm3854 = vcmp.ge.s32.totalorder %v3790, 0
  %vm3855 = vcmp.ge.s32.totalorder %v3791, 0
  %vm3856 = vcmp.ge.s32.totalorder %v3792, 0
  %vm3857 = vcmp.ge.s32.totalorder %v3793, 0
  %vm3858 = vcmp.ge.s32.totalorder %v3794, 0
  %vm3859 = vcmp.ge.s32.totalorder %v3795, 0
  %vm3860 = vcmp.ge.s32.totalorder %v3796, 0
  %vm3861 = vcmp.ge.s32.totalorder %v3797, 0
  %vm3862 = vcmp.ge.s32.totalorder %v3798, 0
  %vm3863 = vcmp.ge.s32.totalorder %v3799, 0
  %vm3864 = vcmp.ge.s32.totalorder %v3800, 0
  %vm3865 = vcmp.ge.s32.totalorder %v3801, 0
  %vm3866 = vcmp.ge.s32.totalorder %v3802, 0
  %vm3867 = vcmp.ge.s32.totalorder %v3803, 0
  %vm3868 = vcmp.ge.s32.totalorder %v3804, 0
  %vm3869 = vcmp.ge.s32.totalorder %v3805, 0
  %vm3870 = vcmp.ge.s32.totalorder %v3806, 0
  %vm3871 = vcmp.ge.s32.totalorder %v3807, 0
  %vm3872 = vcmp.ge.s32.totalorder %v3808, 0
  %vm3873 = vcmp.ge.s32.totalorder %v3809, 0
  %vm3874 = vcmp.ge.s32.totalorder %v3810, 0
  %vm3875 = vcmp.ge.s32.totalorder %v3811, 0
  %vm3876 = vcmp.ge.s32.totalorder %v3812, 0
  %vm3877 = vcmp.ge.s32.totalorder %v3813, 0
  %vm3878 = vcmp.ge.s32.totalorder %v3814, 0
  %vm3879 = vcmp.ge.s32.totalorder %v3815, 0
  %vm3880 = vcmp.ge.s32.totalorder %v3816, 0
  %vm3881 = vcmp.ge.s32.totalorder %v3817, 0
  %vm3882 = vcmp.ge.s32.totalorder %v3818, 0
  %vm3883 = vcmp.ge.s32.totalorder %v3819, 0
  %vm3884 = vcmp.ge.s32.totalorder %v3820, 0
  %vm3885 = vcmp.ge.s32.totalorder %v3821, 0
  %vm3886 = vcmp.ge.s32.totalorder %v3822, 0
  %vm3887 = vcmp.ge.s32.totalorder %v3823, 0
  %vm3888 = vcmp.ge.s32.totalorder %v3824, 0
  %vm3889 = vcmp.ge.s32.totalorder %v3825, 0
  %vm3890 = vcmp.ge.s32.totalorder %v3826, 0
  %vm3891 = vcmp.ge.s32.totalorder %v3827, 0
  %vm3892 = vcmp.ge.s32.totalorder %v3828, 0
  %vm3893 = vcmp.ge.s32.totalorder %v3829, 0
  %vm3894 = vcmp.ge.s32.totalorder %v3830, 0
  %vm3895 = vcmp.ge.s32.totalorder %v3831, 0
  %vm3896 = vcmp.ge.s32.totalorder %v3832, 0
  %vm3897 = vcmp.ge.s32.totalorder %v3833, 0
  %vm3898 = vcmp.ge.s32.totalorder %v3834, 0
  %vm3899 = vcmp.ge.s32.totalorder %v3835, 0
  %vm3900 = vcmp.lt.s32.totalorder %v3772, 16
  %vm3901 = vcmp.lt.s32.totalorder %v3773, 16
  %vm3902 = vcmp.lt.s32.totalorder %v3774, 16
  %vm3903 = vcmp.lt.s32.totalorder %v3775, 16
  %vm3904 = vcmp.lt.s32.totalorder %v3776, 16
  %vm3905 = vcmp.lt.s32.totalorder %v3777, 16
  %vm3906 = vcmp.lt.s32.totalorder %v3778, 16
  %vm3907 = vcmp.lt.s32.totalorder %v3779, 16
  %vm3908 = vcmp.lt.s32.totalorder %v3780, 16
  %vm3909 = vcmp.lt.s32.totalorder %v3781, 16
  %vm3910 = vcmp.lt.s32.totalorder %v3782, 16
  %vm3911 = vcmp.lt.s32.totalorder %v3783, 16
  %vm3912 = vcmp.lt.s32.totalorder %v3784, 16
  %vm3913 = vcmp.lt.s32.totalorder %v3785, 16
  %vm3914 = vcmp.lt.s32.totalorder %v3786, 16
  %vm3915 = vcmp.lt.s32.totalorder %v3787, 16
  %vm3916 = vcmp.lt.s32.totalorder %v3788, 16
  %vm3917 = vcmp.lt.s32.totalorder %v3789, 16
  %vm3918 = vcmp.lt.s32.totalorder %v3790, 16
  %vm3919 = vcmp.lt.s32.totalorder %v3791, 16
  %vm3920 = vcmp.lt.s32.totalorder %v3792, 16
  %vm3921 = vcmp.lt.s32.totalorder %v3793, 16
  %vm3922 = vcmp.lt.s32.totalorder %v3794, 16
  %vm3923 = vcmp.lt.s32.totalorder %v3795, 16
  %vm3924 = vcmp.lt.s32.totalorder %v3796, 16
  %vm3925 = vcmp.lt.s32.totalorder %v3797, 16
  %vm3926 = vcmp.lt.s32.totalorder %v3798, 16
  %vm3927 = vcmp.lt.s32.totalorder %v3799, 16
  %vm3928 = vcmp.lt.s32.totalorder %v3800, 16
  %vm3929 = vcmp.lt.s32.totalorder %v3801, 16
  %vm3930 = vcmp.lt.s32.totalorder %v3802, 16
  %vm3931 = vcmp.lt.s32.totalorder %v3803, 16
  %vm3932 = vcmp.lt.s32.totalorder %v3804, 16
  %vm3933 = vcmp.lt.s32.totalorder %v3805, 16
  %vm3934 = vcmp.lt.s32.totalorder %v3806, 16
  %vm3935 = vcmp.lt.s32.totalorder %v3807, 16
  %vm3936 = vcmp.lt.s32.totalorder %v3808, 16
  %vm3937 = vcmp.lt.s32.totalorder %v3809, 16
  %vm3938 = vcmp.lt.s32.totalorder %v3810, 16
  %vm3939 = vcmp.lt.s32.totalorder %v3811, 16
  %vm3940 = vcmp.lt.s32.totalorder %v3812, 16
  %vm3941 = vcmp.lt.s32.totalorder %v3813, 16
  %vm3942 = vcmp.lt.s32.totalorder %v3814, 16
  %vm3943 = vcmp.lt.s32.totalorder %v3815, 16
  %vm3944 = vcmp.lt.s32.totalorder %v3816, 16
  %vm3945 = vcmp.lt.s32.totalorder %v3817, 16
  %vm3946 = vcmp.lt.s32.totalorder %v3818, 16
  %vm3947 = vcmp.lt.s32.totalorder %v3819, 16
  %vm3948 = vcmp.lt.s32.totalorder %v3820, 16
  %vm3949 = vcmp.lt.s32.totalorder %v3821, 16
  %vm3950 = vcmp.lt.s32.totalorder %v3822, 16
  %vm3951 = vcmp.lt.s32.totalorder %v3823, 16
  %vm3952 = vcmp.lt.s32.totalorder %v3824, 16
  %vm3953 = vcmp.lt.s32.totalorder %v3825, 16
  %vm3954 = vcmp.lt.s32.totalorder %v3826, 16
  %vm3955 = vcmp.lt.s32.totalorder %v3827, 16
  %vm3956 = vcmp.lt.s32.totalorder %v3828, 16
  %vm3957 = vcmp.lt.s32.totalorder %v3829, 16
  %vm3958 = vcmp.lt.s32.totalorder %v3830, 16
  %vm3959 = vcmp.lt.s32.totalorder %v3831, 16
  %vm3960 = vcmp.lt.s32.totalorder %v3832, 16
  %vm3961 = vcmp.lt.s32.totalorder %v3833, 16
  %vm3962 = vcmp.lt.s32.totalorder %v3834, 16
  %vm3963 = vcmp.lt.s32.totalorder %v3835, 16
  %vm3964 = vmand %vm3836, %vm3900
  %vm3965 = vmand %vm3837, %vm3901
  %vm3966 = vmand %vm3838, %vm3902
  %vm3967 = vmand %vm3839, %vm3903
  %vm3968 = vmand %vm3840, %vm3904
  %vm3969 = vmand %vm3841, %vm3905
  %vm3970 = vmand %vm3842, %vm3906
  %vm3971 = vmand %vm3843, %vm3907
  %vm3972 = vmand %vm3844, %vm3908
  %vm3973 = vmand %vm3845, %vm3909
  %vm3974 = vmand %vm3846, %vm3910
  %vm3975 = vmand %vm3847, %vm3911
  %vm3976 = vmand %vm3848, %vm3912
  %vm3977 = vmand %vm3849, %vm3913
  %vm3978 = vmand %vm3850, %vm3914
  %vm3979 = vmand %vm3851, %vm3915
  %vm3980 = vmand %vm3852, %vm3916
  %vm3981 = vmand %vm3853, %vm3917
  %vm3982 = vmand %vm3854, %vm3918
  %vm3983 = vmand %vm3855, %vm3919
  %vm3984 = vmand %vm3856, %vm3920
  %vm3985 = vmand %vm3857, %vm3921
  %vm3986 = vmand %vm3858, %vm3922
  %vm3987 = vmand %vm3859, %vm3923
  %vm3988 = vmand %vm3860, %vm3924
  %vm3989 = vmand %vm3861, %vm3925
  %vm3990 = vmand %vm3862, %vm3926
  %vm3991 = vmand %vm3863, %vm3927
  %vm3992 = vmand %vm3864, %vm3928
  %vm3993 = vmand %vm3865, %vm3929
  %vm3994 = vmand %vm3866, %vm3930
  %vm3995 = vmand %vm3867, %vm3931
  %vm3996 = vmand %vm3868, %vm3932
  %vm3997 = vmand %vm3869, %vm3933
  %vm3998 = vmand %vm3870, %vm3934
  %vm3999 = vmand %vm3871, %vm3935
  %vm4000 = vmand %vm3872, %vm3936
  %vm4001 = vmand %vm3873, %vm3937
  %vm4002 = vmand %vm3874, %vm3938
  %vm4003 = vmand %vm3875, %vm3939
  %vm4004 = vmand %vm3876, %vm3940
  %vm4005 = vmand %vm3877, %vm3941
  %vm4006 = vmand %vm3878, %vm3942
  %vm4007 = vmand %vm3879, %vm3943
  %vm4008 = vmand %vm3880, %vm3944
  %vm4009 = vmand %vm3881, %vm3945
  %vm4010 = vmand %vm3882, %vm3946
  %vm4011 = vmand %vm3883, %vm3947
  %vm4012 = vmand %vm3884, %vm3948
  %vm4013 = vmand %vm3885, %vm3949
  %vm4014 = vmand %vm3886, %vm3950
  %vm4015 = vmand %vm3887, %vm3951
  %vm4016 = vmand %vm3888, %vm3952
  %vm4017 = vmand %vm3889, %vm3953
  %vm4018 = vmand %vm3890, %vm3954
  %vm4019 = vmand %vm3891, %vm3955
  %vm4020 = vmand %vm3892, %vm3956
  %vm4021 = vmand %vm3893, %vm3957
  %vm4022 = vmand %vm3894, %vm3958
  %vm4023 = vmand %vm3895, %vm3959
  %vm4024 = vmand %vm3896, %vm3960
  %vm4025 = vmand %vm3897, %vm3961
  %vm4026 = vmand %vm3898, %vm3962
  %vm4027 = vmand %vm3899, %vm3963
  %vm4028 = vmand %vm3964, %vm1496
  %vm4029 = vmand %vm3965, %vm1497
  %vm4030 = vmand %vm3966, %vm1498
  %vm4031 = vmand %vm3967, %vm1499
  %vm4032 = vmand %vm3968, %vm1500
  %vm4033 = vmand %vm3969, %vm1501
  %vm4034 = vmand %vm3970, %vm1502
  %vm4035 = vmand %vm3971, %vm1503
  %vm4036 = vmand %vm3972, %vm1504
  %vm4037 = vmand %vm3973, %vm1505
  %vm4038 = vmand %vm3974, %vm1506
  %vm4039 = vmand %vm3975, %vm1507
  %vm4040 = vmand %vm3976, %vm1508
  %vm4041 = vmand %vm3977, %vm1509
  %vm4042 = vmand %vm3978, %vm1510
  %vm4043 = vmand %vm3979, %vm1511
  %vm4044 = vmand %vm3980, %vm1512
  %vm4045 = vmand %vm3981, %vm1513
  %vm4046 = vmand %vm3982, %vm1514
  %vm4047 = vmand %vm3983, %vm1515
  %vm4048 = vmand %vm3984, %vm1516
  %vm4049 = vmand %vm3985, %vm1517
  %vm4050 = vmand %vm3986, %vm1518
  %vm4051 = vmand %vm3987, %vm1519
  %vm4052 = vmand %vm3988, %vm1520
  %vm4053 = vmand %vm3989, %vm1521
  %vm4054 = vmand %vm3990, %vm1522
  %vm4055 = vmand %vm3991, %vm1523
  %vm4056 = vmand %vm3992, %vm1524
  %vm4057 = vmand %vm3993, %vm1525
  %vm4058 = vmand %vm3994, %vm1526
  %vm4059 = vmand %vm3995, %vm1527
  %vm4060 = vmand %vm3996, %vm1528
  %vm4061 = vmand %vm3997, %vm1529
  %vm4062 = vmand %vm3998, %vm1530
  %vm4063 = vmand %vm3999, %vm1531
  %vm4064 = vmand %vm4000, %vm1532
  %vm4065 = vmand %vm4001, %vm1533
  %vm4066 = vmand %vm4002, %vm1534
  %vm4067 = vmand %vm4003, %vm1535
  %vm4068 = vmand %vm4004, %vm1536
  %vm4069 = vmand %vm4005, %vm1537
  %vm4070 = vmand %vm4006, %vm1538
  %vm4071 = vmand %vm4007, %vm1539
  %vm4072 = vmand %vm4008, %vm1540
  %vm4073 = vmand %vm4009, %vm1541
  %vm4074 = vmand %vm4010, %vm1542
  %vm4075 = vmand %vm4011, %vm1543
  %vm4076 = vmand %vm4012, %vm1544
  %vm4077 = vmand %vm4013, %vm1545
  %vm4078 = vmand %vm4014, %vm1546
  %vm4079 = vmand %vm4015, %vm1547
  %vm4080 = vmand %vm4016, %vm1548
  %vm4081 = vmand %vm4017, %vm1549
  %vm4082 = vmand %vm4018, %vm1550
  %vm4083 = vmand %vm4019, %vm1551
  %vm4084 = vmand %vm4020, %vm1552
  %vm4085 = vmand %vm4021, %vm1553
  %vm4086 = vmand %vm4022, %vm1554
  %vm4087 = vmand %vm4023, %vm1555
  %vm4088 = vmand %vm4024, %vm1556
  %vm4089 = vmand %vm4025, %vm1557
  %vm4090 = vmand %vm4026, %vm1558
  %vm4091 = vmand %vm4027, %vm1559
  %vm4092 = vmand %vm4028, %vm1624
  %vm4093 = vmand %vm4029, %vm1625
  %vm4094 = vmand %vm4030, %vm1626
  %vm4095 = vmand %vm4031, %vm1627
  %vm4096 = vmand %vm4032, %vm1628
  %vm4097 = vmand %vm4033, %vm1629
  %vm4098 = vmand %vm4034, %vm1630
  %vm4099 = vmand %vm4035, %vm1631
  %vm4100 = vmand %vm4036, %vm1632
  %vm4101 = vmand %vm4037, %vm1633
  %vm4102 = vmand %vm4038, %vm1634
  %vm4103 = vmand %vm4039, %vm1635
  %vm4104 = vmand %vm4040, %vm1636
  %vm4105 = vmand %vm4041, %vm1637
  %vm4106 = vmand %vm4042, %vm1638
  %vm4107 = vmand %vm4043, %vm1639
  %vm4108 = vmand %vm4044, %vm1640
  %vm4109 = vmand %vm4045, %vm1641
  %vm4110 = vmand %vm4046, %vm1642
  %vm4111 = vmand %vm4047, %vm1643
  %vm4112 = vmand %vm4048, %vm1644
  %vm4113 = vmand %vm4049, %vm1645
  %vm4114 = vmand %vm4050, %vm1646
  %vm4115 = vmand %vm4051, %vm1647
  %vm4116 = vmand %vm4052, %vm1648
  %vm4117 = vmand %vm4053, %vm1649
  %vm4118 = vmand %vm4054, %vm1650
  %vm4119 = vmand %vm4055, %vm1651
  %vm4120 = vmand %vm4056, %vm1652
  %vm4121 = vmand %vm4057, %vm1653
  %vm4122 = vmand %vm4058, %vm1654
  %vm4123 = vmand %vm4059, %vm1655
  %vm4124 = vmand %vm4060, %vm1656
  %vm4125 = vmand %vm4061, %vm1657
  %vm4126 = vmand %vm4062, %vm1658
  %vm4127 = vmand %vm4063, %vm1659
  %vm4128 = vmand %vm4064, %vm1660
  %vm4129 = vmand %vm4065, %vm1661
  %vm4130 = vmand %vm4066, %vm1662
  %vm4131 = vmand %vm4067, %vm1663
  %vm4132 = vmand %vm4068, %vm1664
  %vm4133 = vmand %vm4069, %vm1665
  %vm4134 = vmand %vm4070, %vm1666
  %vm4135 = vmand %vm4071, %vm1667
  %vm4136 = vmand %vm4072, %vm1668
  %vm4137 = vmand %vm4073, %vm1669
  %vm4138 = vmand %vm4074, %vm1670
  %vm4139 = vmand %vm4075, %vm1671
  %vm4140 = vmand %vm4076, %vm1672
  %vm4141 = vmand %vm4077, %vm1673
  %vm4142 = vmand %vm4078, %vm1674
  %vm4143 = vmand %vm4079, %vm1675
  %vm4144 = vmand %vm4080, %vm1676
  %vm4145 = vmand %vm4081, %vm1677
  %vm4146 = vmand %vm4082, %vm1678
  %vm4147 = vmand %vm4083, %vm1679
  %vm4148 = vmand %vm4084, %vm1680
  %vm4149 = vmand %vm4085, %vm1681
  %vm4150 = vmand %vm4086, %vm1682
  %vm4151 = vmand %vm4087, %vm1683
  %vm4152 = vmand %vm4088, %vm1684
  %vm4153 = vmand %vm4089, %vm1685
  %vm4154 = vmand %vm4090, %vm1686
  %vm4155 = vmand %vm4091, %vm1687
  %v4156 = vsel %vm4092, 1, 0
  %v4157 = vsel %vm4093, 1, 0
  %v4158 = vsel %vm4094, 1, 0
  %v4159 = vsel %vm4095, 1, 0
  %v4160 = vsel %vm4096, 1, 0
  %v4161 = vsel %vm4097, 1, 0
  %v4162 = vsel %vm4098, 1, 0
  %v4163 = vsel %vm4099, 1, 0
  %v4164 = vsel %vm4100, 1, 0
  %v4165 = vsel %vm4101, 1, 0
  %v4166 = vsel %vm4102, 1, 0
  %v4167 = vsel %vm4103, 1, 0
  %v4168 = vsel %vm4104, 1, 0
  %v4169 = vsel %vm4105, 1, 0
  %v4170 = vsel %vm4106, 1, 0
  %v4171 = vsel %vm4107, 1, 0
  %v4172 = vsel %vm4108, 1, 0
  %v4173 = vsel %vm4109, 1, 0
  %v4174 = vsel %vm4110, 1, 0
  %v4175 = vsel %vm4111, 1, 0
  %v4176 = vsel %vm4112, 1, 0
  %v4177 = vsel %vm4113, 1, 0
  %v4178 = vsel %vm4114, 1, 0
  %v4179 = vsel %vm4115, 1, 0
  %v4180 = vsel %vm4116, 1, 0
  %v4181 = vsel %vm4117, 1, 0
  %v4182 = vsel %vm4118, 1, 0
  %v4183 = vsel %vm4119, 1, 0
  %v4184 = vsel %vm4120, 1, 0
  %v4185 = vsel %vm4121, 1, 0
  %v4186 = vsel %vm4122, 1, 0
  %v4187 = vsel %vm4123, 1, 0
  %v4188 = vsel %vm4124, 1, 0
  %v4189 = vsel %vm4125, 1, 0
  %v4190 = vsel %vm4126, 1, 0
  %v4191 = vsel %vm4127, 1, 0
  %v4192 = vsel %vm4128, 1, 0
  %v4193 = vsel %vm4129, 1, 0
  %v4194 = vsel %vm4130, 1, 0
  %v4195 = vsel %vm4131, 1, 0
  %v4196 = vsel %vm4132, 1, 0
  %v4197 = vsel %vm4133, 1, 0
  %v4198 = vsel %vm4134, 1, 0
  %v4199 = vsel %vm4135, 1, 0
  %v4200 = vsel %vm4136, 1, 0
  %v4201 = vsel %vm4137, 1, 0
  %v4202 = vsel %vm4138, 1, 0
  %v4203 = vsel %vm4139, 1, 0
  %v4204 = vsel %vm4140, 1, 0
  %v4205 = vsel %vm4141, 1, 0
  %v4206 = vsel %vm4142, 1, 0
  %v4207 = vsel %vm4143, 1, 0
  %v4208 = vsel %vm4144, 1, 0
  %v4209 = vsel %vm4145, 1, 0
  %v4210 = vsel %vm4146, 1, 0
  %v4211 = vsel %vm4147, 1, 0
  %v4212 = vsel %vm4148, 1, 0
  %v4213 = vsel %vm4149, 1, 0
  %v4214 = vsel %vm4150, 1, 0
  %v4215 = vsel %vm4151, 1, 0
  %v4216 = vsel %vm4152, 1, 0
  %v4217 = vsel %vm4153, 1, 0
  %v4218 = vsel %vm4154, 1, 0
  %v4219 = vsel %vm4155, 1, 0
  %4220 = vset.pattern.permute.xlu0 0
  %4221 = vperm.xlu0 %4220, %v4156
  %v4222 = vpop.permute.xlu0 %4221
  %4223 = vset.pattern.permute.xlu0 0
  %4224 = vperm.xlu0 %4223, %v4157
  %v4225 = vpop.permute.xlu0 %4224
  %4226 = vset.pattern.permute.xlu0 0
  %4227 = vperm.xlu0 %4226, %v4158
  %v4228 = vpop.permute.xlu0 %4227
  %4229 = vset.pattern.permute.xlu0 0
  %4230 = vperm.xlu0 %4229, %v4159
  %v4231 = vpop.permute.xlu0 %4230
  %4232 = vset.pattern.permute.xlu0 0
  %4233 = vperm.xlu0 %4232, %v4160
  %v4234 = vpop.permute.xlu0 %4233
  %4235 = vset.pattern.permute.xlu0 0
  %4236 = vperm.xlu0 %4235, %v4161
  %v4237 = vpop.permute.xlu0 %4236
  %4238 = vset.pattern.permute.xlu0 0
  %4239 = vperm.xlu0 %4238, %v4162
  %v4240 = vpop.permute.xlu0 %4239
  %4241 = vset.pattern.permute.xlu0 0
  %4242 = vperm.xlu0 %4241, %v4163
  %v4243 = vpop.permute.xlu0 %4242
  %4244 = vset.pattern.permute.xlu0 0
  %4245 = vperm.xlu0 %4244, %v4164
  %v4246 = vpop.permute.xlu0 %4245
  %4247 = vset.pattern.permute.xlu0 0
  %4248 = vperm.xlu0 %4247, %v4165
  %v4249 = vpop.permute.xlu0 %4248
  %4250 = vset.pattern.permute.xlu0 0
  %4251 = vperm.xlu0 %4250, %v4166
  %v4252 = vpop.permute.xlu0 %4251
  %4253 = vset.pattern.permute.xlu0 0
  %4254 = vperm.xlu0 %4253, %v4167
  %v4255 = vpop.permute.xlu0 %4254
  %4256 = vset.pattern.permute.xlu0 0
  %4257 = vperm.xlu0 %4256, %v4168
  %v4258 = vpop.permute.xlu0 %4257
  %4259 = vset.pattern.permute.xlu0 0
  %4260 = vperm.xlu0 %4259, %v4169
  %v4261 = vpop.permute.xlu0 %4260
  %4262 = vset.pattern.permute.xlu0 0
  %4263 = vperm.xlu0 %4262, %v4170
  %v4264 = vpop.permute.xlu0 %4263
  %4265 = vset.pattern.permute.xlu0 0
  %4266 = vperm.xlu0 %4265, %v4171
  %v4267 = vpop.permute.xlu0 %4266
  %4268 = vset.pattern.permute.xlu0 0
  %4269 = vperm.xlu0 %4268, %v4172
  %v4270 = vpop.permute.xlu0 %4269
  %4271 = vset.pattern.permute.xlu0 0
  %4272 = vperm.xlu0 %4271, %v4173
  %v4273 = vpop.permute.xlu0 %4272
  %4274 = vset.pattern.permute.xlu0 0
  %4275 = vperm.xlu0 %4274, %v4174
  %v4276 = vpop.permute.xlu0 %4275
  %4277 = vset.pattern.permute.xlu0 0
  %4278 = vperm.xlu0 %4277, %v4175
  %v4279 = vpop.permute.xlu0 %4278
  %4280 = vset.pattern.permute.xlu0 0
  %4281 = vperm.xlu0 %4280, %v4176
  %v4282 = vpop.permute.xlu0 %4281
  %4283 = vset.pattern.permute.xlu0 0
  %4284 = vperm.xlu0 %4283, %v4177
  %v4285 = vpop.permute.xlu0 %4284
  %4286 = vset.pattern.permute.xlu0 0
  %4287 = vperm.xlu0 %4286, %v4178
  %v4288 = vpop.permute.xlu0 %4287
  %4289 = vset.pattern.permute.xlu0 0
  %4290 = vperm.xlu0 %4289, %v4179
  %v4291 = vpop.permute.xlu0 %4290
  %4292 = vset.pattern.permute.xlu0 0
  %4293 = vperm.xlu0 %4292, %v4180
  %v4294 = vpop.permute.xlu0 %4293
  %4295 = vset.pattern.permute.xlu0 0
  %4296 = vperm.xlu0 %4295, %v4181
  %v4297 = vpop.permute.xlu0 %4296
  %4298 = vset.pattern.permute.xlu0 0
  %4299 = vperm.xlu0 %4298, %v4182
  %v4300 = vpop.permute.xlu0 %4299
  %4301 = vset.pattern.permute.xlu0 0
  %4302 = vperm.xlu0 %4301, %v4183
  %v4303 = vpop.permute.xlu0 %4302
  %4304 = vset.pattern.permute.xlu0 0
  %4305 = vperm.xlu0 %4304, %v4184
  %v4306 = vpop.permute.xlu0 %4305
  %4307 = vset.pattern.permute.xlu0 0
  %4308 = vperm.xlu0 %4307, %v4185
  %v4309 = vpop.permute.xlu0 %4308
  %4310 = vset.pattern.permute.xlu0 0
  %4311 = vperm.xlu0 %4310, %v4186
  %v4312 = vpop.permute.xlu0 %4311
  %4313 = vset.pattern.permute.xlu0 0
  %4314 = vperm.xlu0 %4313, %v4187
  %v4315 = vpop.permute.xlu0 %4314
  %4316 = vset.pattern.permute.xlu0 0
  %4317 = vperm.xlu0 %4316, %v4188
  %v4318 = vpop.permute.xlu0 %4317
  %4319 = vset.pattern.permute.xlu0 0
  %4320 = vperm.xlu0 %4319, %v4189
  %v4321 = vpop.permute.xlu0 %4320
  %4322 = vset.pattern.permute.xlu0 0
  %4323 = vperm.xlu0 %4322, %v4190
  %v4324 = vpop.permute.xlu0 %4323
  %4325 = vset.pattern.permute.xlu0 0
  %4326 = vperm.xlu0 %4325, %v4191
  %v4327 = vpop.permute.xlu0 %4326
  %4328 = vset.pattern.permute.xlu0 0
  %4329 = vperm.xlu0 %4328, %v4192
  %v4330 = vpop.permute.xlu0 %4329
  %4331 = vset.pattern.permute.xlu0 0
  %4332 = vperm.xlu0 %4331, %v4193
  %v4333 = vpop.permute.xlu0 %4332
  %4334 = vset.pattern.permute.xlu0 0
  %4335 = vperm.xlu0 %4334, %v4194
  %v4336 = vpop.permute.xlu0 %4335
  %4337 = vset.pattern.permute.xlu0 0
  %4338 = vperm.xlu0 %4337, %v4195
  %v4339 = vpop.permute.xlu0 %4338
  %4340 = vset.pattern.permute.xlu0 0
  %4341 = vperm.xlu0 %4340, %v4196
  %v4342 = vpop.permute.xlu0 %4341
  %4343 = vset.pattern.permute.xlu0 0
  %4344 = vperm.xlu0 %4343, %v4197
  %v4345 = vpop.permute.xlu0 %4344
  %4346 = vset.pattern.permute.xlu0 0
  %4347 = vperm.xlu0 %4346, %v4198
  %v4348 = vpop.permute.xlu0 %4347
  %4349 = vset.pattern.permute.xlu0 0
  %4350 = vperm.xlu0 %4349, %v4199
  %v4351 = vpop.permute.xlu0 %4350
  %4352 = vset.pattern.permute.xlu0 0
  %4353 = vperm.xlu0 %4352, %v4200
  %v4354 = vpop.permute.xlu0 %4353
  %4355 = vset.pattern.permute.xlu0 0
  %4356 = vperm.xlu0 %4355, %v4201
  %v4357 = vpop.permute.xlu0 %4356
  %4358 = vset.pattern.permute.xlu0 0
  %4359 = vperm.xlu0 %4358, %v4202
  %v4360 = vpop.permute.xlu0 %4359
  %4361 = vset.pattern.permute.xlu0 0
  %4362 = vperm.xlu0 %4361, %v4203
  %v4363 = vpop.permute.xlu0 %4362
  %4364 = vset.pattern.permute.xlu0 0
  %4365 = vperm.xlu0 %4364, %v4204
  %v4366 = vpop.permute.xlu0 %4365
  %4367 = vset.pattern.permute.xlu0 0
  %4368 = vperm.xlu0 %4367, %v4205
  %v4369 = vpop.permute.xlu0 %4368
  %4370 = vset.pattern.permute.xlu0 0
  %4371 = vperm.xlu0 %4370, %v4206
  %v4372 = vpop.permute.xlu0 %4371
  %4373 = vset.pattern.permute.xlu0 0
  %4374 = vperm.xlu0 %4373, %v4207
  %v4375 = vpop.permute.xlu0 %4374
  %4376 = vset.pattern.permute.xlu0 0
  %4377 = vperm.xlu0 %4376, %v4208
  %v4378 = vpop.permute.xlu0 %4377
  %4379 = vset.pattern.permute.xlu0 0
  %4380 = vperm.xlu0 %4379, %v4209
  %v4381 = vpop.permute.xlu0 %4380
  %4382 = vset.pattern.permute.xlu0 0
  %4383 = vperm.xlu0 %4382, %v4210
  %v4384 = vpop.permute.xlu0 %4383
  %4385 = vset.pattern.permute.xlu0 0
  %4386 = vperm.xlu0 %4385, %v4211
  %v4387 = vpop.permute.xlu0 %4386
  %4388 = vset.pattern.permute.xlu0 0
  %4389 = vperm.xlu0 %4388, %v4212
  %v4390 = vpop.permute.xlu0 %4389
  %4391 = vset.pattern.permute.xlu0 0
  %4392 = vperm.xlu0 %4391, %v4213
  %v4393 = vpop.permute.xlu0 %4392
  %4394 = vset.pattern.permute.xlu0 0
  %4395 = vperm.xlu0 %4394, %v4214
  %v4396 = vpop.permute.xlu0 %4395
  %4397 = vset.pattern.permute.xlu0 0
  %4398 = vperm.xlu0 %4397, %v4215
  %v4399 = vpop.permute.xlu0 %4398
  %4400 = vset.pattern.permute.xlu0 0
  %4401 = vperm.xlu0 %4400, %v4216
  %v4402 = vpop.permute.xlu0 %4401
  %4403 = vset.pattern.permute.xlu0 0
  %4404 = vperm.xlu0 %4403, %v4217
  %v4405 = vpop.permute.xlu0 %4404
  %4406 = vset.pattern.permute.xlu0 0
  %4407 = vperm.xlu0 %4406, %v4218
  %v4408 = vpop.permute.xlu0 %4407
  %4409 = vset.pattern.permute.xlu0 0
  %4410 = vperm.xlu0 %4409, %v4219
  %v4411 = vpop.permute.xlu0 %4410
  %vm4412 = vcmp.eq.s32.totalorder %v4222, 1
  %vm4413 = vcmp.eq.s32.totalorder %v4225, 1
  %vm4414 = vcmp.eq.s32.totalorder %v4228, 1
  %vm4415 = vcmp.eq.s32.totalorder %v4231, 1
  %vm4416 = vcmp.eq.s32.totalorder %v4234, 1
  %vm4417 = vcmp.eq.s32.totalorder %v4237, 1
  %vm4418 = vcmp.eq.s32.totalorder %v4240, 1
  %vm4419 = vcmp.eq.s32.totalorder %v4243, 1
  %vm4420 = vcmp.eq.s32.totalorder %v4246, 1
  %vm4421 = vcmp.eq.s32.totalorder %v4249, 1
  %vm4422 = vcmp.eq.s32.totalorder %v4252, 1
  %vm4423 = vcmp.eq.s32.totalorder %v4255, 1
  %vm4424 = vcmp.eq.s32.totalorder %v4258, 1
  %vm4425 = vcmp.eq.s32.totalorder %v4261, 1
  %vm4426 = vcmp.eq.s32.totalorder %v4264, 1
  %vm4427 = vcmp.eq.s32.totalorder %v4267, 1
  %vm4428 = vcmp.eq.s32.totalorder %v4270, 1
  %vm4429 = vcmp.eq.s32.totalorder %v4273, 1
  %vm4430 = vcmp.eq.s32.totalorder %v4276, 1
  %vm4431 = vcmp.eq.s32.totalorder %v4279, 1
  %vm4432 = vcmp.eq.s32.totalorder %v4282, 1
  %vm4433 = vcmp.eq.s32.totalorder %v4285, 1
  %vm4434 = vcmp.eq.s32.totalorder %v4288, 1
  %vm4435 = vcmp.eq.s32.totalorder %v4291, 1
  %vm4436 = vcmp.eq.s32.totalorder %v4294, 1
  %vm4437 = vcmp.eq.s32.totalorder %v4297, 1
  %vm4438 = vcmp.eq.s32.totalorder %v4300, 1
  %vm4439 = vcmp.eq.s32.totalorder %v4303, 1
  %vm4440 = vcmp.eq.s32.totalorder %v4306, 1
  %vm4441 = vcmp.eq.s32.totalorder %v4309, 1
  %vm4442 = vcmp.eq.s32.totalorder %v4312, 1
  %vm4443 = vcmp.eq.s32.totalorder %v4315, 1
  %vm4444 = vcmp.eq.s32.totalorder %v4318, 1
  %vm4445 = vcmp.eq.s32.totalorder %v4321, 1
  %vm4446 = vcmp.eq.s32.totalorder %v4324, 1
  %vm4447 = vcmp.eq.s32.totalorder %v4327, 1
  %vm4448 = vcmp.eq.s32.totalorder %v4330, 1
  %vm4449 = vcmp.eq.s32.totalorder %v4333, 1
  %vm4450 = vcmp.eq.s32.totalorder %v4336, 1
  %vm4451 = vcmp.eq.s32.totalorder %v4339, 1
  %vm4452 = vcmp.eq.s32.totalorder %v4342, 1
  %vm4453 = vcmp.eq.s32.totalorder %v4345, 1
  %vm4454 = vcmp.eq.s32.totalorder %v4348, 1
  %vm4455 = vcmp.eq.s32.totalorder %v4351, 1
  %vm4456 = vcmp.eq.s32.totalorder %v4354, 1
  %vm4457 = vcmp.eq.s32.totalorder %v4357, 1
  %vm4458 = vcmp.eq.s32.totalorder %v4360, 1
  %vm4459 = vcmp.eq.s32.totalorder %v4363, 1
  %vm4460 = vcmp.eq.s32.totalorder %v4366, 1
  %vm4461 = vcmp.eq.s32.totalorder %v4369, 1
  %vm4462 = vcmp.eq.s32.totalorder %v4372, 1
  %vm4463 = vcmp.eq.s32.totalorder %v4375, 1
  %vm4464 = vcmp.eq.s32.totalorder %v4378, 1
  %vm4465 = vcmp.eq.s32.totalorder %v4381, 1
  %vm4466 = vcmp.eq.s32.totalorder %v4384, 1
  %vm4467 = vcmp.eq.s32.totalorder %v4387, 1
  %vm4468 = vcmp.eq.s32.totalorder %v4390, 1
  %vm4469 = vcmp.eq.s32.totalorder %v4393, 1
  %vm4470 = vcmp.eq.s32.totalorder %v4396, 1
  %vm4471 = vcmp.eq.s32.totalorder %v4399, 1
  %vm4472 = vcmp.eq.s32.totalorder %v4402, 1
  %vm4473 = vcmp.eq.s32.totalorder %v4405, 1
  %vm4474 = vcmp.eq.s32.totalorder %v4408, 1
  %vm4475 = vcmp.eq.s32.totalorder %v4411, 1
  %v4476 = vsel %vm4412, %v3708, 0.0
  %v4477 = vsel %vm4413, %v3771, 0.0
  %v4478 = vsel %vm4414, %v3770, 0.0
  %v4479 = vsel %vm4415, %v3769, 0.0
  %v4480 = vsel %vm4416, %v3768, 0.0
  %v4481 = vsel %vm4417, %v3767, 0.0
  %v4482 = vsel %vm4418, %v3766, 0.0
  %v4483 = vsel %vm4419, %v3765, 0.0
  %v4484 = vsel %vm4420, %v3764, 0.0
  %v4485 = vsel %vm4421, %v3763, 0.0
  %v4486 = vsel %vm4422, %v3762, 0.0
  %v4487 = vsel %vm4423, %v3761, 0.0
  %v4488 = vsel %vm4424, %v3760, 0.0
  %v4489 = vsel %vm4425, %v3759, 0.0
  %v4490 = vsel %vm4426, %v3758, 0.0
  %v4491 = vsel %vm4427, %v3757, 0.0
  %v4492 = vsel %vm4428, %v3756, 0.0
  %v4493 = vsel %vm4429, %v3755, 0.0
  %v4494 = vsel %vm4430, %v3754, 0.0
  %v4495 = vsel %vm4431, %v3753, 0.0
  %v4496 = vsel %vm4432, %v3752, 0.0
  %v4497 = vsel %vm4433, %v3751, 0.0
  %v4498 = vsel %vm4434, %v3750, 0.0
  %v4499 = vsel %vm4435, %v3749, 0.0
  %v4500 = vsel %vm4436, %v3748, 0.0
  %v4501 = vsel %vm4437, %v3747, 0.0
  %v4502 = vsel %vm4438, %v3746, 0.0
  %v4503 = vsel %vm4439, %v3745, 0.0
  %v4504 = vsel %vm4440, %v3744, 0.0
  %v4505 = vsel %vm4441, %v3743, 0.0
  %v4506 = vsel %vm4442, %v3742, 0.0
  %v4507 = vsel %vm4443, %v3741, 0.0
  %v4508 = vsel %vm4444, %v3740, 0.0
  %v4509 = vsel %vm4445, %v3739, 0.0
  %v4510 = vsel %vm4446, %v3738, 0.0
  %v4511 = vsel %vm4447, %v3737, 0.0
  %v4512 = vsel %vm4448, %v3736, 0.0
  %v4513 = vsel %vm4449, %v3735, 0.0
  %v4514 = vsel %vm4450, %v3734, 0.0
  %v4515 = vsel %vm4451, %v3733, 0.0
  %v4516 = vsel %vm4452, %v3732, 0.0
  %v4517 = vsel %vm4453, %v3731, 0.0
  %v4518 = vsel %vm4454, %v3730, 0.0
  %v4519 = vsel %vm4455, %v3729, 0.0
  %v4520 = vsel %vm4456, %v3728, 0.0
  %v4521 = vsel %vm4457, %v3727, 0.0
  %v4522 = vsel %vm4458, %v3726, 0.0
  %v4523 = vsel %vm4459, %v3725, 0.0
  %v4524 = vsel %vm4460, %v3724, 0.0
  %v4525 = vsel %vm4461, %v3723, 0.0
  %v4526 = vsel %vm4462, %v3722, 0.0
  %v4527 = vsel %vm4463, %v3721, 0.0
  %v4528 = vsel %vm4464, %v3720, 0.0
  %v4529 = vsel %vm4465, %v3719, 0.0
  %v4530 = vsel %vm4466, %v3718, 0.0
  %v4531 = vsel %vm4467, %v3717, 0.0
  %v4532 = vsel %vm4468, %v3716, 0.0
  %v4533 = vsel %vm4469, %v3715, 0.0
  %v4534 = vsel %vm4470, %v3714, 0.0
  %v4535 = vsel %vm4471, %v3713, 0.0
  %v4536 = vsel %vm4472, %v3712, 0.0
  %v4537 = vsel %vm4473, %v3711, 0.0
  %v4538 = vsel %vm4474, %v3710, 0.0
  %v4539 = vsel %vm4475, %v3709, 0.0
  %s4540 = scalar_lea.vmem %s5, 256
  %v4541 = vld [vmem:[%s4540] sm:$0xff]
  %v4542 = vld [vmem:[%s4540 + $0x8] sm:$0xff]
  %v4543 = vld [vmem:[%s4540 + $0x10] sm:$0xff]
  %v4544 = vld [vmem:[%s4540 + $0x18] sm:$0xff]
  %v4545 = vld [vmem:[%s4540 + $0x20] sm:$0xff]
  %v4546 = vld [vmem:[%s4540 + $0x28] sm:$0xff]
  %v4547 = vld [vmem:[%s4540 + $0x30] sm:$0xff]
  %v4548 = vld [vmem:[%s4540 + $0x38] sm:$0xff]
  %v4549 = vld [vmem:[%s4540 + $0x40] sm:$0xff]
  %v4550 = vld [vmem:[%s4540 + $0x48] sm:$0xff]
  %v4551 = vld [vmem:[%s4540 + $0x50] sm:$0xff]
  %v4552 = vld [vmem:[%s4540 + $0x58] sm:$0xff]
  %v4553 = vld [vmem:[%s4540 + $0x60] sm:$0xff]
  %v4554 = vld [vmem:[%s4540 + $0x68] sm:$0xff]
  %v4555 = vld [vmem:[%s4540 + $0x70] sm:$0xff]
  %v4556 = vld [vmem:[%s4540 + $0x78] sm:$0xff]
  %4557 = vmatprep.subr.mxu0 0.0
  %4558 = vmatpush1.msra.mxu0 %v4541
  %4559 = vmatprep.subr.mxu0 0.0
  %4560 = vmatpush1.msra.mxu0 %v4542
  %4561 = vmatprep.subr.mxu0 0.0
  %4562 = vmatpush1.msra.mxu0 %v4543
  %4563 = vmatprep.subr.mxu0 0.0
  %4564 = vmatpush1.msra.mxu0 %v4544
  %4565 = vmatprep.subr.mxu0 0.0
  %4566 = vmatpush1.msra.mxu0 %v4545
  %4567 = vmatprep.subr.mxu0 0.0
  %4568 = vmatpush1.msra.mxu0 %v4546
  %4569 = vmatprep.subr.mxu0 0.0
  %4570 = vmatpush1.msra.mxu0 %v4547
  %4571 = vmatprep.subr.mxu0 0.0
  %4572 = vmatpush1.msra.mxu0 %v4548
  %4573 = vmatprep.subr.mxu0 0.0
  %4574 = vmatpush1.msra.mxu0 %v4549
  %4575 = vmatprep.subr.mxu0 0.0
  %4576 = vmatpush1.msra.mxu0 %v4550
  %4577 = vmatprep.subr.mxu0 0.0
  %4578 = vmatpush1.msra.mxu0 %v4551
  %4579 = vmatprep.subr.mxu0 0.0
  %4580 = vmatpush1.msra.mxu0 %v4552
  %4581 = vmatprep.subr.mxu0 0.0
  %4582 = vmatpush1.msra.mxu0 %v4553
  %4583 = vmatprep.subr.mxu0 0.0
  %4584 = vmatpush1.msra.mxu0 %v4554
  %4585 = vmatprep.subr.mxu0 0.0
  %4586 = vmatpush1.msra.mxu0 %v4555
  %4587 = vmatprep.subr.mxu0 0.0
  %4588 = vmatpush1.msra.mxu0 %v4556
  %4589 = vmatprep.subr.mxu0 0.0
  %4590 = vmatpush1.msra.mxu0 0.0
  %4591 = vmatprep.subr.mxu0 0.0
  %4592 = vmatpush1.msra.mxu0 0.0
  %4593 = vmatprep.subr.mxu0 0.0
  %4594 = vmatpush1.msra.mxu0 0.0
  %4595 = vmatprep.subr.mxu0 0.0
  %4596 = vmatpush1.msra.mxu0 0.0
  %4597 = vmatprep.subr.mxu0 0.0
  %4598 = vmatpush1.msra.mxu0 0.0
  %4599 = vmatprep.subr.mxu0 0.0
  %4600 = vmatpush1.msra.mxu0 0.0
  %4601 = vmatprep.subr.mxu0 0.0
  %4602 = vmatpush1.msra.mxu0 0.0
  %4603 = vmatprep.subr.mxu0 0.0
  %4604 = vmatpush1.msra.mxu0 0.0
  %4605 = vmatprep.subr.mxu0 0.0
  %4606 = vmatpush1.msra.mxu0 0.0
  %4607 = vmatprep.subr.mxu0 0.0
  %4608 = vmatpush1.msra.mxu0 0.0
  %4609 = vmatprep.subr.mxu0 0.0
  %4610 = vmatpush1.msra.mxu0 0.0
  %4611 = vmatprep.subr.mxu0 0.0
  %4612 = vmatpush1.msra.mxu0 0.0
  %4613 = vmatprep.subr.mxu0 0.0
  %4614 = vmatpush1.msra.mxu0 0.0
  %4615 = vmatprep.subr.mxu0 0.0
  %4616 = vmatpush1.msra.mxu0 0.0
  %4617 = vmatprep.subr.mxu0 0.0
  %4618 = vmatpush1.msra.mxu0 0.0
  %4619 = vmatprep.subr.mxu0 0.0
  %4620 = vmatpush1.msra.mxu0 0.0
  %4621 = vmatprep.mubr.f32.mxu0 0.0
  %4622 = vmatmul.mubr.f32.gmra.mrb[0].mxu0 %v4476
  %v4623 = vpop.f32.mrb[0].mxu0
  %v4624 = vadd.f32 0.0, %v4623
  %v4625 = vpop.f32.mrb[0].mxu0
  %4626 = vmatprep.mubr.f32.mxu0 0.0
  %4627 = vmatmul.mubr.f32.gmra.mrb[0].mxu0 %v4477
  %v4628 = vpop.f32.mrb[0].mxu0
  %v4629 = vadd.f32 0.0, %v4628
  %v4630 = vpop.f32.mrb[0].mxu0
  %4631 = vmatprep.mubr.f32.mxu0 0.0
  %4632 = vmatmul.mubr.f32.gmra.mrb[0].mxu0 %v4478
  %v4633 = vpop.f32.mrb[0].mxu0
  %v4634 = vadd.f32 0.0, %v4633
  %v4635 = vpop.f32.mrb[0].mxu0
  %4636 = vmatprep.mubr.f32.mxu0 0.0
  %4637 = vmatmul.mubr.f32.gmra.mrb[0].mxu0 %v4479
  %v4638 = vpop.f32.mrb[0].mxu0
  %v4639 = vadd.f32 0.0, %v4638
  %v4640 = vpop.f32.mrb[0].mxu0
  %4641 = vmatprep.mubr.f32.mxu0 0.0
  %4642 = vmatmul.mubr.f32.gmra.mrb[0].mxu0 %v4480
  %v4643 = vpop.f32.mrb[0].mxu0
  %v4644 = vadd.f32 0.0, %v4643
  %v4645 = vpop.f32.mrb[0].mxu0
  %4646 = vmatprep.mubr.f32.mxu0 0.0
  %4647 = vmatmul.mubr.f32.gmra.mrb[0].mxu0 %v4481
  %v4648 = vpop.f32.mrb[0].mxu0
  %v4649 = vadd.f32 0.0, %v4648
  %v4650 = vpop.f32.mrb[0].mxu0
  %4651 = vmatprep.mubr.f32.mxu0 0.0
  %4652 = vmatmul.mubr.f32.gmra.mrb[0].mxu0 %v4482
  %v4653 = vpop.f32.mrb[0].mxu0
  %v4654 = vadd.f32 0.0, %v4653
  %v4655 = vpop.f32.mrb[0].mxu0
  %4656 = vmatprep.mubr.f32.mxu0 0.0
  %4657 = vmatmul.mubr.f32.gmra.mrb[0].mxu0 %v4483
  %v4658 = vpop.f32.mrb[0].mxu0
  %v4659 = vadd.f32 0.0, %v4658
  %v4660 = vpop.f32.mrb[0].mxu0
  %4661 = vmatprep.mubr.f32.mxu0 0.0
  %4662 = vmatmul.mubr.f32.gmra.mrb[0].mxu0 %v4484
  %v4663 = vpop.f32.mrb[0].mxu0
  %v4664 = vadd.f32 0.0, %v4663
  %v4665 = vpop.f32.mrb[0].mxu0
  %4666 = vmatprep.mubr.f32.mxu0 0.0
  %4667 = vmatmul.mubr.f32.gmra.mrb[0].mxu0 %v4485
  %v4668 = vpop.f32.mrb[0].mxu0
  %v4669 = vadd.f32 0.0, %v4668
  %v4670 = vpop.f32.mrb[0].mxu0
  %4671 = vmatprep.mubr.f32.mxu0 0.0
  %4672 = vmatmul.mubr.f32.gmra.mrb[0].mxu0 %v4486
  %v4673 = vpop.f32.mrb[0].mxu0
  %v4674 = vadd.f32 0.0, %v4673
  %v4675 = vpop.f32.mrb[0].mxu0
  %4676 = vmatprep.mubr.f32.mxu0 0.0
  %4677 = vmatmul.mubr.f32.gmra.mrb[0].mxu0 %v4487
  %v4678 = vpop.f32.mrb[0].mxu0
  %v4679 = vadd.f32 0.0, %v4678
  %v4680 = vpop.f32.mrb[0].mxu0
  %4681 = vmatprep.mubr.f32.mxu0 0.0
  %4682 = vmatmul.mubr.f32.gmra.mrb[0].mxu0 %v4488
  %v4683 = vpop.f32.mrb[0].mxu0
  %v4684 = vadd.f32 0.0, %v4683
  %v4685 = vpop.f32.mrb[0].mxu0
  %4686 = vmatprep.mubr.f32.mxu0 0.0
  %4687 = vmatmul.mubr.f32.gmra.mrb[0].mxu0 %v4489
  %v4688 = vpop.f32.mrb[0].mxu0
  %v4689 = vadd.f32 0.0, %v4688
  %v4690 = vpop.f32.mrb[0].mxu0
  %4691 = vmatprep.mubr.f32.mxu0 0.0
  %4692 = vmatmul.mubr.f32.gmra.mrb[0].mxu0 %v4490
  %v4693 = vpop.f32.mrb[0].mxu0
  %v4694 = vadd.f32 0.0, %v4693
  %v4695 = vpop.f32.mrb[0].mxu0
  %4696 = vmatprep.mubr.f32.mxu0 0.0
  %4697 = vmatmul.mubr.f32.gmra.mrb[0].mxu0 %v4491
  %v4698 = vpop.f32.mrb[0].mxu0
  %v4699 = vadd.f32 0.0, %v4698
  %v4700 = vpop.f32.mrb[0].mxu0
  %4701 = vmatprep.mubr.f32.mxu0 0.0
  %4702 = vmatmul.mubr.f32.gmra.mrb[0].mxu0 %v4492
  %v4703 = vpop.f32.mrb[0].mxu0
  %v4704 = vadd.f32 0.0, %v4703
  %v4705 = vpop.f32.mrb[0].mxu0
  %4706 = vmatprep.mubr.f32.mxu0 0.0
  %4707 = vmatmul.mubr.f32.gmra.mrb[0].mxu0 %v4493
  %v4708 = vpop.f32.mrb[0].mxu0
  %v4709 = vadd.f32 0.0, %v4708
  %v4710 = vpop.f32.mrb[0].mxu0
  %4711 = vmatprep.mubr.f32.mxu0 0.0
  %4712 = vmatmul.mubr.f32.gmra.mrb[0].mxu0 %v4494
  %v4713 = vpop.f32.mrb[0].mxu0
  %v4714 = vadd.f32 0.0, %v4713
  %v4715 = vpop.f32.mrb[0].mxu0
  %4716 = vmatprep.mubr.f32.mxu0 0.0
  %4717 = vmatmul.mubr.f32.gmra.mrb[0].mxu0 %v4495
  %v4718 = vpop.f32.mrb[0].mxu0
  %v4719 = vadd.f32 0.0, %v4718
  %v4720 = vpop.f32.mrb[0].mxu0
  %4721 = vmatprep.mubr.f32.mxu0 0.0
  %4722 = vmatmul.mubr.f32.gmra.mrb[0].mxu0 %v4496
  %v4723 = vpop.f32.mrb[0].mxu0
  %v4724 = vadd.f32 0.0, %v4723
  %v4725 = vpop.f32.mrb[0].mxu0
  %4726 = vmatprep.mubr.f32.mxu0 0.0
  %4727 = vmatmul.mubr.f32.gmra.mrb[0].mxu0 %v4497
  %v4728 = vpop.f32.mrb[0].mxu0
  %v4729 = vadd.f32 0.0, %v4728
  %v4730 = vpop.f32.mrb[0].mxu0
  %4731 = vmatprep.mubr.f32.mxu0 0.0
  %4732 = vmatmul.mubr.f32.gmra.mrb[0].mxu0 %v4498
  %v4733 = vpop.f32.mrb[0].mxu0
  %v4734 = vadd.f32 0.0, %v4733
  %v4735 = vpop.f32.mrb[0].mxu0
  %4736 = vmatprep.mubr.f32.mxu0 0.0
  %4737 = vmatmul.mubr.f32.gmra.mrb[0].mxu0 %v4499
  %v4738 = vpop.f32.mrb[0].mxu0
  %v4739 = vadd.f32 0.0, %v4738
  %v4740 = vpop.f32.mrb[0].mxu0
  %4741 = vmatprep.mubr.f32.mxu0 0.0
  %4742 = vmatmul.mubr.f32.gmra.mrb[0].mxu0 %v4500
  %v4743 = vpop.f32.mrb[0].mxu0
  %v4744 = vadd.f32 0.0, %v4743
  %v4745 = vpop.f32.mrb[0].mxu0
  %4746 = vmatprep.mubr.f32.mxu0 0.0
  %4747 = vmatmul.mubr.f32.gmra.mrb[0].mxu0 %v4501
  %v4748 = vpop.f32.mrb[0].mxu0
  %v4749 = vadd.f32 0.0, %v4748
  %v4750 = vpop.f32.mrb[0].mxu0
  %4751 = vmatprep.mubr.f32.mxu0 0.0
  %4752 = vmatmul.mubr.f32.gmra.mrb[0].mxu0 %v4502
  %v4753 = vpop.f32.mrb[0].mxu0
  %v4754 = vadd.f32 0.0, %v4753
  %v4755 = vpop.f32.mrb[0].mxu0
  %4756 = vmatprep.mubr.f32.mxu0 0.0
  %4757 = vmatmul.mubr.f32.gmra.mrb[0].mxu0 %v4503
  %v4758 = vpop.f32.mrb[0].mxu0
  %v4759 = vadd.f32 0.0, %v4758
  %v4760 = vpop.f32.mrb[0].mxu0
  %4761 = vmatprep.mubr.f32.mxu0 0.0
  %4762 = vmatmul.mubr.f32.gmra.mrb[0].mxu0 %v4504
  %v4763 = vpop.f32.mrb[0].mxu0
  %v4764 = vadd.f32 0.0, %v4763
  %v4765 = vpop.f32.mrb[0].mxu0
  %4766 = vmatprep.mubr.f32.mxu0 0.0
  %4767 = vmatmul.mubr.f32.gmra.mrb[0].mxu0 %v4505
  %v4768 = vpop.f32.mrb[0].mxu0
  %v4769 = vadd.f32 0.0, %v4768
  %v4770 = vpop.f32.mrb[0].mxu0
  %4771 = vmatprep.mubr.f32.mxu0 0.0
  %4772 = vmatmul.mubr.f32.gmra.mrb[0].mxu0 %v4506
  %v4773 = vpop.f32.mrb[0].mxu0
  %v4774 = vadd.f32 0.0, %v4773
  %v4775 = vpop.f32.mrb[0].mxu0
  %4776 = vmatprep.mubr.f32.mxu0 0.0
  %4777 = vmatmul.mubr.f32.gmra.mrb[0].mxu0 %v4507
  %v4778 = vpop.f32.mrb[0].mxu0
  %v4779 = vadd.f32 0.0, %v4778
  %v4780 = vpop.f32.mrb[0].mxu0
  %4781 = vmatprep.mubr.f32.mxu0 0.0
  %4782 = vmatmul.mubr.f32.gmra.mrb[0].mxu0 %v4508
  %v4783 = vpop.f32.mrb[0].mxu0
  %v4784 = vadd.f32 0.0, %v4783
  %v4785 = vpop.f32.mrb[0].mxu0
  %4786 = vmatprep.mubr.f32.mxu0 0.0
  %4787 = vmatmul.mubr.f32.gmra.mrb[0].mxu0 %v4509
  %v4788 = vpop.f32.mrb[0].mxu0
  %v4789 = vadd.f32 0.0, %v4788
  %v4790 = vpop.f32.mrb[0].mxu0
  %4791 = vmatprep.mubr.f32.mxu0 0.0
  %4792 = vmatmul.mubr.f32.gmra.mrb[0].mxu0 %v4510
  %v4793 = vpop.f32.mrb[0].mxu0
  %v4794 = vadd.f32 0.0, %v4793
  %v4795 = vpop.f32.mrb[0].mxu0
  %4796 = vmatprep.mubr.f32.mxu0 0.0
  %4797 = vmatmul.mubr.f32.gmra.mrb[0].mxu0 %v4511
  %v4798 = vpop.f32.mrb[0].mxu0
  %v4799 = vadd.f32 0.0, %v4798
  %v4800 = vpop.f32.mrb[0].mxu0
  %4801 = vmatprep.mubr.f32.mxu0 0.0
  %4802 = vmatmul.mubr.f32.gmra.mrb[0].mxu0 %v4512
  %v4803 = vpop.f32.mrb[0].mxu0
  %v4804 = vadd.f32 0.0, %v4803
  %v4805 = vpop.f32.mrb[0].mxu0
  %4806 = vmatprep.mubr.f32.mxu0 0.0
  %4807 = vmatmul.mubr.f32.gmra.mrb[0].mxu0 %v4513
  %v4808 = vpop.f32.mrb[0].mxu0
  %v4809 = vadd.f32 0.0, %v4808
  %v4810 = vpop.f32.mrb[0].mxu0
  %4811 = vmatprep.mubr.f32.mxu0 0.0
  %4812 = vmatmul.mubr.f32.gmra.mrb[0].mxu0 %v4514
  %v4813 = vpop.f32.mrb[0].mxu0
  %v4814 = vadd.f32 0.0, %v4813
  %v4815 = vpop.f32.mrb[0].mxu0
  %4816 = vmatprep.mubr.f32.mxu0 0.0
  %4817 = vmatmul.mubr.f32.gmra.mrb[0].mxu0 %v4515
  %v4818 = vpop.f32.mrb[0].mxu0
  %v4819 = vadd.f32 0.0, %v4818
  %v4820 = vpop.f32.mrb[0].mxu0
  %4821 = vmatprep.mubr.f32.mxu0 0.0
  %4822 = vmatmul.mubr.f32.gmra.mrb[0].mxu0 %v4516
  %v4823 = vpop.f32.mrb[0].mxu0
  %v4824 = vadd.f32 0.0, %v4823
  %v4825 = vpop.f32.mrb[0].mxu0
  %4826 = vmatprep.mubr.f32.mxu0 0.0
  %4827 = vmatmul.mubr.f32.gmra.mrb[0].mxu0 %v4517
  %v4828 = vpop.f32.mrb[0].mxu0
  %v4829 = vadd.f32 0.0, %v4828
  %v4830 = vpop.f32.mrb[0].mxu0
  %4831 = vmatprep.mubr.f32.mxu0 0.0
  %4832 = vmatmul.mubr.f32.gmra.mrb[0].mxu0 %v4518
  %v4833 = vpop.f32.mrb[0].mxu0
  %v4834 = vadd.f32 0.0, %v4833
  %v4835 = vpop.f32.mrb[0].mxu0
  %4836 = vmatprep.mubr.f32.mxu0 0.0
  %4837 = vmatmul.mubr.f32.gmra.mrb[0].mxu0 %v4519
  %v4838 = vpop.f32.mrb[0].mxu0
  %v4839 = vadd.f32 0.0, %v4838
  %v4840 = vpop.f32.mrb[0].mxu0
  %4841 = vmatprep.mubr.f32.mxu0 0.0
  %4842 = vmatmul.mubr.f32.gmra.mrb[0].mxu0 %v4520
  %v4843 = vpop.f32.mrb[0].mxu0
  %v4844 = vadd.f32 0.0, %v4843
  %v4845 = vpop.f32.mrb[0].mxu0
  %4846 = vmatprep.mubr.f32.mxu0 0.0
  %4847 = vmatmul.mubr.f32.gmra.mrb[0].mxu0 %v4521
  %v4848 = vpop.f32.mrb[0].mxu0
  %v4849 = vadd.f32 0.0, %v4848
  %v4850 = vpop.f32.mrb[0].mxu0
  %4851 = vmatprep.mubr.f32.mxu0 0.0
  %4852 = vmatmul.mubr.f32.gmra.mrb[0].mxu0 %v4522
  %v4853 = vpop.f32.mrb[0].mxu0
  %v4854 = vadd.f32 0.0, %v4853
  %v4855 = vpop.f32.mrb[0].mxu0
  %4856 = vmatprep.mubr.f32.mxu0 0.0
  %4857 = vmatmul.mubr.f32.gmra.mrb[0].mxu0 %v4523
  %v4858 = vpop.f32.mrb[0].mxu0
  %v4859 = vadd.f32 0.0, %v4858
  %v4860 = vpop.f32.mrb[0].mxu0
  %4861 = vmatprep.mubr.f32.mxu0 0.0
  %4862 = vmatmul.mubr.f32.gmra.mrb[0].mxu0 %v4524
  %v4863 = vpop.f32.mrb[0].mxu0
  %v4864 = vadd.f32 0.0, %v4863
  %v4865 = vpop.f32.mrb[0].mxu0
  %4866 = vmatprep.mubr.f32.mxu0 0.0
  %4867 = vmatmul.mubr.f32.gmra.mrb[0].mxu0 %v4525
  %v4868 = vpop.f32.mrb[0].mxu0
  %v4869 = vadd.f32 0.0, %v4868
  %v4870 = vpop.f32.mrb[0].mxu0
  %4871 = vmatprep.mubr.f32.mxu0 0.0
  %4872 = vmatmul.mubr.f32.gmra.mrb[0].mxu0 %v4526
  %v4873 = vpop.f32.mrb[0].mxu0
  %v4874 = vadd.f32 0.0, %v4873
  %v4875 = vpop.f32.mrb[0].mxu0
  %4876 = vmatprep.mubr.f32.mxu0 0.0
  %4877 = vmatmul.mubr.f32.gmra.mrb[0].mxu0 %v4527
  %v4878 = vpop.f32.mrb[0].mxu0
  %v4879 = vadd.f32 0.0, %v4878
  %v4880 = vpop.f32.mrb[0].mxu0
  %4881 = vmatprep.mubr.f32.mxu0 0.0
  %4882 = vmatmul.mubr.f32.gmra.mrb[0].mxu0 %v4528
  %v4883 = vpop.f32.mrb[0].mxu0
  %v4884 = vadd.f32 0.0, %v4883
  %v4885 = vpop.f32.mrb[0].mxu0
  %4886 = vmatprep.mubr.f32.mxu0 0.0
  %4887 = vmatmul.mubr.f32.gmra.mrb[0].mxu0 %v4529
  %v4888 = vpop.f32.mrb[0].mxu0
  %v4889 = vadd.f32 0.0, %v4888
  %v4890 = vpop.f32.mrb[0].mxu0
  %4891 = vmatprep.mubr.f32.mxu0 0.0
  %4892 = vmatmul.mubr.f32.gmra.mrb[0].mxu0 %v4530
  %v4893 = vpop.f32.mrb[0].mxu0
  %v4894 = vadd.f32 0.0, %v4893
  %v4895 = vpop.f32.mrb[0].mxu0
  %4896 = vmatprep.mubr.f32.mxu0 0.0
  %4897 = vmatmul.mubr.f32.gmra.mrb[0].mxu0 %v4531
  %v4898 = vpop.f32.mrb[0].mxu0
  %v4899 = vadd.f32 0.0, %v4898
  %v4900 = vpop.f32.mrb[0].mxu0
  %4901 = vmatprep.mubr.f32.mxu0 0.0
  %4902 = vmatmul.mubr.f32.gmra.mrb[0].mxu0 %v4532
  %v4903 = vpop.f32.mrb[0].mxu0
  %v4904 = vadd.f32 0.0, %v4903
  %v4905 = vpop.f32.mrb[0].mxu0
  %4906 = vmatprep.mubr.f32.mxu0 0.0
  %4907 = vmatmul.mubr.f32.gmra.mrb[0].mxu0 %v4533
  %v4908 = vpop.f32.mrb[0].mxu0
  %v4909 = vadd.f32 0.0, %v4908
  %v4910 = vpop.f32.mrb[0].mxu0
  %4911 = vmatprep.mubr.f32.mxu0 0.0
  %4912 = vmatmul.mubr.f32.gmra.mrb[0].mxu0 %v4534
  %v4913 = vpop.f32.mrb[0].mxu0
  %v4914 = vadd.f32 0.0, %v4913
  %v4915 = vpop.f32.mrb[0].mxu0
  %4916 = vmatprep.mubr.f32.mxu0 0.0
  %4917 = vmatmul.mubr.f32.gmra.mrb[0].mxu0 %v4535
  %v4918 = vpop.f32.mrb[0].mxu0
  %v4919 = vadd.f32 0.0, %v4918
  %v4920 = vpop.f32.mrb[0].mxu0
  %4921 = vmatprep.mubr.f32.mxu0 0.0
  %4922 = vmatmul.mubr.f32.gmra.mrb[0].mxu0 %v4536
  %v4923 = vpop.f32.mrb[0].mxu0
  %v4924 = vadd.f32 0.0, %v4923
  %v4925 = vpop.f32.mrb[0].mxu0
  %4926 = vmatprep.mubr.f32.mxu0 0.0
  %4927 = vmatmul.mubr.f32.gmra.mrb[0].mxu0 %v4537
  %v4928 = vpop.f32.mrb[0].mxu0
  %v4929 = vadd.f32 0.0, %v4928
  %v4930 = vpop.f32.mrb[0].mxu0
  %4931 = vmatprep.mubr.f32.mxu0 0.0
  %4932 = vmatmul.mubr.f32.gmra.mrb[0].mxu0 %v4538
  %v4933 = vpop.f32.mrb[0].mxu0
  %v4934 = vadd.f32 0.0, %v4933
  %v4935 = vpop.f32.mrb[0].mxu0
  %4936 = vmatprep.mubr.f32.mxu0 0.0
  %4937 = vmatmul.mubr.f32.gmra.mrb[0].mxu0 %v4539
  %v4938 = vpop.f32.mrb[0].mxu0
  %v4939 = vadd.f32 0.0, %v4938
  %v4940 = vpop.f32.mrb[0].mxu0
  %4941 = vdwg.mxu0
  %v4942 = vadd.f32 %v3325, %v4624
  %v4943 = vadd.f32 %v3330, %v4629
  %v4944 = vadd.f32 %v3335, %v4634
  %v4945 = vadd.f32 %v3340, %v4639
  %v4946 = vadd.f32 %v3345, %v4644
  %v4947 = vadd.f32 %v3350, %v4649
  %v4948 = vadd.f32 %v3355, %v4654
  %v4949 = vadd.f32 %v3360, %v4659
  %v4950 = vadd.f32 %v3365, %v4664
  %v4951 = vadd.f32 %v3370, %v4669
  %v4952 = vadd.f32 %v3375, %v4674
  %v4953 = vadd.f32 %v3380, %v4679
  %v4954 = vadd.f32 %v3385, %v4684
  %v4955 = vadd.f32 %v3390, %v4689
  %v4956 = vadd.f32 %v3395, %v4694
  %v4957 = vadd.f32 %v3400, %v4699
  %v4958 = vadd.f32 %v3405, %v4704
  %v4959 = vadd.f32 %v3410, %v4709
  %v4960 = vadd.f32 %v3415, %v4714
  %v4961 = vadd.f32 %v3420, %v4719
  %v4962 = vadd.f32 %v3425, %v4724
  %v4963 = vadd.f32 %v3430, %v4729
  %v4964 = vadd.f32 %v3435, %v4734
  %v4965 = vadd.f32 %v3440, %v4739
  %v4966 = vadd.f32 %v3445, %v4744
  %v4967 = vadd.f32 %v3450, %v4749
  %v4968 = vadd.f32 %v3455, %v4754
  %v4969 = vadd.f32 %v3460, %v4759
  %v4970 = vadd.f32 %v3465, %v4764
  %v4971 = vadd.f32 %v3470, %v4769
  %v4972 = vadd.f32 %v3475, %v4774
  %v4973 = vadd.f32 %v3480, %v4779
  %v4974 = vadd.f32 %v3485, %v4784
  %v4975 = vadd.f32 %v3490, %v4789
  %v4976 = vadd.f32 %v3495, %v4794
  %v4977 = vadd.f32 %v3500, %v4799
  %v4978 = vadd.f32 %v3505, %v4804
  %v4979 = vadd.f32 %v3510, %v4809
  %v4980 = vadd.f32 %v3515, %v4814
  %v4981 = vadd.f32 %v3520, %v4819
  %v4982 = vadd.f32 %v3525, %v4824
  %v4983 = vadd.f32 %v3530, %v4829
  %v4984 = vadd.f32 %v3535, %v4834
  %v4985 = vadd.f32 %v3540, %v4839
  %v4986 = vadd.f32 %v3545, %v4844
  %v4987 = vadd.f32 %v3550, %v4849
  %v4988 = vadd.f32 %v3555, %v4854
  %v4989 = vadd.f32 %v3560, %v4859
  %v4990 = vadd.f32 %v3565, %v4864
  %v4991 = vadd.f32 %v3570, %v4869
  %v4992 = vadd.f32 %v3575, %v4874
  %v4993 = vadd.f32 %v3580, %v4879
  %v4994 = vadd.f32 %v3585, %v4884
  %v4995 = vadd.f32 %v3590, %v4889
  %v4996 = vadd.f32 %v3595, %v4894
  %v4997 = vadd.f32 %v3600, %v4899
  %v4998 = vadd.f32 %v3605, %v4904
  %v4999 = vadd.f32 %v3610, %v4909
  %v5000 = vadd.f32 %v3615, %v4914
  %v5001 = vadd.f32 %v3620, %v4919
  %v5002 = vadd.f32 %v3625, %v4924
  %v5003 = vadd.f32 %v3630, %v4929
  %v5004 = vadd.f32 %v3635, %v4934
  %v5005 = vadd.f32 %v3640, %v4939
  %vm5006 = vcmp.ge.s32.totalorder %v981, 0
  %vm5007 = vcmp.ge.s32.totalorder %v982, 0
  %vm5008 = vcmp.ge.s32.totalorder %v983, 0
  %vm5009 = vcmp.ge.s32.totalorder %v984, 0
  %vm5010 = vcmp.ge.s32.totalorder %v985, 0
  %vm5011 = vcmp.ge.s32.totalorder %v986, 0
  %vm5012 = vcmp.ge.s32.totalorder %v987, 0
  %vm5013 = vcmp.ge.s32.totalorder %v988, 0
  %vm5014 = vcmp.ge.s32.totalorder %v989, 0
  %vm5015 = vcmp.ge.s32.totalorder %v990, 0
  %vm5016 = vcmp.ge.s32.totalorder %v991, 0
  %vm5017 = vcmp.ge.s32.totalorder %v992, 0
  %vm5018 = vcmp.ge.s32.totalorder %v993, 0
  %vm5019 = vcmp.ge.s32.totalorder %v994, 0
  %vm5020 = vcmp.ge.s32.totalorder %v995, 0
  %vm5021 = vcmp.ge.s32.totalorder %v996, 0
  %vm5022 = vcmp.ge.s32.totalorder %v997, 0
  %vm5023 = vcmp.ge.s32.totalorder %v998, 0
  %vm5024 = vcmp.ge.s32.totalorder %v999, 0
  %vm5025 = vcmp.ge.s32.totalorder %v1000, 0
  %vm5026 = vcmp.ge.s32.totalorder %v1001, 0
  %vm5027 = vcmp.ge.s32.totalorder %v1002, 0
  %vm5028 = vcmp.ge.s32.totalorder %v1003, 0
  %vm5029 = vcmp.ge.s32.totalorder %v1004, 0
  %vm5030 = vcmp.ge.s32.totalorder %v1005, 0
  %vm5031 = vcmp.ge.s32.totalorder %v1006, 0
  %vm5032 = vcmp.ge.s32.totalorder %v1007, 0
  %vm5033 = vcmp.ge.s32.totalorder %v1008, 0
  %vm5034 = vcmp.ge.s32.totalorder %v1009, 0
  %vm5035 = vcmp.ge.s32.totalorder %v1010, 0
  %vm5036 = vcmp.ge.s32.totalorder %v1011, 0
  %vm5037 = vcmp.ge.s32.totalorder %v1012, 0
  %vm5038 = vcmp.ge.s32.totalorder %v1013, 0
  %vm5039 = vcmp.ge.s32.totalorder %v1014, 0
  %vm5040 = vcmp.ge.s32.totalorder %v1015, 0
  %vm5041 = vcmp.ge.s32.totalorder %v1016, 0
  %vm5042 = vcmp.ge.s32.totalorder %v1017, 0
  %vm5043 = vcmp.ge.s32.totalorder %v1018, 0
  %vm5044 = vcmp.ge.s32.totalorder %v1019, 0
  %vm5045 = vcmp.ge.s32.totalorder %v1020, 0
  %vm5046 = vcmp.ge.s32.totalorder %v1021, 0
  %vm5047 = vcmp.ge.s32.totalorder %v1022, 0
  %vm5048 = vcmp.ge.s32.totalorder %v1023, 0
  %vm5049 = vcmp.ge.s32.totalorder %v1024, 0
  %vm5050 = vcmp.ge.s32.totalorder %v1025, 0
  %vm5051 = vcmp.ge.s32.totalorder %v1026, 0
  %vm5052 = vcmp.ge.s32.totalorder %v1027, 0
  %vm5053 = vcmp.ge.s32.totalorder %v1028, 0
  %vm5054 = vcmp.ge.s32.totalorder %v1029, 0
  %vm5055 = vcmp.ge.s32.totalorder %v1030, 0
  %vm5056 = vcmp.ge.s32.totalorder %v1031, 0
  %vm5057 = vcmp.ge.s32.totalorder %v1032, 0
  %vm5058 = vcmp.ge.s32.totalorder %v1033, 0
  %vm5059 = vcmp.ge.s32.totalorder %v1034, 0
  %vm5060 = vcmp.ge.s32.totalorder %v1035, 0
  %vm5061 = vcmp.ge.s32.totalorder %v1036, 0
  %vm5062 = vcmp.ge.s32.totalorder %v1037, 0
  %vm5063 = vcmp.ge.s32.totalorder %v1038, 0
  %vm5064 = vcmp.ge.s32.totalorder %v1039, 0
  %vm5065 = vcmp.ge.s32.totalorder %v1040, 0
  %vm5066 = vcmp.ge.s32.totalorder %v1041, 0
  %vm5067 = vcmp.ge.s32.totalorder %v1042, 0
  %vm5068 = vcmp.ge.s32.totalorder %v1043, 0
  %vm5069 = vcmp.ge.s32.totalorder %v1044, 0
  %vm5070 = vmand %vm1368, %vm5006
  %vm5071 = vmand %vm1369, %vm5007
  %vm5072 = vmand %vm1370, %vm5008
  %vm5073 = vmand %vm1371, %vm5009
  %vm5074 = vmand %vm1372, %vm5010
  %vm5075 = vmand %vm1373, %vm5011
  %vm5076 = vmand %vm1374, %vm5012
  %vm5077 = vmand %vm1375, %vm5013
  %vm5078 = vmand %vm1376, %vm5014
  %vm5079 = vmand %vm1377, %vm5015
  %vm5080 = vmand %vm1378, %vm5016
  %vm5081 = vmand %vm1379, %vm5017
  %vm5082 = vmand %vm1380, %vm5018
  %vm5083 = vmand %vm1381, %vm5019
  %vm5084 = vmand %vm1382, %vm5020
  %vm5085 = vmand %vm1383, %vm5021
  %vm5086 = vmand %vm1384, %vm5022
  %vm5087 = vmand %vm1385, %vm5023
  %vm5088 = vmand %vm1386, %vm5024
  %vm5089 = vmand %vm1387, %vm5025
  %vm5090 = vmand %vm1388, %vm5026
  %vm5091 = vmand %vm1389, %vm5027
  %vm5092 = vmand %vm1390, %vm5028
  %vm5093 = vmand %vm1391, %vm5029
  %vm5094 = vmand %vm1392, %vm5030
  %vm5095 = vmand %vm1393, %vm5031
  %vm5096 = vmand %vm1394, %vm5032
  %vm5097 = vmand %vm1395, %vm5033
  %vm5098 = vmand %vm1396, %vm5034
  %vm5099 = vmand %vm1397, %vm5035
  %vm5100 = vmand %vm1398, %vm5036
  %vm5101 = vmand %vm1399, %vm5037
  %vm5102 = vmand %vm1400, %vm5038
  %vm5103 = vmand %vm1401, %vm5039
  %vm5104 = vmand %vm1402, %vm5040
  %vm5105 = vmand %vm1403, %vm5041
  %vm5106 = vmand %vm1404, %vm5042
  %vm5107 = vmand %vm1405, %vm5043
  %vm5108 = vmand %vm1406, %vm5044
  %vm5109 = vmand %vm1407, %vm5045
  %vm5110 = vmand %vm1408, %vm5046
  %vm5111 = vmand %vm1409, %vm5047
  %vm5112 = vmand %vm1410, %vm5048
  %vm5113 = vmand %vm1411, %vm5049
  %vm5114 = vmand %vm1412, %vm5050
  %vm5115 = vmand %vm1413, %vm5051
  %vm5116 = vmand %vm1414, %vm5052
  %vm5117 = vmand %vm1415, %vm5053
  %vm5118 = vmand %vm1416, %vm5054
  %vm5119 = vmand %vm1417, %vm5055
  %vm5120 = vmand %vm1418, %vm5056
  %vm5121 = vmand %vm1419, %vm5057
  %vm5122 = vmand %vm1420, %vm5058
  %vm5123 = vmand %vm1421, %vm5059
  %vm5124 = vmand %vm1422, %vm5060
  %vm5125 = vmand %vm1423, %vm5061
  %vm5126 = vmand %vm1424, %vm5062
  %vm5127 = vmand %vm1425, %vm5063
  %vm5128 = vmand %vm1426, %vm5064
  %vm5129 = vmand %vm1427, %vm5065
  %vm5130 = vmand %vm1428, %vm5066
  %vm5131 = vmand %vm1429, %vm5067
  %vm5132 = vmand %vm1430, %vm5068
  %vm5133 = vmand %vm1431, %vm5069
  %vm5134 = vcmp.lt.s32.totalorder %v981, 16
  %vm5135 = vcmp.lt.s32.totalorder %v982, 16
  %vm5136 = vcmp.lt.s32.totalorder %v983, 16
  %vm5137 = vcmp.lt.s32.totalorder %v984, 16
  %vm5138 = vcmp.lt.s32.totalorder %v985, 16
  %vm5139 = vcmp.lt.s32.totalorder %v986, 16
  %vm5140 = vcmp.lt.s32.totalorder %v987, 16
  %vm5141 = vcmp.lt.s32.totalorder %v988, 16
  %vm5142 = vcmp.lt.s32.totalorder %v989, 16
  %vm5143 = vcmp.lt.s32.totalorder %v990, 16
  %vm5144 = vcmp.lt.s32.totalorder %v991, 16
  %vm5145 = vcmp.lt.s32.totalorder %v992, 16
  %vm5146 = vcmp.lt.s32.totalorder %v993, 16
  %vm5147 = vcmp.lt.s32.totalorder %v994, 16
  %vm5148 = vcmp.lt.s32.totalorder %v995, 16
  %vm5149 = vcmp.lt.s32.totalorder %v996, 16
  %vm5150 = vcmp.lt.s32.totalorder %v997, 16
  %vm5151 = vcmp.lt.s32.totalorder %v998, 16
  %vm5152 = vcmp.lt.s32.totalorder %v999, 16
  %vm5153 = vcmp.lt.s32.totalorder %v1000, 16
  %vm5154 = vcmp.lt.s32.totalorder %v1001, 16
  %vm5155 = vcmp.lt.s32.totalorder %v1002, 16
  %vm5156 = vcmp.lt.s32.totalorder %v1003, 16
  %vm5157 = vcmp.lt.s32.totalorder %v1004, 16
  %vm5158 = vcmp.lt.s32.totalorder %v1005, 16
  %vm5159 = vcmp.lt.s32.totalorder %v1006, 16
  %vm5160 = vcmp.lt.s32.totalorder %v1007, 16
  %vm5161 = vcmp.lt.s32.totalorder %v1008, 16
  %vm5162 = vcmp.lt.s32.totalorder %v1009, 16
  %vm5163 = vcmp.lt.s32.totalorder %v1010, 16
  %vm5164 = vcmp.lt.s32.totalorder %v1011, 16
  %vm5165 = vcmp.lt.s32.totalorder %v1012, 16
  %vm5166 = vcmp.lt.s32.totalorder %v1013, 16
  %vm5167 = vcmp.lt.s32.totalorder %v1014, 16
  %vm5168 = vcmp.lt.s32.totalorder %v1015, 16
  %vm5169 = vcmp.lt.s32.totalorder %v1016, 16
  %vm5170 = vcmp.lt.s32.totalorder %v1017, 16
  %vm5171 = vcmp.lt.s32.totalorder %v1018, 16
  %vm5172 = vcmp.lt.s32.totalorder %v1019, 16
  %vm5173 = vcmp.lt.s32.totalorder %v1020, 16
  %vm5174 = vcmp.lt.s32.totalorder %v1021, 16
  %vm5175 = vcmp.lt.s32.totalorder %v1022, 16
  %vm5176 = vcmp.lt.s32.totalorder %v1023, 16
  %vm5177 = vcmp.lt.s32.totalorder %v1024, 16
  %vm5178 = vcmp.lt.s32.totalorder %v1025, 16
  %vm5179 = vcmp.lt.s32.totalorder %v1026, 16
  %vm5180 = vcmp.lt.s32.totalorder %v1027, 16
  %vm5181 = vcmp.lt.s32.totalorder %v1028, 16
  %vm5182 = vcmp.lt.s32.totalorder %v1029, 16
  %vm5183 = vcmp.lt.s32.totalorder %v1030, 16
  %vm5184 = vcmp.lt.s32.totalorder %v1031, 16
  %vm5185 = vcmp.lt.s32.totalorder %v1032, 16
  %vm5186 = vcmp.lt.s32.totalorder %v1033, 16
  %vm5187 = vcmp.lt.s32.totalorder %v1034, 16
  %vm5188 = vcmp.lt.s32.totalorder %v1035, 16
  %vm5189 = vcmp.lt.s32.totalorder %v1036, 16
  %vm5190 = vcmp.lt.s32.totalorder %v1037, 16
  %vm5191 = vcmp.lt.s32.totalorder %v1038, 16
  %vm5192 = vcmp.lt.s32.totalorder %v1039, 16
  %vm5193 = vcmp.lt.s32.totalorder %v1040, 16
  %vm5194 = vcmp.lt.s32.totalorder %v1041, 16
  %vm5195 = vcmp.lt.s32.totalorder %v1042, 16
  %vm5196 = vcmp.lt.s32.totalorder %v1043, 16
  %vm5197 = vcmp.lt.s32.totalorder %v1044, 16
  %vm5198 = vmand %vm5070, %vm5134
  %vm5199 = vmand %vm5071, %vm5135
  %vm5200 = vmand %vm5072, %vm5136
  %vm5201 = vmand %vm5073, %vm5137
  %vm5202 = vmand %vm5074, %vm5138
  %vm5203 = vmand %vm5075, %vm5139
  %vm5204 = vmand %vm5076, %vm5140
  %vm5205 = vmand %vm5077, %vm5141
  %vm5206 = vmand %vm5078, %vm5142
  %vm5207 = vmand %vm5079, %vm5143
  %vm5208 = vmand %vm5080, %vm5144
  %vm5209 = vmand %vm5081, %vm5145
  %vm5210 = vmand %vm5082, %vm5146
  %vm5211 = vmand %vm5083, %vm5147
  %vm5212 = vmand %vm5084, %vm5148
  %vm5213 = vmand %vm5085, %vm5149
  %vm5214 = vmand %vm5086, %vm5150
  %vm5215 = vmand %vm5087, %vm5151
  %vm5216 = vmand %vm5088, %vm5152
  %vm5217 = vmand %vm5089, %vm5153
  %vm5218 = vmand %vm5090, %vm5154
  %vm5219 = vmand %vm5091, %vm5155
  %vm5220 = vmand %vm5092, %vm5156
  %vm5221 = vmand %vm5093, %vm5157
  %vm5222 = vmand %vm5094, %vm5158
  %vm5223 = vmand %vm5095, %vm5159
  %vm5224 = vmand %vm5096, %vm5160
  %vm5225 = vmand %vm5097, %vm5161
  %vm5226 = vmand %vm5098, %vm5162
  %vm5227 = vmand %vm5099, %vm5163
  %vm5228 = vmand %vm5100, %vm5164
  %vm5229 = vmand %vm5101, %vm5165
  %vm5230 = vmand %vm5102, %vm5166
  %vm5231 = vmand %vm5103, %vm5167
  %vm5232 = vmand %vm5104, %vm5168
  %vm5233 = vmand %vm5105, %vm5169
  %vm5234 = vmand %vm5106, %vm5170
  %vm5235 = vmand %vm5107, %vm5171
  %vm5236 = vmand %vm5108, %vm5172
  %vm5237 = vmand %vm5109, %vm5173
  %vm5238 = vmand %vm5110, %vm5174
  %vm5239 = vmand %vm5111, %vm5175
  %vm5240 = vmand %vm5112, %vm5176
  %vm5241 = vmand %vm5113, %vm5177
  %vm5242 = vmand %vm5114, %vm5178
  %vm5243 = vmand %vm5115, %vm5179
  %vm5244 = vmand %vm5116, %vm5180
  %vm5245 = vmand %vm5117, %vm5181
  %vm5246 = vmand %vm5118, %vm5182
  %vm5247 = vmand %vm5119, %vm5183
  %vm5248 = vmand %vm5120, %vm5184
  %vm5249 = vmand %vm5121, %vm5185
  %vm5250 = vmand %vm5122, %vm5186
  %vm5251 = vmand %vm5123, %vm5187
  %vm5252 = vmand %vm5124, %vm5188
  %vm5253 = vmand %vm5125, %vm5189
  %vm5254 = vmand %vm5126, %vm5190
  %vm5255 = vmand %vm5127, %vm5191
  %vm5256 = vmand %vm5128, %vm5192
  %vm5257 = vmand %vm5129, %vm5193
  %vm5258 = vmand %vm5130, %vm5194
  %vm5259 = vmand %vm5131, %vm5195
  %vm5260 = vmand %vm5132, %vm5196
  %vm5261 = vmand %vm5133, %vm5197
  %v5262 = vsel %vm5198, 1, 0
  %v5263 = vsel %vm5199, 1, 0
  %v5264 = vsel %vm5200, 1, 0
  %v5265 = vsel %vm5201, 1, 0
  %v5266 = vsel %vm5202, 1, 0
  %v5267 = vsel %vm5203, 1, 0
  %v5268 = vsel %vm5204, 1, 0
  %v5269 = vsel %vm5205, 1, 0
  %v5270 = vsel %vm5206, 1, 0
  %v5271 = vsel %vm5207, 1, 0
  %v5272 = vsel %vm5208, 1, 0
  %v5273 = vsel %vm5209, 1, 0
  %v5274 = vsel %vm5210, 1, 0
  %v5275 = vsel %vm5211, 1, 0
  %v5276 = vsel %vm5212, 1, 0
  %v5277 = vsel %vm5213, 1, 0
  %v5278 = vsel %vm5214, 1, 0
  %v5279 = vsel %vm5215, 1, 0
  %v5280 = vsel %vm5216, 1, 0
  %v5281 = vsel %vm5217, 1, 0
  %v5282 = vsel %vm5218, 1, 0
  %v5283 = vsel %vm5219, 1, 0
  %v5284 = vsel %vm5220, 1, 0
  %v5285 = vsel %vm5221, 1, 0
  %v5286 = vsel %vm5222, 1, 0
  %v5287 = vsel %vm5223, 1, 0
  %v5288 = vsel %vm5224, 1, 0
  %v5289 = vsel %vm5225, 1, 0
  %v5290 = vsel %vm5226, 1, 0
  %v5291 = vsel %vm5227, 1, 0
  %v5292 = vsel %vm5228, 1, 0
  %v5293 = vsel %vm5229, 1, 0
  %v5294 = vsel %vm5230, 1, 0
  %v5295 = vsel %vm5231, 1, 0
  %v5296 = vsel %vm5232, 1, 0
  %v5297 = vsel %vm5233, 1, 0
  %v5298 = vsel %vm5234, 1, 0
  %v5299 = vsel %vm5235, 1, 0
  %v5300 = vsel %vm5236, 1, 0
  %v5301 = vsel %vm5237, 1, 0
  %v5302 = vsel %vm5238, 1, 0
  %v5303 = vsel %vm5239, 1, 0
  %v5304 = vsel %vm5240, 1, 0
  %v5305 = vsel %vm5241, 1, 0
  %v5306 = vsel %vm5242, 1, 0
  %v5307 = vsel %vm5243, 1, 0
  %v5308 = vsel %vm5244, 1, 0
  %v5309 = vsel %vm5245, 1, 0
  %v5310 = vsel %vm5246, 1, 0
  %v5311 = vsel %vm5247, 1, 0
  %v5312 = vsel %vm5248, 1, 0
  %v5313 = vsel %vm5249, 1, 0
  %v5314 = vsel %vm5250, 1, 0
  %v5315 = vsel %vm5251, 1, 0
  %v5316 = vsel %vm5252, 1, 0
  %v5317 = vsel %vm5253, 1, 0
  %v5318 = vsel %vm5254, 1, 0
  %v5319 = vsel %vm5255, 1, 0
  %v5320 = vsel %vm5256, 1, 0
  %v5321 = vsel %vm5257, 1, 0
  %v5322 = vsel %vm5258, 1, 0
  %v5323 = vsel %vm5259, 1, 0
  %v5324 = vsel %vm5260, 1, 0
  %v5325 = vsel %vm5261, 1, 0
  %5326 = vset.pattern.permute.xlu0 0
  %5327 = vperm.xlu0 %5326, %v5262
  %v5328 = vpop.permute.xlu0 %5327
  %5329 = vset.pattern.permute.xlu0 0
  %5330 = vperm.xlu0 %5329, %v5263
  %v5331 = vpop.permute.xlu0 %5330
  %5332 = vset.pattern.permute.xlu0 0
  %5333 = vperm.xlu0 %5332, %v5264
  %v5334 = vpop.permute.xlu0 %5333
  %5335 = vset.pattern.permute.xlu0 0
  %5336 = vperm.xlu0 %5335, %v5265
  %v5337 = vpop.permute.xlu0 %5336
  %5338 = vset.pattern.permute.xlu0 0
  %5339 = vperm.xlu0 %5338, %v5266
  %v5340 = vpop.permute.xlu0 %5339
  %5341 = vset.pattern.permute.xlu0 0
  %5342 = vperm.xlu0 %5341, %v5267
  %v5343 = vpop.permute.xlu0 %5342
  %5344 = vset.pattern.permute.xlu0 0
  %5345 = vperm.xlu0 %5344, %v5268
  %v5346 = vpop.permute.xlu0 %5345
  %5347 = vset.pattern.permute.xlu0 0
  %5348 = vperm.xlu0 %5347, %v5269
  %v5349 = vpop.permute.xlu0 %5348
  %5350 = vset.pattern.permute.xlu0 0
  %5351 = vperm.xlu0 %5350, %v5270
  %v5352 = vpop.permute.xlu0 %5351
  %5353 = vset.pattern.permute.xlu0 0
  %5354 = vperm.xlu0 %5353, %v5271
  %v5355 = vpop.permute.xlu0 %5354
  %5356 = vset.pattern.permute.xlu0 0
  %5357 = vperm.xlu0 %5356, %v5272
  %v5358 = vpop.permute.xlu0 %5357
  %5359 = vset.pattern.permute.xlu0 0
  %5360 = vperm.xlu0 %5359, %v5273
  %v5361 = vpop.permute.xlu0 %5360
  %5362 = vset.pattern.permute.xlu0 0
  %5363 = vperm.xlu0 %5362, %v5274
  %v5364 = vpop.permute.xlu0 %5363
  %5365 = vset.pattern.permute.xlu0 0
  %5366 = vperm.xlu0 %5365, %v5275
  %v5367 = vpop.permute.xlu0 %5366
  %5368 = vset.pattern.permute.xlu0 0
  %5369 = vperm.xlu0 %5368, %v5276
  %v5370 = vpop.permute.xlu0 %5369
  %5371 = vset.pattern.permute.xlu0 0
  %5372 = vperm.xlu0 %5371, %v5277
  %v5373 = vpop.permute.xlu0 %5372
  %5374 = vset.pattern.permute.xlu0 0
  %5375 = vperm.xlu0 %5374, %v5278
  %v5376 = vpop.permute.xlu0 %5375
  %5377 = vset.pattern.permute.xlu0 0
  %5378 = vperm.xlu0 %5377, %v5279
  %v5379 = vpop.permute.xlu0 %5378
  %5380 = vset.pattern.permute.xlu0 0
  %5381 = vperm.xlu0 %5380, %v5280
  %v5382 = vpop.permute.xlu0 %5381
  %5383 = vset.pattern.permute.xlu0 0
  %5384 = vperm.xlu0 %5383, %v5281
  %v5385 = vpop.permute.xlu0 %5384
  %5386 = vset.pattern.permute.xlu0 0
  %5387 = vperm.xlu0 %5386, %v5282
  %v5388 = vpop.permute.xlu0 %5387
  %5389 = vset.pattern.permute.xlu0 0
  %5390 = vperm.xlu0 %5389, %v5283
  %v5391 = vpop.permute.xlu0 %5390
  %5392 = vset.pattern.permute.xlu0 0
  %5393 = vperm.xlu0 %5392, %v5284
  %v5394 = vpop.permute.xlu0 %5393
  %5395 = vset.pattern.permute.xlu0 0
  %5396 = vperm.xlu0 %5395, %v5285
  %v5397 = vpop.permute.xlu0 %5396
  %5398 = vset.pattern.permute.xlu0 0
  %5399 = vperm.xlu0 %5398, %v5286
  %v5400 = vpop.permute.xlu0 %5399
  %5401 = vset.pattern.permute.xlu0 0
  %5402 = vperm.xlu0 %5401, %v5287
  %v5403 = vpop.permute.xlu0 %5402
  %5404 = vset.pattern.permute.xlu0 0
  %5405 = vperm.xlu0 %5404, %v5288
  %v5406 = vpop.permute.xlu0 %5405
  %5407 = vset.pattern.permute.xlu0 0
  %5408 = vperm.xlu0 %5407, %v5289
  %v5409 = vpop.permute.xlu0 %5408
  %5410 = vset.pattern.permute.xlu0 0
  %5411 = vperm.xlu0 %5410, %v5290
  %v5412 = vpop.permute.xlu0 %5411
  %5413 = vset.pattern.permute.xlu0 0
  %5414 = vperm.xlu0 %5413, %v5291
  %v5415 = vpop.permute.xlu0 %5414
  %5416 = vset.pattern.permute.xlu0 0
  %5417 = vperm.xlu0 %5416, %v5292
  %v5418 = vpop.permute.xlu0 %5417
  %5419 = vset.pattern.permute.xlu0 0
  %5420 = vperm.xlu0 %5419, %v5293
  %v5421 = vpop.permute.xlu0 %5420
  %5422 = vset.pattern.permute.xlu0 0
  %5423 = vperm.xlu0 %5422, %v5294
  %v5424 = vpop.permute.xlu0 %5423
  %5425 = vset.pattern.permute.xlu0 0
  %5426 = vperm.xlu0 %5425, %v5295
  %v5427 = vpop.permute.xlu0 %5426
  %5428 = vset.pattern.permute.xlu0 0
  %5429 = vperm.xlu0 %5428, %v5296
  %v5430 = vpop.permute.xlu0 %5429
  %5431 = vset.pattern.permute.xlu0 0
  %5432 = vperm.xlu0 %5431, %v5297
  %v5433 = vpop.permute.xlu0 %5432
  %5434 = vset.pattern.permute.xlu0 0
  %5435 = vperm.xlu0 %5434, %v5298
  %v5436 = vpop.permute.xlu0 %5435
  %5437 = vset.pattern.permute.xlu0 0
  %5438 = vperm.xlu0 %5437, %v5299
  %v5439 = vpop.permute.xlu0 %5438
  %5440 = vset.pattern.permute.xlu0 0
  %5441 = vperm.xlu0 %5440, %v5300
  %v5442 = vpop.permute.xlu0 %5441
  %5443 = vset.pattern.permute.xlu0 0
  %5444 = vperm.xlu0 %5443, %v5301
  %v5445 = vpop.permute.xlu0 %5444
  %5446 = vset.pattern.permute.xlu0 0
  %5447 = vperm.xlu0 %5446, %v5302
  %v5448 = vpop.permute.xlu0 %5447
  %5449 = vset.pattern.permute.xlu0 0
  %5450 = vperm.xlu0 %5449, %v5303
  %v5451 = vpop.permute.xlu0 %5450
  %5452 = vset.pattern.permute.xlu0 0
  %5453 = vperm.xlu0 %5452, %v5304
  %v5454 = vpop.permute.xlu0 %5453
  %5455 = vset.pattern.permute.xlu0 0
  %5456 = vperm.xlu0 %5455, %v5305
  %v5457 = vpop.permute.xlu0 %5456
  %5458 = vset.pattern.permute.xlu0 0
  %5459 = vperm.xlu0 %5458, %v5306
  %v5460 = vpop.permute.xlu0 %5459
  %5461 = vset.pattern.permute.xlu0 0
  %5462 = vperm.xlu0 %5461, %v5307
  %v5463 = vpop.permute.xlu0 %5462
  %5464 = vset.pattern.permute.xlu0 0
  %5465 = vperm.xlu0 %5464, %v5308
  %v5466 = vpop.permute.xlu0 %5465
  %5467 = vset.pattern.permute.xlu0 0
  %5468 = vperm.xlu0 %5467, %v5309
  %v5469 = vpop.permute.xlu0 %5468
  %5470 = vset.pattern.permute.xlu0 0
  %5471 = vperm.xlu0 %5470, %v5310
  %v5472 = vpop.permute.xlu0 %5471
  %5473 = vset.pattern.permute.xlu0 0
  %5474 = vperm.xlu0 %5473, %v5311
  %v5475 = vpop.permute.xlu0 %5474
  %5476 = vset.pattern.permute.xlu0 0
  %5477 = vperm.xlu0 %5476, %v5312
  %v5478 = vpop.permute.xlu0 %5477
  %5479 = vset.pattern.permute.xlu0 0
  %5480 = vperm.xlu0 %5479, %v5313
  %v5481 = vpop.permute.xlu0 %5480
  %5482 = vset.pattern.permute.xlu0 0
  %5483 = vperm.xlu0 %5482, %v5314
  %v5484 = vpop.permute.xlu0 %5483
  %5485 = vset.pattern.permute.xlu0 0
  %5486 = vperm.xlu0 %5485, %v5315
  %v5487 = vpop.permute.xlu0 %5486
  %5488 = vset.pattern.permute.xlu0 0
  %5489 = vperm.xlu0 %5488, %v5316
  %v5490 = vpop.permute.xlu0 %5489
  %5491 = vset.pattern.permute.xlu0 0
  %5492 = vperm.xlu0 %5491, %v5317
  %v5493 = vpop.permute.xlu0 %5492
  %5494 = vset.pattern.permute.xlu0 0
  %5495 = vperm.xlu0 %5494, %v5318
  %v5496 = vpop.permute.xlu0 %5495
  %5497 = vset.pattern.permute.xlu0 0
  %5498 = vperm.xlu0 %5497, %v5319
  %v5499 = vpop.permute.xlu0 %5498
  %5500 = vset.pattern.permute.xlu0 0
  %5501 = vperm.xlu0 %5500, %v5320
  %v5502 = vpop.permute.xlu0 %5501
  %5503 = vset.pattern.permute.xlu0 0
  %5504 = vperm.xlu0 %5503, %v5321
  %v5505 = vpop.permute.xlu0 %5504
  %5506 = vset.pattern.permute.xlu0 0
  %5507 = vperm.xlu0 %5506, %v5322
  %v5508 = vpop.permute.xlu0 %5507
  %5509 = vset.pattern.permute.xlu0 0
  %5510 = vperm.xlu0 %5509, %v5323
  %v5511 = vpop.permute.xlu0 %5510
  %5512 = vset.pattern.permute.xlu0 0
  %5513 = vperm.xlu0 %5512, %v5324
  %v5514 = vpop.permute.xlu0 %5513
  %5515 = vset.pattern.permute.xlu0 0
  %5516 = vperm.xlu0 %5515, %v5325
  %v5517 = vpop.permute.xlu0 %5516
  %vm5518 = vcmp.eq.s32.totalorder %v5328, 1
  %vm5519 = vcmp.eq.s32.totalorder %v5331, 1
  %vm5520 = vcmp.eq.s32.totalorder %v5334, 1
  %vm5521 = vcmp.eq.s32.totalorder %v5337, 1
  %vm5522 = vcmp.eq.s32.totalorder %v5340, 1
  %vm5523 = vcmp.eq.s32.totalorder %v5343, 1
  %vm5524 = vcmp.eq.s32.totalorder %v5346, 1
  %vm5525 = vcmp.eq.s32.totalorder %v5349, 1
  %vm5526 = vcmp.eq.s32.totalorder %v5352, 1
  %vm5527 = vcmp.eq.s32.totalorder %v5355, 1
  %vm5528 = vcmp.eq.s32.totalorder %v5358, 1
  %vm5529 = vcmp.eq.s32.totalorder %v5361, 1
  %vm5530 = vcmp.eq.s32.totalorder %v5364, 1
  %vm5531 = vcmp.eq.s32.totalorder %v5367, 1
  %vm5532 = vcmp.eq.s32.totalorder %v5370, 1
  %vm5533 = vcmp.eq.s32.totalorder %v5373, 1
  %vm5534 = vcmp.eq.s32.totalorder %v5376, 1
  %vm5535 = vcmp.eq.s32.totalorder %v5379, 1
  %vm5536 = vcmp.eq.s32.totalorder %v5382, 1
  %vm5537 = vcmp.eq.s32.totalorder %v5385, 1
  %vm5538 = vcmp.eq.s32.totalorder %v5388, 1
  %vm5539 = vcmp.eq.s32.totalorder %v5391, 1
  %vm5540 = vcmp.eq.s32.totalorder %v5394, 1
  %vm5541 = vcmp.eq.s32.totalorder %v5397, 1
  %vm5542 = vcmp.eq.s32.totalorder %v5400, 1
  %vm5543 = vcmp.eq.s32.totalorder %v5403, 1
  %vm5544 = vcmp.eq.s32.totalorder %v5406, 1
  %vm5545 = vcmp.eq.s32.totalorder %v5409, 1
  %vm5546 = vcmp.eq.s32.totalorder %v5412, 1
  %vm5547 = vcmp.eq.s32.totalorder %v5415, 1
  %vm5548 = vcmp.eq.s32.totalorder %v5418, 1
  %vm5549 = vcmp.eq.s32.totalorder %v5421, 1
  %vm5550 = vcmp.eq.s32.totalorder %v5424, 1
  %vm5551 = vcmp.eq.s32.totalorder %v5427, 1
  %vm5552 = vcmp.eq.s32.totalorder %v5430, 1
  %vm5553 = vcmp.eq.s32.totalorder %v5433, 1
  %vm5554 = vcmp.eq.s32.totalorder %v5436, 1
  %vm5555 = vcmp.eq.s32.totalorder %v5439, 1
  %vm5556 = vcmp.eq.s32.totalorder %v5442, 1
  %vm5557 = vcmp.eq.s32.totalorder %v5445, 1
  %vm5558 = vcmp.eq.s32.totalorder %v5448, 1
  %vm5559 = vcmp.eq.s32.totalorder %v5451, 1
  %vm5560 = vcmp.eq.s32.totalorder %v5454, 1
  %vm5561 = vcmp.eq.s32.totalorder %v5457, 1
  %vm5562 = vcmp.eq.s32.totalorder %v5460, 1
  %vm5563 = vcmp.eq.s32.totalorder %v5463, 1
  %vm5564 = vcmp.eq.s32.totalorder %v5466, 1
  %vm5565 = vcmp.eq.s32.totalorder %v5469, 1
  %vm5566 = vcmp.eq.s32.totalorder %v5472, 1
  %vm5567 = vcmp.eq.s32.totalorder %v5475, 1
  %vm5568 = vcmp.eq.s32.totalorder %v5478, 1
  %vm5569 = vcmp.eq.s32.totalorder %v5481, 1
  %vm5570 = vcmp.eq.s32.totalorder %v5484, 1
  %vm5571 = vcmp.eq.s32.totalorder %v5487, 1
  %vm5572 = vcmp.eq.s32.totalorder %v5490, 1
  %vm5573 = vcmp.eq.s32.totalorder %v5493, 1
  %vm5574 = vcmp.eq.s32.totalorder %v5496, 1
  %vm5575 = vcmp.eq.s32.totalorder %v5499, 1
  %vm5576 = vcmp.eq.s32.totalorder %v5502, 1
  %vm5577 = vcmp.eq.s32.totalorder %v5505, 1
  %vm5578 = vcmp.eq.s32.totalorder %v5508, 1
  %vm5579 = vcmp.eq.s32.totalorder %v5511, 1
  %vm5580 = vcmp.eq.s32.totalorder %v5514, 1
  %vm5581 = vcmp.eq.s32.totalorder %v5517, 1
  %v5582 = vsel %vm5518, %v1175, 0.0
  %v5583 = vsel %vm5519, %v1174, 0.0
  %v5584 = vsel %vm5520, %v1173, 0.0
  %v5585 = vsel %vm5521, %v1172, 0.0
  %v5586 = vsel %vm5522, %v1171, 0.0
  %v5587 = vsel %vm5523, %v1170, 0.0
  %v5588 = vsel %vm5524, %v1169, 0.0
  %v5589 = vsel %vm5525, %v1168, 0.0
  %v5590 = vsel %vm5526, %v1167, 0.0
  %v5591 = vsel %vm5527, %v1166, 0.0
  %v5592 = vsel %vm5528, %v1165, 0.0
  %v5593 = vsel %vm5529, %v1164, 0.0
  %v5594 = vsel %vm5530, %v1163, 0.0
  %v5595 = vsel %vm5531, %v1162, 0.0
  %v5596 = vsel %vm5532, %v1161, 0.0
  %v5597 = vsel %vm5533, %v1160, 0.0
  %v5598 = vsel %vm5534, %v1159, 0.0
  %v5599 = vsel %vm5535, %v1158, 0.0
  %v5600 = vsel %vm5536, %v1157, 0.0
  %v5601 = vsel %vm5537, %v1156, 0.0
  %v5602 = vsel %vm5538, %v1155, 0.0
  %v5603 = vsel %vm5539, %v1154, 0.0
  %v5604 = vsel %vm5540, %v1153, 0.0
  %v5605 = vsel %vm5541, %v1152, 0.0
  %v5606 = vsel %vm5542, %v1151, 0.0
  %v5607 = vsel %vm5543, %v1150, 0.0
  %v5608 = vsel %vm5544, %v1149, 0.0
  %v5609 = vsel %vm5545, %v1148, 0.0
  %v5610 = vsel %vm5546, %v1147, 0.0
  %v5611 = vsel %vm5547, %v1146, 0.0
  %v5612 = vsel %vm5548, %v1145, 0.0
  %v5613 = vsel %vm5549, %v1144, 0.0
  %v5614 = vsel %vm5550, %v1143, 0.0
  %v5615 = vsel %vm5551, %v1142, 0.0
  %v5616 = vsel %vm5552, %v1141, 0.0
  %v5617 = vsel %vm5553, %v1140, 0.0
  %v5618 = vsel %vm5554, %v1139, 0.0
  %v5619 = vsel %vm5555, %v1138, 0.0
  %v5620 = vsel %vm5556, %v1137, 0.0
  %v5621 = vsel %vm5557, %v1136, 0.0
  %v5622 = vsel %vm5558, %v1135, 0.0
  %v5623 = vsel %vm5559, %v1134, 0.0
  %v5624 = vsel %vm5560, %v1133, 0.0
  %v5625 = vsel %vm5561, %v1132, 0.0
  %v5626 = vsel %vm5562, %v1131, 0.0
  %v5627 = vsel %vm5563, %v1130, 0.0
  %v5628 = vsel %vm5564, %v1129, 0.0
  %v5629 = vsel %vm5565, %v1128, 0.0
  %v5630 = vsel %vm5566, %v1127, 0.0
  %v5631 = vsel %vm5567, %v1126, 0.0
  %v5632 = vsel %vm5568, %v1125, 0.0
  %v5633 = vsel %vm5569, %v1124, 0.0
  %v5634 = vsel %vm5570, %v1123, 0.0
  %v5635 = vsel %vm5571, %v1122, 0.0
  %v5636 = vsel %vm5572, %v1121, 0.0
  %v5637 = vsel %vm5573, %v1120, 0.0
  %v5638 = vsel %vm5574, %v1119, 0.0
  %v5639 = vsel %vm5575, %v1118, 0.0
  %v5640 = vsel %vm5576, %v1117, 0.0
  %v5641 = vsel %vm5577, %v1116, 0.0
  %v5642 = vsel %vm5578, %v1115, 0.0
  %v5643 = vsel %vm5579, %v1114, 0.0
  %v5644 = vsel %vm5580, %v1113, 0.0
  %v5645 = vsel %vm5581, %v1112, 0.0
  %s5646 = scalar_lea.vmem %s5, 384
  %v5647 = vld [vmem:[%s5646] sm:$0xff]
  %v5648 = vld [vmem:[%s5646 + $0x8] sm:$0xff]
  %v5649 = vld [vmem:[%s5646 + $0x10] sm:$0xff]
  %v5650 = vld [vmem:[%s5646 + $0x18] sm:$0xff]
  %v5651 = vld [vmem:[%s5646 + $0x20] sm:$0xff]
  %v5652 = vld [vmem:[%s5646 + $0x28] sm:$0xff]
  %v5653 = vld [vmem:[%s5646 + $0x30] sm:$0xff]
  %v5654 = vld [vmem:[%s5646 + $0x38] sm:$0xff]
  %v5655 = vld [vmem:[%s5646 + $0x40] sm:$0xff]
  %v5656 = vld [vmem:[%s5646 + $0x48] sm:$0xff]
  %v5657 = vld [vmem:[%s5646 + $0x50] sm:$0xff]
  %v5658 = vld [vmem:[%s5646 + $0x58] sm:$0xff]
  %v5659 = vld [vmem:[%s5646 + $0x60] sm:$0xff]
  %v5660 = vld [vmem:[%s5646 + $0x68] sm:$0xff]
  %v5661 = vld [vmem:[%s5646 + $0x70] sm:$0xff]
  %v5662 = vld [vmem:[%s5646 + $0x78] sm:$0xff]
  %5663 = vmatprep.subr.mxu0 0.0
  %5664 = vmatpush1.msra.mxu0 %v5647
  %5665 = vmatprep.subr.mxu0 0.0
  %5666 = vmatpush1.msra.mxu0 %v5648
  %5667 = vmatprep.subr.mxu0 0.0
  %5668 = vmatpush1.msra.mxu0 %v5649
  %5669 = vmatprep.subr.mxu0 0.0
  %5670 = vmatpush1.msra.mxu0 %v5650
  %5671 = vmatprep.subr.mxu0 0.0
  %5672 = vmatpush1.msra.mxu0 %v5651
  %5673 = vmatprep.subr.mxu0 0.0
  %5674 = vmatpush1.msra.mxu0 %v5652
  %5675 = vmatprep.subr.mxu0 0.0
  %5676 = vmatpush1.msra.mxu0 %v5653
  %5677 = vmatprep.subr.mxu0 0.0
  %5678 = vmatpush1.msra.mxu0 %v5654
  %5679 = vmatprep.subr.mxu0 0.0
  %5680 = vmatpush1.msra.mxu0 %v5655
  %5681 = vmatprep.subr.mxu0 0.0
  %5682 = vmatpush1.msra.mxu0 %v5656
  %5683 = vmatprep.subr.mxu0 0.0
  %5684 = vmatpush1.msra.mxu0 %v5657
  %5685 = vmatprep.subr.mxu0 0.0
  %5686 = vmatpush1.msra.mxu0 %v5658
  %5687 = vmatprep.subr.mxu0 0.0
  %5688 = vmatpush1.msra.mxu0 %v5659
  %5689 = vmatprep.subr.mxu0 0.0
  %5690 = vmatpush1.msra.mxu0 %v5660
  %5691 = vmatprep.subr.mxu0 0.0
  %5692 = vmatpush1.msra.mxu0 %v5661
  %5693 = vmatprep.subr.mxu0 0.0
  %5694 = vmatpush1.msra.mxu0 %v5662
  %5695 = vmatprep.subr.mxu0 0.0
  %5696 = vmatpush1.msra.mxu0 0.0
  %5697 = vmatprep.subr.mxu0 0.0
  %5698 = vmatpush1.msra.mxu0 0.0
  %5699 = vmatprep.subr.mxu0 0.0
  %5700 = vmatpush1.msra.mxu0 0.0
  %5701 = vmatprep.subr.mxu0 0.0
  %5702 = vmatpush1.msra.mxu0 0.0
  %5703 = vmatprep.subr.mxu0 0.0
  %5704 = vmatpush1.msra.mxu0 0.0
  %5705 = vmatprep.subr.mxu0 0.0
  %5706 = vmatpush1.msra.mxu0 0.0
  %5707 = vmatprep.subr.mxu0 0.0
  %5708 = vmatpush1.msra.mxu0 0.0
  %5709 = vmatprep.subr.mxu0 0.0
  %5710 = vmatpush1.msra.mxu0 0.0
  %5711 = vmatprep.subr.mxu0 0.0
  %5712 = vmatpush1.msra.mxu0 0.0
  %5713 = vmatprep.subr.mxu0 0.0
  %5714 = vmatpush1.msra.mxu0 0.0
  %5715 = vmatprep.subr.mxu0 0.0
  %5716 = vmatpush1.msra.mxu0 0.0
  %5717 = vmatprep.subr.mxu0 0.0
  %5718 = vmatpush1.msra.mxu0 0.0
  %5719 = vmatprep.subr.mxu0 0.0
  %5720 = vmatpush1.msra.mxu0 0.0
  %5721 = vmatprep.subr.mxu0 0.0
  %5722 = vmatpush1.msra.mxu0 0.0
  %5723 = vmatprep.subr.mxu0 0.0
  %5724 = vmatpush1.msra.mxu0 0.0
  %5725 = vmatprep.subr.mxu0 0.0
  %5726 = vmatpush1.msra.mxu0 0.0
  %5727 = vmatprep.mubr.f32.mxu0 0.0
  %5728 = vmatmul.mubr.f32.gmra.mrb[0].mxu0 %v5582
  %v5729 = vpop.f32.mrb[0].mxu0
  %v5730 = vadd.f32 0.0, %v5729
  %v5731 = vpop.f32.mrb[0].mxu0
  %5732 = vmatprep.mubr.f32.mxu0 0.0
  %5733 = vmatmul.mubr.f32.gmra.mrb[0].mxu0 %v5583
  %v5734 = vpop.f32.mrb[0].mxu0
  %v5735 = vadd.f32 0.0, %v5734
  %v5736 = vpop.f32.mrb[0].mxu0
  %5737 = vmatprep.mubr.f32.mxu0 0.0
  %5738 = vmatmul.mubr.f32.gmra.mrb[0].mxu0 %v5584
  %v5739 = vpop.f32.mrb[0].mxu0
  %v5740 = vadd.f32 0.0, %v5739
  %v5741 = vpop.f32.mrb[0].mxu0
  %5742 = vmatprep.mubr.f32.mxu0 0.0
  %5743 = vmatmul.mubr.f32.gmra.mrb[0].mxu0 %v5585
  %v5744 = vpop.f32.mrb[0].mxu0
  %v5745 = vadd.f32 0.0, %v5744
  %v5746 = vpop.f32.mrb[0].mxu0
  %5747 = vmatprep.mubr.f32.mxu0 0.0
  %5748 = vmatmul.mubr.f32.gmra.mrb[0].mxu0 %v5586
  %v5749 = vpop.f32.mrb[0].mxu0
  %v5750 = vadd.f32 0.0, %v5749
  %v5751 = vpop.f32.mrb[0].mxu0
  %5752 = vmatprep.mubr.f32.mxu0 0.0
  %5753 = vmatmul.mubr.f32.gmra.mrb[0].mxu0 %v5587
  %v5754 = vpop.f32.mrb[0].mxu0
  %v5755 = vadd.f32 0.0, %v5754
  %v5756 = vpop.f32.mrb[0].mxu0
  %5757 = vmatprep.mubr.f32.mxu0 0.0
  %5758 = vmatmul.mubr.f32.gmra.mrb[0].mxu0 %v5588
  %v5759 = vpop.f32.mrb[0].mxu0
  %v5760 = vadd.f32 0.0, %v5759
  %v5761 = vpop.f32.mrb[0].mxu0
  %5762 = vmatprep.mubr.f32.mxu0 0.0
  %5763 = vmatmul.mubr.f32.gmra.mrb[0].mxu0 %v5589
  %v5764 = vpop.f32.mrb[0].mxu0
  %v5765 = vadd.f32 0.0, %v5764
  %v5766 = vpop.f32.mrb[0].mxu0
  %5767 = vmatprep.mubr.f32.mxu0 0.0
  %5768 = vmatmul.mubr.f32.gmra.mrb[0].mxu0 %v5590
  %v5769 = vpop.f32.mrb[0].mxu0
  %v5770 = vadd.f32 0.0, %v5769
  %v5771 = vpop.f32.mrb[0].mxu0
  %5772 = vmatprep.mubr.f32.mxu0 0.0
  %5773 = vmatmul.mubr.f32.gmra.mrb[0].mxu0 %v5591
  %v5774 = vpop.f32.mrb[0].mxu0
  %v5775 = vadd.f32 0.0, %v5774
  %v5776 = vpop.f32.mrb[0].mxu0
  %5777 = vmatprep.mubr.f32.mxu0 0.0
  %5778 = vmatmul.mubr.f32.gmra.mrb[0].mxu0 %v5592
  %v5779 = vpop.f32.mrb[0].mxu0
  %v5780 = vadd.f32 0.0, %v5779
  %v5781 = vpop.f32.mrb[0].mxu0
  %5782 = vmatprep.mubr.f32.mxu0 0.0
  %5783 = vmatmul.mubr.f32.gmra.mrb[0].mxu0 %v5593
  %v5784 = vpop.f32.mrb[0].mxu0
  %v5785 = vadd.f32 0.0, %v5784
  %v5786 = vpop.f32.mrb[0].mxu0
  %5787 = vmatprep.mubr.f32.mxu0 0.0
  %5788 = vmatmul.mubr.f32.gmra.mrb[0].mxu0 %v5594
  %v5789 = vpop.f32.mrb[0].mxu0
  %v5790 = vadd.f32 0.0, %v5789
  %v5791 = vpop.f32.mrb[0].mxu0
  %5792 = vmatprep.mubr.f32.mxu0 0.0
  %5793 = vmatmul.mubr.f32.gmra.mrb[0].mxu0 %v5595
  %v5794 = vpop.f32.mrb[0].mxu0
  %v5795 = vadd.f32 0.0, %v5794
  %v5796 = vpop.f32.mrb[0].mxu0
  %5797 = vmatprep.mubr.f32.mxu0 0.0
  %5798 = vmatmul.mubr.f32.gmra.mrb[0].mxu0 %v5596
  %v5799 = vpop.f32.mrb[0].mxu0
  %v5800 = vadd.f32 0.0, %v5799
  %v5801 = vpop.f32.mrb[0].mxu0
  %5802 = vmatprep.mubr.f32.mxu0 0.0
  %5803 = vmatmul.mubr.f32.gmra.mrb[0].mxu0 %v5597
  %v5804 = vpop.f32.mrb[0].mxu0
  %v5805 = vadd.f32 0.0, %v5804
  %v5806 = vpop.f32.mrb[0].mxu0
  %5807 = vmatprep.mubr.f32.mxu0 0.0
  %5808 = vmatmul.mubr.f32.gmra.mrb[0].mxu0 %v5598
  %v5809 = vpop.f32.mrb[0].mxu0
  %v5810 = vadd.f32 0.0, %v5809
  %v5811 = vpop.f32.mrb[0].mxu0
  %5812 = vmatprep.mubr.f32.mxu0 0.0
  %5813 = vmatmul.mubr.f32.gmra.mrb[0].mxu0 %v5599
  %v5814 = vpop.f32.mrb[0].mxu0
  %v5815 = vadd.f32 0.0, %v5814
  %v5816 = vpop.f32.mrb[0].mxu0
  %5817 = vmatprep.mubr.f32.mxu0 0.0
  %5818 = vmatmul.mubr.f32.gmra.mrb[0].mxu0 %v5600
  %v5819 = vpop.f32.mrb[0].mxu0
  %v5820 = vadd.f32 0.0, %v5819
  %v5821 = vpop.f32.mrb[0].mxu0
  %5822 = vmatprep.mubr.f32.mxu0 0.0
  %5823 = vmatmul.mubr.f32.gmra.mrb[0].mxu0 %v5601
  %v5824 = vpop.f32.mrb[0].mxu0
  %v5825 = vadd.f32 0.0, %v5824
  %v5826 = vpop.f32.mrb[0].mxu0
  %5827 = vmatprep.mubr.f32.mxu0 0.0
  %5828 = vmatmul.mubr.f32.gmra.mrb[0].mxu0 %v5602
  %v5829 = vpop.f32.mrb[0].mxu0
  %v5830 = vadd.f32 0.0, %v5829
  %v5831 = vpop.f32.mrb[0].mxu0
  %5832 = vmatprep.mubr.f32.mxu0 0.0
  %5833 = vmatmul.mubr.f32.gmra.mrb[0].mxu0 %v5603
  %v5834 = vpop.f32.mrb[0].mxu0
  %v5835 = vadd.f32 0.0, %v5834
  %v5836 = vpop.f32.mrb[0].mxu0
  %5837 = vmatprep.mubr.f32.mxu0 0.0
  %5838 = vmatmul.mubr.f32.gmra.mrb[0].mxu0 %v5604
  %v5839 = vpop.f32.mrb[0].mxu0
  %v5840 = vadd.f32 0.0, %v5839
  %v5841 = vpop.f32.mrb[0].mxu0
  %5842 = vmatprep.mubr.f32.mxu0 0.0
  %5843 = vmatmul.mubr.f32.gmra.mrb[0].mxu0 %v5605
  %v5844 = vpop.f32.mrb[0].mxu0
  %v5845 = vadd.f32 0.0, %v5844
  %v5846 = vpop.f32.mrb[0].mxu0
  %5847 = vmatprep.mubr.f32.mxu0 0.0
  %5848 = vmatmul.mubr.f32.gmra.mrb[0].mxu0 %v5606
  %v5849 = vpop.f32.mrb[0].mxu0
  %v5850 = vadd.f32 0.0, %v5849
  %v5851 = vpop.f32.mrb[0].mxu0
  %5852 = vmatprep.mubr.f32.mxu0 0.0
  %5853 = vmatmul.mubr.f32.gmra.mrb[0].mxu0 %v5607
  %v5854 = vpop.f32.mrb[0].mxu0
  %v5855 = vadd.f32 0.0, %v5854
  %v5856 = vpop.f32.mrb[0].mxu0
  %5857 = vmatprep.mubr.f32.mxu0 0.0
  %5858 = vmatmul.mubr.f32.gmra.mrb[0].mxu0 %v5608
  %v5859 = vpop.f32.mrb[0].mxu0
  %v5860 = vadd.f32 0.0, %v5859
  %v5861 = vpop.f32.mrb[0].mxu0
  %5862 = vmatprep.mubr.f32.mxu0 0.0
  %5863 = vmatmul.mubr.f32.gmra.mrb[0].mxu0 %v5609
  %v5864 = vpop.f32.mrb[0].mxu0
  %v5865 = vadd.f32 0.0, %v5864
  %v5866 = vpop.f32.mrb[0].mxu0
  %5867 = vmatprep.mubr.f32.mxu0 0.0
  %5868 = vmatmul.mubr.f32.gmra.mrb[0].mxu0 %v5610
  %v5869 = vpop.f32.mrb[0].mxu0
  %v5870 = vadd.f32 0.0, %v5869
  %v5871 = vpop.f32.mrb[0].mxu0
  %5872 = vmatprep.mubr.f32.mxu0 0.0
  %5873 = vmatmul.mubr.f32.gmra.mrb[0].mxu0 %v5611
  %v5874 = vpop.f32.mrb[0].mxu0
  %v5875 = vadd.f32 0.0, %v5874
  %v5876 = vpop.f32.mrb[0].mxu0
  %5877 = vmatprep.mubr.f32.mxu0 0.0
  %5878 = vmatmul.mubr.f32.gmra.mrb[0].mxu0 %v5612
  %v5879 = vpop.f32.mrb[0].mxu0
  %v5880 = vadd.f32 0.0, %v5879
  %v5881 = vpop.f32.mrb[0].mxu0
  %5882 = vmatprep.mubr.f32.mxu0 0.0
  %5883 = vmatmul.mubr.f32.gmra.mrb[0].mxu0 %v5613
  %v5884 = vpop.f32.mrb[0].mxu0
  %v5885 = vadd.f32 0.0, %v5884
  %v5886 = vpop.f32.mrb[0].mxu0
  %5887 = vmatprep.mubr.f32.mxu0 0.0
  %5888 = vmatmul.mubr.f32.gmra.mrb[0].mxu0 %v5614
  %v5889 = vpop.f32.mrb[0].mxu0
  %v5890 = vadd.f32 0.0, %v5889
  %v5891 = vpop.f32.mrb[0].mxu0
  %5892 = vmatprep.mubr.f32.mxu0 0.0
  %5893 = vmatmul.mubr.f32.gmra.mrb[0].mxu0 %v5615
  %v5894 = vpop.f32.mrb[0].mxu0
  %v5895 = vadd.f32 0.0, %v5894
  %v5896 = vpop.f32.mrb[0].mxu0
  %5897 = vmatprep.mubr.f32.mxu0 0.0
  %5898 = vmatmul.mubr.f32.gmra.mrb[0].mxu0 %v5616
  %v5899 = vpop.f32.mrb[0].mxu0
  %v5900 = vadd.f32 0.0, %v5899
  %v5901 = vpop.f32.mrb[0].mxu0
  %5902 = vmatprep.mubr.f32.mxu0 0.0
  %5903 = vmatmul.mubr.f32.gmra.mrb[0].mxu0 %v5617
  %v5904 = vpop.f32.mrb[0].mxu0
  %v5905 = vadd.f32 0.0, %v5904
  %v5906 = vpop.f32.mrb[0].mxu0
  %5907 = vmatprep.mubr.f32.mxu0 0.0
  %5908 = vmatmul.mubr.f32.gmra.mrb[0].mxu0 %v5618
  %v5909 = vpop.f32.mrb[0].mxu0
  %v5910 = vadd.f32 0.0, %v5909
  %v5911 = vpop.f32.mrb[0].mxu0
  %5912 = vmatprep.mubr.f32.mxu0 0.0
  %5913 = vmatmul.mubr.f32.gmra.mrb[0].mxu0 %v5619
  %v5914 = vpop.f32.mrb[0].mxu0
  %v5915 = vadd.f32 0.0, %v5914
  %v5916 = vpop.f32.mrb[0].mxu0
  %5917 = vmatprep.mubr.f32.mxu0 0.0
  %5918 = vmatmul.mubr.f32.gmra.mrb[0].mxu0 %v5620
  %v5919 = vpop.f32.mrb[0].mxu0
  %v5920 = vadd.f32 0.0, %v5919
  %v5921 = vpop.f32.mrb[0].mxu0
  %5922 = vmatprep.mubr.f32.mxu0 0.0
  %5923 = vmatmul.mubr.f32.gmra.mrb[0].mxu0 %v5621
  %v5924 = vpop.f32.mrb[0].mxu0
  %v5925 = vadd.f32 0.0, %v5924
  %v5926 = vpop.f32.mrb[0].mxu0
  %5927 = vmatprep.mubr.f32.mxu0 0.0
  %5928 = vmatmul.mubr.f32.gmra.mrb[0].mxu0 %v5622
  %v5929 = vpop.f32.mrb[0].mxu0
  %v5930 = vadd.f32 0.0, %v5929
  %v5931 = vpop.f32.mrb[0].mxu0
  %5932 = vmatprep.mubr.f32.mxu0 0.0
  %5933 = vmatmul.mubr.f32.gmra.mrb[0].mxu0 %v5623
  %v5934 = vpop.f32.mrb[0].mxu0
  %v5935 = vadd.f32 0.0, %v5934
  %v5936 = vpop.f32.mrb[0].mxu0
  %5937 = vmatprep.mubr.f32.mxu0 0.0
  %5938 = vmatmul.mubr.f32.gmra.mrb[0].mxu0 %v5624
  %v5939 = vpop.f32.mrb[0].mxu0
  %v5940 = vadd.f32 0.0, %v5939
  %v5941 = vpop.f32.mrb[0].mxu0
  %5942 = vmatprep.mubr.f32.mxu0 0.0
  %5943 = vmatmul.mubr.f32.gmra.mrb[0].mxu0 %v5625
  %v5944 = vpop.f32.mrb[0].mxu0
  %v5945 = vadd.f32 0.0, %v5944
  %v5946 = vpop.f32.mrb[0].mxu0
  %5947 = vmatprep.mubr.f32.mxu0 0.0
  %5948 = vmatmul.mubr.f32.gmra.mrb[0].mxu0 %v5626
  %v5949 = vpop.f32.mrb[0].mxu0
  %v5950 = vadd.f32 0.0, %v5949
  %v5951 = vpop.f32.mrb[0].mxu0
  %5952 = vmatprep.mubr.f32.mxu0 0.0
  %5953 = vmatmul.mubr.f32.gmra.mrb[0].mxu0 %v5627
  %v5954 = vpop.f32.mrb[0].mxu0
  %v5955 = vadd.f32 0.0, %v5954
  %v5956 = vpop.f32.mrb[0].mxu0
  %5957 = vmatprep.mubr.f32.mxu0 0.0
  %5958 = vmatmul.mubr.f32.gmra.mrb[0].mxu0 %v5628
  %v5959 = vpop.f32.mrb[0].mxu0
  %v5960 = vadd.f32 0.0, %v5959
  %v5961 = vpop.f32.mrb[0].mxu0
  %5962 = vmatprep.mubr.f32.mxu0 0.0
  %5963 = vmatmul.mubr.f32.gmra.mrb[0].mxu0 %v5629
  %v5964 = vpop.f32.mrb[0].mxu0
  %v5965 = vadd.f32 0.0, %v5964
  %v5966 = vpop.f32.mrb[0].mxu0
  %5967 = vmatprep.mubr.f32.mxu0 0.0
  %5968 = vmatmul.mubr.f32.gmra.mrb[0].mxu0 %v5630
  %v5969 = vpop.f32.mrb[0].mxu0
  %v5970 = vadd.f32 0.0, %v5969
  %v5971 = vpop.f32.mrb[0].mxu0
  %5972 = vmatprep.mubr.f32.mxu0 0.0
  %5973 = vmatmul.mubr.f32.gmra.mrb[0].mxu0 %v5631
  %v5974 = vpop.f32.mrb[0].mxu0
  %v5975 = vadd.f32 0.0, %v5974
  %v5976 = vpop.f32.mrb[0].mxu0
  %5977 = vmatprep.mubr.f32.mxu0 0.0
  %5978 = vmatmul.mubr.f32.gmra.mrb[0].mxu0 %v5632
  %v5979 = vpop.f32.mrb[0].mxu0
  %v5980 = vadd.f32 0.0, %v5979
  %v5981 = vpop.f32.mrb[0].mxu0
  %5982 = vmatprep.mubr.f32.mxu0 0.0
  %5983 = vmatmul.mubr.f32.gmra.mrb[0].mxu0 %v5633
  %v5984 = vpop.f32.mrb[0].mxu0
  %v5985 = vadd.f32 0.0, %v5984
  %v5986 = vpop.f32.mrb[0].mxu0
  %5987 = vmatprep.mubr.f32.mxu0 0.0
  %5988 = vmatmul.mubr.f32.gmra.mrb[0].mxu0 %v5634
  %v5989 = vpop.f32.mrb[0].mxu0
  %v5990 = vadd.f32 0.0, %v5989
  %v5991 = vpop.f32.mrb[0].mxu0
  %5992 = vmatprep.mubr.f32.mxu0 0.0
  %5993 = vmatmul.mubr.f32.gmra.mrb[0].mxu0 %v5635
  %v5994 = vpop.f32.mrb[0].mxu0
  %v5995 = vadd.f32 0.0, %v5994
  %v5996 = vpop.f32.mrb[0].mxu0
  %5997 = vmatprep.mubr.f32.mxu0 0.0
  %5998 = vmatmul.mubr.f32.gmra.mrb[0].mxu0 %v5636
  %v5999 = vpop.f32.mrb[0].mxu0
  %v6000 = vadd.f32 0.0, %v5999
  %v6001 = vpop.f32.mrb[0].mxu0
  %6002 = vmatprep.mubr.f32.mxu0 0.0
  %6003 = vmatmul.mubr.f32.gmra.mrb[0].mxu0 %v5637
  %v6004 = vpop.f32.mrb[0].mxu0
  %v6005 = vadd.f32 0.0, %v6004
  %v6006 = vpop.f32.mrb[0].mxu0
  %6007 = vmatprep.mubr.f32.mxu0 0.0
  %6008 = vmatmul.mubr.f32.gmra.mrb[0].mxu0 %v5638
  %v6009 = vpop.f32.mrb[0].mxu0
  %v6010 = vadd.f32 0.0, %v6009
  %v6011 = vpop.f32.mrb[0].mxu0
  %6012 = vmatprep.mubr.f32.mxu0 0.0
  %6013 = vmatmul.mubr.f32.gmra.mrb[0].mxu0 %v5639
  %v6014 = vpop.f32.mrb[0].mxu0
  %v6015 = vadd.f32 0.0, %v6014
  %v6016 = vpop.f32.mrb[0].mxu0
  %6017 = vmatprep.mubr.f32.mxu0 0.0
  %6018 = vmatmul.mubr.f32.gmra.mrb[0].mxu0 %v5640
  %v6019 = vpop.f32.mrb[0].mxu0
  %v6020 = vadd.f32 0.0, %v6019
  %v6021 = vpop.f32.mrb[0].mxu0
  %6022 = vmatprep.mubr.f32.mxu0 0.0
  %6023 = vmatmul.mubr.f32.gmra.mrb[0].mxu0 %v5641
  %v6024 = vpop.f32.mrb[0].mxu0
  %v6025 = vadd.f32 0.0, %v6024
  %v6026 = vpop.f32.mrb[0].mxu0
  %6027 = vmatprep.mubr.f32.mxu0 0.0
  %6028 = vmatmul.mubr.f32.gmra.mrb[0].mxu0 %v5642
  %v6029 = vpop.f32.mrb[0].mxu0
  %v6030 = vadd.f32 0.0, %v6029
  %v6031 = vpop.f32.mrb[0].mxu0
  %6032 = vmatprep.mubr.f32.mxu0 0.0
  %6033 = vmatmul.mubr.f32.gmra.mrb[0].mxu0 %v5643
  %v6034 = vpop.f32.mrb[0].mxu0
  %v6035 = vadd.f32 0.0, %v6034
  %v6036 = vpop.f32.mrb[0].mxu0
  %6037 = vmatprep.mubr.f32.mxu0 0.0
  %6038 = vmatmul.mubr.f32.gmra.mrb[0].mxu0 %v5644
  %v6039 = vpop.f32.mrb[0].mxu0
  %v6040 = vadd.f32 0.0, %v6039
  %v6041 = vpop.f32.mrb[0].mxu0
  %6042 = vmatprep.mubr.f32.mxu0 0.0
  %6043 = vmatmul.mubr.f32.gmra.mrb[0].mxu0 %v5645
  %v6044 = vpop.f32.mrb[0].mxu0
  %v6045 = vadd.f32 0.0, %v6044
  %v6046 = vpop.f32.mrb[0].mxu0
  %6047 = vdwg.mxu0
  %v6048 = vadd.f32 %v4942, %v5730
  %v6049 = vadd.f32 %v4943, %v5735
  %v6050 = vadd.f32 %v4944, %v5740
  %v6051 = vadd.f32 %v4945, %v5745
  %v6052 = vadd.f32 %v4946, %v5750
  %v6053 = vadd.f32 %v4947, %v5755
  %v6054 = vadd.f32 %v4948, %v5760
  %v6055 = vadd.f32 %v4949, %v5765
  %v6056 = vadd.f32 %v4950, %v5770
  %v6057 = vadd.f32 %v4951, %v5775
  %v6058 = vadd.f32 %v4952, %v5780
  %v6059 = vadd.f32 %v4953, %v5785
  %v6060 = vadd.f32 %v4954, %v5790
  %v6061 = vadd.f32 %v4955, %v5795
  %v6062 = vadd.f32 %v4956, %v5800
  %v6063 = vadd.f32 %v4957, %v5805
  %v6064 = vadd.f32 %v4958, %v5810
  %v6065 = vadd.f32 %v4959, %v5815
  %v6066 = vadd.f32 %v4960, %v5820
  %v6067 = vadd.f32 %v4961, %v5825
  %v6068 = vadd.f32 %v4962, %v5830
  %v6069 = vadd.f32 %v4963, %v5835
  %v6070 = vadd.f32 %v4964, %v5840
  %v6071 = vadd.f32 %v4965, %v5845
  %v6072 = vadd.f32 %v4966, %v5850
  %v6073 = vadd.f32 %v4967, %v5855
  %v6074 = vadd.f32 %v4968, %v5860
  %v6075 = vadd.f32 %v4969, %v5865
  %v6076 = vadd.f32 %v4970, %v5870
  %v6077 = vadd.f32 %v4971, %v5875
  %v6078 = vadd.f32 %v4972, %v5880
  %v6079 = vadd.f32 %v4973, %v5885
  %v6080 = vadd.f32 %v4974, %v5890
  %v6081 = vadd.f32 %v4975, %v5895
  %v6082 = vadd.f32 %v4976, %v5900
  %v6083 = vadd.f32 %v4977, %v5905
  %v6084 = vadd.f32 %v4978, %v5910
  %v6085 = vadd.f32 %v4979, %v5915
  %v6086 = vadd.f32 %v4980, %v5920
  %v6087 = vadd.f32 %v4981, %v5925
  %v6088 = vadd.f32 %v4982, %v5930
  %v6089 = vadd.f32 %v4983, %v5935
  %v6090 = vadd.f32 %v4984, %v5940
  %v6091 = vadd.f32 %v4985, %v5945
  %v6092 = vadd.f32 %v4986, %v5950
  %v6093 = vadd.f32 %v4987, %v5955
  %v6094 = vadd.f32 %v4988, %v5960
  %v6095 = vadd.f32 %v4989, %v5965
  %v6096 = vadd.f32 %v4990, %v5970
  %v6097 = vadd.f32 %v4991, %v5975
  %v6098 = vadd.f32 %v4992, %v5980
  %v6099 = vadd.f32 %v4993, %v5985
  %v6100 = vadd.f32 %v4994, %v5990
  %v6101 = vadd.f32 %v4995, %v5995
  %v6102 = vadd.f32 %v4996, %v6000
  %v6103 = vadd.f32 %v4997, %v6005
  %v6104 = vadd.f32 %v4998, %v6010
  %v6105 = vadd.f32 %v4999, %v6015
  %v6106 = vadd.f32 %v5000, %v6020
  %v6107 = vadd.f32 %v5001, %v6025
  %v6108 = vadd.f32 %v5002, %v6030
  %v6109 = vadd.f32 %v5003, %v6035
  %v6110 = vadd.f32 %v5004, %v6040
  %v6111 = vadd.f32 %v5005, %v6045
  %s6112 = scalar_lea.vmem %s5, 512
  %v6113 = vld [vmem:[%s6112] sm:$0xff]
  %v6114 = vld [vmem:[%s6112 + $0x8] sm:$0xff]
  %v6115 = vld [vmem:[%s6112 + $0x10] sm:$0xff]
  %v6116 = vld [vmem:[%s6112 + $0x18] sm:$0xff]
  %v6117 = vld [vmem:[%s6112 + $0x20] sm:$0xff]
  %v6118 = vld [vmem:[%s6112 + $0x28] sm:$0xff]
  %v6119 = vld [vmem:[%s6112 + $0x30] sm:$0xff]
  %v6120 = vld [vmem:[%s6112 + $0x38] sm:$0xff]
  %v6121 = vld [vmem:[%s6112 + $0x40] sm:$0xff]
  %v6122 = vld [vmem:[%s6112 + $0x48] sm:$0xff]
  %v6123 = vld [vmem:[%s6112 + $0x50] sm:$0xff]
  %v6124 = vld [vmem:[%s6112 + $0x58] sm:$0xff]
  %v6125 = vld [vmem:[%s6112 + $0x60] sm:$0xff]
  %v6126 = vld [vmem:[%s6112 + $0x68] sm:$0xff]
  %v6127 = vld [vmem:[%s6112 + $0x70] sm:$0xff]
  %v6128 = vld [vmem:[%s6112 + $0x78] sm:$0xff]
  %6129 = vmatprep.subr.mxu0 0.0
  %6130 = vmatpush1.msra.mxu0 %v6113
  %6131 = vmatprep.subr.mxu0 0.0
  %6132 = vmatpush1.msra.mxu0 %v6114
  %6133 = vmatprep.subr.mxu0 0.0
  %6134 = vmatpush1.msra.mxu0 %v6115
  %6135 = vmatprep.subr.mxu0 0.0
  %6136 = vmatpush1.msra.mxu0 %v6116
  %6137 = vmatprep.subr.mxu0 0.0
  %6138 = vmatpush1.msra.mxu0 %v6117
  %6139 = vmatprep.subr.mxu0 0.0
  %6140 = vmatpush1.msra.mxu0 %v6118
  %6141 = vmatprep.subr.mxu0 0.0
  %6142 = vmatpush1.msra.mxu0 %v6119
  %6143 = vmatprep.subr.mxu0 0.0
  %6144 = vmatpush1.msra.mxu0 %v6120
  %6145 = vmatprep.subr.mxu0 0.0
  %6146 = vmatpush1.msra.mxu0 %v6121
  %6147 = vmatprep.subr.mxu0 0.0
  %6148 = vmatpush1.msra.mxu0 %v6122
  %6149 = vmatprep.subr.mxu0 0.0
  %6150 = vmatpush1.msra.mxu0 %v6123
  %6151 = vmatprep.subr.mxu0 0.0
  %6152 = vmatpush1.msra.mxu0 %v6124
  %6153 = vmatprep.subr.mxu0 0.0
  %6154 = vmatpush1.msra.mxu0 %v6125
  %6155 = vmatprep.subr.mxu0 0.0
  %6156 = vmatpush1.msra.mxu0 %v6126
  %6157 = vmatprep.subr.mxu0 0.0
  %6158 = vmatpush1.msra.mxu0 %v6127
  %6159 = vmatprep.subr.mxu0 0.0
  %6160 = vmatpush1.msra.mxu0 %v6128
  %6161 = vmatprep.subr.mxu0 0.0
  %6162 = vmatpush1.msra.mxu0 0.0
  %6163 = vmatprep.subr.mxu0 0.0
  %6164 = vmatpush1.msra.mxu0 0.0
  %6165 = vmatprep.subr.mxu0 0.0
  %6166 = vmatpush1.msra.mxu0 0.0
  %6167 = vmatprep.subr.mxu0 0.0
  %6168 = vmatpush1.msra.mxu0 0.0
  %6169 = vmatprep.subr.mxu0 0.0
  %6170 = vmatpush1.msra.mxu0 0.0
  %6171 = vmatprep.subr.mxu0 0.0
  %6172 = vmatpush1.msra.mxu0 0.0
  %6173 = vmatprep.subr.mxu0 0.0
  %6174 = vmatpush1.msra.mxu0 0.0
  %6175 = vmatprep.subr.mxu0 0.0
  %6176 = vmatpush1.msra.mxu0 0.0
  %6177 = vmatprep.subr.mxu0 0.0
  %6178 = vmatpush1.msra.mxu0 0.0
  %6179 = vmatprep.subr.mxu0 0.0
  %6180 = vmatpush1.msra.mxu0 0.0
  %6181 = vmatprep.subr.mxu0 0.0
  %6182 = vmatpush1.msra.mxu0 0.0
  %6183 = vmatprep.subr.mxu0 0.0
  %6184 = vmatpush1.msra.mxu0 0.0
  %6185 = vmatprep.subr.mxu0 0.0
  %6186 = vmatpush1.msra.mxu0 0.0
  %6187 = vmatprep.subr.mxu0 0.0
  %6188 = vmatpush1.msra.mxu0 0.0
  %6189 = vmatprep.subr.mxu0 0.0
  %6190 = vmatpush1.msra.mxu0 0.0
  %6191 = vmatprep.subr.mxu0 0.0
  %6192 = vmatpush1.msra.mxu0 0.0
  %6193 = vmatprep.mubr.f32.mxu0 0.0
  %6194 = vmatmul.mubr.f32.gmra.mrb[0].mxu0 %v853
  %v6195 = vpop.f32.mrb[0].mxu0
  %v6196 = vadd.f32 0.0, %v6195
  %v6197 = vpop.f32.mrb[0].mxu0
  %6198 = vmatprep.mubr.f32.mxu0 0.0
  %6199 = vmatmul.mubr.f32.gmra.mrb[0].mxu0 %v854
  %v6200 = vpop.f32.mrb[0].mxu0
  %v6201 = vadd.f32 0.0, %v6200
  %v6202 = vpop.f32.mrb[0].mxu0
  %6203 = vmatprep.mubr.f32.mxu0 0.0
  %6204 = vmatmul.mubr.f32.gmra.mrb[0].mxu0 %v855
  %v6205 = vpop.f32.mrb[0].mxu0
  %v6206 = vadd.f32 0.0, %v6205
  %v6207 = vpop.f32.mrb[0].mxu0
  %6208 = vmatprep.mubr.f32.mxu0 0.0
  %6209 = vmatmul.mubr.f32.gmra.mrb[0].mxu0 %v856
  %v6210 = vpop.f32.mrb[0].mxu0
  %v6211 = vadd.f32 0.0, %v6210
  %v6212 = vpop.f32.mrb[0].mxu0
  %6213 = vmatprep.mubr.f32.mxu0 0.0
  %6214 = vmatmul.mubr.f32.gmra.mrb[0].mxu0 %v857
  %v6215 = vpop.f32.mrb[0].mxu0
  %v6216 = vadd.f32 0.0, %v6215
  %v6217 = vpop.f32.mrb[0].mxu0
  %6218 = vmatprep.mubr.f32.mxu0 0.0
  %6219 = vmatmul.mubr.f32.gmra.mrb[0].mxu0 %v858
  %v6220 = vpop.f32.mrb[0].mxu0
  %v6221 = vadd.f32 0.0, %v6220
  %v6222 = vpop.f32.mrb[0].mxu0
  %6223 = vmatprep.mubr.f32.mxu0 0.0
  %6224 = vmatmul.mubr.f32.gmra.mrb[0].mxu0 %v859
  %v6225 = vpop.f32.mrb[0].mxu0
  %v6226 = vadd.f32 0.0, %v6225
  %v6227 = vpop.f32.mrb[0].mxu0
  %6228 = vmatprep.mubr.f32.mxu0 0.0
  %6229 = vmatmul.mubr.f32.gmra.mrb[0].mxu0 %v860
  %v6230 = vpop.f32.mrb[0].mxu0
  %v6231 = vadd.f32 0.0, %v6230
  %v6232 = vpop.f32.mrb[0].mxu0
  %6233 = vmatprep.mubr.f32.mxu0 0.0
  %6234 = vmatmul.mubr.f32.gmra.mrb[0].mxu0 %v861
  %v6235 = vpop.f32.mrb[0].mxu0
  %v6236 = vadd.f32 0.0, %v6235
  %v6237 = vpop.f32.mrb[0].mxu0
  %6238 = vmatprep.mubr.f32.mxu0 0.0
  %6239 = vmatmul.mubr.f32.gmra.mrb[0].mxu0 %v862
  %v6240 = vpop.f32.mrb[0].mxu0
  %v6241 = vadd.f32 0.0, %v6240
  %v6242 = vpop.f32.mrb[0].mxu0
  %6243 = vmatprep.mubr.f32.mxu0 0.0
  %6244 = vmatmul.mubr.f32.gmra.mrb[0].mxu0 %v863
  %v6245 = vpop.f32.mrb[0].mxu0
  %v6246 = vadd.f32 0.0, %v6245
  %v6247 = vpop.f32.mrb[0].mxu0
  %6248 = vmatprep.mubr.f32.mxu0 0.0
  %6249 = vmatmul.mubr.f32.gmra.mrb[0].mxu0 %v864
  %v6250 = vpop.f32.mrb[0].mxu0
  %v6251 = vadd.f32 0.0, %v6250
  %v6252 = vpop.f32.mrb[0].mxu0
  %6253 = vmatprep.mubr.f32.mxu0 0.0
  %6254 = vmatmul.mubr.f32.gmra.mrb[0].mxu0 %v865
  %v6255 = vpop.f32.mrb[0].mxu0
  %v6256 = vadd.f32 0.0, %v6255
  %v6257 = vpop.f32.mrb[0].mxu0
  %6258 = vmatprep.mubr.f32.mxu0 0.0
  %6259 = vmatmul.mubr.f32.gmra.mrb[0].mxu0 %v866
  %v6260 = vpop.f32.mrb[0].mxu0
  %v6261 = vadd.f32 0.0, %v6260
  %v6262 = vpop.f32.mrb[0].mxu0
  %6263 = vmatprep.mubr.f32.mxu0 0.0
  %6264 = vmatmul.mubr.f32.gmra.mrb[0].mxu0 %v867
  %v6265 = vpop.f32.mrb[0].mxu0
  %v6266 = vadd.f32 0.0, %v6265
  %v6267 = vpop.f32.mrb[0].mxu0
  %6268 = vmatprep.mubr.f32.mxu0 0.0
  %6269 = vmatmul.mubr.f32.gmra.mrb[0].mxu0 %v868
  %v6270 = vpop.f32.mrb[0].mxu0
  %v6271 = vadd.f32 0.0, %v6270
  %v6272 = vpop.f32.mrb[0].mxu0
  %6273 = vmatprep.mubr.f32.mxu0 0.0
  %6274 = vmatmul.mubr.f32.gmra.mrb[0].mxu0 %v869
  %v6275 = vpop.f32.mrb[0].mxu0
  %v6276 = vadd.f32 0.0, %v6275
  %v6277 = vpop.f32.mrb[0].mxu0
  %6278 = vmatprep.mubr.f32.mxu0 0.0
  %6279 = vmatmul.mubr.f32.gmra.mrb[0].mxu0 %v870
  %v6280 = vpop.f32.mrb[0].mxu0
  %v6281 = vadd.f32 0.0, %v6280
  %v6282 = vpop.f32.mrb[0].mxu0
  %6283 = vmatprep.mubr.f32.mxu0 0.0
  %6284 = vmatmul.mubr.f32.gmra.mrb[0].mxu0 %v871
  %v6285 = vpop.f32.mrb[0].mxu0
  %v6286 = vadd.f32 0.0, %v6285
  %v6287 = vpop.f32.mrb[0].mxu0
  %6288 = vmatprep.mubr.f32.mxu0 0.0
  %6289 = vmatmul.mubr.f32.gmra.mrb[0].mxu0 %v872
  %v6290 = vpop.f32.mrb[0].mxu0
  %v6291 = vadd.f32 0.0, %v6290
  %v6292 = vpop.f32.mrb[0].mxu0
  %6293 = vmatprep.mubr.f32.mxu0 0.0
  %6294 = vmatmul.mubr.f32.gmra.mrb[0].mxu0 %v873
  %v6295 = vpop.f32.mrb[0].mxu0
  %v6296 = vadd.f32 0.0, %v6295
  %v6297 = vpop.f32.mrb[0].mxu0
  %6298 = vmatprep.mubr.f32.mxu0 0.0
  %6299 = vmatmul.mubr.f32.gmra.mrb[0].mxu0 %v874
  %v6300 = vpop.f32.mrb[0].mxu0
  %v6301 = vadd.f32 0.0, %v6300
  %v6302 = vpop.f32.mrb[0].mxu0
  %6303 = vmatprep.mubr.f32.mxu0 0.0
  %6304 = vmatmul.mubr.f32.gmra.mrb[0].mxu0 %v875
  %v6305 = vpop.f32.mrb[0].mxu0
  %v6306 = vadd.f32 0.0, %v6305
  %v6307 = vpop.f32.mrb[0].mxu0
  %6308 = vmatprep.mubr.f32.mxu0 0.0
  %6309 = vmatmul.mubr.f32.gmra.mrb[0].mxu0 %v876
  %v6310 = vpop.f32.mrb[0].mxu0
  %v6311 = vadd.f32 0.0, %v6310
  %v6312 = vpop.f32.mrb[0].mxu0
  %6313 = vmatprep.mubr.f32.mxu0 0.0
  %6314 = vmatmul.mubr.f32.gmra.mrb[0].mxu0 %v877
  %v6315 = vpop.f32.mrb[0].mxu0
  %v6316 = vadd.f32 0.0, %v6315
  %v6317 = vpop.f32.mrb[0].mxu0
  %6318 = vmatprep.mubr.f32.mxu0 0.0
  %6319 = vmatmul.mubr.f32.gmra.mrb[0].mxu0 %v878
  %v6320 = vpop.f32.mrb[0].mxu0
  %v6321 = vadd.f32 0.0, %v6320
  %v6322 = vpop.f32.mrb[0].mxu0
  %6323 = vmatprep.mubr.f32.mxu0 0.0
  %6324 = vmatmul.mubr.f32.gmra.mrb[0].mxu0 %v879
  %v6325 = vpop.f32.mrb[0].mxu0
  %v6326 = vadd.f32 0.0, %v6325
  %v6327 = vpop.f32.mrb[0].mxu0
  %6328 = vmatprep.mubr.f32.mxu0 0.0
  %6329 = vmatmul.mubr.f32.gmra.mrb[0].mxu0 %v880
  %v6330 = vpop.f32.mrb[0].mxu0
  %v6331 = vadd.f32 0.0, %v6330
  %v6332 = vpop.f32.mrb[0].mxu0
  %6333 = vmatprep.mubr.f32.mxu0 0.0
  %6334 = vmatmul.mubr.f32.gmra.mrb[0].mxu0 %v881
  %v6335 = vpop.f32.mrb[0].mxu0
  %v6336 = vadd.f32 0.0, %v6335
  %v6337 = vpop.f32.mrb[0].mxu0
  %6338 = vmatprep.mubr.f32.mxu0 0.0
  %6339 = vmatmul.mubr.f32.gmra.mrb[0].mxu0 %v882
  %v6340 = vpop.f32.mrb[0].mxu0
  %v6341 = vadd.f32 0.0, %v6340
  %v6342 = vpop.f32.mrb[0].mxu0
  %6343 = vmatprep.mubr.f32.mxu0 0.0
  %6344 = vmatmul.mubr.f32.gmra.mrb[0].mxu0 %v883
  %v6345 = vpop.f32.mrb[0].mxu0
  %v6346 = vadd.f32 0.0, %v6345
  %v6347 = vpop.f32.mrb[0].mxu0
  %6348 = vmatprep.mubr.f32.mxu0 0.0
  %6349 = vmatmul.mubr.f32.gmra.mrb[0].mxu0 %v884
  %v6350 = vpop.f32.mrb[0].mxu0
  %v6351 = vadd.f32 0.0, %v6350
  %v6352 = vpop.f32.mrb[0].mxu0
  %6353 = vmatprep.mubr.f32.mxu0 0.0
  %6354 = vmatmul.mubr.f32.gmra.mrb[0].mxu0 %v885
  %v6355 = vpop.f32.mrb[0].mxu0
  %v6356 = vadd.f32 0.0, %v6355
  %v6357 = vpop.f32.mrb[0].mxu0
  %6358 = vmatprep.mubr.f32.mxu0 0.0
  %6359 = vmatmul.mubr.f32.gmra.mrb[0].mxu0 %v886
  %v6360 = vpop.f32.mrb[0].mxu0
  %v6361 = vadd.f32 0.0, %v6360
  %v6362 = vpop.f32.mrb[0].mxu0
  %6363 = vmatprep.mubr.f32.mxu0 0.0
  %6364 = vmatmul.mubr.f32.gmra.mrb[0].mxu0 %v887
  %v6365 = vpop.f32.mrb[0].mxu0
  %v6366 = vadd.f32 0.0, %v6365
  %v6367 = vpop.f32.mrb[0].mxu0
  %6368 = vmatprep.mubr.f32.mxu0 0.0
  %6369 = vmatmul.mubr.f32.gmra.mrb[0].mxu0 %v888
  %v6370 = vpop.f32.mrb[0].mxu0
  %v6371 = vadd.f32 0.0, %v6370
  %v6372 = vpop.f32.mrb[0].mxu0
  %6373 = vmatprep.mubr.f32.mxu0 0.0
  %6374 = vmatmul.mubr.f32.gmra.mrb[0].mxu0 %v889
  %v6375 = vpop.f32.mrb[0].mxu0
  %v6376 = vadd.f32 0.0, %v6375
  %v6377 = vpop.f32.mrb[0].mxu0
  %6378 = vmatprep.mubr.f32.mxu0 0.0
  %6379 = vmatmul.mubr.f32.gmra.mrb[0].mxu0 %v890
  %v6380 = vpop.f32.mrb[0].mxu0
  %v6381 = vadd.f32 0.0, %v6380
  %v6382 = vpop.f32.mrb[0].mxu0
  %6383 = vmatprep.mubr.f32.mxu0 0.0
  %6384 = vmatmul.mubr.f32.gmra.mrb[0].mxu0 %v891
  %v6385 = vpop.f32.mrb[0].mxu0
  %v6386 = vadd.f32 0.0, %v6385
  %v6387 = vpop.f32.mrb[0].mxu0
  %6388 = vmatprep.mubr.f32.mxu0 0.0
  %6389 = vmatmul.mubr.f32.gmra.mrb[0].mxu0 %v892
  %v6390 = vpop.f32.mrb[0].mxu0
  %v6391 = vadd.f32 0.0, %v6390
  %v6392 = vpop.f32.mrb[0].mxu0
  %6393 = vmatprep.mubr.f32.mxu0 0.0
  %6394 = vmatmul.mubr.f32.gmra.mrb[0].mxu0 %v893
  %v6395 = vpop.f32.mrb[0].mxu0
  %v6396 = vadd.f32 0.0, %v6395
  %v6397 = vpop.f32.mrb[0].mxu0
  %6398 = vmatprep.mubr.f32.mxu0 0.0
  %6399 = vmatmul.mubr.f32.gmra.mrb[0].mxu0 %v894
  %v6400 = vpop.f32.mrb[0].mxu0
  %v6401 = vadd.f32 0.0, %v6400
  %v6402 = vpop.f32.mrb[0].mxu0
  %6403 = vmatprep.mubr.f32.mxu0 0.0
  %6404 = vmatmul.mubr.f32.gmra.mrb[0].mxu0 %v895
  %v6405 = vpop.f32.mrb[0].mxu0
  %v6406 = vadd.f32 0.0, %v6405
  %v6407 = vpop.f32.mrb[0].mxu0
  %6408 = vmatprep.mubr.f32.mxu0 0.0
  %6409 = vmatmul.mubr.f32.gmra.mrb[0].mxu0 %v896
  %v6410 = vpop.f32.mrb[0].mxu0
  %v6411 = vadd.f32 0.0, %v6410
  %v6412 = vpop.f32.mrb[0].mxu0
  %6413 = vmatprep.mubr.f32.mxu0 0.0
  %6414 = vmatmul.mubr.f32.gmra.mrb[0].mxu0 %v897
  %v6415 = vpop.f32.mrb[0].mxu0
  %v6416 = vadd.f32 0.0, %v6415
  %v6417 = vpop.f32.mrb[0].mxu0
  %6418 = vmatprep.mubr.f32.mxu0 0.0
  %6419 = vmatmul.mubr.f32.gmra.mrb[0].mxu0 %v898
  %v6420 = vpop.f32.mrb[0].mxu0
  %v6421 = vadd.f32 0.0, %v6420
  %v6422 = vpop.f32.mrb[0].mxu0
  %6423 = vmatprep.mubr.f32.mxu0 0.0
  %6424 = vmatmul.mubr.f32.gmra.mrb[0].mxu0 %v899
  %v6425 = vpop.f32.mrb[0].mxu0
  %v6426 = vadd.f32 0.0, %v6425
  %v6427 = vpop.f32.mrb[0].mxu0
  %6428 = vmatprep.mubr.f32.mxu0 0.0
  %6429 = vmatmul.mubr.f32.gmra.mrb[0].mxu0 %v900
  %v6430 = vpop.f32.mrb[0].mxu0
  %v6431 = vadd.f32 0.0, %v6430
  %v6432 = vpop.f32.mrb[0].mxu0
  %6433 = vmatprep.mubr.f32.mxu0 0.0
  %6434 = vmatmul.mubr.f32.gmra.mrb[0].mxu0 %v901
  %v6435 = vpop.f32.mrb[0].mxu0
  %v6436 = vadd.f32 0.0, %v6435
  %v6437 = vpop.f32.mrb[0].mxu0
  %6438 = vmatprep.mubr.f32.mxu0 0.0
  %6439 = vmatmul.mubr.f32.gmra.mrb[0].mxu0 %v902
  %v6440 = vpop.f32.mrb[0].mxu0
  %v6441 = vadd.f32 0.0, %v6440
  %v6442 = vpop.f32.mrb[0].mxu0
  %6443 = vmatprep.mubr.f32.mxu0 0.0
  %6444 = vmatmul.mubr.f32.gmra.mrb[0].mxu0 %v903
  %v6445 = vpop.f32.mrb[0].mxu0
  %v6446 = vadd.f32 0.0, %v6445
  %v6447 = vpop.f32.mrb[0].mxu0
  %6448 = vmatprep.mubr.f32.mxu0 0.0
  %6449 = vmatmul.mubr.f32.gmra.mrb[0].mxu0 %v904
  %v6450 = vpop.f32.mrb[0].mxu0
  %v6451 = vadd.f32 0.0, %v6450
  %v6452 = vpop.f32.mrb[0].mxu0
  %6453 = vmatprep.mubr.f32.mxu0 0.0
  %6454 = vmatmul.mubr.f32.gmra.mrb[0].mxu0 %v905
  %v6455 = vpop.f32.mrb[0].mxu0
  %v6456 = vadd.f32 0.0, %v6455
  %v6457 = vpop.f32.mrb[0].mxu0
  %6458 = vmatprep.mubr.f32.mxu0 0.0
  %6459 = vmatmul.mubr.f32.gmra.mrb[0].mxu0 %v906
  %v6460 = vpop.f32.mrb[0].mxu0
  %v6461 = vadd.f32 0.0, %v6460
  %v6462 = vpop.f32.mrb[0].mxu0
  %6463 = vmatprep.mubr.f32.mxu0 0.0
  %6464 = vmatmul.mubr.f32.gmra.mrb[0].mxu0 %v907
  %v6465 = vpop.f32.mrb[0].mxu0
  %v6466 = vadd.f32 0.0, %v6465
  %v6467 = vpop.f32.mrb[0].mxu0
  %6468 = vmatprep.mubr.f32.mxu0 0.0
  %6469 = vmatmul.mubr.f32.gmra.mrb[0].mxu0 %v908
  %v6470 = vpop.f32.mrb[0].mxu0
  %v6471 = vadd.f32 0.0, %v6470
  %v6472 = vpop.f32.mrb[0].mxu0
  %6473 = vmatprep.mubr.f32.mxu0 0.0
  %6474 = vmatmul.mubr.f32.gmra.mrb[0].mxu0 %v909
  %v6475 = vpop.f32.mrb[0].mxu0
  %v6476 = vadd.f32 0.0, %v6475
  %v6477 = vpop.f32.mrb[0].mxu0
  %6478 = vmatprep.mubr.f32.mxu0 0.0
  %6479 = vmatmul.mubr.f32.gmra.mrb[0].mxu0 %v910
  %v6480 = vpop.f32.mrb[0].mxu0
  %v6481 = vadd.f32 0.0, %v6480
  %v6482 = vpop.f32.mrb[0].mxu0
  %6483 = vmatprep.mubr.f32.mxu0 0.0
  %6484 = vmatmul.mubr.f32.gmra.mrb[0].mxu0 %v911
  %v6485 = vpop.f32.mrb[0].mxu0
  %v6486 = vadd.f32 0.0, %v6485
  %v6487 = vpop.f32.mrb[0].mxu0
  %6488 = vmatprep.mubr.f32.mxu0 0.0
  %6489 = vmatmul.mubr.f32.gmra.mrb[0].mxu0 %v912
  %v6490 = vpop.f32.mrb[0].mxu0
  %v6491 = vadd.f32 0.0, %v6490
  %v6492 = vpop.f32.mrb[0].mxu0
  %6493 = vmatprep.mubr.f32.mxu0 0.0
  %6494 = vmatmul.mubr.f32.gmra.mrb[0].mxu0 %v913
  %v6495 = vpop.f32.mrb[0].mxu0
  %v6496 = vadd.f32 0.0, %v6495
  %v6497 = vpop.f32.mrb[0].mxu0
  %6498 = vmatprep.mubr.f32.mxu0 0.0
  %6499 = vmatmul.mubr.f32.gmra.mrb[0].mxu0 %v914
  %v6500 = vpop.f32.mrb[0].mxu0
  %v6501 = vadd.f32 0.0, %v6500
  %v6502 = vpop.f32.mrb[0].mxu0
  %6503 = vmatprep.mubr.f32.mxu0 0.0
  %6504 = vmatmul.mubr.f32.gmra.mrb[0].mxu0 %v915
  %v6505 = vpop.f32.mrb[0].mxu0
  %v6506 = vadd.f32 0.0, %v6505
  %v6507 = vpop.f32.mrb[0].mxu0
  %6508 = vmatprep.mubr.f32.mxu0 0.0
  %6509 = vmatmul.mubr.f32.gmra.mrb[0].mxu0 %v916
  %v6510 = vpop.f32.mrb[0].mxu0
  %v6511 = vadd.f32 0.0, %v6510
  %v6512 = vpop.f32.mrb[0].mxu0
  %6513 = vdwg.mxu0
  %v6514 = vadd.f32 %v6048, %v6196
  %v6515 = vadd.f32 %v6049, %v6201
  %v6516 = vadd.f32 %v6050, %v6206
  %v6517 = vadd.f32 %v6051, %v6211
  %v6518 = vadd.f32 %v6052, %v6216
  %v6519 = vadd.f32 %v6053, %v6221
  %v6520 = vadd.f32 %v6054, %v6226
  %v6521 = vadd.f32 %v6055, %v6231
  %v6522 = vadd.f32 %v6056, %v6236
  %v6523 = vadd.f32 %v6057, %v6241
  %v6524 = vadd.f32 %v6058, %v6246
  %v6525 = vadd.f32 %v6059, %v6251
  %v6526 = vadd.f32 %v6060, %v6256
  %v6527 = vadd.f32 %v6061, %v6261
  %v6528 = vadd.f32 %v6062, %v6266
  %v6529 = vadd.f32 %v6063, %v6271
  %v6530 = vadd.f32 %v6064, %v6276
  %v6531 = vadd.f32 %v6065, %v6281
  %v6532 = vadd.f32 %v6066, %v6286
  %v6533 = vadd.f32 %v6067, %v6291
  %v6534 = vadd.f32 %v6068, %v6296
  %v6535 = vadd.f32 %v6069, %v6301
  %v6536 = vadd.f32 %v6070, %v6306
  %v6537 = vadd.f32 %v6071, %v6311
  %v6538 = vadd.f32 %v6072, %v6316
  %v6539 = vadd.f32 %v6073, %v6321
  %v6540 = vadd.f32 %v6074, %v6326
  %v6541 = vadd.f32 %v6075, %v6331
  %v6542 = vadd.f32 %v6076, %v6336
  %v6543 = vadd.f32 %v6077, %v6341
  %v6544 = vadd.f32 %v6078, %v6346
  %v6545 = vadd.f32 %v6079, %v6351
  %v6546 = vadd.f32 %v6080, %v6356
  %v6547 = vadd.f32 %v6081, %v6361
  %v6548 = vadd.f32 %v6082, %v6366
  %v6549 = vadd.f32 %v6083, %v6371
  %v6550 = vadd.f32 %v6084, %v6376
  %v6551 = vadd.f32 %v6085, %v6381
  %v6552 = vadd.f32 %v6086, %v6386
  %v6553 = vadd.f32 %v6087, %v6391
  %v6554 = vadd.f32 %v6088, %v6396
  %v6555 = vadd.f32 %v6089, %v6401
  %v6556 = vadd.f32 %v6090, %v6406
  %v6557 = vadd.f32 %v6091, %v6411
  %v6558 = vadd.f32 %v6092, %v6416
  %v6559 = vadd.f32 %v6093, %v6421
  %v6560 = vadd.f32 %v6094, %v6426
  %v6561 = vadd.f32 %v6095, %v6431
  %v6562 = vadd.f32 %v6096, %v6436
  %v6563 = vadd.f32 %v6097, %v6441
  %v6564 = vadd.f32 %v6098, %v6446
  %v6565 = vadd.f32 %v6099, %v6451
  %v6566 = vadd.f32 %v6100, %v6456
  %v6567 = vadd.f32 %v6101, %v6461
  %v6568 = vadd.f32 %v6102, %v6466
  %v6569 = vadd.f32 %v6103, %v6471
  %v6570 = vadd.f32 %v6104, %v6476
  %v6571 = vadd.f32 %v6105, %v6481
  %v6572 = vadd.f32 %v6106, %v6486
  %v6573 = vadd.f32 %v6107, %v6491
  %v6574 = vadd.f32 %v6108, %v6496
  %v6575 = vadd.f32 %v6109, %v6501
  %v6576 = vadd.f32 %v6110, %v6506
  %v6577 = vadd.f32 %v6111, %v6511
  %vm6578 = vmand %vm3964, %vm5006
  %vm6579 = vmand %vm3965, %vm5007
  %vm6580 = vmand %vm3966, %vm5008
  %vm6581 = vmand %vm3967, %vm5009
  %vm6582 = vmand %vm3968, %vm5010
  %vm6583 = vmand %vm3969, %vm5011
  %vm6584 = vmand %vm3970, %vm5012
  %vm6585 = vmand %vm3971, %vm5013
  %vm6586 = vmand %vm3972, %vm5014
  %vm6587 = vmand %vm3973, %vm5015
  %vm6588 = vmand %vm3974, %vm5016
  %vm6589 = vmand %vm3975, %vm5017
  %vm6590 = vmand %vm3976, %vm5018
  %vm6591 = vmand %vm3977, %vm5019
  %vm6592 = vmand %vm3978, %vm5020
  %vm6593 = vmand %vm3979, %vm5021
  %vm6594 = vmand %vm3980, %vm5022
  %vm6595 = vmand %vm3981, %vm5023
  %vm6596 = vmand %vm3982, %vm5024
  %vm6597 = vmand %vm3983, %vm5025
  %vm6598 = vmand %vm3984, %vm5026
  %vm6599 = vmand %vm3985, %vm5027
  %vm6600 = vmand %vm3986, %vm5028
  %vm6601 = vmand %vm3987, %vm5029
  %vm6602 = vmand %vm3988, %vm5030
  %vm6603 = vmand %vm3989, %vm5031
  %vm6604 = vmand %vm3990, %vm5032
  %vm6605 = vmand %vm3991, %vm5033
  %vm6606 = vmand %vm3992, %vm5034
  %vm6607 = vmand %vm3993, %vm5035
  %vm6608 = vmand %vm3994, %vm5036
  %vm6609 = vmand %vm3995, %vm5037
  %vm6610 = vmand %vm3996, %vm5038
  %vm6611 = vmand %vm3997, %vm5039
  %vm6612 = vmand %vm3998, %vm5040
  %vm6613 = vmand %vm3999, %vm5041
  %vm6614 = vmand %vm4000, %vm5042
  %vm6615 = vmand %vm4001, %vm5043
  %vm6616 = vmand %vm4002, %vm5044
  %vm6617 = vmand %vm4003, %vm5045
  %vm6618 = vmand %vm4004, %vm5046
  %vm6619 = vmand %vm4005, %vm5047
  %vm6620 = vmand %vm4006, %vm5048
  %vm6621 = vmand %vm4007, %vm5049
  %vm6622 = vmand %vm4008, %vm5050
  %vm6623 = vmand %vm4009, %vm5051
  %vm6624 = vmand %vm4010, %vm5052
  %vm6625 = vmand %vm4011, %vm5053
  %vm6626 = vmand %vm4012, %vm5054
  %vm6627 = vmand %vm4013, %vm5055
  %vm6628 = vmand %vm4014, %vm5056
  %vm6629 = vmand %vm4015, %vm5057
  %vm6630 = vmand %vm4016, %vm5058
  %vm6631 = vmand %vm4017, %vm5059
  %vm6632 = vmand %vm4018, %vm5060
  %vm6633 = vmand %vm4019, %vm5061
  %vm6634 = vmand %vm4020, %vm5062
  %vm6635 = vmand %vm4021, %vm5063
  %vm6636 = vmand %vm4022, %vm5064
  %vm6637 = vmand %vm4023, %vm5065
  %vm6638 = vmand %vm4024, %vm5066
  %vm6639 = vmand %vm4025, %vm5067
  %vm6640 = vmand %vm4026, %vm5068
  %vm6641 = vmand %vm4027, %vm5069
  %vm6642 = vmand %vm6578, %vm5134
  %vm6643 = vmand %vm6579, %vm5135
  %vm6644 = vmand %vm6580, %vm5136
  %vm6645 = vmand %vm6581, %vm5137
  %vm6646 = vmand %vm6582, %vm5138
  %vm6647 = vmand %vm6583, %vm5139
  %vm6648 = vmand %vm6584, %vm5140
  %vm6649 = vmand %vm6585, %vm5141
  %vm6650 = vmand %vm6586, %vm5142
  %vm6651 = vmand %vm6587, %vm5143
  %vm6652 = vmand %vm6588, %vm5144
  %vm6653 = vmand %vm6589, %vm5145
  %vm6654 = vmand %vm6590, %vm5146
  %vm6655 = vmand %vm6591, %vm5147
  %vm6656 = vmand %vm6592, %vm5148
  %vm6657 = vmand %vm6593, %vm5149
  %vm6658 = vmand %vm6594, %vm5150
  %vm6659 = vmand %vm6595, %vm5151
  %vm6660 = vmand %vm6596, %vm5152
  %vm6661 = vmand %vm6597, %vm5153
  %vm6662 = vmand %vm6598, %vm5154
  %vm6663 = vmand %vm6599, %vm5155
  %vm6664 = vmand %vm6600, %vm5156
  %vm6665 = vmand %vm6601, %vm5157
  %vm6666 = vmand %vm6602, %vm5158
  %vm6667 = vmand %vm6603, %vm5159
  %vm6668 = vmand %vm6604, %vm5160
  %vm6669 = vmand %vm6605, %vm5161
  %vm6670 = vmand %vm6606, %vm5162
  %vm6671 = vmand %vm6607, %vm5163
  %vm6672 = vmand %vm6608, %vm5164
  %vm6673 = vmand %vm6609, %vm5165
  %vm6674 = vmand %vm6610, %vm5166
  %vm6675 = vmand %vm6611, %vm5167
  %vm6676 = vmand %vm6612, %vm5168
  %vm6677 = vmand %vm6613, %vm5169
  %vm6678 = vmand %vm6614, %vm5170
  %vm6679 = vmand %vm6615, %vm5171
  %vm6680 = vmand %vm6616, %vm5172
  %vm6681 = vmand %vm6617, %vm5173
  %vm6682 = vmand %vm6618, %vm5174
  %vm6683 = vmand %vm6619, %vm5175
  %vm6684 = vmand %vm6620, %vm5176
  %vm6685 = vmand %vm6621, %vm5177
  %vm6686 = vmand %vm6622, %vm5178
  %vm6687 = vmand %vm6623, %vm5179
  %vm6688 = vmand %vm6624, %vm5180
  %vm6689 = vmand %vm6625, %vm5181
  %vm6690 = vmand %vm6626, %vm5182
  %vm6691 = vmand %vm6627, %vm5183
  %vm6692 = vmand %vm6628, %vm5184
  %vm6693 = vmand %vm6629, %vm5185
  %vm6694 = vmand %vm6630, %vm5186
  %vm6695 = vmand %vm6631, %vm5187
  %vm6696 = vmand %vm6632, %vm5188
  %vm6697 = vmand %vm6633, %vm5189
  %vm6698 = vmand %vm6634, %vm5190
  %vm6699 = vmand %vm6635, %vm5191
  %vm6700 = vmand %vm6636, %vm5192
  %vm6701 = vmand %vm6637, %vm5193
  %vm6702 = vmand %vm6638, %vm5194
  %vm6703 = vmand %vm6639, %vm5195
  %vm6704 = vmand %vm6640, %vm5196
  %vm6705 = vmand %vm6641, %vm5197
  %v6706 = vsel %vm6642, 1, 0
  %v6707 = vsel %vm6643, 1, 0
  %v6708 = vsel %vm6644, 1, 0
  %v6709 = vsel %vm6645, 1, 0
  %v6710 = vsel %vm6646, 1, 0
  %v6711 = vsel %vm6647, 1, 0
  %v6712 = vsel %vm6648, 1, 0
  %v6713 = vsel %vm6649, 1, 0
  %v6714 = vsel %vm6650, 1, 0
  %v6715 = vsel %vm6651, 1, 0
  %v6716 = vsel %vm6652, 1, 0
  %v6717 = vsel %vm6653, 1, 0
  %v6718 = vsel %vm6654, 1, 0
  %v6719 = vsel %vm6655, 1, 0
  %v6720 = vsel %vm6656, 1, 0
  %v6721 = vsel %vm6657, 1, 0
  %v6722 = vsel %vm6658, 1, 0
  %v6723 = vsel %vm6659, 1, 0
  %v6724 = vsel %vm6660, 1, 0
  %v6725 = vsel %vm6661, 1, 0
  %v6726 = vsel %vm6662, 1, 0
  %v6727 = vsel %vm6663, 1, 0
  %v6728 = vsel %vm6664, 1, 0
  %v6729 = vsel %vm6665, 1, 0
  %v6730 = vsel %vm6666, 1, 0
  %v6731 = vsel %vm6667, 1, 0
  %v6732 = vsel %vm6668, 1, 0
  %v6733 = vsel %vm6669, 1, 0
  %v6734 = vsel %vm6670, 1, 0
  %v6735 = vsel %vm6671, 1, 0
  %v6736 = vsel %vm6672, 1, 0
  %v6737 = vsel %vm6673, 1, 0
  %v6738 = vsel %vm6674, 1, 0
  %v6739 = vsel %vm6675, 1, 0
  %v6740 = vsel %vm6676, 1, 0
  %v6741 = vsel %vm6677, 1, 0
  %v6742 = vsel %vm6678, 1, 0
  %v6743 = vsel %vm6679, 1, 0
  %v6744 = vsel %vm6680, 1, 0
  %v6745 = vsel %vm6681, 1, 0
  %v6746 = vsel %vm6682, 1, 0
  %v6747 = vsel %vm6683, 1, 0
  %v6748 = vsel %vm6684, 1, 0
  %v6749 = vsel %vm6685, 1, 0
  %v6750 = vsel %vm6686, 1, 0
  %v6751 = vsel %vm6687, 1, 0
  %v6752 = vsel %vm6688, 1, 0
  %v6753 = vsel %vm6689, 1, 0
  %v6754 = vsel %vm6690, 1, 0
  %v6755 = vsel %vm6691, 1, 0
  %v6756 = vsel %vm6692, 1, 0
  %v6757 = vsel %vm6693, 1, 0
  %v6758 = vsel %vm6694, 1, 0
  %v6759 = vsel %vm6695, 1, 0
  %v6760 = vsel %vm6696, 1, 0
  %v6761 = vsel %vm6697, 1, 0
  %v6762 = vsel %vm6698, 1, 0
  %v6763 = vsel %vm6699, 1, 0
  %v6764 = vsel %vm6700, 1, 0
  %v6765 = vsel %vm6701, 1, 0
  %v6766 = vsel %vm6702, 1, 0
  %v6767 = vsel %vm6703, 1, 0
  %v6768 = vsel %vm6704, 1, 0
  %v6769 = vsel %vm6705, 1, 0
  %6770 = vset.pattern.permute.xlu0 0
  %6771 = vperm.xlu0 %6770, %v6706
  %v6772 = vpop.permute.xlu0 %6771
  %6773 = vset.pattern.permute.xlu0 0
  %6774 = vperm.xlu0 %6773, %v6707
  %v6775 = vpop.permute.xlu0 %6774
  %6776 = vset.pattern.permute.xlu0 0
  %6777 = vperm.xlu0 %6776, %v6708
  %v6778 = vpop.permute.xlu0 %6777
  %6779 = vset.pattern.permute.xlu0 0
  %6780 = vperm.xlu0 %6779, %v6709
  %v6781 = vpop.permute.xlu0 %6780
  %6782 = vset.pattern.permute.xlu0 0
  %6783 = vperm.xlu0 %6782, %v6710
  %v6784 = vpop.permute.xlu0 %6783
  %6785 = vset.pattern.permute.xlu0 0
  %6786 = vperm.xlu0 %6785, %v6711
  %v6787 = vpop.permute.xlu0 %6786
  %6788 = vset.pattern.permute.xlu0 0
  %6789 = vperm.xlu0 %6788, %v6712
  %v6790 = vpop.permute.xlu0 %6789
  %6791 = vset.pattern.permute.xlu0 0
  %6792 = vperm.xlu0 %6791, %v6713
  %v6793 = vpop.permute.xlu0 %6792
  %6794 = vset.pattern.permute.xlu0 0
  %6795 = vperm.xlu0 %6794, %v6714
  %v6796 = vpop.permute.xlu0 %6795
  %6797 = vset.pattern.permute.xlu0 0
  %6798 = vperm.xlu0 %6797, %v6715
  %v6799 = vpop.permute.xlu0 %6798
  %6800 = vset.pattern.permute.xlu0 0
  %6801 = vperm.xlu0 %6800, %v6716
  %v6802 = vpop.permute.xlu0 %6801
  %6803 = vset.pattern.permute.xlu0 0
  %6804 = vperm.xlu0 %6803, %v6717
  %v6805 = vpop.permute.xlu0 %6804
  %6806 = vset.pattern.permute.xlu0 0
  %6807 = vperm.xlu0 %6806, %v6718
  %v6808 = vpop.permute.xlu0 %6807
  %6809 = vset.pattern.permute.xlu0 0
  %6810 = vperm.xlu0 %6809, %v6719
  %v6811 = vpop.permute.xlu0 %6810
  %6812 = vset.pattern.permute.xlu0 0
  %6813 = vperm.xlu0 %6812, %v6720
  %v6814 = vpop.permute.xlu0 %6813
  %6815 = vset.pattern.permute.xlu0 0
  %6816 = vperm.xlu0 %6815, %v6721
  %v6817 = vpop.permute.xlu0 %6816
  %6818 = vset.pattern.permute.xlu0 0
  %6819 = vperm.xlu0 %6818, %v6722
  %v6820 = vpop.permute.xlu0 %6819
  %6821 = vset.pattern.permute.xlu0 0
  %6822 = vperm.xlu0 %6821, %v6723
  %v6823 = vpop.permute.xlu0 %6822
  %6824 = vset.pattern.permute.xlu0 0
  %6825 = vperm.xlu0 %6824, %v6724
  %v6826 = vpop.permute.xlu0 %6825
  %6827 = vset.pattern.permute.xlu0 0
  %6828 = vperm.xlu0 %6827, %v6725
  %v6829 = vpop.permute.xlu0 %6828
  %6830 = vset.pattern.permute.xlu0 0
  %6831 = vperm.xlu0 %6830, %v6726
  %v6832 = vpop.permute.xlu0 %6831
  %6833 = vset.pattern.permute.xlu0 0
  %6834 = vperm.xlu0 %6833, %v6727
  %v6835 = vpop.permute.xlu0 %6834
  %6836 = vset.pattern.permute.xlu0 0
  %6837 = vperm.xlu0 %6836, %v6728
  %v6838 = vpop.permute.xlu0 %6837
  %6839 = vset.pattern.permute.xlu0 0
  %6840 = vperm.xlu0 %6839, %v6729
  %v6841 = vpop.permute.xlu0 %6840
  %6842 = vset.pattern.permute.xlu0 0
  %6843 = vperm.xlu0 %6842, %v6730
  %v6844 = vpop.permute.xlu0 %6843
  %6845 = vset.pattern.permute.xlu0 0
  %6846 = vperm.xlu0 %6845, %v6731
  %v6847 = vpop.permute.xlu0 %6846
  %6848 = vset.pattern.permute.xlu0 0
  %6849 = vperm.xlu0 %6848, %v6732
  %v6850 = vpop.permute.xlu0 %6849
  %6851 = vset.pattern.permute.xlu0 0
  %6852 = vperm.xlu0 %6851, %v6733
  %v6853 = vpop.permute.xlu0 %6852
  %6854 = vset.pattern.permute.xlu0 0
  %6855 = vperm.xlu0 %6854, %v6734
  %v6856 = vpop.permute.xlu0 %6855
  %6857 = vset.pattern.permute.xlu0 0
  %6858 = vperm.xlu0 %6857, %v6735
  %v6859 = vpop.permute.xlu0 %6858
  %6860 = vset.pattern.permute.xlu0 0
  %6861 = vperm.xlu0 %6860, %v6736
  %v6862 = vpop.permute.xlu0 %6861
  %6863 = vset.pattern.permute.xlu0 0
  %6864 = vperm.xlu0 %6863, %v6737
  %v6865 = vpop.permute.xlu0 %6864
  %6866 = vset.pattern.permute.xlu0 0
  %6867 = vperm.xlu0 %6866, %v6738
  %v6868 = vpop.permute.xlu0 %6867
  %6869 = vset.pattern.permute.xlu0 0
  %6870 = vperm.xlu0 %6869, %v6739
  %v6871 = vpop.permute.xlu0 %6870
  %6872 = vset.pattern.permute.xlu0 0
  %6873 = vperm.xlu0 %6872, %v6740
  %v6874 = vpop.permute.xlu0 %6873
  %6875 = vset.pattern.permute.xlu0 0
  %6876 = vperm.xlu0 %6875, %v6741
  %v6877 = vpop.permute.xlu0 %6876
  %6878 = vset.pattern.permute.xlu0 0
  %6879 = vperm.xlu0 %6878, %v6742
  %v6880 = vpop.permute.xlu0 %6879
  %6881 = vset.pattern.permute.xlu0 0
  %6882 = vperm.xlu0 %6881, %v6743
  %v6883 = vpop.permute.xlu0 %6882
  %6884 = vset.pattern.permute.xlu0 0
  %6885 = vperm.xlu0 %6884, %v6744
  %v6886 = vpop.permute.xlu0 %6885
  %6887 = vset.pattern.permute.xlu0 0
  %6888 = vperm.xlu0 %6887, %v6745
  %v6889 = vpop.permute.xlu0 %6888
  %6890 = vset.pattern.permute.xlu0 0
  %6891 = vperm.xlu0 %6890, %v6746
  %v6892 = vpop.permute.xlu0 %6891
  %6893 = vset.pattern.permute.xlu0 0
  %6894 = vperm.xlu0 %6893, %v6747
  %v6895 = vpop.permute.xlu0 %6894
  %6896 = vset.pattern.permute.xlu0 0
  %6897 = vperm.xlu0 %6896, %v6748
  %v6898 = vpop.permute.xlu0 %6897
  %6899 = vset.pattern.permute.xlu0 0
  %6900 = vperm.xlu0 %6899, %v6749
  %v6901 = vpop.permute.xlu0 %6900
  %6902 = vset.pattern.permute.xlu0 0
  %6903 = vperm.xlu0 %6902, %v6750
  %v6904 = vpop.permute.xlu0 %6903
  %6905 = vset.pattern.permute.xlu0 0
  %6906 = vperm.xlu0 %6905, %v6751
  %v6907 = vpop.permute.xlu0 %6906
  %6908 = vset.pattern.permute.xlu0 0
  %6909 = vperm.xlu0 %6908, %v6752
  %v6910 = vpop.permute.xlu0 %6909
  %6911 = vset.pattern.permute.xlu0 0
  %6912 = vperm.xlu0 %6911, %v6753
  %v6913 = vpop.permute.xlu0 %6912
  %6914 = vset.pattern.permute.xlu0 0
  %6915 = vperm.xlu0 %6914, %v6754
  %v6916 = vpop.permute.xlu0 %6915
  %6917 = vset.pattern.permute.xlu0 0
  %6918 = vperm.xlu0 %6917, %v6755
  %v6919 = vpop.permute.xlu0 %6918
  %6920 = vset.pattern.permute.xlu0 0
  %6921 = vperm.xlu0 %6920, %v6756
  %v6922 = vpop.permute.xlu0 %6921
  %6923 = vset.pattern.permute.xlu0 0
  %6924 = vperm.xlu0 %6923, %v6757
  %v6925 = vpop.permute.xlu0 %6924
  %6926 = vset.pattern.permute.xlu0 0
  %6927 = vperm.xlu0 %6926, %v6758
  %v6928 = vpop.permute.xlu0 %6927
  %6929 = vset.pattern.permute.xlu0 0
  %6930 = vperm.xlu0 %6929, %v6759
  %v6931 = vpop.permute.xlu0 %6930
  %6932 = vset.pattern.permute.xlu0 0
  %6933 = vperm.xlu0 %6932, %v6760
  %v6934 = vpop.permute.xlu0 %6933
  %6935 = vset.pattern.permute.xlu0 0
  %6936 = vperm.xlu0 %6935, %v6761
  %v6937 = vpop.permute.xlu0 %6936
  %6938 = vset.pattern.permute.xlu0 0
  %6939 = vperm.xlu0 %6938, %v6762
  %v6940 = vpop.permute.xlu0 %6939
  %6941 = vset.pattern.permute.xlu0 0
  %6942 = vperm.xlu0 %6941, %v6763
  %v6943 = vpop.permute.xlu0 %6942
  %6944 = vset.pattern.permute.xlu0 0
  %6945 = vperm.xlu0 %6944, %v6764
  %v6946 = vpop.permute.xlu0 %6945
  %6947 = vset.pattern.permute.xlu0 0
  %6948 = vperm.xlu0 %6947, %v6765
  %v6949 = vpop.permute.xlu0 %6948
  %6950 = vset.pattern.permute.xlu0 0
  %6951 = vperm.xlu0 %6950, %v6766
  %v6952 = vpop.permute.xlu0 %6951
  %6953 = vset.pattern.permute.xlu0 0
  %6954 = vperm.xlu0 %6953, %v6767
  %v6955 = vpop.permute.xlu0 %6954
  %6956 = vset.pattern.permute.xlu0 0
  %6957 = vperm.xlu0 %6956, %v6768
  %v6958 = vpop.permute.xlu0 %6957
  %6959 = vset.pattern.permute.xlu0 0
  %6960 = vperm.xlu0 %6959, %v6769
  %v6961 = vpop.permute.xlu0 %6960
  %vm6962 = vcmp.eq.s32.totalorder %v6772, 1
  %vm6963 = vcmp.eq.s32.totalorder %v6775, 1
  %vm6964 = vcmp.eq.s32.totalorder %v6778, 1
  %vm6965 = vcmp.eq.s32.totalorder %v6781, 1
  %vm6966 = vcmp.eq.s32.totalorder %v6784, 1
  %vm6967 = vcmp.eq.s32.totalorder %v6787, 1
  %vm6968 = vcmp.eq.s32.totalorder %v6790, 1
  %vm6969 = vcmp.eq.s32.totalorder %v6793, 1
  %vm6970 = vcmp.eq.s32.totalorder %v6796, 1
  %vm6971 = vcmp.eq.s32.totalorder %v6799, 1
  %vm6972 = vcmp.eq.s32.totalorder %v6802, 1
  %vm6973 = vcmp.eq.s32.totalorder %v6805, 1
  %vm6974 = vcmp.eq.s32.totalorder %v6808, 1
  %vm6975 = vcmp.eq.s32.totalorder %v6811, 1
  %vm6976 = vcmp.eq.s32.totalorder %v6814, 1
  %vm6977 = vcmp.eq.s32.totalorder %v6817, 1
  %vm6978 = vcmp.eq.s32.totalorder %v6820, 1
  %vm6979 = vcmp.eq.s32.totalorder %v6823, 1
  %vm6980 = vcmp.eq.s32.totalorder %v6826, 1
  %vm6981 = vcmp.eq.s32.totalorder %v6829, 1
  %vm6982 = vcmp.eq.s32.totalorder %v6832, 1
  %vm6983 = vcmp.eq.s32.totalorder %v6835, 1
  %vm6984 = vcmp.eq.s32.totalorder %v6838, 1
  %vm6985 = vcmp.eq.s32.totalorder %v6841, 1
  %vm6986 = vcmp.eq.s32.totalorder %v6844, 1
  %vm6987 = vcmp.eq.s32.totalorder %v6847, 1
  %vm6988 = vcmp.eq.s32.totalorder %v6850, 1
  %vm6989 = vcmp.eq.s32.totalorder %v6853, 1
  %vm6990 = vcmp.eq.s32.totalorder %v6856, 1
  %vm6991 = vcmp.eq.s32.totalorder %v6859, 1
  %vm6992 = vcmp.eq.s32.totalorder %v6862, 1
  %vm6993 = vcmp.eq.s32.totalorder %v6865, 1
  %vm6994 = vcmp.eq.s32.totalorder %v6868, 1
  %vm6995 = vcmp.eq.s32.totalorder %v6871, 1
  %vm6996 = vcmp.eq.s32.totalorder %v6874, 1
  %vm6997 = vcmp.eq.s32.totalorder %v6877, 1
  %vm6998 = vcmp.eq.s32.totalorder %v6880, 1
  %vm6999 = vcmp.eq.s32.totalorder %v6883, 1
  %vm7000 = vcmp.eq.s32.totalorder %v6886, 1
  %vm7001 = vcmp.eq.s32.totalorder %v6889, 1
  %vm7002 = vcmp.eq.s32.totalorder %v6892, 1
  %vm7003 = vcmp.eq.s32.totalorder %v6895, 1
  %vm7004 = vcmp.eq.s32.totalorder %v6898, 1
  %vm7005 = vcmp.eq.s32.totalorder %v6901, 1
  %vm7006 = vcmp.eq.s32.totalorder %v6904, 1
  %vm7007 = vcmp.eq.s32.totalorder %v6907, 1
  %vm7008 = vcmp.eq.s32.totalorder %v6910, 1
  %vm7009 = vcmp.eq.s32.totalorder %v6913, 1
  %vm7010 = vcmp.eq.s32.totalorder %v6916, 1
  %vm7011 = vcmp.eq.s32.totalorder %v6919, 1
  %vm7012 = vcmp.eq.s32.totalorder %v6922, 1
  %vm7013 = vcmp.eq.s32.totalorder %v6925, 1
  %vm7014 = vcmp.eq.s32.totalorder %v6928, 1
  %vm7015 = vcmp.eq.s32.totalorder %v6931, 1
  %vm7016 = vcmp.eq.s32.totalorder %v6934, 1
  %vm7017 = vcmp.eq.s32.totalorder %v6937, 1
  %vm7018 = vcmp.eq.s32.totalorder %v6940, 1
  %vm7019 = vcmp.eq.s32.totalorder %v6943, 1
  %vm7020 = vcmp.eq.s32.totalorder %v6946, 1
  %vm7021 = vcmp.eq.s32.totalorder %v6949, 1
  %vm7022 = vcmp.eq.s32.totalorder %v6952, 1
  %vm7023 = vcmp.eq.s32.totalorder %v6955, 1
  %vm7024 = vcmp.eq.s32.totalorder %v6958, 1
  %vm7025 = vcmp.eq.s32.totalorder %v6961, 1
  %v7026 = vsel %vm6962, %v3770, 0.0
  %v7027 = vsel %vm6963, %v3769, 0.0
  %v7028 = vsel %vm6964, %v3768, 0.0
  %v7029 = vsel %vm6965, %v3767, 0.0
  %v7030 = vsel %vm6966, %v3766, 0.0
  %v7031 = vsel %vm6967, %v3765, 0.0
  %v7032 = vsel %vm6968, %v3764, 0.0
  %v7033 = vsel %vm6969, %v3763, 0.0
  %v7034 = vsel %vm6970, %v3762, 0.0
  %v7035 = vsel %vm6971, %v3761, 0.0
  %v7036 = vsel %vm6972, %v3760, 0.0
  %v7037 = vsel %vm6973, %v3759, 0.0
  %v7038 = vsel %vm6974, %v3758, 0.0
  %v7039 = vsel %vm6975, %v3757, 0.0
  %v7040 = vsel %vm6976, %v3756, 0.0
  %v7041 = vsel %vm6977, %v3755, 0.0
  %v7042 = vsel %vm6978, %v3754, 0.0
  %v7043 = vsel %vm6979, %v3753, 0.0
  %v7044 = vsel %vm6980, %v3752, 0.0
  %v7045 = vsel %vm6981, %v3751, 0.0
  %v7046 = vsel %vm6982, %v3750, 0.0
  %v7047 = vsel %vm6983, %v3749, 0.0
  %v7048 = vsel %vm6984, %v3748, 0.0
  %v7049 = vsel %vm6985, %v3747, 0.0
  %v7050 = vsel %vm6986, %v3746, 0.0
  %v7051 = vsel %vm6987, %v3745, 0.0
  %v7052 = vsel %vm6988, %v3744, 0.0
  %v7053 = vsel %vm6989, %v3743, 0.0
  %v7054 = vsel %vm6990, %v3742, 0.0
  %v7055 = vsel %vm6991, %v3741, 0.0
  %v7056 = vsel %vm6992, %v3740, 0.0
  %v7057 = vsel %vm6993, %v3739, 0.0
  %v7058 = vsel %vm6994, %v3738, 0.0
  %v7059 = vsel %vm6995, %v3737, 0.0
  %v7060 = vsel %vm6996, %v3736, 0.0
  %v7061 = vsel %vm6997, %v3735, 0.0
  %v7062 = vsel %vm6998, %v3734, 0.0
  %v7063 = vsel %vm6999, %v3733, 0.0
  %v7064 = vsel %vm7000, %v3732, 0.0
  %v7065 = vsel %vm7001, %v3731, 0.0
  %v7066 = vsel %vm7002, %v3730, 0.0
  %v7067 = vsel %vm7003, %v3729, 0.0
  %v7068 = vsel %vm7004, %v3728, 0.0
  %v7069 = vsel %vm7005, %v3727, 0.0
  %v7070 = vsel %vm7006, %v3726, 0.0
  %v7071 = vsel %vm7007, %v3725, 0.0
  %v7072 = vsel %vm7008, %v3724, 0.0
  %v7073 = vsel %vm7009, %v3723, 0.0
  %v7074 = vsel %vm7010, %v3722, 0.0
  %v7075 = vsel %vm7011, %v3721, 0.0
  %v7076 = vsel %vm7012, %v3720, 0.0
  %v7077 = vsel %vm7013, %v3719, 0.0
  %v7078 = vsel %vm7014, %v3718, 0.0
  %v7079 = vsel %vm7015, %v3717, 0.0
  %v7080 = vsel %vm7016, %v3716, 0.0
  %v7081 = vsel %vm7017, %v3715, 0.0
  %v7082 = vsel %vm7018, %v3714, 0.0
  %v7083 = vsel %vm7019, %v3713, 0.0
  %v7084 = vsel %vm7020, %v3712, 0.0
  %v7085 = vsel %vm7021, %v3711, 0.0
  %v7086 = vsel %vm7022, %v3710, 0.0
  %v7087 = vsel %vm7023, %v3709, 0.0
  %v7088 = vsel %vm7024, %v3708, 0.0
  %v7089 = vsel %vm7025, %v3771, 0.0
  %s7090 = scalar_lea.vmem %s5, 640
  %v7091 = vld [vmem:[%s7090] sm:$0xff]
  %v7092 = vld [vmem:[%s7090 + $0x8] sm:$0xff]
  %v7093 = vld [vmem:[%s7090 + $0x10] sm:$0xff]
  %v7094 = vld [vmem:[%s7090 + $0x18] sm:$0xff]
  %v7095 = vld [vmem:[%s7090 + $0x20] sm:$0xff]
  %v7096 = vld [vmem:[%s7090 + $0x28] sm:$0xff]
  %v7097 = vld [vmem:[%s7090 + $0x30] sm:$0xff]
  %v7098 = vld [vmem:[%s7090 + $0x38] sm:$0xff]
  %v7099 = vld [vmem:[%s7090 + $0x40] sm:$0xff]
  %v7100 = vld [vmem:[%s7090 + $0x48] sm:$0xff]
  %v7101 = vld [vmem:[%s7090 + $0x50] sm:$0xff]
  %v7102 = vld [vmem:[%s7090 + $0x58] sm:$0xff]
  %v7103 = vld [vmem:[%s7090 + $0x60] sm:$0xff]
  %v7104 = vld [vmem:[%s7090 + $0x68] sm:$0xff]
  %v7105 = vld [vmem:[%s7090 + $0x70] sm:$0xff]
  %v7106 = vld [vmem:[%s7090 + $0x78] sm:$0xff]
  %7107 = vmatprep.subr.mxu0 0.0
  %7108 = vmatpush1.msra.mxu0 %v7091
  %7109 = vmatprep.subr.mxu0 0.0
  %7110 = vmatpush1.msra.mxu0 %v7092
  %7111 = vmatprep.subr.mxu0 0.0
  %7112 = vmatpush1.msra.mxu0 %v7093
  %7113 = vmatprep.subr.mxu0 0.0
  %7114 = vmatpush1.msra.mxu0 %v7094
  %7115 = vmatprep.subr.mxu0 0.0
  %7116 = vmatpush1.msra.mxu0 %v7095
  %7117 = vmatprep.subr.mxu0 0.0
  %7118 = vmatpush1.msra.mxu0 %v7096
  %7119 = vmatprep.subr.mxu0 0.0
  %7120 = vmatpush1.msra.mxu0 %v7097
  %7121 = vmatprep.subr.mxu0 0.0
  %7122 = vmatpush1.msra.mxu0 %v7098
  %7123 = vmatprep.subr.mxu0 0.0
  %7124 = vmatpush1.msra.mxu0 %v7099
  %7125 = vmatprep.subr.mxu0 0.0
  %7126 = vmatpush1.msra.mxu0 %v7100
  %7127 = vmatprep.subr.mxu0 0.0
  %7128 = vmatpush1.msra.mxu0 %v7101
  %7129 = vmatprep.subr.mxu0 0.0
  %7130 = vmatpush1.msra.mxu0 %v7102
  %7131 = vmatprep.subr.mxu0 0.0
  %7132 = vmatpush1.msra.mxu0 %v7103
  %7133 = vmatprep.subr.mxu0 0.0
  %7134 = vmatpush1.msra.mxu0 %v7104
  %7135 = vmatprep.subr.mxu0 0.0
  %7136 = vmatpush1.msra.mxu0 %v7105
  %7137 = vmatprep.subr.mxu0 0.0
  %7138 = vmatpush1.msra.mxu0 %v7106
  %7139 = vmatprep.subr.mxu0 0.0
  %7140 = vmatpush1.msra.mxu0 0.0
  %7141 = vmatprep.subr.mxu0 0.0
  %7142 = vmatpush1.msra.mxu0 0.0
  %7143 = vmatprep.subr.mxu0 0.0
  %7144 = vmatpush1.msra.mxu0 0.0
  %7145 = vmatprep.subr.mxu0 0.0
  %7146 = vmatpush1.msra.mxu0 0.0
  %7147 = vmatprep.subr.mxu0 0.0
  %7148 = vmatpush1.msra.mxu0 0.0
  %7149 = vmatprep.subr.mxu0 0.0
  %7150 = vmatpush1.msra.mxu0 0.0
  %7151 = vmatprep.subr.mxu0 0.0
  %7152 = vmatpush1.msra.mxu0 0.0
  %7153 = vmatprep.subr.mxu0 0.0
  %7154 = vmatpush1.msra.mxu0 0.0
  %7155 = vmatprep.subr.mxu0 0.0
  %7156 = vmatpush1.msra.mxu0 0.0
  %7157 = vmatprep.subr.mxu0 0.0
  %7158 = vmatpush1.msra.mxu0 0.0
  %7159 = vmatprep.subr.mxu0 0.0
  %7160 = vmatpush1.msra.mxu0 0.0
  %7161 = vmatprep.subr.mxu0 0.0
  %7162 = vmatpush1.msra.mxu0 0.0
  %7163 = vmatprep.subr.mxu0 0.0
  %7164 = vmatpush1.msra.mxu0 0.0
  %7165 = vmatprep.subr.mxu0 0.0
  %7166 = vmatpush1.msra.mxu0 0.0
  %7167 = vmatprep.subr.mxu0 0.0
  %7168 = vmatpush1.msra.mxu0 0.0
  %7169 = vmatprep.subr.mxu0 0.0
  %7170 = vmatpush1.msra.mxu0 0.0
  %7171 = vmatprep.mubr.f32.mxu0 0.0
  %7172 = vmatmul.mubr.f32.gmra.mrb[0].mxu0 %v7026
  %v7173 = vpop.f32.mrb[0].mxu0
  %v7174 = vadd.f32 0.0, %v7173
  %v7175 = vpop.f32.mrb[0].mxu0
  %7176 = vmatprep.mubr.f32.mxu0 0.0
  %7177 = vmatmul.mubr.f32.gmra.mrb[0].mxu0 %v7027
  %v7178 = vpop.f32.mrb[0].mxu0
  %v7179 = vadd.f32 0.0, %v7178
  %v7180 = vpop.f32.mrb[0].mxu0
  %7181 = vmatprep.mubr.f32.mxu0 0.0
  %7182 = vmatmul.mubr.f32.gmra.mrb[0].mxu0 %v7028
  %v7183 = vpop.f32.mrb[0].mxu0
  %v7184 = vadd.f32 0.0, %v7183
  %v7185 = vpop.f32.mrb[0].mxu0
  %7186 = vmatprep.mubr.f32.mxu0 0.0
  %7187 = vmatmul.mubr.f32.gmra.mrb[0].mxu0 %v7029
  %v7188 = vpop.f32.mrb[0].mxu0
  %v7189 = vadd.f32 0.0, %v7188
  %v7190 = vpop.f32.mrb[0].mxu0
  %7191 = vmatprep.mubr.f32.mxu0 0.0
  %7192 = vmatmul.mubr.f32.gmra.mrb[0].mxu0 %v7030
  %v7193 = vpop.f32.mrb[0].mxu0
  %v7194 = vadd.f32 0.0, %v7193
  %v7195 = vpop.f32.mrb[0].mxu0
  %7196 = vmatprep.mubr.f32.mxu0 0.0
  %7197 = vmatmul.mubr.f32.gmra.mrb[0].mxu0 %v7031
  %v7198 = vpop.f32.mrb[0].mxu0
  %v7199 = vadd.f32 0.0, %v7198
  %v7200 = vpop.f32.mrb[0].mxu0
  %7201 = vmatprep.mubr.f32.mxu0 0.0
  %7202 = vmatmul.mubr.f32.gmra.mrb[0].mxu0 %v7032
  %v7203 = vpop.f32.mrb[0].mxu0
  %v7204 = vadd.f32 0.0, %v7203
  %v7205 = vpop.f32.mrb[0].mxu0
  %7206 = vmatprep.mubr.f32.mxu0 0.0
  %7207 = vmatmul.mubr.f32.gmra.mrb[0].mxu0 %v7033
  %v7208 = vpop.f32.mrb[0].mxu0
  %v7209 = vadd.f32 0.0, %v7208
  %v7210 = vpop.f32.mrb[0].mxu0
  %7211 = vmatprep.mubr.f32.mxu0 0.0
  %7212 = vmatmul.mubr.f32.gmra.mrb[0].mxu0 %v7034
  %v7213 = vpop.f32.mrb[0].mxu0
  %v7214 = vadd.f32 0.0, %v7213
  %v7215 = vpop.f32.mrb[0].mxu0
  %7216 = vmatprep.mubr.f32.mxu0 0.0
  %7217 = vmatmul.mubr.f32.gmra.mrb[0].mxu0 %v7035
  %v7218 = vpop.f32.mrb[0].mxu0
  %v7219 = vadd.f32 0.0, %v7218
  %v7220 = vpop.f32.mrb[0].mxu0
  %7221 = vmatprep.mubr.f32.mxu0 0.0
  %7222 = vmatmul.mubr.f32.gmra.mrb[0].mxu0 %v7036
  %v7223 = vpop.f32.mrb[0].mxu0
  %v7224 = vadd.f32 0.0, %v7223
  %v7225 = vpop.f32.mrb[0].mxu0
  %7226 = vmatprep.mubr.f32.mxu0 0.0
  %7227 = vmatmul.mubr.f32.gmra.mrb[0].mxu0 %v7037
  %v7228 = vpop.f32.mrb[0].mxu0
  %v7229 = vadd.f32 0.0, %v7228
  %v7230 = vpop.f32.mrb[0].mxu0
  %7231 = vmatprep.mubr.f32.mxu0 0.0
  %7232 = vmatmul.mubr.f32.gmra.mrb[0].mxu0 %v7038
  %v7233 = vpop.f32.mrb[0].mxu0
  %v7234 = vadd.f32 0.0, %v7233
  %v7235 = vpop.f32.mrb[0].mxu0
  %7236 = vmatprep.mubr.f32.mxu0 0.0
  %7237 = vmatmul.mubr.f32.gmra.mrb[0].mxu0 %v7039
  %v7238 = vpop.f32.mrb[0].mxu0
  %v7239 = vadd.f32 0.0, %v7238
  %v7240 = vpop.f32.mrb[0].mxu0
  %7241 = vmatprep.mubr.f32.mxu0 0.0
  %7242 = vmatmul.mubr.f32.gmra.mrb[0].mxu0 %v7040
  %v7243 = vpop.f32.mrb[0].mxu0
  %v7244 = vadd.f32 0.0, %v7243
  %v7245 = vpop.f32.mrb[0].mxu0
  %7246 = vmatprep.mubr.f32.mxu0 0.0
  %7247 = vmatmul.mubr.f32.gmra.mrb[0].mxu0 %v7041
  %v7248 = vpop.f32.mrb[0].mxu0
  %v7249 = vadd.f32 0.0, %v7248
  %v7250 = vpop.f32.mrb[0].mxu0
  %7251 = vmatprep.mubr.f32.mxu0 0.0
  %7252 = vmatmul.mubr.f32.gmra.mrb[0].mxu0 %v7042
  %v7253 = vpop.f32.mrb[0].mxu0
  %v7254 = vadd.f32 0.0, %v7253
  %v7255 = vpop.f32.mrb[0].mxu0
  %7256 = vmatprep.mubr.f32.mxu0 0.0
  %7257 = vmatmul.mubr.f32.gmra.mrb[0].mxu0 %v7043
  %v7258 = vpop.f32.mrb[0].mxu0
  %v7259 = vadd.f32 0.0, %v7258
  %v7260 = vpop.f32.mrb[0].mxu0
  %7261 = vmatprep.mubr.f32.mxu0 0.0
  %7262 = vmatmul.mubr.f32.gmra.mrb[0].mxu0 %v7044
  %v7263 = vpop.f32.mrb[0].mxu0
  %v7264 = vadd.f32 0.0, %v7263
  %v7265 = vpop.f32.mrb[0].mxu0
  %7266 = vmatprep.mubr.f32.mxu0 0.0
  %7267 = vmatmul.mubr.f32.gmra.mrb[0].mxu0 %v7045
  %v7268 = vpop.f32.mrb[0].mxu0
  %v7269 = vadd.f32 0.0, %v7268
  %v7270 = vpop.f32.mrb[0].mxu0
  %7271 = vmatprep.mubr.f32.mxu0 0.0
  %7272 = vmatmul.mubr.f32.gmra.mrb[0].mxu0 %v7046
  %v7273 = vpop.f32.mrb[0].mxu0
  %v7274 = vadd.f32 0.0, %v7273
  %v7275 = vpop.f32.mrb[0].mxu0
  %7276 = vmatprep.mubr.f32.mxu0 0.0
  %7277 = vmatmul.mubr.f32.gmra.mrb[0].mxu0 %v7047
  %v7278 = vpop.f32.mrb[0].mxu0
  %v7279 = vadd.f32 0.0, %v7278
  %v7280 = vpop.f32.mrb[0].mxu0
  %7281 = vmatprep.mubr.f32.mxu0 0.0
  %7282 = vmatmul.mubr.f32.gmra.mrb[0].mxu0 %v7048
  %v7283 = vpop.f32.mrb[0].mxu0
  %v7284 = vadd.f32 0.0, %v7283
  %v7285 = vpop.f32.mrb[0].mxu0
  %7286 = vmatprep.mubr.f32.mxu0 0.0
  %7287 = vmatmul.mubr.f32.gmra.mrb[0].mxu0 %v7049
  %v7288 = vpop.f32.mrb[0].mxu0
  %v7289 = vadd.f32 0.0, %v7288
  %v7290 = vpop.f32.mrb[0].mxu0
  %7291 = vmatprep.mubr.f32.mxu0 0.0
  %7292 = vmatmul.mubr.f32.gmra.mrb[0].mxu0 %v7050
  %v7293 = vpop.f32.mrb[0].mxu0
  %v7294 = vadd.f32 0.0, %v7293
  %v7295 = vpop.f32.mrb[0].mxu0
  %7296 = vmatprep.mubr.f32.mxu0 0.0
  %7297 = vmatmul.mubr.f32.gmra.mrb[0].mxu0 %v7051
  %v7298 = vpop.f32.mrb[0].mxu0
  %v7299 = vadd.f32 0.0, %v7298
  %v7300 = vpop.f32.mrb[0].mxu0
  %7301 = vmatprep.mubr.f32.mxu0 0.0
  %7302 = vmatmul.mubr.f32.gmra.mrb[0].mxu0 %v7052
  %v7303 = vpop.f32.mrb[0].mxu0
  %v7304 = vadd.f32 0.0, %v7303
  %v7305 = vpop.f32.mrb[0].mxu0
  %7306 = vmatprep.mubr.f32.mxu0 0.0
  %7307 = vmatmul.mubr.f32.gmra.mrb[0].mxu0 %v7053
  %v7308 = vpop.f32.mrb[0].mxu0
  %v7309 = vadd.f32 0.0, %v7308
  %v7310 = vpop.f32.mrb[0].mxu0
  %7311 = vmatprep.mubr.f32.mxu0 0.0
  %7312 = vmatmul.mubr.f32.gmra.mrb[0].mxu0 %v7054
  %v7313 = vpop.f32.mrb[0].mxu0
  %v7314 = vadd.f32 0.0, %v7313
  %v7315 = vpop.f32.mrb[0].mxu0
  %7316 = vmatprep.mubr.f32.mxu0 0.0
  %7317 = vmatmul.mubr.f32.gmra.mrb[0].mxu0 %v7055
  %v7318 = vpop.f32.mrb[0].mxu0
  %v7319 = vadd.f32 0.0, %v7318
  %v7320 = vpop.f32.mrb[0].mxu0
  %7321 = vmatprep.mubr.f32.mxu0 0.0
  %7322 = vmatmul.mubr.f32.gmra.mrb[0].mxu0 %v7056
  %v7323 = vpop.f32.mrb[0].mxu0
  %v7324 = vadd.f32 0.0, %v7323
  %v7325 = vpop.f32.mrb[0].mxu0
  %7326 = vmatprep.mubr.f32.mxu0 0.0
  %7327 = vmatmul.mubr.f32.gmra.mrb[0].mxu0 %v7057
  %v7328 = vpop.f32.mrb[0].mxu0
  %v7329 = vadd.f32 0.0, %v7328
  %v7330 = vpop.f32.mrb[0].mxu0
  %7331 = vmatprep.mubr.f32.mxu0 0.0
  %7332 = vmatmul.mubr.f32.gmra.mrb[0].mxu0 %v7058
  %v7333 = vpop.f32.mrb[0].mxu0
  %v7334 = vadd.f32 0.0, %v7333
  %v7335 = vpop.f32.mrb[0].mxu0
  %7336 = vmatprep.mubr.f32.mxu0 0.0
  %7337 = vmatmul.mubr.f32.gmra.mrb[0].mxu0 %v7059
  %v7338 = vpop.f32.mrb[0].mxu0
  %v7339 = vadd.f32 0.0, %v7338
  %v7340 = vpop.f32.mrb[0].mxu0
  %7341 = vmatprep.mubr.f32.mxu0 0.0
  %7342 = vmatmul.mubr.f32.gmra.mrb[0].mxu0 %v7060
  %v7343 = vpop.f32.mrb[0].mxu0
  %v7344 = vadd.f32 0.0, %v7343
  %v7345 = vpop.f32.mrb[0].mxu0
  %7346 = vmatprep.mubr.f32.mxu0 0.0
  %7347 = vmatmul.mubr.f32.gmra.mrb[0].mxu0 %v7061
  %v7348 = vpop.f32.mrb[0].mxu0
  %v7349 = vadd.f32 0.0, %v7348
  %v7350 = vpop.f32.mrb[0].mxu0
  %7351 = vmatprep.mubr.f32.mxu0 0.0
  %7352 = vmatmul.mubr.f32.gmra.mrb[0].mxu0 %v7062
  %v7353 = vpop.f32.mrb[0].mxu0
  %v7354 = vadd.f32 0.0, %v7353
  %v7355 = vpop.f32.mrb[0].mxu0
  %7356 = vmatprep.mubr.f32.mxu0 0.0
  %7357 = vmatmul.mubr.f32.gmra.mrb[0].mxu0 %v7063
  %v7358 = vpop.f32.mrb[0].mxu0
  %v7359 = vadd.f32 0.0, %v7358
  %v7360 = vpop.f32.mrb[0].mxu0
  %7361 = vmatprep.mubr.f32.mxu0 0.0
  %7362 = vmatmul.mubr.f32.gmra.mrb[0].mxu0 %v7064
  %v7363 = vpop.f32.mrb[0].mxu0
  %v7364 = vadd.f32 0.0, %v7363
  %v7365 = vpop.f32.mrb[0].mxu0
  %7366 = vmatprep.mubr.f32.mxu0 0.0
  %7367 = vmatmul.mubr.f32.gmra.mrb[0].mxu0 %v7065
  %v7368 = vpop.f32.mrb[0].mxu0
  %v7369 = vadd.f32 0.0, %v7368
  %v7370 = vpop.f32.mrb[0].mxu0
  %7371 = vmatprep.mubr.f32.mxu0 0.0
  %7372 = vmatmul.mubr.f32.gmra.mrb[0].mxu0 %v7066
  %v7373 = vpop.f32.mrb[0].mxu0
  %v7374 = vadd.f32 0.0, %v7373
  %v7375 = vpop.f32.mrb[0].mxu0
  %7376 = vmatprep.mubr.f32.mxu0 0.0
  %7377 = vmatmul.mubr.f32.gmra.mrb[0].mxu0 %v7067
  %v7378 = vpop.f32.mrb[0].mxu0
  %v7379 = vadd.f32 0.0, %v7378
  %v7380 = vpop.f32.mrb[0].mxu0
  %7381 = vmatprep.mubr.f32.mxu0 0.0
  %7382 = vmatmul.mubr.f32.gmra.mrb[0].mxu0 %v7068
  %v7383 = vpop.f32.mrb[0].mxu0
  %v7384 = vadd.f32 0.0, %v7383
  %v7385 = vpop.f32.mrb[0].mxu0
  %7386 = vmatprep.mubr.f32.mxu0 0.0
  %7387 = vmatmul.mubr.f32.gmra.mrb[0].mxu0 %v7069
  %v7388 = vpop.f32.mrb[0].mxu0
  %v7389 = vadd.f32 0.0, %v7388
  %v7390 = vpop.f32.mrb[0].mxu0
  %7391 = vmatprep.mubr.f32.mxu0 0.0
  %7392 = vmatmul.mubr.f32.gmra.mrb[0].mxu0 %v7070
  %v7393 = vpop.f32.mrb[0].mxu0
  %v7394 = vadd.f32 0.0, %v7393
  %v7395 = vpop.f32.mrb[0].mxu0
  %7396 = vmatprep.mubr.f32.mxu0 0.0
  %7397 = vmatmul.mubr.f32.gmra.mrb[0].mxu0 %v7071
  %v7398 = vpop.f32.mrb[0].mxu0
  %v7399 = vadd.f32 0.0, %v7398
  %v7400 = vpop.f32.mrb[0].mxu0
  %7401 = vmatprep.mubr.f32.mxu0 0.0
  %7402 = vmatmul.mubr.f32.gmra.mrb[0].mxu0 %v7072
  %v7403 = vpop.f32.mrb[0].mxu0
  %v7404 = vadd.f32 0.0, %v7403
  %v7405 = vpop.f32.mrb[0].mxu0
  %7406 = vmatprep.mubr.f32.mxu0 0.0
  %7407 = vmatmul.mubr.f32.gmra.mrb[0].mxu0 %v7073
  %v7408 = vpop.f32.mrb[0].mxu0
  %v7409 = vadd.f32 0.0, %v7408
  %v7410 = vpop.f32.mrb[0].mxu0
  %7411 = vmatprep.mubr.f32.mxu0 0.0
  %7412 = vmatmul.mubr.f32.gmra.mrb[0].mxu0 %v7074
  %v7413 = vpop.f32.mrb[0].mxu0
  %v7414 = vadd.f32 0.0, %v7413
  %v7415 = vpop.f32.mrb[0].mxu0
  %7416 = vmatprep.mubr.f32.mxu0 0.0
  %7417 = vmatmul.mubr.f32.gmra.mrb[0].mxu0 %v7075
  %v7418 = vpop.f32.mrb[0].mxu0
  %v7419 = vadd.f32 0.0, %v7418
  %v7420 = vpop.f32.mrb[0].mxu0
  %7421 = vmatprep.mubr.f32.mxu0 0.0
  %7422 = vmatmul.mubr.f32.gmra.mrb[0].mxu0 %v7076
  %v7423 = vpop.f32.mrb[0].mxu0
  %v7424 = vadd.f32 0.0, %v7423
  %v7425 = vpop.f32.mrb[0].mxu0
  %7426 = vmatprep.mubr.f32.mxu0 0.0
  %7427 = vmatmul.mubr.f32.gmra.mrb[0].mxu0 %v7077
  %v7428 = vpop.f32.mrb[0].mxu0
  %v7429 = vadd.f32 0.0, %v7428
  %v7430 = vpop.f32.mrb[0].mxu0
  %7431 = vmatprep.mubr.f32.mxu0 0.0
  %7432 = vmatmul.mubr.f32.gmra.mrb[0].mxu0 %v7078
  %v7433 = vpop.f32.mrb[0].mxu0
  %v7434 = vadd.f32 0.0, %v7433
  %v7435 = vpop.f32.mrb[0].mxu0
  %7436 = vmatprep.mubr.f32.mxu0 0.0
  %7437 = vmatmul.mubr.f32.gmra.mrb[0].mxu0 %v7079
  %v7438 = vpop.f32.mrb[0].mxu0
  %v7439 = vadd.f32 0.0, %v7438
  %v7440 = vpop.f32.mrb[0].mxu0
  %7441 = vmatprep.mubr.f32.mxu0 0.0
  %7442 = vmatmul.mubr.f32.gmra.mrb[0].mxu0 %v7080
  %v7443 = vpop.f32.mrb[0].mxu0
  %v7444 = vadd.f32 0.0, %v7443
  %v7445 = vpop.f32.mrb[0].mxu0
  %7446 = vmatprep.mubr.f32.mxu0 0.0
  %7447 = vmatmul.mubr.f32.gmra.mrb[0].mxu0 %v7081
  %v7448 = vpop.f32.mrb[0].mxu0
  %v7449 = vadd.f32 0.0, %v7448
  %v7450 = vpop.f32.mrb[0].mxu0
  %7451 = vmatprep.mubr.f32.mxu0 0.0
  %7452 = vmatmul.mubr.f32.gmra.mrb[0].mxu0 %v7082
  %v7453 = vpop.f32.mrb[0].mxu0
  %v7454 = vadd.f32 0.0, %v7453
  %v7455 = vpop.f32.mrb[0].mxu0
  %7456 = vmatprep.mubr.f32.mxu0 0.0
  %7457 = vmatmul.mubr.f32.gmra.mrb[0].mxu0 %v7083
  %v7458 = vpop.f32.mrb[0].mxu0
  %v7459 = vadd.f32 0.0, %v7458
  %v7460 = vpop.f32.mrb[0].mxu0
  %7461 = vmatprep.mubr.f32.mxu0 0.0
  %7462 = vmatmul.mubr.f32.gmra.mrb[0].mxu0 %v7084
  %v7463 = vpop.f32.mrb[0].mxu0
  %v7464 = vadd.f32 0.0, %v7463
  %v7465 = vpop.f32.mrb[0].mxu0
  %7466 = vmatprep.mubr.f32.mxu0 0.0
  %7467 = vmatmul.mubr.f32.gmra.mrb[0].mxu0 %v7085
  %v7468 = vpop.f32.mrb[0].mxu0
  %v7469 = vadd.f32 0.0, %v7468
  %v7470 = vpop.f32.mrb[0].mxu0
  %7471 = vmatprep.mubr.f32.mxu0 0.0
  %7472 = vmatmul.mubr.f32.gmra.mrb[0].mxu0 %v7086
  %v7473 = vpop.f32.mrb[0].mxu0
  %v7474 = vadd.f32 0.0, %v7473
  %v7475 = vpop.f32.mrb[0].mxu0
  %7476 = vmatprep.mubr.f32.mxu0 0.0
  %7477 = vmatmul.mubr.f32.gmra.mrb[0].mxu0 %v7087
  %v7478 = vpop.f32.mrb[0].mxu0
  %v7479 = vadd.f32 0.0, %v7478
  %v7480 = vpop.f32.mrb[0].mxu0
  %7481 = vmatprep.mubr.f32.mxu0 0.0
  %7482 = vmatmul.mubr.f32.gmra.mrb[0].mxu0 %v7088
  %v7483 = vpop.f32.mrb[0].mxu0
  %v7484 = vadd.f32 0.0, %v7483
  %v7485 = vpop.f32.mrb[0].mxu0
  %7486 = vmatprep.mubr.f32.mxu0 0.0
  %7487 = vmatmul.mubr.f32.gmra.mrb[0].mxu0 %v7089
  %v7488 = vpop.f32.mrb[0].mxu0
  %v7489 = vadd.f32 0.0, %v7488
  %v7490 = vpop.f32.mrb[0].mxu0
  %7491 = vdwg.mxu0
  %v7492 = vadd.f32 %v6514, %v7174
  %v7493 = vadd.f32 %v6515, %v7179
  %v7494 = vadd.f32 %v6516, %v7184
  %v7495 = vadd.f32 %v6517, %v7189
  %v7496 = vadd.f32 %v6518, %v7194
  %v7497 = vadd.f32 %v6519, %v7199
  %v7498 = vadd.f32 %v6520, %v7204
  %v7499 = vadd.f32 %v6521, %v7209
  %v7500 = vadd.f32 %v6522, %v7214
  %v7501 = vadd.f32 %v6523, %v7219
  %v7502 = vadd.f32 %v6524, %v7224
  %v7503 = vadd.f32 %v6525, %v7229
  %v7504 = vadd.f32 %v6526, %v7234
  %v7505 = vadd.f32 %v6527, %v7239
  %v7506 = vadd.f32 %v6528, %v7244
  %v7507 = vadd.f32 %v6529, %v7249
  %v7508 = vadd.f32 %v6530, %v7254
  %v7509 = vadd.f32 %v6531, %v7259
  %v7510 = vadd.f32 %v6532, %v7264
  %v7511 = vadd.f32 %v6533, %v7269
  %v7512 = vadd.f32 %v6534, %v7274
  %v7513 = vadd.f32 %v6535, %v7279
  %v7514 = vadd.f32 %v6536, %v7284
  %v7515 = vadd.f32 %v6537, %v7289
  %v7516 = vadd.f32 %v6538, %v7294
  %v7517 = vadd.f32 %v6539, %v7299
  %v7518 = vadd.f32 %v6540, %v7304
  %v7519 = vadd.f32 %v6541, %v7309
  %v7520 = vadd.f32 %v6542, %v7314
  %v7521 = vadd.f32 %v6543, %v7319
  %v7522 = vadd.f32 %v6544, %v7324
  %v7523 = vadd.f32 %v6545, %v7329
  %v7524 = vadd.f32 %v6546, %v7334
  %v7525 = vadd.f32 %v6547, %v7339
  %v7526 = vadd.f32 %v6548, %v7344
  %v7527 = vadd.f32 %v6549, %v7349
  %v7528 = vadd.f32 %v6550, %v7354
  %v7529 = vadd.f32 %v6551, %v7359
  %v7530 = vadd.f32 %v6552, %v7364
  %v7531 = vadd.f32 %v6553, %v7369
  %v7532 = vadd.f32 %v6554, %v7374
  %v7533 = vadd.f32 %v6555, %v7379
  %v7534 = vadd.f32 %v6556, %v7384
  %v7535 = vadd.f32 %v6557, %v7389
  %v7536 = vadd.f32 %v6558, %v7394
  %v7537 = vadd.f32 %v6559, %v7399
  %v7538 = vadd.f32 %v6560, %v7404
  %v7539 = vadd.f32 %v6561, %v7409
  %v7540 = vadd.f32 %v6562, %v7414
  %v7541 = vadd.f32 %v6563, %v7419
  %v7542 = vadd.f32 %v6564, %v7424
  %v7543 = vadd.f32 %v6565, %v7429
  %v7544 = vadd.f32 %v6566, %v7434
  %v7545 = vadd.f32 %v6567, %v7439
  %v7546 = vadd.f32 %v6568, %v7444
  %v7547 = vadd.f32 %v6569, %v7449
  %v7548 = vadd.f32 %v6570, %v7454
  %v7549 = vadd.f32 %v6571, %v7459
  %v7550 = vadd.f32 %v6572, %v7464
  %v7551 = vadd.f32 %v6573, %v7469
  %v7552 = vadd.f32 %v6574, %v7474
  %v7553 = vadd.f32 %v6575, %v7479
  %v7554 = vadd.f32 %v6576, %v7484
  %v7555 = vadd.f32 %v6577, %v7489
  %v7556 = vadd.s32 %v981, 1
  %v7557 = vadd.s32 %v982, 1
  %v7558 = vadd.s32 %v983, 1
  %v7559 = vadd.s32 %v984, 1
  %v7560 = vadd.s32 %v985, 1
  %v7561 = vadd.s32 %v986, 1
  %v7562 = vadd.s32 %v987, 1
  %v7563 = vadd.s32 %v988, 1
  %v7564 = vadd.s32 %v989, 1
  %v7565 = vadd.s32 %v990, 1
  %v7566 = vadd.s32 %v991, 1
  %v7567 = vadd.s32 %v992, 1
  %v7568 = vadd.s32 %v993, 1
  %v7569 = vadd.s32 %v994, 1
  %v7570 = vadd.s32 %v995, 1
  %v7571 = vadd.s32 %v996, 1
  %v7572 = vadd.s32 %v997, 1
  %v7573 = vadd.s32 %v998, 1
  %v7574 = vadd.s32 %v999, 1
  %v7575 = vadd.s32 %v1000, 1
  %v7576 = vadd.s32 %v1001, 1
  %v7577 = vadd.s32 %v1002, 1
  %v7578 = vadd.s32 %v1003, 1
  %v7579 = vadd.s32 %v1004, 1
  %v7580 = vadd.s32 %v1005, 1
  %v7581 = vadd.s32 %v1006, 1
  %v7582 = vadd.s32 %v1007, 1
  %v7583 = vadd.s32 %v1008, 1
  %v7584 = vadd.s32 %v1009, 1
  %v7585 = vadd.s32 %v1010, 1
  %v7586 = vadd.s32 %v1011, 1
  %v7587 = vadd.s32 %v1012, 1
  %v7588 = vadd.s32 %v1013, 1
  %v7589 = vadd.s32 %v1014, 1
  %v7590 = vadd.s32 %v1015, 1
  %v7591 = vadd.s32 %v1016, 1
  %v7592 = vadd.s32 %v1017, 1
  %v7593 = vadd.s32 %v1018, 1
  %v7594 = vadd.s32 %v1019, 1
  %v7595 = vadd.s32 %v1020, 1
  %v7596 = vadd.s32 %v1021, 1
  %v7597 = vadd.s32 %v1022, 1
  %v7598 = vadd.s32 %v1023, 1
  %v7599 = vadd.s32 %v1024, 1
  %v7600 = vadd.s32 %v1025, 1
  %v7601 = vadd.s32 %v1026, 1
  %v7602 = vadd.s32 %v1027, 1
  %v7603 = vadd.s32 %v1028, 1
  %v7604 = vadd.s32 %v1029, 1
  %v7605 = vadd.s32 %v1030, 1
  %v7606 = vadd.s32 %v1031, 1
  %v7607 = vadd.s32 %v1032, 1
  %v7608 = vadd.s32 %v1033, 1
  %v7609 = vadd.s32 %v1034, 1
  %v7610 = vadd.s32 %v1035, 1
  %v7611 = vadd.s32 %v1036, 1
  %v7612 = vadd.s32 %v1037, 1
  %v7613 = vadd.s32 %v1038, 1
  %v7614 = vadd.s32 %v1039, 1
  %v7615 = vadd.s32 %v1040, 1
  %v7616 = vadd.s32 %v1041, 1
  %v7617 = vadd.s32 %v1042, 1
  %v7618 = vadd.s32 %v1043, 1
  %v7619 = vadd.s32 %v1044, 1
  %vm7620 = vcmp.ge.s32.totalorder %v7556, 0
  %vm7621 = vcmp.ge.s32.totalorder %v7557, 0
  %vm7622 = vcmp.ge.s32.totalorder %v7558, 0
  %vm7623 = vcmp.ge.s32.totalorder %v7559, 0
  %vm7624 = vcmp.ge.s32.totalorder %v7560, 0
  %vm7625 = vcmp.ge.s32.totalorder %v7561, 0
  %vm7626 = vcmp.ge.s32.totalorder %v7562, 0
  %vm7627 = vcmp.ge.s32.totalorder %v7563, 0
  %vm7628 = vcmp.ge.s32.totalorder %v7564, 0
  %vm7629 = vcmp.ge.s32.totalorder %v7565, 0
  %vm7630 = vcmp.ge.s32.totalorder %v7566, 0
  %vm7631 = vcmp.ge.s32.totalorder %v7567, 0
  %vm7632 = vcmp.ge.s32.totalorder %v7568, 0
  %vm7633 = vcmp.ge.s32.totalorder %v7569, 0
  %vm7634 = vcmp.ge.s32.totalorder %v7570, 0
  %vm7635 = vcmp.ge.s32.totalorder %v7571, 0
  %vm7636 = vcmp.ge.s32.totalorder %v7572, 0
  %vm7637 = vcmp.ge.s32.totalorder %v7573, 0
  %vm7638 = vcmp.ge.s32.totalorder %v7574, 0
  %vm7639 = vcmp.ge.s32.totalorder %v7575, 0
  %vm7640 = vcmp.ge.s32.totalorder %v7576, 0
  %vm7641 = vcmp.ge.s32.totalorder %v7577, 0
  %vm7642 = vcmp.ge.s32.totalorder %v7578, 0
  %vm7643 = vcmp.ge.s32.totalorder %v7579, 0
  %vm7644 = vcmp.ge.s32.totalorder %v7580, 0
  %vm7645 = vcmp.ge.s32.totalorder %v7581, 0
  %vm7646 = vcmp.ge.s32.totalorder %v7582, 0
  %vm7647 = vcmp.ge.s32.totalorder %v7583, 0
  %vm7648 = vcmp.ge.s32.totalorder %v7584, 0
  %vm7649 = vcmp.ge.s32.totalorder %v7585, 0
  %vm7650 = vcmp.ge.s32.totalorder %v7586, 0
  %vm7651 = vcmp.ge.s32.totalorder %v7587, 0
  %vm7652 = vcmp.ge.s32.totalorder %v7588, 0
  %vm7653 = vcmp.ge.s32.totalorder %v7589, 0
  %vm7654 = vcmp.ge.s32.totalorder %v7590, 0
  %vm7655 = vcmp.ge.s32.totalorder %v7591, 0
  %vm7656 = vcmp.ge.s32.totalorder %v7592, 0
  %vm7657 = vcmp.ge.s32.totalorder %v7593, 0
  %vm7658 = vcmp.ge.s32.totalorder %v7594, 0
  %vm7659 = vcmp.ge.s32.totalorder %v7595, 0
  %vm7660 = vcmp.ge.s32.totalorder %v7596, 0
  %vm7661 = vcmp.ge.s32.totalorder %v7597, 0
  %vm7662 = vcmp.ge.s32.totalorder %v7598, 0
  %vm7663 = vcmp.ge.s32.totalorder %v7599, 0
  %vm7664 = vcmp.ge.s32.totalorder %v7600, 0
  %vm7665 = vcmp.ge.s32.totalorder %v7601, 0
  %vm7666 = vcmp.ge.s32.totalorder %v7602, 0
  %vm7667 = vcmp.ge.s32.totalorder %v7603, 0
  %vm7668 = vcmp.ge.s32.totalorder %v7604, 0
  %vm7669 = vcmp.ge.s32.totalorder %v7605, 0
  %vm7670 = vcmp.ge.s32.totalorder %v7606, 0
  %vm7671 = vcmp.ge.s32.totalorder %v7607, 0
  %vm7672 = vcmp.ge.s32.totalorder %v7608, 0
  %vm7673 = vcmp.ge.s32.totalorder %v7609, 0
  %vm7674 = vcmp.ge.s32.totalorder %v7610, 0
  %vm7675 = vcmp.ge.s32.totalorder %v7611, 0
  %vm7676 = vcmp.ge.s32.totalorder %v7612, 0
  %vm7677 = vcmp.ge.s32.totalorder %v7613, 0
  %vm7678 = vcmp.ge.s32.totalorder %v7614, 0
  %vm7679 = vcmp.ge.s32.totalorder %v7615, 0
  %vm7680 = vcmp.ge.s32.totalorder %v7616, 0
  %vm7681 = vcmp.ge.s32.totalorder %v7617, 0
  %vm7682 = vcmp.ge.s32.totalorder %v7618, 0
  %vm7683 = vcmp.ge.s32.totalorder %v7619, 0
  %vm7684 = vmand %vm1368, %vm7620
  %vm7685 = vmand %vm1369, %vm7621
  %vm7686 = vmand %vm1370, %vm7622
  %vm7687 = vmand %vm1371, %vm7623
  %vm7688 = vmand %vm1372, %vm7624
  %vm7689 = vmand %vm1373, %vm7625
  %vm7690 = vmand %vm1374, %vm7626
  %vm7691 = vmand %vm1375, %vm7627
  %vm7692 = vmand %vm1376, %vm7628
  %vm7693 = vmand %vm1377, %vm7629
  %vm7694 = vmand %vm1378, %vm7630
  %vm7695 = vmand %vm1379, %vm7631
  %vm7696 = vmand %vm1380, %vm7632
  %vm7697 = vmand %vm1381, %vm7633
  %vm7698 = vmand %vm1382, %vm7634
  %vm7699 = vmand %vm1383, %vm7635
  %vm7700 = vmand %vm1384, %vm7636
  %vm7701 = vmand %vm1385, %vm7637
  %vm7702 = vmand %vm1386, %vm7638
  %vm7703 = vmand %vm1387, %vm7639
  %vm7704 = vmand %vm1388, %vm7640
  %vm7705 = vmand %vm1389, %vm7641
  %vm7706 = vmand %vm1390, %vm7642
  %vm7707 = vmand %vm1391, %vm7643
  %vm7708 = vmand %vm1392, %vm7644
  %vm7709 = vmand %vm1393, %vm7645
  %vm7710 = vmand %vm1394, %vm7646
  %vm7711 = vmand %vm1395, %vm7647
  %vm7712 = vmand %vm1396, %vm7648
  %vm7713 = vmand %vm1397, %vm7649
  %vm7714 = vmand %vm1398, %vm7650
  %vm7715 = vmand %vm1399, %vm7651
  %vm7716 = vmand %vm1400, %vm7652
  %vm7717 = vmand %vm1401, %vm7653
  %vm7718 = vmand %vm1402, %vm7654
  %vm7719 = vmand %vm1403, %vm7655
  %vm7720 = vmand %vm1404, %vm7656
  %vm7721 = vmand %vm1405, %vm7657
  %vm7722 = vmand %vm1406, %vm7658
  %vm7723 = vmand %vm1407, %vm7659
  %vm7724 = vmand %vm1408, %vm7660
  %vm7725 = vmand %vm1409, %vm7661
  %vm7726 = vmand %vm1410, %vm7662
  %vm7727 = vmand %vm1411, %vm7663
  %vm7728 = vmand %vm1412, %vm7664
  %vm7729 = vmand %vm1413, %vm7665
  %vm7730 = vmand %vm1414, %vm7666
  %vm7731 = vmand %vm1415, %vm7667
  %vm7732 = vmand %vm1416, %vm7668
  %vm7733 = vmand %vm1417, %vm7669
  %vm7734 = vmand %vm1418, %vm7670
  %vm7735 = vmand %vm1419, %vm7671
  %vm7736 = vmand %vm1420, %vm7672
  %vm7737 = vmand %vm1421, %vm7673
  %vm7738 = vmand %vm1422, %vm7674
  %vm7739 = vmand %vm1423, %vm7675
  %vm7740 = vmand %vm1424, %vm7676
  %vm7741 = vmand %vm1425, %vm7677
  %vm7742 = vmand %vm1426, %vm7678
  %vm7743 = vmand %vm1427, %vm7679
  %vm7744 = vmand %vm1428, %vm7680
  %vm7745 = vmand %vm1429, %vm7681
  %vm7746 = vmand %vm1430, %vm7682
  %vm7747 = vmand %vm1431, %vm7683
  %vm7748 = vcmp.lt.s32.totalorder %v7556, 16
  %vm7749 = vcmp.lt.s32.totalorder %v7557, 16
  %vm7750 = vcmp.lt.s32.totalorder %v7558, 16
  %vm7751 = vcmp.lt.s32.totalorder %v7559, 16
  %vm7752 = vcmp.lt.s32.totalorder %v7560, 16
  %vm7753 = vcmp.lt.s32.totalorder %v7561, 16
  %vm7754 = vcmp.lt.s32.totalorder %v7562, 16
  %vm7755 = vcmp.lt.s32.totalorder %v7563, 16
  %vm7756 = vcmp.lt.s32.totalorder %v7564, 16
  %vm7757 = vcmp.lt.s32.totalorder %v7565, 16
  %vm7758 = vcmp.lt.s32.totalorder %v7566, 16
  %vm7759 = vcmp.lt.s32.totalorder %v7567, 16
  %vm7760 = vcmp.lt.s32.totalorder %v7568, 16
  %vm7761 = vcmp.lt.s32.totalorder %v7569, 16
  %vm7762 = vcmp.lt.s32.totalorder %v7570, 16
  %vm7763 = vcmp.lt.s32.totalorder %v7571, 16
  %vm7764 = vcmp.lt.s32.totalorder %v7572, 16
  %vm7765 = vcmp.lt.s32.totalorder %v7573, 16
  %vm7766 = vcmp.lt.s32.totalorder %v7574, 16
  %vm7767 = vcmp.lt.s32.totalorder %v7575, 16
  %vm7768 = vcmp.lt.s32.totalorder %v7576, 16
  %vm7769 = vcmp.lt.s32.totalorder %v7577, 16
  %vm7770 = vcmp.lt.s32.totalorder %v7578, 16
  %vm7771 = vcmp.lt.s32.totalorder %v7579, 16
  %vm7772 = vcmp.lt.s32.totalorder %v7580, 16
  %vm7773 = vcmp.lt.s32.totalorder %v7581, 16
  %vm7774 = vcmp.lt.s32.totalorder %v7582, 16
  %vm7775 = vcmp.lt.s32.totalorder %v7583, 16
  %vm7776 = vcmp.lt.s32.totalorder %v7584, 16
  %vm7777 = vcmp.lt.s32.totalorder %v7585, 16
  %vm7778 = vcmp.lt.s32.totalorder %v7586, 16
  %vm7779 = vcmp.lt.s32.totalorder %v7587, 16
  %vm7780 = vcmp.lt.s32.totalorder %v7588, 16
  %vm7781 = vcmp.lt.s32.totalorder %v7589, 16
  %vm7782 = vcmp.lt.s32.totalorder %v7590, 16
  %vm7783 = vcmp.lt.s32.totalorder %v7591, 16
  %vm7784 = vcmp.lt.s32.totalorder %v7592, 16
  %vm7785 = vcmp.lt.s32.totalorder %v7593, 16
  %vm7786 = vcmp.lt.s32.totalorder %v7594, 16
  %vm7787 = vcmp.lt.s32.totalorder %v7595, 16
  %vm7788 = vcmp.lt.s32.totalorder %v7596, 16
  %vm7789 = vcmp.lt.s32.totalorder %v7597, 16
  %vm7790 = vcmp.lt.s32.totalorder %v7598, 16
  %vm7791 = vcmp.lt.s32.totalorder %v7599, 16
  %vm7792 = vcmp.lt.s32.totalorder %v7600, 16
  %vm7793 = vcmp.lt.s32.totalorder %v7601, 16
  %vm7794 = vcmp.lt.s32.totalorder %v7602, 16
  %vm7795 = vcmp.lt.s32.totalorder %v7603, 16
  %vm7796 = vcmp.lt.s32.totalorder %v7604, 16
  %vm7797 = vcmp.lt.s32.totalorder %v7605, 16
  %vm7798 = vcmp.lt.s32.totalorder %v7606, 16
  %vm7799 = vcmp.lt.s32.totalorder %v7607, 16
  %vm7800 = vcmp.lt.s32.totalorder %v7608, 16
  %vm7801 = vcmp.lt.s32.totalorder %v7609, 16
  %vm7802 = vcmp.lt.s32.totalorder %v7610, 16
  %vm7803 = vcmp.lt.s32.totalorder %v7611, 16
  %vm7804 = vcmp.lt.s32.totalorder %v7612, 16
  %vm7805 = vcmp.lt.s32.totalorder %v7613, 16
  %vm7806 = vcmp.lt.s32.totalorder %v7614, 16
  %vm7807 = vcmp.lt.s32.totalorder %v7615, 16
  %vm7808 = vcmp.lt.s32.totalorder %v7616, 16
  %vm7809 = vcmp.lt.s32.totalorder %v7617, 16
  %vm7810 = vcmp.lt.s32.totalorder %v7618, 16
  %vm7811 = vcmp.lt.s32.totalorder %v7619, 16
  %vm7812 = vmand %vm7684, %vm7748
  %vm7813 = vmand %vm7685, %vm7749
  %vm7814 = vmand %vm7686, %vm7750
  %vm7815 = vmand %vm7687, %vm7751
  %vm7816 = vmand %vm7688, %vm7752
  %vm7817 = vmand %vm7689, %vm7753
  %vm7818 = vmand %vm7690, %vm7754
  %vm7819 = vmand %vm7691, %vm7755
  %vm7820 = vmand %vm7692, %vm7756
  %vm7821 = vmand %vm7693, %vm7757
  %vm7822 = vmand %vm7694, %vm7758
  %vm7823 = vmand %vm7695, %vm7759
  %vm7824 = vmand %vm7696, %vm7760
  %vm7825 = vmand %vm7697, %vm7761
  %vm7826 = vmand %vm7698, %vm7762
  %vm7827 = vmand %vm7699, %vm7763
  %vm7828 = vmand %vm7700, %vm7764
  %vm7829 = vmand %vm7701, %vm7765
  %vm7830 = vmand %vm7702, %vm7766
  %vm7831 = vmand %vm7703, %vm7767
  %vm7832 = vmand %vm7704, %vm7768
  %vm7833 = vmand %vm7705, %vm7769
  %vm7834 = vmand %vm7706, %vm7770
  %vm7835 = vmand %vm7707, %vm7771
  %vm7836 = vmand %vm7708, %vm7772
  %vm7837 = vmand %vm7709, %vm7773
  %vm7838 = vmand %vm7710, %vm7774
  %vm7839 = vmand %vm7711, %vm7775
  %vm7840 = vmand %vm7712, %vm7776
  %vm7841 = vmand %vm7713, %vm7777
  %vm7842 = vmand %vm7714, %vm7778
  %vm7843 = vmand %vm7715, %vm7779
  %vm7844 = vmand %vm7716, %vm7780
  %vm7845 = vmand %vm7717, %vm7781
  %vm7846 = vmand %vm7718, %vm7782
  %vm7847 = vmand %vm7719, %vm7783
  %vm7848 = vmand %vm7720, %vm7784
  %vm7849 = vmand %vm7721, %vm7785
  %vm7850 = vmand %vm7722, %vm7786
  %vm7851 = vmand %vm7723, %vm7787
  %vm7852 = vmand %vm7724, %vm7788
  %vm7853 = vmand %vm7725, %vm7789
  %vm7854 = vmand %vm7726, %vm7790
  %vm7855 = vmand %vm7727, %vm7791
  %vm7856 = vmand %vm7728, %vm7792
  %vm7857 = vmand %vm7729, %vm7793
  %vm7858 = vmand %vm7730, %vm7794
  %vm7859 = vmand %vm7731, %vm7795
  %vm7860 = vmand %vm7732, %vm7796
  %vm7861 = vmand %vm7733, %vm7797
  %vm7862 = vmand %vm7734, %vm7798
  %vm7863 = vmand %vm7735, %vm7799
  %vm7864 = vmand %vm7736, %vm7800
  %vm7865 = vmand %vm7737, %vm7801
  %vm7866 = vmand %vm7738, %vm7802
  %vm7867 = vmand %vm7739, %vm7803
  %vm7868 = vmand %vm7740, %vm7804
  %vm7869 = vmand %vm7741, %vm7805
  %vm7870 = vmand %vm7742, %vm7806
  %vm7871 = vmand %vm7743, %vm7807
  %vm7872 = vmand %vm7744, %vm7808
  %vm7873 = vmand %vm7745, %vm7809
  %vm7874 = vmand %vm7746, %vm7810
  %vm7875 = vmand %vm7747, %vm7811
  %v7876 = vsel %vm7812, 1, 0
  %v7877 = vsel %vm7813, 1, 0
  %v7878 = vsel %vm7814, 1, 0
  %v7879 = vsel %vm7815, 1, 0
  %v7880 = vsel %vm7816, 1, 0
  %v7881 = vsel %vm7817, 1, 0
  %v7882 = vsel %vm7818, 1, 0
  %v7883 = vsel %vm7819, 1, 0
  %v7884 = vsel %vm7820, 1, 0
  %v7885 = vsel %vm7821, 1, 0
  %v7886 = vsel %vm7822, 1, 0
  %v7887 = vsel %vm7823, 1, 0
  %v7888 = vsel %vm7824, 1, 0
  %v7889 = vsel %vm7825, 1, 0
  %v7890 = vsel %vm7826, 1, 0
  %v7891 = vsel %vm7827, 1, 0
  %v7892 = vsel %vm7828, 1, 0
  %v7893 = vsel %vm7829, 1, 0
  %v7894 = vsel %vm7830, 1, 0
  %v7895 = vsel %vm7831, 1, 0
  %v7896 = vsel %vm7832, 1, 0
  %v7897 = vsel %vm7833, 1, 0
  %v7898 = vsel %vm7834, 1, 0
  %v7899 = vsel %vm7835, 1, 0
  %v7900 = vsel %vm7836, 1, 0
  %v7901 = vsel %vm7837, 1, 0
  %v7902 = vsel %vm7838, 1, 0
  %v7903 = vsel %vm7839, 1, 0
  %v7904 = vsel %vm7840, 1, 0
  %v7905 = vsel %vm7841, 1, 0
  %v7906 = vsel %vm7842, 1, 0
  %v7907 = vsel %vm7843, 1, 0
  %v7908 = vsel %vm7844, 1, 0
  %v7909 = vsel %vm7845, 1, 0
  %v7910 = vsel %vm7846, 1, 0
  %v7911 = vsel %vm7847, 1, 0
  %v7912 = vsel %vm7848, 1, 0
  %v7913 = vsel %vm7849, 1, 0
  %v7914 = vsel %vm7850, 1, 0
  %v7915 = vsel %vm7851, 1, 0
  %v7916 = vsel %vm7852, 1, 0
  %v7917 = vsel %vm7853, 1, 0
  %v7918 = vsel %vm7854, 1, 0
  %v7919 = vsel %vm7855, 1, 0
  %v7920 = vsel %vm7856, 1, 0
  %v7921 = vsel %vm7857, 1, 0
  %v7922 = vsel %vm7858, 1, 0
  %v7923 = vsel %vm7859, 1, 0
  %v7924 = vsel %vm7860, 1, 0
  %v7925 = vsel %vm7861, 1, 0
  %v7926 = vsel %vm7862, 1, 0
  %v7927 = vsel %vm7863, 1, 0
  %v7928 = vsel %vm7864, 1, 0
  %v7929 = vsel %vm7865, 1, 0
  %v7930 = vsel %vm7866, 1, 0
  %v7931 = vsel %vm7867, 1, 0
  %v7932 = vsel %vm7868, 1, 0
  %v7933 = vsel %vm7869, 1, 0
  %v7934 = vsel %vm7870, 1, 0
  %v7935 = vsel %vm7871, 1, 0
  %v7936 = vsel %vm7872, 1, 0
  %v7937 = vsel %vm7873, 1, 0
  %v7938 = vsel %vm7874, 1, 0
  %v7939 = vsel %vm7875, 1, 0
  %7940 = vset.pattern.permute.xlu0 0
  %7941 = vperm.xlu0 %7940, %v7876
  %v7942 = vpop.permute.xlu0 %7941
  %7943 = vset.pattern.permute.xlu0 0
  %7944 = vperm.xlu0 %7943, %v7877
  %v7945 = vpop.permute.xlu0 %7944
  %7946 = vset.pattern.permute.xlu0 0
  %7947 = vperm.xlu0 %7946, %v7878
  %v7948 = vpop.permute.xlu0 %7947
  %7949 = vset.pattern.permute.xlu0 0
  %7950 = vperm.xlu0 %7949, %v7879
  %v7951 = vpop.permute.xlu0 %7950
  %7952 = vset.pattern.permute.xlu0 0
  %7953 = vperm.xlu0 %7952, %v7880
  %v7954 = vpop.permute.xlu0 %7953
  %7955 = vset.pattern.permute.xlu0 0
  %7956 = vperm.xlu0 %7955, %v7881
  %v7957 = vpop.permute.xlu0 %7956
  %7958 = vset.pattern.permute.xlu0 0
  %7959 = vperm.xlu0 %7958, %v7882
  %v7960 = vpop.permute.xlu0 %7959
  %7961 = vset.pattern.permute.xlu0 0
  %7962 = vperm.xlu0 %7961, %v7883
  %v7963 = vpop.permute.xlu0 %7962
  %7964 = vset.pattern.permute.xlu0 0
  %7965 = vperm.xlu0 %7964, %v7884
  %v7966 = vpop.permute.xlu0 %7965
  %7967 = vset.pattern.permute.xlu0 0
  %7968 = vperm.xlu0 %7967, %v7885
  %v7969 = vpop.permute.xlu0 %7968
  %7970 = vset.pattern.permute.xlu0 0
  %7971 = vperm.xlu0 %7970, %v7886
  %v7972 = vpop.permute.xlu0 %7971
  %7973 = vset.pattern.permute.xlu0 0
  %7974 = vperm.xlu0 %7973, %v7887
  %v7975 = vpop.permute.xlu0 %7974
  %7976 = vset.pattern.permute.xlu0 0
  %7977 = vperm.xlu0 %7976, %v7888
  %v7978 = vpop.permute.xlu0 %7977
  %7979 = vset.pattern.permute.xlu0 0
  %7980 = vperm.xlu0 %7979, %v7889
  %v7981 = vpop.permute.xlu0 %7980
  %7982 = vset.pattern.permute.xlu0 0
  %7983 = vperm.xlu0 %7982, %v7890
  %v7984 = vpop.permute.xlu0 %7983
  %7985 = vset.pattern.permute.xlu0 0
  %7986 = vperm.xlu0 %7985, %v7891
  %v7987 = vpop.permute.xlu0 %7986
  %7988 = vset.pattern.permute.xlu0 0
  %7989 = vperm.xlu0 %7988, %v7892
  %v7990 = vpop.permute.xlu0 %7989
  %7991 = vset.pattern.permute.xlu0 0
  %7992 = vperm.xlu0 %7991, %v7893
  %v7993 = vpop.permute.xlu0 %7992
  %7994 = vset.pattern.permute.xlu0 0
  %7995 = vperm.xlu0 %7994, %v7894
  %v7996 = vpop.permute.xlu0 %7995
  %7997 = vset.pattern.permute.xlu0 0
  %7998 = vperm.xlu0 %7997, %v7895
  %v7999 = vpop.permute.xlu0 %7998
  %8000 = vset.pattern.permute.xlu0 0
  %8001 = vperm.xlu0 %8000, %v7896
  %v8002 = vpop.permute.xlu0 %8001
  %8003 = vset.pattern.permute.xlu0 0
  %8004 = vperm.xlu0 %8003, %v7897
  %v8005 = vpop.permute.xlu0 %8004
  %8006 = vset.pattern.permute.xlu0 0
  %8007 = vperm.xlu0 %8006, %v7898
  %v8008 = vpop.permute.xlu0 %8007
  %8009 = vset.pattern.permute.xlu0 0
  %8010 = vperm.xlu0 %8009, %v7899
  %v8011 = vpop.permute.xlu0 %8010
  %8012 = vset.pattern.permute.xlu0 0
  %8013 = vperm.xlu0 %8012, %v7900
  %v8014 = vpop.permute.xlu0 %8013
  %8015 = vset.pattern.permute.xlu0 0
  %8016 = vperm.xlu0 %8015, %v7901
  %v8017 = vpop.permute.xlu0 %8016
  %8018 = vset.pattern.permute.xlu0 0
  %8019 = vperm.xlu0 %8018, %v7902
  %v8020 = vpop.permute.xlu0 %8019
  %8021 = vset.pattern.permute.xlu0 0
  %8022 = vperm.xlu0 %8021, %v7903
  %v8023 = vpop.permute.xlu0 %8022
  %8024 = vset.pattern.permute.xlu0 0
  %8025 = vperm.xlu0 %8024, %v7904
  %v8026 = vpop.permute.xlu0 %8025
  %8027 = vset.pattern.permute.xlu0 0
  %8028 = vperm.xlu0 %8027, %v7905
  %v8029 = vpop.permute.xlu0 %8028
  %8030 = vset.pattern.permute.xlu0 0
  %8031 = vperm.xlu0 %8030, %v7906
  %v8032 = vpop.permute.xlu0 %8031
  %8033 = vset.pattern.permute.xlu0 0
  %8034 = vperm.xlu0 %8033, %v7907
  %v8035 = vpop.permute.xlu0 %8034
  %8036 = vset.pattern.permute.xlu0 0
  %8037 = vperm.xlu0 %8036, %v7908
  %v8038 = vpop.permute.xlu0 %8037
  %8039 = vset.pattern.permute.xlu0 0
  %8040 = vperm.xlu0 %8039, %v7909
  %v8041 = vpop.permute.xlu0 %8040
  %8042 = vset.pattern.permute.xlu0 0
  %8043 = vperm.xlu0 %8042, %v7910
  %v8044 = vpop.permute.xlu0 %8043
  %8045 = vset.pattern.permute.xlu0 0
  %8046 = vperm.xlu0 %8045, %v7911
  %v8047 = vpop.permute.xlu0 %8046
  %8048 = vset.pattern.permute.xlu0 0
  %8049 = vperm.xlu0 %8048, %v7912
  %v8050 = vpop.permute.xlu0 %8049
  %8051 = vset.pattern.permute.xlu0 0
  %8052 = vperm.xlu0 %8051, %v7913
  %v8053 = vpop.permute.xlu0 %8052
  %8054 = vset.pattern.permute.xlu0 0
  %8055 = vperm.xlu0 %8054, %v7914
  %v8056 = vpop.permute.xlu0 %8055
  %8057 = vset.pattern.permute.xlu0 0
  %8058 = vperm.xlu0 %8057, %v7915
  %v8059 = vpop.permute.xlu0 %8058
  %8060 = vset.pattern.permute.xlu0 0
  %8061 = vperm.xlu0 %8060, %v7916
  %v8062 = vpop.permute.xlu0 %8061
  %8063 = vset.pattern.permute.xlu0 0
  %8064 = vperm.xlu0 %8063, %v7917
  %v8065 = vpop.permute.xlu0 %8064
  %8066 = vset.pattern.permute.xlu0 0
  %8067 = vperm.xlu0 %8066, %v7918
  %v8068 = vpop.permute.xlu0 %8067
  %8069 = vset.pattern.permute.xlu0 0
  %8070 = vperm.xlu0 %8069, %v7919
  %v8071 = vpop.permute.xlu0 %8070
  %8072 = vset.pattern.permute.xlu0 0
  %8073 = vperm.xlu0 %8072, %v7920
  %v8074 = vpop.permute.xlu0 %8073
  %8075 = vset.pattern.permute.xlu0 0
  %8076 = vperm.xlu0 %8075, %v7921
  %v8077 = vpop.permute.xlu0 %8076
  %8078 = vset.pattern.permute.xlu0 0
  %8079 = vperm.xlu0 %8078, %v7922
  %v8080 = vpop.permute.xlu0 %8079
  %8081 = vset.pattern.permute.xlu0 0
  %8082 = vperm.xlu0 %8081, %v7923
  %v8083 = vpop.permute.xlu0 %8082
  %8084 = vset.pattern.permute.xlu0 0
  %8085 = vperm.xlu0 %8084, %v7924
  %v8086 = vpop.permute.xlu0 %8085
  %8087 = vset.pattern.permute.xlu0 0
  %8088 = vperm.xlu0 %8087, %v7925
  %v8089 = vpop.permute.xlu0 %8088
  %8090 = vset.pattern.permute.xlu0 0
  %8091 = vperm.xlu0 %8090, %v7926
  %v8092 = vpop.permute.xlu0 %8091
  %8093 = vset.pattern.permute.xlu0 0
  %8094 = vperm.xlu0 %8093, %v7927
  %v8095 = vpop.permute.xlu0 %8094
  %8096 = vset.pattern.permute.xlu0 0
  %8097 = vperm.xlu0 %8096, %v7928
  %v8098 = vpop.permute.xlu0 %8097
  %8099 = vset.pattern.permute.xlu0 0
  %8100 = vperm.xlu0 %8099, %v7929
  %v8101 = vpop.permute.xlu0 %8100
  %8102 = vset.pattern.permute.xlu0 0
  %8103 = vperm.xlu0 %8102, %v7930
  %v8104 = vpop.permute.xlu0 %8103
  %8105 = vset.pattern.permute.xlu0 0
  %8106 = vperm.xlu0 %8105, %v7931
  %v8107 = vpop.permute.xlu0 %8106
  %8108 = vset.pattern.permute.xlu0 0
  %8109 = vperm.xlu0 %8108, %v7932
  %v8110 = vpop.permute.xlu0 %8109
  %8111 = vset.pattern.permute.xlu0 0
  %8112 = vperm.xlu0 %8111, %v7933
  %v8113 = vpop.permute.xlu0 %8112
  %8114 = vset.pattern.permute.xlu0 0
  %8115 = vperm.xlu0 %8114, %v7934
  %v8116 = vpop.permute.xlu0 %8115
  %8117 = vset.pattern.permute.xlu0 0
  %8118 = vperm.xlu0 %8117, %v7935
  %v8119 = vpop.permute.xlu0 %8118
  %8120 = vset.pattern.permute.xlu0 0
  %8121 = vperm.xlu0 %8120, %v7936
  %v8122 = vpop.permute.xlu0 %8121
  %8123 = vset.pattern.permute.xlu0 0
  %8124 = vperm.xlu0 %8123, %v7937
  %v8125 = vpop.permute.xlu0 %8124
  %8126 = vset.pattern.permute.xlu0 0
  %8127 = vperm.xlu0 %8126, %v7938
  %v8128 = vpop.permute.xlu0 %8127
  %8129 = vset.pattern.permute.xlu0 0
  %8130 = vperm.xlu0 %8129, %v7939
  %v8131 = vpop.permute.xlu0 %8130
  %vm8132 = vcmp.eq.s32.totalorder %v7942, 1
  %vm8133 = vcmp.eq.s32.totalorder %v7945, 1
  %vm8134 = vcmp.eq.s32.totalorder %v7948, 1
  %vm8135 = vcmp.eq.s32.totalorder %v7951, 1
  %vm8136 = vcmp.eq.s32.totalorder %v7954, 1
  %vm8137 = vcmp.eq.s32.totalorder %v7957, 1
  %vm8138 = vcmp.eq.s32.totalorder %v7960, 1
  %vm8139 = vcmp.eq.s32.totalorder %v7963, 1
  %vm8140 = vcmp.eq.s32.totalorder %v7966, 1
  %vm8141 = vcmp.eq.s32.totalorder %v7969, 1
  %vm8142 = vcmp.eq.s32.totalorder %v7972, 1
  %vm8143 = vcmp.eq.s32.totalorder %v7975, 1
  %vm8144 = vcmp.eq.s32.totalorder %v7978, 1
  %vm8145 = vcmp.eq.s32.totalorder %v7981, 1
  %vm8146 = vcmp.eq.s32.totalorder %v7984, 1
  %vm8147 = vcmp.eq.s32.totalorder %v7987, 1
  %vm8148 = vcmp.eq.s32.totalorder %v7990, 1
  %vm8149 = vcmp.eq.s32.totalorder %v7993, 1
  %vm8150 = vcmp.eq.s32.totalorder %v7996, 1
  %vm8151 = vcmp.eq.s32.totalorder %v7999, 1
  %vm8152 = vcmp.eq.s32.totalorder %v8002, 1
  %vm8153 = vcmp.eq.s32.totalorder %v8005, 1
  %vm8154 = vcmp.eq.s32.totalorder %v8008, 1
  %vm8155 = vcmp.eq.s32.totalorder %v8011, 1
  %vm8156 = vcmp.eq.s32.totalorder %v8014, 1
  %vm8157 = vcmp.eq.s32.totalorder %v8017, 1
  %vm8158 = vcmp.eq.s32.totalorder %v8020, 1
  %vm8159 = vcmp.eq.s32.totalorder %v8023, 1
  %vm8160 = vcmp.eq.s32.totalorder %v8026, 1
  %vm8161 = vcmp.eq.s32.totalorder %v8029, 1
  %vm8162 = vcmp.eq.s32.totalorder %v8032, 1
  %vm8163 = vcmp.eq.s32.totalorder %v8035, 1
  %vm8164 = vcmp.eq.s32.totalorder %v8038, 1
  %vm8165 = vcmp.eq.s32.totalorder %v8041, 1
  %vm8166 = vcmp.eq.s32.totalorder %v8044, 1
  %vm8167 = vcmp.eq.s32.totalorder %v8047, 1
  %vm8168 = vcmp.eq.s32.totalorder %v8050, 1
  %vm8169 = vcmp.eq.s32.totalorder %v8053, 1
  %vm8170 = vcmp.eq.s32.totalorder %v8056, 1
  %vm8171 = vcmp.eq.s32.totalorder %v8059, 1
  %vm8172 = vcmp.eq.s32.totalorder %v8062, 1
  %vm8173 = vcmp.eq.s32.totalorder %v8065, 1
  %vm8174 = vcmp.eq.s32.totalorder %v8068, 1
  %vm8175 = vcmp.eq.s32.totalorder %v8071, 1
  %vm8176 = vcmp.eq.s32.totalorder %v8074, 1
  %vm8177 = vcmp.eq.s32.totalorder %v8077, 1
  %vm8178 = vcmp.eq.s32.totalorder %v8080, 1
  %vm8179 = vcmp.eq.s32.totalorder %v8083, 1
  %vm8180 = vcmp.eq.s32.totalorder %v8086, 1
  %vm8181 = vcmp.eq.s32.totalorder %v8089, 1
  %vm8182 = vcmp.eq.s32.totalorder %v8092, 1
  %vm8183 = vcmp.eq.s32.totalorder %v8095, 1
  %vm8184 = vcmp.eq.s32.totalorder %v8098, 1
  %vm8185 = vcmp.eq.s32.totalorder %v8101, 1
  %vm8186 = vcmp.eq.s32.totalorder %v8104, 1
  %vm8187 = vcmp.eq.s32.totalorder %v8107, 1
  %vm8188 = vcmp.eq.s32.totalorder %v8110, 1
  %vm8189 = vcmp.eq.s32.totalorder %v8113, 1
  %vm8190 = vcmp.eq.s32.totalorder %v8116, 1
  %vm8191 = vcmp.eq.s32.totalorder %v8119, 1
  %vm8192 = vcmp.eq.s32.totalorder %v8122, 1
  %vm8193 = vcmp.eq.s32.totalorder %v8125, 1
  %vm8194 = vcmp.eq.s32.totalorder %v8128, 1
  %vm8195 = vcmp.eq.s32.totalorder %v8131, 1
  %v8196 = vsel %vm8132, %v1173, 0.0
  %v8197 = vsel %vm8133, %v1172, 0.0
  %v8198 = vsel %vm8134, %v1171, 0.0
  %v8199 = vsel %vm8135, %v1170, 0.0
  %v8200 = vsel %vm8136, %v1169, 0.0
  %v8201 = vsel %vm8137, %v1168, 0.0
  %v8202 = vsel %vm8138, %v1167, 0.0
  %v8203 = vsel %vm8139, %v1166, 0.0
  %v8204 = vsel %vm8140, %v1165, 0.0
  %v8205 = vsel %vm8141, %v1164, 0.0
  %v8206 = vsel %vm8142, %v1163, 0.0
  %v8207 = vsel %vm8143, %v1162, 0.0
  %v8208 = vsel %vm8144, %v1161, 0.0
  %v8209 = vsel %vm8145, %v1160, 0.0
  %v8210 = vsel %vm8146, %v1159, 0.0
  %v8211 = vsel %vm8147, %v1158, 0.0
  %v8212 = vsel %vm8148, %v1157, 0.0
  %v8213 = vsel %vm8149, %v1156, 0.0
  %v8214 = vsel %vm8150, %v1155, 0.0
  %v8215 = vsel %vm8151, %v1154, 0.0
  %v8216 = vsel %vm8152, %v1153, 0.0
  %v8217 = vsel %vm8153, %v1152, 0.0
  %v8218 = vsel %vm8154, %v1151, 0.0
  %v8219 = vsel %vm8155, %v1150, 0.0
  %v8220 = vsel %vm8156, %v1149, 0.0
  %v8221 = vsel %vm8157, %v1148, 0.0
  %v8222 = vsel %vm8158, %v1147, 0.0
  %v8223 = vsel %vm8159, %v1146, 0.0
  %v8224 = vsel %vm8160, %v1145, 0.0
  %v8225 = vsel %vm8161, %v1144, 0.0
  %v8226 = vsel %vm8162, %v1143, 0.0
  %v8227 = vsel %vm8163, %v1142, 0.0
  %v8228 = vsel %vm8164, %v1141, 0.0
  %v8229 = vsel %vm8165, %v1140, 0.0
  %v8230 = vsel %vm8166, %v1139, 0.0
  %v8231 = vsel %vm8167, %v1138, 0.0
  %v8232 = vsel %vm8168, %v1137, 0.0
  %v8233 = vsel %vm8169, %v1136, 0.0
  %v8234 = vsel %vm8170, %v1135, 0.0
  %v8235 = vsel %vm8171, %v1134, 0.0
  %v8236 = vsel %vm8172, %v1133, 0.0
  %v8237 = vsel %vm8173, %v1132, 0.0
  %v8238 = vsel %vm8174, %v1131, 0.0
  %v8239 = vsel %vm8175, %v1130, 0.0
  %v8240 = vsel %vm8176, %v1129, 0.0
  %v8241 = vsel %vm8177, %v1128, 0.0
  %v8242 = vsel %vm8178, %v1127, 0.0
  %v8243 = vsel %vm8179, %v1126, 0.0
  %v8244 = vsel %vm8180, %v1125, 0.0
  %v8245 = vsel %vm8181, %v1124, 0.0
  %v8246 = vsel %vm8182, %v1123, 0.0
  %v8247 = vsel %vm8183, %v1122, 0.0
  %v8248 = vsel %vm8184, %v1121, 0.0
  %v8249 = vsel %vm8185, %v1120, 0.0
  %v8250 = vsel %vm8186, %v1119, 0.0
  %v8251 = vsel %vm8187, %v1118, 0.0
  %v8252 = vsel %vm8188, %v1117, 0.0
  %v8253 = vsel %vm8189, %v1116, 0.0
  %v8254 = vsel %vm8190, %v1115, 0.0
  %v8255 = vsel %vm8191, %v1114, 0.0
  %v8256 = vsel %vm8192, %v1113, 0.0
  %v8257 = vsel %vm8193, %v1112, 0.0
  %v8258 = vsel %vm8194, %v1175, 0.0
  %v8259 = vsel %vm8195, %v1174, 0.0
  %s8260 = scalar_lea.vmem %s5, 768
  %v8261 = vld [vmem:[%s8260] sm:$0xff]
  %v8262 = vld [vmem:[%s8260 + $0x8] sm:$0xff]
  %v8263 = vld [vmem:[%s8260 + $0x10] sm:$0xff]
  %v8264 = vld [vmem:[%s8260 + $0x18] sm:$0xff]
  %v8265 = vld [vmem:[%s8260 + $0x20] sm:$0xff]
  %v8266 = vld [vmem:[%s8260 + $0x28] sm:$0xff]
  %v8267 = vld [vmem:[%s8260 + $0x30] sm:$0xff]
  %v8268 = vld [vmem:[%s8260 + $0x38] sm:$0xff]
  %v8269 = vld [vmem:[%s8260 + $0x40] sm:$0xff]
  %v8270 = vld [vmem:[%s8260 + $0x48] sm:$0xff]
  %v8271 = vld [vmem:[%s8260 + $0x50] sm:$0xff]
  %v8272 = vld [vmem:[%s8260 + $0x58] sm:$0xff]
  %v8273 = vld [vmem:[%s8260 + $0x60] sm:$0xff]
  %v8274 = vld [vmem:[%s8260 + $0x68] sm:$0xff]
  %v8275 = vld [vmem:[%s8260 + $0x70] sm:$0xff]
  %v8276 = vld [vmem:[%s8260 + $0x78] sm:$0xff]
  %8277 = vmatprep.subr.mxu0 0.0
  %8278 = vmatpush1.msra.mxu0 %v8261
  %8279 = vmatprep.subr.mxu0 0.0
  %8280 = vmatpush1.msra.mxu0 %v8262
  %8281 = vmatprep.subr.mxu0 0.0
  %8282 = vmatpush1.msra.mxu0 %v8263
  %8283 = vmatprep.subr.mxu0 0.0
  %8284 = vmatpush1.msra.mxu0 %v8264
  %8285 = vmatprep.subr.mxu0 0.0
  %8286 = vmatpush1.msra.mxu0 %v8265
  %8287 = vmatprep.subr.mxu0 0.0
  %8288 = vmatpush1.msra.mxu0 %v8266
  %8289 = vmatprep.subr.mxu0 0.0
  %8290 = vmatpush1.msra.mxu0 %v8267
  %8291 = vmatprep.subr.mxu0 0.0
  %8292 = vmatpush1.msra.mxu0 %v8268
  %8293 = vmatprep.subr.mxu0 0.0
  %8294 = vmatpush1.msra.mxu0 %v8269
  %8295 = vmatprep.subr.mxu0 0.0
  %8296 = vmatpush1.msra.mxu0 %v8270
  %8297 = vmatprep.subr.mxu0 0.0
  %8298 = vmatpush1.msra.mxu0 %v8271
  %8299 = vmatprep.subr.mxu0 0.0
  %8300 = vmatpush1.msra.mxu0 %v8272
  %8301 = vmatprep.subr.mxu0 0.0
  %8302 = vmatpush1.msra.mxu0 %v8273
  %8303 = vmatprep.subr.mxu0 0.0
  %8304 = vmatpush1.msra.mxu0 %v8274
  %8305 = vmatprep.subr.mxu0 0.0
  %8306 = vmatpush1.msra.mxu0 %v8275
  %8307 = vmatprep.subr.mxu0 0.0
  %8308 = vmatpush1.msra.mxu0 %v8276
  %8309 = vmatprep.subr.mxu0 0.0
  %8310 = vmatpush1.msra.mxu0 0.0
  %8311 = vmatprep.subr.mxu0 0.0
  %8312 = vmatpush1.msra.mxu0 0.0
  %8313 = vmatprep.subr.mxu0 0.0
  %8314 = vmatpush1.msra.mxu0 0.0
  %8315 = vmatprep.subr.mxu0 0.0
  %8316 = vmatpush1.msra.mxu0 0.0
  %8317 = vmatprep.subr.mxu0 0.0
  %8318 = vmatpush1.msra.mxu0 0.0
  %8319 = vmatprep.subr.mxu0 0.0
  %8320 = vmatpush1.msra.mxu0 0.0
  %8321 = vmatprep.subr.mxu0 0.0
  %8322 = vmatpush1.msra.mxu0 0.0
  %8323 = vmatprep.subr.mxu0 0.0
  %8324 = vmatpush1.msra.mxu0 0.0
  %8325 = vmatprep.subr.mxu0 0.0
  %8326 = vmatpush1.msra.mxu0 0.0
  %8327 = vmatprep.subr.mxu0 0.0
  %8328 = vmatpush1.msra.mxu0 0.0
  %8329 = vmatprep.subr.mxu0 0.0
  %8330 = vmatpush1.msra.mxu0 0.0
  %8331 = vmatprep.subr.mxu0 0.0
  %8332 = vmatpush1.msra.mxu0 0.0
  %8333 = vmatprep.subr.mxu0 0.0
  %8334 = vmatpush1.msra.mxu0 0.0
  %8335 = vmatprep.subr.mxu0 0.0
  %8336 = vmatpush1.msra.mxu0 0.0
  %8337 = vmatprep.subr.mxu0 0.0
  %8338 = vmatpush1.msra.mxu0 0.0
  %8339 = vmatprep.subr.mxu0 0.0
  %8340 = vmatpush1.msra.mxu0 0.0
  %8341 = vmatprep.mubr.f32.mxu0 0.0
  %8342 = vmatmul.mubr.f32.gmra.mrb[0].mxu0 %v8196
  %v8343 = vpop.f32.mrb[0].mxu0
  %v8344 = vadd.f32 0.0, %v8343
  %v8345 = vpop.f32.mrb[0].mxu0
  %8346 = vmatprep.mubr.f32.mxu0 0.0
  %8347 = vmatmul.mubr.f32.gmra.mrb[0].mxu0 %v8197
  %v8348 = vpop.f32.mrb[0].mxu0
  %v8349 = vadd.f32 0.0, %v8348
  %v8350 = vpop.f32.mrb[0].mxu0
  %8351 = vmatprep.mubr.f32.mxu0 0.0
  %8352 = vmatmul.mubr.f32.gmra.mrb[0].mxu0 %v8198
  %v8353 = vpop.f32.mrb[0].mxu0
  %v8354 = vadd.f32 0.0, %v8353
  %v8355 = vpop.f32.mrb[0].mxu0
  %8356 = vmatprep.mubr.f32.mxu0 0.0
  %8357 = vmatmul.mubr.f32.gmra.mrb[0].mxu0 %v8199
  %v8358 = vpop.f32.mrb[0].mxu0
  %v8359 = vadd.f32 0.0, %v8358
  %v8360 = vpop.f32.mrb[0].mxu0
  %8361 = vmatprep.mubr.f32.mxu0 0.0
  %8362 = vmatmul.mubr.f32.gmra.mrb[0].mxu0 %v8200
  %v8363 = vpop.f32.mrb[0].mxu0
  %v8364 = vadd.f32 0.0, %v8363
  %v8365 = vpop.f32.mrb[0].mxu0
  %8366 = vmatprep.mubr.f32.mxu0 0.0
  %8367 = vmatmul.mubr.f32.gmra.mrb[0].mxu0 %v8201
  %v8368 = vpop.f32.mrb[0].mxu0
  %v8369 = vadd.f32 0.0, %v8368
  %v8370 = vpop.f32.mrb[0].mxu0
  %8371 = vmatprep.mubr.f32.mxu0 0.0
  %8372 = vmatmul.mubr.f32.gmra.mrb[0].mxu0 %v8202
  %v8373 = vpop.f32.mrb[0].mxu0
  %v8374 = vadd.f32 0.0, %v8373
  %v8375 = vpop.f32.mrb[0].mxu0
  %8376 = vmatprep.mubr.f32.mxu0 0.0
  %8377 = vmatmul.mubr.f32.gmra.mrb[0].mxu0 %v8203
  %v8378 = vpop.f32.mrb[0].mxu0
  %v8379 = vadd.f32 0.0, %v8378
  %v8380 = vpop.f32.mrb[0].mxu0
  %8381 = vmatprep.mubr.f32.mxu0 0.0
  %8382 = vmatmul.mubr.f32.gmra.mrb[0].mxu0 %v8204
  %v8383 = vpop.f32.mrb[0].mxu0
  %v8384 = vadd.f32 0.0, %v8383
  %v8385 = vpop.f32.mrb[0].mxu0
  %8386 = vmatprep.mubr.f32.mxu0 0.0
  %8387 = vmatmul.mubr.f32.gmra.mrb[0].mxu0 %v8205
  %v8388 = vpop.f32.mrb[0].mxu0
  %v8389 = vadd.f32 0.0, %v8388
  %v8390 = vpop.f32.mrb[0].mxu0
  %8391 = vmatprep.mubr.f32.mxu0 0.0
  %8392 = vmatmul.mubr.f32.gmra.mrb[0].mxu0 %v8206
  %v8393 = vpop.f32.mrb[0].mxu0
  %v8394 = vadd.f32 0.0, %v8393
  %v8395 = vpop.f32.mrb[0].mxu0
  %8396 = vmatprep.mubr.f32.mxu0 0.0
  %8397 = vmatmul.mubr.f32.gmra.mrb[0].mxu0 %v8207
  %v8398 = vpop.f32.mrb[0].mxu0
  %v8399 = vadd.f32 0.0, %v8398
  %v8400 = vpop.f32.mrb[0].mxu0
  %8401 = vmatprep.mubr.f32.mxu0 0.0
  %8402 = vmatmul.mubr.f32.gmra.mrb[0].mxu0 %v8208
  %v8403 = vpop.f32.mrb[0].mxu0
  %v8404 = vadd.f32 0.0, %v8403
  %v8405 = vpop.f32.mrb[0].mxu0
  %8406 = vmatprep.mubr.f32.mxu0 0.0
  %8407 = vmatmul.mubr.f32.gmra.mrb[0].mxu0 %v8209
  %v8408 = vpop.f32.mrb[0].mxu0
  %v8409 = vadd.f32 0.0, %v8408
  %v8410 = vpop.f32.mrb[0].mxu0
  %8411 = vmatprep.mubr.f32.mxu0 0.0
  %8412 = vmatmul.mubr.f32.gmra.mrb[0].mxu0 %v8210
  %v8413 = vpop.f32.mrb[0].mxu0
  %v8414 = vadd.f32 0.0, %v8413
  %v8415 = vpop.f32.mrb[0].mxu0
  %8416 = vmatprep.mubr.f32.mxu0 0.0
  %8417 = vmatmul.mubr.f32.gmra.mrb[0].mxu0 %v8211
  %v8418 = vpop.f32.mrb[0].mxu0
  %v8419 = vadd.f32 0.0, %v8418
  %v8420 = vpop.f32.mrb[0].mxu0
  %8421 = vmatprep.mubr.f32.mxu0 0.0
  %8422 = vmatmul.mubr.f32.gmra.mrb[0].mxu0 %v8212
  %v8423 = vpop.f32.mrb[0].mxu0
  %v8424 = vadd.f32 0.0, %v8423
  %v8425 = vpop.f32.mrb[0].mxu0
  %8426 = vmatprep.mubr.f32.mxu0 0.0
  %8427 = vmatmul.mubr.f32.gmra.mrb[0].mxu0 %v8213
  %v8428 = vpop.f32.mrb[0].mxu0
  %v8429 = vadd.f32 0.0, %v8428
  %v8430 = vpop.f32.mrb[0].mxu0
  %8431 = vmatprep.mubr.f32.mxu0 0.0
  %8432 = vmatmul.mubr.f32.gmra.mrb[0].mxu0 %v8214
  %v8433 = vpop.f32.mrb[0].mxu0
  %v8434 = vadd.f32 0.0, %v8433
  %v8435 = vpop.f32.mrb[0].mxu0
  %8436 = vmatprep.mubr.f32.mxu0 0.0
  %8437 = vmatmul.mubr.f32.gmra.mrb[0].mxu0 %v8215
  %v8438 = vpop.f32.mrb[0].mxu0
  %v8439 = vadd.f32 0.0, %v8438
  %v8440 = vpop.f32.mrb[0].mxu0
  %8441 = vmatprep.mubr.f32.mxu0 0.0
  %8442 = vmatmul.mubr.f32.gmra.mrb[0].mxu0 %v8216
  %v8443 = vpop.f32.mrb[0].mxu0
  %v8444 = vadd.f32 0.0, %v8443
  %v8445 = vpop.f32.mrb[0].mxu0
  %8446 = vmatprep.mubr.f32.mxu0 0.0
  %8447 = vmatmul.mubr.f32.gmra.mrb[0].mxu0 %v8217
  %v8448 = vpop.f32.mrb[0].mxu0
  %v8449 = vadd.f32 0.0, %v8448
  %v8450 = vpop.f32.mrb[0].mxu0
  %8451 = vmatprep.mubr.f32.mxu0 0.0
  %8452 = vmatmul.mubr.f32.gmra.mrb[0].mxu0 %v8218
  %v8453 = vpop.f32.mrb[0].mxu0
  %v8454 = vadd.f32 0.0, %v8453
  %v8455 = vpop.f32.mrb[0].mxu0
  %8456 = vmatprep.mubr.f32.mxu0 0.0
  %8457 = vmatmul.mubr.f32.gmra.mrb[0].mxu0 %v8219
  %v8458 = vpop.f32.mrb[0].mxu0
  %v8459 = vadd.f32 0.0, %v8458
  %v8460 = vpop.f32.mrb[0].mxu0
  %8461 = vmatprep.mubr.f32.mxu0 0.0
  %8462 = vmatmul.mubr.f32.gmra.mrb[0].mxu0 %v8220
  %v8463 = vpop.f32.mrb[0].mxu0
  %v8464 = vadd.f32 0.0, %v8463
  %v8465 = vpop.f32.mrb[0].mxu0
  %8466 = vmatprep.mubr.f32.mxu0 0.0
  %8467 = vmatmul.mubr.f32.gmra.mrb[0].mxu0 %v8221
  %v8468 = vpop.f32.mrb[0].mxu0
  %v8469 = vadd.f32 0.0, %v8468
  %v8470 = vpop.f32.mrb[0].mxu0
  %8471 = vmatprep.mubr.f32.mxu0 0.0
  %8472 = vmatmul.mubr.f32.gmra.mrb[0].mxu0 %v8222
  %v8473 = vpop.f32.mrb[0].mxu0
  %v8474 = vadd.f32 0.0, %v8473
  %v8475 = vpop.f32.mrb[0].mxu0
  %8476 = vmatprep.mubr.f32.mxu0 0.0
  %8477 = vmatmul.mubr.f32.gmra.mrb[0].mxu0 %v8223
  %v8478 = vpop.f32.mrb[0].mxu0
  %v8479 = vadd.f32 0.0, %v8478
  %v8480 = vpop.f32.mrb[0].mxu0
  %8481 = vmatprep.mubr.f32.mxu0 0.0
  %8482 = vmatmul.mubr.f32.gmra.mrb[0].mxu0 %v8224
  %v8483 = vpop.f32.mrb[0].mxu0
  %v8484 = vadd.f32 0.0, %v8483
  %v8485 = vpop.f32.mrb[0].mxu0
  %8486 = vmatprep.mubr.f32.mxu0 0.0
  %8487 = vmatmul.mubr.f32.gmra.mrb[0].mxu0 %v8225
  %v8488 = vpop.f32.mrb[0].mxu0
  %v8489 = vadd.f32 0.0, %v8488
  %v8490 = vpop.f32.mrb[0].mxu0
  %8491 = vmatprep.mubr.f32.mxu0 0.0
  %8492 = vmatmul.mubr.f32.gmra.mrb[0].mxu0 %v8226
  %v8493 = vpop.f32.mrb[0].mxu0
  %v8494 = vadd.f32 0.0, %v8493
  %v8495 = vpop.f32.mrb[0].mxu0
  %8496 = vmatprep.mubr.f32.mxu0 0.0
  %8497 = vmatmul.mubr.f32.gmra.mrb[0].mxu0 %v8227
  %v8498 = vpop.f32.mrb[0].mxu0
  %v8499 = vadd.f32 0.0, %v8498
  %v8500 = vpop.f32.mrb[0].mxu0
  %8501 = vmatprep.mubr.f32.mxu0 0.0
  %8502 = vmatmul.mubr.f32.gmra.mrb[0].mxu0 %v8228
  %v8503 = vpop.f32.mrb[0].mxu0
  %v8504 = vadd.f32 0.0, %v8503
  %v8505 = vpop.f32.mrb[0].mxu0
  %8506 = vmatprep.mubr.f32.mxu0 0.0
  %8507 = vmatmul.mubr.f32.gmra.mrb[0].mxu0 %v8229
  %v8508 = vpop.f32.mrb[0].mxu0
  %v8509 = vadd.f32 0.0, %v8508
  %v8510 = vpop.f32.mrb[0].mxu0
  %8511 = vmatprep.mubr.f32.mxu0 0.0
  %8512 = vmatmul.mubr.f32.gmra.mrb[0].mxu0 %v8230
  %v8513 = vpop.f32.mrb[0].mxu0
  %v8514 = vadd.f32 0.0, %v8513
  %v8515 = vpop.f32.mrb[0].mxu0
  %8516 = vmatprep.mubr.f32.mxu0 0.0
  %8517 = vmatmul.mubr.f32.gmra.mrb[0].mxu0 %v8231
  %v8518 = vpop.f32.mrb[0].mxu0
  %v8519 = vadd.f32 0.0, %v8518
  %v8520 = vpop.f32.mrb[0].mxu0
  %8521 = vmatprep.mubr.f32.mxu0 0.0
  %8522 = vmatmul.mubr.f32.gmra.mrb[0].mxu0 %v8232
  %v8523 = vpop.f32.mrb[0].mxu0
  %v8524 = vadd.f32 0.0, %v8523
  %v8525 = vpop.f32.mrb[0].mxu0
  %8526 = vmatprep.mubr.f32.mxu0 0.0
  %8527 = vmatmul.mubr.f32.gmra.mrb[0].mxu0 %v8233
  %v8528 = vpop.f32.mrb[0].mxu0
  %v8529 = vadd.f32 0.0, %v8528
  %v8530 = vpop.f32.mrb[0].mxu0
  %8531 = vmatprep.mubr.f32.mxu0 0.0
  %8532 = vmatmul.mubr.f32.gmra.mrb[0].mxu0 %v8234
  %v8533 = vpop.f32.mrb[0].mxu0
  %v8534 = vadd.f32 0.0, %v8533
  %v8535 = vpop.f32.mrb[0].mxu0
  %8536 = vmatprep.mubr.f32.mxu0 0.0
  %8537 = vmatmul.mubr.f32.gmra.mrb[0].mxu0 %v8235
  %v8538 = vpop.f32.mrb[0].mxu0
  %v8539 = vadd.f32 0.0, %v8538
  %v8540 = vpop.f32.mrb[0].mxu0
  %8541 = vmatprep.mubr.f32.mxu0 0.0
  %8542 = vmatmul.mubr.f32.gmra.mrb[0].mxu0 %v8236
  %v8543 = vpop.f32.mrb[0].mxu0
  %v8544 = vadd.f32 0.0, %v8543
  %v8545 = vpop.f32.mrb[0].mxu0
  %8546 = vmatprep.mubr.f32.mxu0 0.0
  %8547 = vmatmul.mubr.f32.gmra.mrb[0].mxu0 %v8237
  %v8548 = vpop.f32.mrb[0].mxu0
  %v8549 = vadd.f32 0.0, %v8548
  %v8550 = vpop.f32.mrb[0].mxu0
  %8551 = vmatprep.mubr.f32.mxu0 0.0
  %8552 = vmatmul.mubr.f32.gmra.mrb[0].mxu0 %v8238
  %v8553 = vpop.f32.mrb[0].mxu0
  %v8554 = vadd.f32 0.0, %v8553
  %v8555 = vpop.f32.mrb[0].mxu0
  %8556 = vmatprep.mubr.f32.mxu0 0.0
  %8557 = vmatmul.mubr.f32.gmra.mrb[0].mxu0 %v8239
  %v8558 = vpop.f32.mrb[0].mxu0
  %v8559 = vadd.f32 0.0, %v8558
  %v8560 = vpop.f32.mrb[0].mxu0
  %8561 = vmatprep.mubr.f32.mxu0 0.0
  %8562 = vmatmul.mubr.f32.gmra.mrb[0].mxu0 %v8240
  %v8563 = vpop.f32.mrb[0].mxu0
  %v8564 = vadd.f32 0.0, %v8563
  %v8565 = vpop.f32.mrb[0].mxu0
  %8566 = vmatprep.mubr.f32.mxu0 0.0
  %8567 = vmatmul.mubr.f32.gmra.mrb[0].mxu0 %v8241
  %v8568 = vpop.f32.mrb[0].mxu0
  %v8569 = vadd.f32 0.0, %v8568
  %v8570 = vpop.f32.mrb[0].mxu0
  %8571 = vmatprep.mubr.f32.mxu0 0.0
  %8572 = vmatmul.mubr.f32.gmra.mrb[0].mxu0 %v8242
  %v8573 = vpop.f32.mrb[0].mxu0
  %v8574 = vadd.f32 0.0, %v8573
  %v8575 = vpop.f32.mrb[0].mxu0
  %8576 = vmatprep.mubr.f32.mxu0 0.0
  %8577 = vmatmul.mubr.f32.gmra.mrb[0].mxu0 %v8243
  %v8578 = vpop.f32.mrb[0].mxu0
  %v8579 = vadd.f32 0.0, %v8578
  %v8580 = vpop.f32.mrb[0].mxu0
  %8581 = vmatprep.mubr.f32.mxu0 0.0
  %8582 = vmatmul.mubr.f32.gmra.mrb[0].mxu0 %v8244
  %v8583 = vpop.f32.mrb[0].mxu0
  %v8584 = vadd.f32 0.0, %v8583
  %v8585 = vpop.f32.mrb[0].mxu0
  %8586 = vmatprep.mubr.f32.mxu0 0.0
  %8587 = vmatmul.mubr.f32.gmra.mrb[0].mxu0 %v8245
  %v8588 = vpop.f32.mrb[0].mxu0
  %v8589 = vadd.f32 0.0, %v8588
  %v8590 = vpop.f32.mrb[0].mxu0
  %8591 = vmatprep.mubr.f32.mxu0 0.0
  %8592 = vmatmul.mubr.f32.gmra.mrb[0].mxu0 %v8246
  %v8593 = vpop.f32.mrb[0].mxu0
  %v8594 = vadd.f32 0.0, %v8593
  %v8595 = vpop.f32.mrb[0].mxu0
  %8596 = vmatprep.mubr.f32.mxu0 0.0
  %8597 = vmatmul.mubr.f32.gmra.mrb[0].mxu0 %v8247
  %v8598 = vpop.f32.mrb[0].mxu0
  %v8599 = vadd.f32 0.0, %v8598
  %v8600 = vpop.f32.mrb[0].mxu0
  %8601 = vmatprep.mubr.f32.mxu0 0.0
  %8602 = vmatmul.mubr.f32.gmra.mrb[0].mxu0 %v8248
  %v8603 = vpop.f32.mrb[0].mxu0
  %v8604 = vadd.f32 0.0, %v8603
  %v8605 = vpop.f32.mrb[0].mxu0
  %8606 = vmatprep.mubr.f32.mxu0 0.0
  %8607 = vmatmul.mubr.f32.gmra.mrb[0].mxu0 %v8249
  %v8608 = vpop.f32.mrb[0].mxu0
  %v8609 = vadd.f32 0.0, %v8608
  %v8610 = vpop.f32.mrb[0].mxu0
  %8611 = vmatprep.mubr.f32.mxu0 0.0
  %8612 = vmatmul.mubr.f32.gmra.mrb[0].mxu0 %v8250
  %v8613 = vpop.f32.mrb[0].mxu0
  %v8614 = vadd.f32 0.0, %v8613
  %v8615 = vpop.f32.mrb[0].mxu0
  %8616 = vmatprep.mubr.f32.mxu0 0.0
  %8617 = vmatmul.mubr.f32.gmra.mrb[0].mxu0 %v8251
  %v8618 = vpop.f32.mrb[0].mxu0
  %v8619 = vadd.f32 0.0, %v8618
  %v8620 = vpop.f32.mrb[0].mxu0
  %8621 = vmatprep.mubr.f32.mxu0 0.0
  %8622 = vmatmul.mubr.f32.gmra.mrb[0].mxu0 %v8252
  %v8623 = vpop.f32.mrb[0].mxu0
  %v8624 = vadd.f32 0.0, %v8623
  %v8625 = vpop.f32.mrb[0].mxu0
  %8626 = vmatprep.mubr.f32.mxu0 0.0
  %8627 = vmatmul.mubr.f32.gmra.mrb[0].mxu0 %v8253
  %v8628 = vpop.f32.mrb[0].mxu0
  %v8629 = vadd.f32 0.0, %v8628
  %v8630 = vpop.f32.mrb[0].mxu0
  %8631 = vmatprep.mubr.f32.mxu0 0.0
  %8632 = vmatmul.mubr.f32.gmra.mrb[0].mxu0 %v8254
  %v8633 = vpop.f32.mrb[0].mxu0
  %v8634 = vadd.f32 0.0, %v8633
  %v8635 = vpop.f32.mrb[0].mxu0
  %8636 = vmatprep.mubr.f32.mxu0 0.0
  %8637 = vmatmul.mubr.f32.gmra.mrb[0].mxu0 %v8255
  %v8638 = vpop.f32.mrb[0].mxu0
  %v8639 = vadd.f32 0.0, %v8638
  %v8640 = vpop.f32.mrb[0].mxu0
  %8641 = vmatprep.mubr.f32.mxu0 0.0
  %8642 = vmatmul.mubr.f32.gmra.mrb[0].mxu0 %v8256
  %v8643 = vpop.f32.mrb[0].mxu0
  %v8644 = vadd.f32 0.0, %v8643
  %v8645 = vpop.f32.mrb[0].mxu0
  %8646 = vmatprep.mubr.f32.mxu0 0.0
  %8647 = vmatmul.mubr.f32.gmra.mrb[0].mxu0 %v8257
  %v8648 = vpop.f32.mrb[0].mxu0
  %v8649 = vadd.f32 0.0, %v8648
  %v8650 = vpop.f32.mrb[0].mxu0
  %8651 = vmatprep.mubr.f32.mxu0 0.0
  %8652 = vmatmul.mubr.f32.gmra.mrb[0].mxu0 %v8258
  %v8653 = vpop.f32.mrb[0].mxu0
  %v8654 = vadd.f32 0.0, %v8653
  %v8655 = vpop.f32.mrb[0].mxu0
  %8656 = vmatprep.mubr.f32.mxu0 0.0
  %8657 = vmatmul.mubr.f32.gmra.mrb[0].mxu0 %v8259
  %v8658 = vpop.f32.mrb[0].mxu0
  %v8659 = vadd.f32 0.0, %v8658
  %v8660 = vpop.f32.mrb[0].mxu0
  %8661 = vdwg.mxu0
  %v8662 = vadd.f32 %v7492, %v8344
  %v8663 = vadd.f32 %v7493, %v8349
  %v8664 = vadd.f32 %v7494, %v8354
  %v8665 = vadd.f32 %v7495, %v8359
  %v8666 = vadd.f32 %v7496, %v8364
  %v8667 = vadd.f32 %v7497, %v8369
  %v8668 = vadd.f32 %v7498, %v8374
  %v8669 = vadd.f32 %v7499, %v8379
  %v8670 = vadd.f32 %v7500, %v8384
  %v8671 = vadd.f32 %v7501, %v8389
  %v8672 = vadd.f32 %v7502, %v8394
  %v8673 = vadd.f32 %v7503, %v8399
  %v8674 = vadd.f32 %v7504, %v8404
  %v8675 = vadd.f32 %v7505, %v8409
  %v8676 = vadd.f32 %v7506, %v8414
  %v8677 = vadd.f32 %v7507, %v8419
  %v8678 = vadd.f32 %v7508, %v8424
  %v8679 = vadd.f32 %v7509, %v8429
  %v8680 = vadd.f32 %v7510, %v8434
  %v8681 = vadd.f32 %v7511, %v8439
  %v8682 = vadd.f32 %v7512, %v8444
  %v8683 = vadd.f32 %v7513, %v8449
  %v8684 = vadd.f32 %v7514, %v8454
  %v8685 = vadd.f32 %v7515, %v8459
  %v8686 = vadd.f32 %v7516, %v8464
  %v8687 = vadd.f32 %v7517, %v8469
  %v8688 = vadd.f32 %v7518, %v8474
  %v8689 = vadd.f32 %v7519, %v8479
  %v8690 = vadd.f32 %v7520, %v8484
  %v8691 = vadd.f32 %v7521, %v8489
  %v8692 = vadd.f32 %v7522, %v8494
  %v8693 = vadd.f32 %v7523, %v8499
  %v8694 = vadd.f32 %v7524, %v8504
  %v8695 = vadd.f32 %v7525, %v8509
  %v8696 = vadd.f32 %v7526, %v8514
  %v8697 = vadd.f32 %v7527, %v8519
  %v8698 = vadd.f32 %v7528, %v8524
  %v8699 = vadd.f32 %v7529, %v8529
  %v8700 = vadd.f32 %v7530, %v8534
  %v8701 = vadd.f32 %v7531, %v8539
  %v8702 = vadd.f32 %v7532, %v8544
  %v8703 = vadd.f32 %v7533, %v8549
  %v8704 = vadd.f32 %v7534, %v8554
  %v8705 = vadd.f32 %v7535, %v8559
  %v8706 = vadd.f32 %v7536, %v8564
  %v8707 = vadd.f32 %v7537, %v8569
  %v8708 = vadd.f32 %v7538, %v8574
  %v8709 = vadd.f32 %v7539, %v8579
  %v8710 = vadd.f32 %v7540, %v8584
  %v8711 = vadd.f32 %v7541, %v8589
  %v8712 = vadd.f32 %v7542, %v8594
  %v8713 = vadd.f32 %v7543, %v8599
  %v8714 = vadd.f32 %v7544, %v8604
  %v8715 = vadd.f32 %v7545, %v8609
  %v8716 = vadd.f32 %v7546, %v8614
  %v8717 = vadd.f32 %v7547, %v8619
  %v8718 = vadd.f32 %v7548, %v8624
  %v8719 = vadd.f32 %v7549, %v8629
  %v8720 = vadd.f32 %v7550, %v8634
  %v8721 = vadd.f32 %v7551, %v8639
  %v8722 = vadd.f32 %v7552, %v8644
  %v8723 = vadd.f32 %v7553, %v8649
  %v8724 = vadd.f32 %v7554, %v8654
  %v8725 = vadd.f32 %v7555, %v8659
  %vm8726 = vmand %vm2280, %vm7620
  %vm8727 = vmand %vm2281, %vm7621
  %vm8728 = vmand %vm2282, %vm7622
  %vm8729 = vmand %vm2283, %vm7623
  %vm8730 = vmand %vm2284, %vm7624
  %vm8731 = vmand %vm2285, %vm7625
  %vm8732 = vmand %vm2286, %vm7626
  %vm8733 = vmand %vm2287, %vm7627
  %vm8734 = vmand %vm2288, %vm7628
  %vm8735 = vmand %vm2289, %vm7629
  %vm8736 = vmand %vm2290, %vm7630
  %vm8737 = vmand %vm2291, %vm7631
  %vm8738 = vmand %vm2292, %vm7632
  %vm8739 = vmand %vm2293, %vm7633
  %vm8740 = vmand %vm2294, %vm7634
  %vm8741 = vmand %vm2295, %vm7635
  %vm8742 = vmand %vm2296, %vm7636
  %vm8743 = vmand %vm2297, %vm7637
  %vm8744 = vmand %vm2298, %vm7638
  %vm8745 = vmand %vm2299, %vm7639
  %vm8746 = vmand %vm2300, %vm7640
  %vm8747 = vmand %vm2301, %vm7641
  %vm8748 = vmand %vm2302, %vm7642
  %vm8749 = vmand %vm2303, %vm7643
  %vm8750 = vmand %vm2304, %vm7644
  %vm8751 = vmand %vm2305, %vm7645
  %vm8752 = vmand %vm2306, %vm7646
  %vm8753 = vmand %vm2307, %vm7647
  %vm8754 = vmand %vm2308, %vm7648
  %vm8755 = vmand %vm2309, %vm7649
  %vm8756 = vmand %vm2310, %vm7650
  %vm8757 = vmand %vm2311, %vm7651
  %vm8758 = vmand %vm2312, %vm7652
  %vm8759 = vmand %vm2313, %vm7653
  %vm8760 = vmand %vm2314, %vm7654
  %vm8761 = vmand %vm2315, %vm7655
  %vm8762 = vmand %vm2316, %vm7656
  %vm8763 = vmand %vm2317, %vm7657
  %vm8764 = vmand %vm2318, %vm7658
  %vm8765 = vmand %vm2319, %vm7659
  %vm8766 = vmand %vm2320, %vm7660
  %vm8767 = vmand %vm2321, %vm7661
  %vm8768 = vmand %vm2322, %vm7662
  %vm8769 = vmand %vm2323, %vm7663
  %vm8770 = vmand %vm2324, %vm7664
  %vm8771 = vmand %vm2325, %vm7665
  %vm8772 = vmand %vm2326, %vm7666
  %vm8773 = vmand %vm2327, %vm7667
  %vm8774 = vmand %vm2328, %vm7668
  %vm8775 = vmand %vm2329, %vm7669
  %vm8776 = vmand %vm2330, %vm7670
  %vm8777 = vmand %vm2331, %vm7671
  %vm8778 = vmand %vm2332, %vm7672
  %vm8779 = vmand %vm2333, %vm7673
  %vm8780 = vmand %vm2334, %vm7674
  %vm8781 = vmand %vm2335, %vm7675
  %vm8782 = vmand %vm2336, %vm7676
  %vm8783 = vmand %vm2337, %vm7677
  %vm8784 = vmand %vm2338, %vm7678
  %vm8785 = vmand %vm2339, %vm7679
  %vm8786 = vmand %vm2340, %vm7680
  %vm8787 = vmand %vm2341, %vm7681
  %vm8788 = vmand %vm2342, %vm7682
  %vm8789 = vmand %vm2343, %vm7683
  %vm8790 = vmand %vm8726, %vm7748
  %vm8791 = vmand %vm8727, %vm7749
  %vm8792 = vmand %vm8728, %vm7750
  %vm8793 = vmand %vm8729, %vm7751
  %vm8794 = vmand %vm8730, %vm7752
  %vm8795 = vmand %vm8731, %vm7753
  %vm8796 = vmand %vm8732, %vm7754
  %vm8797 = vmand %vm8733, %vm7755
  %vm8798 = vmand %vm8734, %vm7756
  %vm8799 = vmand %vm8735, %vm7757
  %vm8800 = vmand %vm8736, %vm7758
  %vm8801 = vmand %vm8737, %vm7759
  %vm8802 = vmand %vm8738, %vm7760
  %vm8803 = vmand %vm8739, %vm7761
  %vm8804 = vmand %vm8740, %vm7762
  %vm8805 = vmand %vm8741, %vm7763
  %vm8806 = vmand %vm8742, %vm7764
  %vm8807 = vmand %vm8743, %vm7765
  %vm8808 = vmand %vm8744, %vm7766
  %vm8809 = vmand %vm8745, %vm7767
  %vm8810 = vmand %vm8746, %vm7768
  %vm8811 = vmand %vm8747, %vm7769
  %vm8812 = vmand %vm8748, %vm7770
  %vm8813 = vmand %vm8749, %vm7771
  %vm8814 = vmand %vm8750, %vm7772
  %vm8815 = vmand %vm8751, %vm7773
  %vm8816 = vmand %vm8752, %vm7774
  %vm8817 = vmand %vm8753, %vm7775
  %vm8818 = vmand %vm8754, %vm7776
  %vm8819 = vmand %vm8755, %vm7777
  %vm8820 = vmand %vm8756, %vm7778
  %vm8821 = vmand %vm8757, %vm7779
  %vm8822 = vmand %vm8758, %vm7780
  %vm8823 = vmand %vm8759, %vm7781
  %vm8824 = vmand %vm8760, %vm7782
  %vm8825 = vmand %vm8761, %vm7783
  %vm8826 = vmand %vm8762, %vm7784
  %vm8827 = vmand %vm8763, %vm7785
  %vm8828 = vmand %vm8764, %vm7786
  %vm8829 = vmand %vm8765, %vm7787
  %vm8830 = vmand %vm8766, %vm7788
  %vm8831 = vmand %vm8767, %vm7789
  %vm8832 = vmand %vm8768, %vm7790
  %vm8833 = vmand %vm8769, %vm7791
  %vm8834 = vmand %vm8770, %vm7792
  %vm8835 = vmand %vm8771, %vm7793
  %vm8836 = vmand %vm8772, %vm7794
  %vm8837 = vmand %vm8773, %vm7795
  %vm8838 = vmand %vm8774, %vm7796
  %vm8839 = vmand %vm8775, %vm7797
  %vm8840 = vmand %vm8776, %vm7798
  %vm8841 = vmand %vm8777, %vm7799
  %vm8842 = vmand %vm8778, %vm7800
  %vm8843 = vmand %vm8779, %vm7801
  %vm8844 = vmand %vm8780, %vm7802
  %vm8845 = vmand %vm8781, %vm7803
  %vm8846 = vmand %vm8782, %vm7804
  %vm8847 = vmand %vm8783, %vm7805
  %vm8848 = vmand %vm8784, %vm7806
  %vm8849 = vmand %vm8785, %vm7807
  %vm8850 = vmand %vm8786, %vm7808
  %vm8851 = vmand %vm8787, %vm7809
  %vm8852 = vmand %vm8788, %vm7810
  %vm8853 = vmand %vm8789, %vm7811
  %v8854 = vsel %vm8790, 1, 0
  %v8855 = vsel %vm8791, 1, 0
  %v8856 = vsel %vm8792, 1, 0
  %v8857 = vsel %vm8793, 1, 0
  %v8858 = vsel %vm8794, 1, 0
  %v8859 = vsel %vm8795, 1, 0
  %v8860 = vsel %vm8796, 1, 0
  %v8861 = vsel %vm8797, 1, 0
  %v8862 = vsel %vm8798, 1, 0
  %v8863 = vsel %vm8799, 1, 0
  %v8864 = vsel %vm8800, 1, 0
  %v8865 = vsel %vm8801, 1, 0
  %v8866 = vsel %vm8802, 1, 0
  %v8867 = vsel %vm8803, 1, 0
  %v8868 = vsel %vm8804, 1, 0
  %v8869 = vsel %vm8805, 1, 0
  %v8870 = vsel %vm8806, 1, 0
  %v8871 = vsel %vm8807, 1, 0
  %v8872 = vsel %vm8808, 1, 0
  %v8873 = vsel %vm8809, 1, 0
  %v8874 = vsel %vm8810, 1, 0
  %v8875 = vsel %vm8811, 1, 0
  %v8876 = vsel %vm8812, 1, 0
  %v8877 = vsel %vm8813, 1, 0
  %v8878 = vsel %vm8814, 1, 0
  %v8879 = vsel %vm8815, 1, 0
  %v8880 = vsel %vm8816, 1, 0
  %v8881 = vsel %vm8817, 1, 0
  %v8882 = vsel %vm8818, 1, 0
  %v8883 = vsel %vm8819, 1, 0
  %v8884 = vsel %vm8820, 1, 0
  %v8885 = vsel %vm8821, 1, 0
  %v8886 = vsel %vm8822, 1, 0
  %v8887 = vsel %vm8823, 1, 0
  %v8888 = vsel %vm8824, 1, 0
  %v8889 = vsel %vm8825, 1, 0
  %v8890 = vsel %vm8826, 1, 0
  %v8891 = vsel %vm8827, 1, 0
  %v8892 = vsel %vm8828, 1, 0
  %v8893 = vsel %vm8829, 1, 0
  %v8894 = vsel %vm8830, 1, 0
  %v8895 = vsel %vm8831, 1, 0
  %v8896 = vsel %vm8832, 1, 0
  %v8897 = vsel %vm8833, 1, 0
  %v8898 = vsel %vm8834, 1, 0
  %v8899 = vsel %vm8835, 1, 0
  %v8900 = vsel %vm8836, 1, 0
  %v8901 = vsel %vm8837, 1, 0
  %v8902 = vsel %vm8838, 1, 0
  %v8903 = vsel %vm8839, 1, 0
  %v8904 = vsel %vm8840, 1, 0
  %v8905 = vsel %vm8841, 1, 0
  %v8906 = vsel %vm8842, 1, 0
  %v8907 = vsel %vm8843, 1, 0
  %v8908 = vsel %vm8844, 1, 0
  %v8909 = vsel %vm8845, 1, 0
  %v8910 = vsel %vm8846, 1, 0
  %v8911 = vsel %vm8847, 1, 0
  %v8912 = vsel %vm8848, 1, 0
  %v8913 = vsel %vm8849, 1, 0
  %v8914 = vsel %vm8850, 1, 0
  %v8915 = vsel %vm8851, 1, 0
  %v8916 = vsel %vm8852, 1, 0
  %v8917 = vsel %vm8853, 1, 0
  %8918 = vset.pattern.permute.xlu0 0
  %8919 = vperm.xlu0 %8918, %v8854
  %v8920 = vpop.permute.xlu0 %8919
  %8921 = vset.pattern.permute.xlu0 0
  %8922 = vperm.xlu0 %8921, %v8855
  %v8923 = vpop.permute.xlu0 %8922
  %8924 = vset.pattern.permute.xlu0 0
  %8925 = vperm.xlu0 %8924, %v8856
  %v8926 = vpop.permute.xlu0 %8925
  %8927 = vset.pattern.permute.xlu0 0
  %8928 = vperm.xlu0 %8927, %v8857
  %v8929 = vpop.permute.xlu0 %8928
  %8930 = vset.pattern.permute.xlu0 0
  %8931 = vperm.xlu0 %8930, %v8858
  %v8932 = vpop.permute.xlu0 %8931
  %8933 = vset.pattern.permute.xlu0 0
  %8934 = vperm.xlu0 %8933, %v8859
  %v8935 = vpop.permute.xlu0 %8934
  %8936 = vset.pattern.permute.xlu0 0
  %8937 = vperm.xlu0 %8936, %v8860
  %v8938 = vpop.permute.xlu0 %8937
  %8939 = vset.pattern.permute.xlu0 0
  %8940 = vperm.xlu0 %8939, %v8861
  %v8941 = vpop.permute.xlu0 %8940
  %8942 = vset.pattern.permute.xlu0 0
  %8943 = vperm.xlu0 %8942, %v8862
  %v8944 = vpop.permute.xlu0 %8943
  %8945 = vset.pattern.permute.xlu0 0
  %8946 = vperm.xlu0 %8945, %v8863
  %v8947 = vpop.permute.xlu0 %8946
  %8948 = vset.pattern.permute.xlu0 0
  %8949 = vperm.xlu0 %8948, %v8864
  %v8950 = vpop.permute.xlu0 %8949
  %8951 = vset.pattern.permute.xlu0 0
  %8952 = vperm.xlu0 %8951, %v8865
  %v8953 = vpop.permute.xlu0 %8952
  %8954 = vset.pattern.permute.xlu0 0
  %8955 = vperm.xlu0 %8954, %v8866
  %v8956 = vpop.permute.xlu0 %8955
  %8957 = vset.pattern.permute.xlu0 0
  %8958 = vperm.xlu0 %8957, %v8867
  %v8959 = vpop.permute.xlu0 %8958
  %8960 = vset.pattern.permute.xlu0 0
  %8961 = vperm.xlu0 %8960, %v8868
  %v8962 = vpop.permute.xlu0 %8961
  %8963 = vset.pattern.permute.xlu0 0
  %8964 = vperm.xlu0 %8963, %v8869
  %v8965 = vpop.permute.xlu0 %8964
  %8966 = vset.pattern.permute.xlu0 0
  %8967 = vperm.xlu0 %8966, %v8870
  %v8968 = vpop.permute.xlu0 %8967
  %8969 = vset.pattern.permute.xlu0 0
  %8970 = vperm.xlu0 %8969, %v8871
  %v8971 = vpop.permute.xlu0 %8970
  %8972 = vset.pattern.permute.xlu0 0
  %8973 = vperm.xlu0 %8972, %v8872
  %v8974 = vpop.permute.xlu0 %8973
  %8975 = vset.pattern.permute.xlu0 0
  %8976 = vperm.xlu0 %8975, %v8873
  %v8977 = vpop.permute.xlu0 %8976
  %8978 = vset.pattern.permute.xlu0 0
  %8979 = vperm.xlu0 %8978, %v8874
  %v8980 = vpop.permute.xlu0 %8979
  %8981 = vset.pattern.permute.xlu0 0
  %8982 = vperm.xlu0 %8981, %v8875
  %v8983 = vpop.permute.xlu0 %8982
  %8984 = vset.pattern.permute.xlu0 0
  %8985 = vperm.xlu0 %8984, %v8876
  %v8986 = vpop.permute.xlu0 %8985
  %8987 = vset.pattern.permute.xlu0 0
  %8988 = vperm.xlu0 %8987, %v8877
  %v8989 = vpop.permute.xlu0 %8988
  %8990 = vset.pattern.permute.xlu0 0
  %8991 = vperm.xlu0 %8990, %v8878
  %v8992 = vpop.permute.xlu0 %8991
  %8993 = vset.pattern.permute.xlu0 0
  %8994 = vperm.xlu0 %8993, %v8879
  %v8995 = vpop.permute.xlu0 %8994
  %8996 = vset.pattern.permute.xlu0 0
  %8997 = vperm.xlu0 %8996, %v8880
  %v8998 = vpop.permute.xlu0 %8997
  %8999 = vset.pattern.permute.xlu0 0
  %9000 = vperm.xlu0 %8999, %v8881
  %v9001 = vpop.permute.xlu0 %9000
  %9002 = vset.pattern.permute.xlu0 0
  %9003 = vperm.xlu0 %9002, %v8882
  %v9004 = vpop.permute.xlu0 %9003
  %9005 = vset.pattern.permute.xlu0 0
  %9006 = vperm.xlu0 %9005, %v8883
  %v9007 = vpop.permute.xlu0 %9006
  %9008 = vset.pattern.permute.xlu0 0
  %9009 = vperm.xlu0 %9008, %v8884
  %v9010 = vpop.permute.xlu0 %9009
  %9011 = vset.pattern.permute.xlu0 0
  %9012 = vperm.xlu0 %9011, %v8885
  %v9013 = vpop.permute.xlu0 %9012
  %9014 = vset.pattern.permute.xlu0 0
  %9015 = vperm.xlu0 %9014, %v8886
  %v9016 = vpop.permute.xlu0 %9015
  %9017 = vset.pattern.permute.xlu0 0
  %9018 = vperm.xlu0 %9017, %v8887
  %v9019 = vpop.permute.xlu0 %9018
  %9020 = vset.pattern.permute.xlu0 0
  %9021 = vperm.xlu0 %9020, %v8888
  %v9022 = vpop.permute.xlu0 %9021
  %9023 = vset.pattern.permute.xlu0 0
  %9024 = vperm.xlu0 %9023, %v8889
  %v9025 = vpop.permute.xlu0 %9024
  %9026 = vset.pattern.permute.xlu0 0
  %9027 = vperm.xlu0 %9026, %v8890
  %v9028 = vpop.permute.xlu0 %9027
  %9029 = vset.pattern.permute.xlu0 0
  %9030 = vperm.xlu0 %9029, %v8891
  %v9031 = vpop.permute.xlu0 %9030
  %9032 = vset.pattern.permute.xlu0 0
  %9033 = vperm.xlu0 %9032, %v8892
  %v9034 = vpop.permute.xlu0 %9033
  %9035 = vset.pattern.permute.xlu0 0
  %9036 = vperm.xlu0 %9035, %v8893
  %v9037 = vpop.permute.xlu0 %9036
  %9038 = vset.pattern.permute.xlu0 0
  %9039 = vperm.xlu0 %9038, %v8894
  %v9040 = vpop.permute.xlu0 %9039
  %9041 = vset.pattern.permute.xlu0 0
  %9042 = vperm.xlu0 %9041, %v8895
  %v9043 = vpop.permute.xlu0 %9042
  %9044 = vset.pattern.permute.xlu0 0
  %9045 = vperm.xlu0 %9044, %v8896
  %v9046 = vpop.permute.xlu0 %9045
  %9047 = vset.pattern.permute.xlu0 0
  %9048 = vperm.xlu0 %9047, %v8897
  %v9049 = vpop.permute.xlu0 %9048
  %9050 = vset.pattern.permute.xlu0 0
  %9051 = vperm.xlu0 %9050, %v8898
  %v9052 = vpop.permute.xlu0 %9051
  %9053 = vset.pattern.permute.xlu0 0
  %9054 = vperm.xlu0 %9053, %v8899
  %v9055 = vpop.permute.xlu0 %9054
  %9056 = vset.pattern.permute.xlu0 0
  %9057 = vperm.xlu0 %9056, %v8900
  %v9058 = vpop.permute.xlu0 %9057
  %9059 = vset.pattern.permute.xlu0 0
  %9060 = vperm.xlu0 %9059, %v8901
  %v9061 = vpop.permute.xlu0 %9060
  %9062 = vset.pattern.permute.xlu0 0
  %9063 = vperm.xlu0 %9062, %v8902
  %v9064 = vpop.permute.xlu0 %9063
  %9065 = vset.pattern.permute.xlu0 0
  %9066 = vperm.xlu0 %9065, %v8903
  %v9067 = vpop.permute.xlu0 %9066
  %9068 = vset.pattern.permute.xlu0 0
  %9069 = vperm.xlu0 %9068, %v8904
  %v9070 = vpop.permute.xlu0 %9069
  %9071 = vset.pattern.permute.xlu0 0
  %9072 = vperm.xlu0 %9071, %v8905
  %v9073 = vpop.permute.xlu0 %9072
  %9074 = vset.pattern.permute.xlu0 0
  %9075 = vperm.xlu0 %9074, %v8906
  %v9076 = vpop.permute.xlu0 %9075
  %9077 = vset.pattern.permute.xlu0 0
  %9078 = vperm.xlu0 %9077, %v8907
  %v9079 = vpop.permute.xlu0 %9078
  %9080 = vset.pattern.permute.xlu0 0
  %9081 = vperm.xlu0 %9080, %v8908
  %v9082 = vpop.permute.xlu0 %9081
  %9083 = vset.pattern.permute.xlu0 0
  %9084 = vperm.xlu0 %9083, %v8909
  %v9085 = vpop.permute.xlu0 %9084
  %9086 = vset.pattern.permute.xlu0 0
  %9087 = vperm.xlu0 %9086, %v8910
  %v9088 = vpop.permute.xlu0 %9087
  %9089 = vset.pattern.permute.xlu0 0
  %9090 = vperm.xlu0 %9089, %v8911
  %v9091 = vpop.permute.xlu0 %9090
  %9092 = vset.pattern.permute.xlu0 0
  %9093 = vperm.xlu0 %9092, %v8912
  %v9094 = vpop.permute.xlu0 %9093
  %9095 = vset.pattern.permute.xlu0 0
  %9096 = vperm.xlu0 %9095, %v8913
  %v9097 = vpop.permute.xlu0 %9096
  %9098 = vset.pattern.permute.xlu0 0
  %9099 = vperm.xlu0 %9098, %v8914
  %v9100 = vpop.permute.xlu0 %9099
  %9101 = vset.pattern.permute.xlu0 0
  %9102 = vperm.xlu0 %9101, %v8915
  %v9103 = vpop.permute.xlu0 %9102
  %9104 = vset.pattern.permute.xlu0 0
  %9105 = vperm.xlu0 %9104, %v8916
  %v9106 = vpop.permute.xlu0 %9105
  %9107 = vset.pattern.permute.xlu0 0
  %9108 = vperm.xlu0 %9107, %v8917
  %v9109 = vpop.permute.xlu0 %9108
  %vm9110 = vcmp.eq.s32.totalorder %v8920, 1
  %vm9111 = vcmp.eq.s32.totalorder %v8923, 1
  %vm9112 = vcmp.eq.s32.totalorder %v8926, 1
  %vm9113 = vcmp.eq.s32.totalorder %v8929, 1
  %vm9114 = vcmp.eq.s32.totalorder %v8932, 1
  %vm9115 = vcmp.eq.s32.totalorder %v8935, 1
  %vm9116 = vcmp.eq.s32.totalorder %v8938, 1
  %vm9117 = vcmp.eq.s32.totalorder %v8941, 1
  %vm9118 = vcmp.eq.s32.totalorder %v8944, 1
  %vm9119 = vcmp.eq.s32.totalorder %v8947, 1
  %vm9120 = vcmp.eq.s32.totalorder %v8950, 1
  %vm9121 = vcmp.eq.s32.totalorder %v8953, 1
  %vm9122 = vcmp.eq.s32.totalorder %v8956, 1
  %vm9123 = vcmp.eq.s32.totalorder %v8959, 1
  %vm9124 = vcmp.eq.s32.totalorder %v8962, 1
  %vm9125 = vcmp.eq.s32.totalorder %v8965, 1
  %vm9126 = vcmp.eq.s32.totalorder %v8968, 1
  %vm9127 = vcmp.eq.s32.totalorder %v8971, 1
  %vm9128 = vcmp.eq.s32.totalorder %v8974, 1
  %vm9129 = vcmp.eq.s32.totalorder %v8977, 1
  %vm9130 = vcmp.eq.s32.totalorder %v8980, 1
  %vm9131 = vcmp.eq.s32.totalorder %v8983, 1
  %vm9132 = vcmp.eq.s32.totalorder %v8986, 1
  %vm9133 = vcmp.eq.s32.totalorder %v8989, 1
  %vm9134 = vcmp.eq.s32.totalorder %v8992, 1
  %vm9135 = vcmp.eq.s32.totalorder %v8995, 1
  %vm9136 = vcmp.eq.s32.totalorder %v8998, 1
  %vm9137 = vcmp.eq.s32.totalorder %v9001, 1
  %vm9138 = vcmp.eq.s32.totalorder %v9004, 1
  %vm9139 = vcmp.eq.s32.totalorder %v9007, 1
  %vm9140 = vcmp.eq.s32.totalorder %v9010, 1
  %vm9141 = vcmp.eq.s32.totalorder %v9013, 1
  %vm9142 = vcmp.eq.s32.totalorder %v9016, 1
  %vm9143 = vcmp.eq.s32.totalorder %v9019, 1
  %vm9144 = vcmp.eq.s32.totalorder %v9022, 1
  %vm9145 = vcmp.eq.s32.totalorder %v9025, 1
  %vm9146 = vcmp.eq.s32.totalorder %v9028, 1
  %vm9147 = vcmp.eq.s32.totalorder %v9031, 1
  %vm9148 = vcmp.eq.s32.totalorder %v9034, 1
  %vm9149 = vcmp.eq.s32.totalorder %v9037, 1
  %vm9150 = vcmp.eq.s32.totalorder %v9040, 1
  %vm9151 = vcmp.eq.s32.totalorder %v9043, 1
  %vm9152 = vcmp.eq.s32.totalorder %v9046, 1
  %vm9153 = vcmp.eq.s32.totalorder %v9049, 1
  %vm9154 = vcmp.eq.s32.totalorder %v9052, 1
  %vm9155 = vcmp.eq.s32.totalorder %v9055, 1
  %vm9156 = vcmp.eq.s32.totalorder %v9058, 1
  %vm9157 = vcmp.eq.s32.totalorder %v9061, 1
  %vm9158 = vcmp.eq.s32.totalorder %v9064, 1
  %vm9159 = vcmp.eq.s32.totalorder %v9067, 1
  %vm9160 = vcmp.eq.s32.totalorder %v9070, 1
  %vm9161 = vcmp.eq.s32.totalorder %v9073, 1
  %vm9162 = vcmp.eq.s32.totalorder %v9076, 1
  %vm9163 = vcmp.eq.s32.totalorder %v9079, 1
  %vm9164 = vcmp.eq.s32.totalorder %v9082, 1
  %vm9165 = vcmp.eq.s32.totalorder %v9085, 1
  %vm9166 = vcmp.eq.s32.totalorder %v9088, 1
  %vm9167 = vcmp.eq.s32.totalorder %v9091, 1
  %vm9168 = vcmp.eq.s32.totalorder %v9094, 1
  %vm9169 = vcmp.eq.s32.totalorder %v9097, 1
  %vm9170 = vcmp.eq.s32.totalorder %v9100, 1
  %vm9171 = vcmp.eq.s32.totalorder %v9103, 1
  %vm9172 = vcmp.eq.s32.totalorder %v9106, 1
  %vm9173 = vcmp.eq.s32.totalorder %v9109, 1
  %v9174 = vsel %vm9110, %v855, 0.0
  %v9175 = vsel %vm9111, %v856, 0.0
  %v9176 = vsel %vm9112, %v857, 0.0
  %v9177 = vsel %vm9113, %v858, 0.0
  %v9178 = vsel %vm9114, %v859, 0.0
  %v9179 = vsel %vm9115, %v860, 0.0
  %v9180 = vsel %vm9116, %v861, 0.0
  %v9181 = vsel %vm9117, %v862, 0.0
  %v9182 = vsel %vm9118, %v863, 0.0
  %v9183 = vsel %vm9119, %v864, 0.0
  %v9184 = vsel %vm9120, %v865, 0.0
  %v9185 = vsel %vm9121, %v866, 0.0
  %v9186 = vsel %vm9122, %v867, 0.0
  %v9187 = vsel %vm9123, %v868, 0.0
  %v9188 = vsel %vm9124, %v869, 0.0
  %v9189 = vsel %vm9125, %v870, 0.0
  %v9190 = vsel %vm9126, %v871, 0.0
  %v9191 = vsel %vm9127, %v872, 0.0
  %v9192 = vsel %vm9128, %v873, 0.0
  %v9193 = vsel %vm9129, %v874, 0.0
  %v9194 = vsel %vm9130, %v875, 0.0
  %v9195 = vsel %vm9131, %v876, 0.0
  %v9196 = vsel %vm9132, %v877, 0.0
  %v9197 = vsel %vm9133, %v878, 0.0
  %v9198 = vsel %vm9134, %v879, 0.0
  %v9199 = vsel %vm9135, %v880, 0.0
  %v9200 = vsel %vm9136, %v881, 0.0
  %v9201 = vsel %vm9137, %v882, 0.0
  %v9202 = vsel %vm9138, %v883, 0.0
  %v9203 = vsel %vm9139, %v884, 0.0
  %v9204 = vsel %vm9140, %v885, 0.0
  %v9205 = vsel %vm9141, %v886, 0.0
  %v9206 = vsel %vm9142, %v887, 0.0
  %v9207 = vsel %vm9143, %v888, 0.0
  %v9208 = vsel %vm9144, %v889, 0.0
  %v9209 = vsel %vm9145, %v890, 0.0
  %v9210 = vsel %vm9146, %v891, 0.0
  %v9211 = vsel %vm9147, %v892, 0.0
  %v9212 = vsel %vm9148, %v893, 0.0
  %v9213 = vsel %vm9149, %v894, 0.0
  %v9214 = vsel %vm9150, %v895, 0.0
  %v9215 = vsel %vm9151, %v896, 0.0
  %v9216 = vsel %vm9152, %v897, 0.0
  %v9217 = vsel %vm9153, %v898, 0.0
  %v9218 = vsel %vm9154, %v899, 0.0
  %v9219 = vsel %vm9155, %v900, 0.0
  %v9220 = vsel %vm9156, %v901, 0.0
  %v9221 = vsel %vm9157, %v902, 0.0
  %v9222 = vsel %vm9158, %v903, 0.0
  %v9223 = vsel %vm9159, %v904, 0.0
  %v9224 = vsel %vm9160, %v905, 0.0
  %v9225 = vsel %vm9161, %v906, 0.0
  %v9226 = vsel %vm9162, %v907, 0.0
  %v9227 = vsel %vm9163, %v908, 0.0
  %v9228 = vsel %vm9164, %v909, 0.0
  %v9229 = vsel %vm9165, %v910, 0.0
  %v9230 = vsel %vm9166, %v911, 0.0
  %v9231 = vsel %vm9167, %v912, 0.0
  %v9232 = vsel %vm9168, %v913, 0.0
  %v9233 = vsel %vm9169, %v914, 0.0
  %v9234 = vsel %vm9170, %v915, 0.0
  %v9235 = vsel %vm9171, %v916, 0.0
  %v9236 = vsel %vm9172, %v853, 0.0
  %v9237 = vsel %vm9173, %v854, 0.0
  %s9238 = scalar_lea.vmem %s5, 896
  %v9239 = vld [vmem:[%s9238] sm:$0xff]
  %v9240 = vld [vmem:[%s9238 + $0x8] sm:$0xff]
  %v9241 = vld [vmem:[%s9238 + $0x10] sm:$0xff]
  %v9242 = vld [vmem:[%s9238 + $0x18] sm:$0xff]
  %v9243 = vld [vmem:[%s9238 + $0x20] sm:$0xff]
  %v9244 = vld [vmem:[%s9238 + $0x28] sm:$0xff]
  %v9245 = vld [vmem:[%s9238 + $0x30] sm:$0xff]
  %v9246 = vld [vmem:[%s9238 + $0x38] sm:$0xff]
  %v9247 = vld [vmem:[%s9238 + $0x40] sm:$0xff]
  %v9248 = vld [vmem:[%s9238 + $0x48] sm:$0xff]
  %v9249 = vld [vmem:[%s9238 + $0x50] sm:$0xff]
  %v9250 = vld [vmem:[%s9238 + $0x58] sm:$0xff]
  %v9251 = vld [vmem:[%s9238 + $0x60] sm:$0xff]
  %v9252 = vld [vmem:[%s9238 + $0x68] sm:$0xff]
  %v9253 = vld [vmem:[%s9238 + $0x70] sm:$0xff]
  %v9254 = vld [vmem:[%s9238 + $0x78] sm:$0xff]
  %9255 = vmatprep.subr.mxu0 0.0
  %9256 = vmatpush1.msra.mxu0 %v9239
  %9257 = vmatprep.subr.mxu0 0.0
  %9258 = vmatpush1.msra.mxu0 %v9240
  %9259 = vmatprep.subr.mxu0 0.0
  %9260 = vmatpush1.msra.mxu0 %v9241
  %9261 = vmatprep.subr.mxu0 0.0
  %9262 = vmatpush1.msra.mxu0 %v9242
  %9263 = vmatprep.subr.mxu0 0.0
  %9264 = vmatpush1.msra.mxu0 %v9243
  %9265 = vmatprep.subr.mxu0 0.0
  %9266 = vmatpush1.msra.mxu0 %v9244
  %9267 = vmatprep.subr.mxu0 0.0
  %9268 = vmatpush1.msra.mxu0 %v9245
  %9269 = vmatprep.subr.mxu0 0.0
  %9270 = vmatpush1.msra.mxu0 %v9246
  %9271 = vmatprep.subr.mxu0 0.0
  %9272 = vmatpush1.msra.mxu0 %v9247
  %9273 = vmatprep.subr.mxu0 0.0
  %9274 = vmatpush1.msra.mxu0 %v9248
  %9275 = vmatprep.subr.mxu0 0.0
  %9276 = vmatpush1.msra.mxu0 %v9249
  %9277 = vmatprep.subr.mxu0 0.0
  %9278 = vmatpush1.msra.mxu0 %v9250
  %9279 = vmatprep.subr.mxu0 0.0
  %9280 = vmatpush1.msra.mxu0 %v9251
  %9281 = vmatprep.subr.mxu0 0.0
  %9282 = vmatpush1.msra.mxu0 %v9252
  %9283 = vmatprep.subr.mxu0 0.0
  %9284 = vmatpush1.msra.mxu0 %v9253
  %9285 = vmatprep.subr.mxu0 0.0
  %9286 = vmatpush1.msra.mxu0 %v9254
  %9287 = vmatprep.subr.mxu0 0.0
  %9288 = vmatpush1.msra.mxu0 0.0
  %9289 = vmatprep.subr.mxu0 0.0
  %9290 = vmatpush1.msra.mxu0 0.0
  %9291 = vmatprep.subr.mxu0 0.0
  %9292 = vmatpush1.msra.mxu0 0.0
  %9293 = vmatprep.subr.mxu0 0.0
  %9294 = vmatpush1.msra.mxu0 0.0
  %9295 = vmatprep.subr.mxu0 0.0
  %9296 = vmatpush1.msra.mxu0 0.0
  %9297 = vmatprep.subr.mxu0 0.0
  %9298 = vmatpush1.msra.mxu0 0.0
  %9299 = vmatprep.subr.mxu0 0.0
  %9300 = vmatpush1.msra.mxu0 0.0
  %9301 = vmatprep.subr.mxu0 0.0
  %9302 = vmatpush1.msra.mxu0 0.0
  %9303 = vmatprep.subr.mxu0 0.0
  %9304 = vmatpush1.msra.mxu0 0.0
  %9305 = vmatprep.subr.mxu0 0.0
  %9306 = vmatpush1.msra.mxu0 0.0
  %9307 = vmatprep.subr.mxu0 0.0
  %9308 = vmatpush1.msra.mxu0 0.0
  %9309 = vmatprep.subr.mxu0 0.0
  %9310 = vmatpush1.msra.mxu0 0.0
  %9311 = vmatprep.subr.mxu0 0.0
  %9312 = vmatpush1.msra.mxu0 0.0
  %9313 = vmatprep.subr.mxu0 0.0
  %9314 = vmatpush1.msra.mxu0 0.0
  %9315 = vmatprep.subr.mxu0 0.0
  %9316 = vmatpush1.msra.mxu0 0.0
  %9317 = vmatprep.subr.mxu0 0.0
  %9318 = vmatpush1.msra.mxu0 0.0
  %9319 = vmatprep.mubr.f32.mxu0 0.0
  %9320 = vmatmul.mubr.f32.gmra.mrb[0].mxu0 %v9174
  %v9321 = vpop.f32.mrb[0].mxu0
  %v9322 = vadd.f32 0.0, %v9321
  %v9323 = vpop.f32.mrb[0].mxu0
  %9324 = vmatprep.mubr.f32.mxu0 0.0
  %9325 = vmatmul.mubr.f32.gmra.mrb[0].mxu0 %v9175
  %v9326 = vpop.f32.mrb[0].mxu0
  %v9327 = vadd.f32 0.0, %v9326
  %v9328 = vpop.f32.mrb[0].mxu0
  %9329 = vmatprep.mubr.f32.mxu0 0.0
  %9330 = vmatmul.mubr.f32.gmra.mrb[0].mxu0 %v9176
  %v9331 = vpop.f32.mrb[0].mxu0
  %v9332 = vadd.f32 0.0, %v9331
  %v9333 = vpop.f32.mrb[0].mxu0
  %9334 = vmatprep.mubr.f32.mxu0 0.0
  %9335 = vmatmul.mubr.f32.gmra.mrb[0].mxu0 %v9177
  %v9336 = vpop.f32.mrb[0].mxu0
  %v9337 = vadd.f32 0.0, %v9336
  %v9338 = vpop.f32.mrb[0].mxu0
  %9339 = vmatprep.mubr.f32.mxu0 0.0
  %9340 = vmatmul.mubr.f32.gmra.mrb[0].mxu0 %v9178
  %v9341 = vpop.f32.mrb[0].mxu0
  %v9342 = vadd.f32 0.0, %v9341
  %v9343 = vpop.f32.mrb[0].mxu0
  %9344 = vmatprep.mubr.f32.mxu0 0.0
  %9345 = vmatmul.mubr.f32.gmra.mrb[0].mxu0 %v9179
  %v9346 = vpop.f32.mrb[0].mxu0
  %v9347 = vadd.f32 0.0, %v9346
  %v9348 = vpop.f32.mrb[0].mxu0
  %9349 = vmatprep.mubr.f32.mxu0 0.0
  %9350 = vmatmul.mubr.f32.gmra.mrb[0].mxu0 %v9180
  %v9351 = vpop.f32.mrb[0].mxu0
  %v9352 = vadd.f32 0.0, %v9351
  %v9353 = vpop.f32.mrb[0].mxu0
  %9354 = vmatprep.mubr.f32.mxu0 0.0
  %9355 = vmatmul.mubr.f32.gmra.mrb[0].mxu0 %v9181
  %v9356 = vpop.f32.mrb[0].mxu0
  %v9357 = vadd.f32 0.0, %v9356
  %v9358 = vpop.f32.mrb[0].mxu0
  %9359 = vmatprep.mubr.f32.mxu0 0.0
  %9360 = vmatmul.mubr.f32.gmra.mrb[0].mxu0 %v9182
  %v9361 = vpop.f32.mrb[0].mxu0
  %v9362 = vadd.f32 0.0, %v9361
  %v9363 = vpop.f32.mrb[0].mxu0
  %9364 = vmatprep.mubr.f32.mxu0 0.0
  %9365 = vmatmul.mubr.f32.gmra.mrb[0].mxu0 %v9183
  %v9366 = vpop.f32.mrb[0].mxu0
  %v9367 = vadd.f32 0.0, %v9366
  %v9368 = vpop.f32.mrb[0].mxu0
  %9369 = vmatprep.mubr.f32.mxu0 0.0
  %9370 = vmatmul.mubr.f32.gmra.mrb[0].mxu0 %v9184
  %v9371 = vpop.f32.mrb[0].mxu0
  %v9372 = vadd.f32 0.0, %v9371
  %v9373 = vpop.f32.mrb[0].mxu0
  %9374 = vmatprep.mubr.f32.mxu0 0.0
  %9375 = vmatmul.mubr.f32.gmra.mrb[0].mxu0 %v9185
  %v9376 = vpop.f32.mrb[0].mxu0
  %v9377 = vadd.f32 0.0, %v9376
  %v9378 = vpop.f32.mrb[0].mxu0
  %9379 = vmatprep.mubr.f32.mxu0 0.0
  %9380 = vmatmul.mubr.f32.gmra.mrb[0].mxu0 %v9186
  %v9381 = vpop.f32.mrb[0].mxu0
  %v9382 = vadd.f32 0.0, %v9381
  %v9383 = vpop.f32.mrb[0].mxu0
  %9384 = vmatprep.mubr.f32.mxu0 0.0
  %9385 = vmatmul.mubr.f32.gmra.mrb[0].mxu0 %v9187
  %v9386 = vpop.f32.mrb[0].mxu0
  %v9387 = vadd.f32 0.0, %v9386
  %v9388 = vpop.f32.mrb[0].mxu0
  %9389 = vmatprep.mubr.f32.mxu0 0.0
  %9390 = vmatmul.mubr.f32.gmra.mrb[0].mxu0 %v9188
  %v9391 = vpop.f32.mrb[0].mxu0
  %v9392 = vadd.f32 0.0, %v9391
  %v9393 = vpop.f32.mrb[0].mxu0
  %9394 = vmatprep.mubr.f32.mxu0 0.0
  %9395 = vmatmul.mubr.f32.gmra.mrb[0].mxu0 %v9189
  %v9396 = vpop.f32.mrb[0].mxu0
  %v9397 = vadd.f32 0.0, %v9396
  %v9398 = vpop.f32.mrb[0].mxu0
  %9399 = vmatprep.mubr.f32.mxu0 0.0
  %9400 = vmatmul.mubr.f32.gmra.mrb[0].mxu0 %v9190
  %v9401 = vpop.f32.mrb[0].mxu0
  %v9402 = vadd.f32 0.0, %v9401
  %v9403 = vpop.f32.mrb[0].mxu0
  %9404 = vmatprep.mubr.f32.mxu0 0.0
  %9405 = vmatmul.mubr.f32.gmra.mrb[0].mxu0 %v9191
  %v9406 = vpop.f32.mrb[0].mxu0
  %v9407 = vadd.f32 0.0, %v9406
  %v9408 = vpop.f32.mrb[0].mxu0
  %9409 = vmatprep.mubr.f32.mxu0 0.0
  %9410 = vmatmul.mubr.f32.gmra.mrb[0].mxu0 %v9192
  %v9411 = vpop.f32.mrb[0].mxu0
  %v9412 = vadd.f32 0.0, %v9411
  %v9413 = vpop.f32.mrb[0].mxu0
  %9414 = vmatprep.mubr.f32.mxu0 0.0
  %9415 = vmatmul.mubr.f32.gmra.mrb[0].mxu0 %v9193
  %v9416 = vpop.f32.mrb[0].mxu0
  %v9417 = vadd.f32 0.0, %v9416
  %v9418 = vpop.f32.mrb[0].mxu0
  %9419 = vmatprep.mubr.f32.mxu0 0.0
  %9420 = vmatmul.mubr.f32.gmra.mrb[0].mxu0 %v9194
  %v9421 = vpop.f32.mrb[0].mxu0
  %v9422 = vadd.f32 0.0, %v9421
  %v9423 = vpop.f32.mrb[0].mxu0
  %9424 = vmatprep.mubr.f32.mxu0 0.0
  %9425 = vmatmul.mubr.f32.gmra.mrb[0].mxu0 %v9195
  %v9426 = vpop.f32.mrb[0].mxu0
  %v9427 = vadd.f32 0.0, %v9426
  %v9428 = vpop.f32.mrb[0].mxu0
  %9429 = vmatprep.mubr.f32.mxu0 0.0
  %9430 = vmatmul.mubr.f32.gmra.mrb[0].mxu0 %v9196
  %v9431 = vpop.f32.mrb[0].mxu0
  %v9432 = vadd.f32 0.0, %v9431
  %v9433 = vpop.f32.mrb[0].mxu0
  %9434 = vmatprep.mubr.f32.mxu0 0.0
  %9435 = vmatmul.mubr.f32.gmra.mrb[0].mxu0 %v9197
  %v9436 = vpop.f32.mrb[0].mxu0
  %v9437 = vadd.f32 0.0, %v9436
  %v9438 = vpop.f32.mrb[0].mxu0
  %9439 = vmatprep.mubr.f32.mxu0 0.0
  %9440 = vmatmul.mubr.f32.gmra.mrb[0].mxu0 %v9198
  %v9441 = vpop.f32.mrb[0].mxu0
  %v9442 = vadd.f32 0.0, %v9441
  %v9443 = vpop.f32.mrb[0].mxu0
  %9444 = vmatprep.mubr.f32.mxu0 0.0
  %9445 = vmatmul.mubr.f32.gmra.mrb[0].mxu0 %v9199
  %v9446 = vpop.f32.mrb[0].mxu0
  %v9447 = vadd.f32 0.0, %v9446
  %v9448 = vpop.f32.mrb[0].mxu0
  %9449 = vmatprep.mubr.f32.mxu0 0.0
  %9450 = vmatmul.mubr.f32.gmra.mrb[0].mxu0 %v9200
  %v9451 = vpop.f32.mrb[0].mxu0
  %v9452 = vadd.f32 0.0, %v9451
  %v9453 = vpop.f32.mrb[0].mxu0
  %9454 = vmatprep.mubr.f32.mxu0 0.0
  %9455 = vmatmul.mubr.f32.gmra.mrb[0].mxu0 %v9201
  %v9456 = vpop.f32.mrb[0].mxu0
  %v9457 = vadd.f32 0.0, %v9456
  %v9458 = vpop.f32.mrb[0].mxu0
  %9459 = vmatprep.mubr.f32.mxu0 0.0
  %9460 = vmatmul.mubr.f32.gmra.mrb[0].mxu0 %v9202
  %v9461 = vpop.f32.mrb[0].mxu0
  %v9462 = vadd.f32 0.0, %v9461
  %v9463 = vpop.f32.mrb[0].mxu0
  %9464 = vmatprep.mubr.f32.mxu0 0.0
  %9465 = vmatmul.mubr.f32.gmra.mrb[0].mxu0 %v9203
  %v9466 = vpop.f32.mrb[0].mxu0
  %v9467 = vadd.f32 0.0, %v9466
  %v9468 = vpop.f32.mrb[0].mxu0
  %9469 = vmatprep.mubr.f32.mxu0 0.0
  %9470 = vmatmul.mubr.f32.gmra.mrb[0].mxu0 %v9204
  %v9471 = vpop.f32.mrb[0].mxu0
  %v9472 = vadd.f32 0.0, %v9471
  %v9473 = vpop.f32.mrb[0].mxu0
  %9474 = vmatprep.mubr.f32.mxu0 0.0
  %9475 = vmatmul.mubr.f32.gmra.mrb[0].mxu0 %v9205
  %v9476 = vpop.f32.mrb[0].mxu0
  %v9477 = vadd.f32 0.0, %v9476
  %v9478 = vpop.f32.mrb[0].mxu0
  %9479 = vmatprep.mubr.f32.mxu0 0.0
  %9480 = vmatmul.mubr.f32.gmra.mrb[0].mxu0 %v9206
  %v9481 = vpop.f32.mrb[0].mxu0
  %v9482 = vadd.f32 0.0, %v9481
  %v9483 = vpop.f32.mrb[0].mxu0
  %9484 = vmatprep.mubr.f32.mxu0 0.0
  %9485 = vmatmul.mubr.f32.gmra.mrb[0].mxu0 %v9207
  %v9486 = vpop.f32.mrb[0].mxu0
  %v9487 = vadd.f32 0.0, %v9486
  %v9488 = vpop.f32.mrb[0].mxu0
  %9489 = vmatprep.mubr.f32.mxu0 0.0
  %9490 = vmatmul.mubr.f32.gmra.mrb[0].mxu0 %v9208
  %v9491 = vpop.f32.mrb[0].mxu0
  %v9492 = vadd.f32 0.0, %v9491
  %v9493 = vpop.f32.mrb[0].mxu0
  %9494 = vmatprep.mubr.f32.mxu0 0.0
  %9495 = vmatmul.mubr.f32.gmra.mrb[0].mxu0 %v9209
  %v9496 = vpop.f32.mrb[0].mxu0
  %v9497 = vadd.f32 0.0, %v9496
  %v9498 = vpop.f32.mrb[0].mxu0
  %9499 = vmatprep.mubr.f32.mxu0 0.0
  %9500 = vmatmul.mubr.f32.gmra.mrb[0].mxu0 %v9210
  %v9501 = vpop.f32.mrb[0].mxu0
  %v9502 = vadd.f32 0.0, %v9501
  %v9503 = vpop.f32.mrb[0].mxu0
  %9504 = vmatprep.mubr.f32.mxu0 0.0
  %9505 = vmatmul.mubr.f32.gmra.mrb[0].mxu0 %v9211
  %v9506 = vpop.f32.mrb[0].mxu0
  %v9507 = vadd.f32 0.0, %v9506
  %v9508 = vpop.f32.mrb[0].mxu0
  %9509 = vmatprep.mubr.f32.mxu0 0.0
  %9510 = vmatmul.mubr.f32.gmra.mrb[0].mxu0 %v9212
  %v9511 = vpop.f32.mrb[0].mxu0
  %v9512 = vadd.f32 0.0, %v9511
  %v9513 = vpop.f32.mrb[0].mxu0
  %9514 = vmatprep.mubr.f32.mxu0 0.0
  %9515 = vmatmul.mubr.f32.gmra.mrb[0].mxu0 %v9213
  %v9516 = vpop.f32.mrb[0].mxu0
  %v9517 = vadd.f32 0.0, %v9516
  %v9518 = vpop.f32.mrb[0].mxu0
  %9519 = vmatprep.mubr.f32.mxu0 0.0
  %9520 = vmatmul.mubr.f32.gmra.mrb[0].mxu0 %v9214
  %v9521 = vpop.f32.mrb[0].mxu0
  %v9522 = vadd.f32 0.0, %v9521
  %v9523 = vpop.f32.mrb[0].mxu0
  %9524 = vmatprep.mubr.f32.mxu0 0.0
  %9525 = vmatmul.mubr.f32.gmra.mrb[0].mxu0 %v9215
  %v9526 = vpop.f32.mrb[0].mxu0
  %v9527 = vadd.f32 0.0, %v9526
  %v9528 = vpop.f32.mrb[0].mxu0
  %9529 = vmatprep.mubr.f32.mxu0 0.0
  %9530 = vmatmul.mubr.f32.gmra.mrb[0].mxu0 %v9216
  %v9531 = vpop.f32.mrb[0].mxu0
  %v9532 = vadd.f32 0.0, %v9531
  %v9533 = vpop.f32.mrb[0].mxu0
  %9534 = vmatprep.mubr.f32.mxu0 0.0
  %9535 = vmatmul.mubr.f32.gmra.mrb[0].mxu0 %v9217
  %v9536 = vpop.f32.mrb[0].mxu0
  %v9537 = vadd.f32 0.0, %v9536
  %v9538 = vpop.f32.mrb[0].mxu0
  %9539 = vmatprep.mubr.f32.mxu0 0.0
  %9540 = vmatmul.mubr.f32.gmra.mrb[0].mxu0 %v9218
  %v9541 = vpop.f32.mrb[0].mxu0
  %v9542 = vadd.f32 0.0, %v9541
  %v9543 = vpop.f32.mrb[0].mxu0
  %9544 = vmatprep.mubr.f32.mxu0 0.0
  %9545 = vmatmul.mubr.f32.gmra.mrb[0].mxu0 %v9219
  %v9546 = vpop.f32.mrb[0].mxu0
  %v9547 = vadd.f32 0.0, %v9546
  %v9548 = vpop.f32.mrb[0].mxu0
  %9549 = vmatprep.mubr.f32.mxu0 0.0
  %9550 = vmatmul.mubr.f32.gmra.mrb[0].mxu0 %v9220
  %v9551 = vpop.f32.mrb[0].mxu0
  %v9552 = vadd.f32 0.0, %v9551
  %v9553 = vpop.f32.mrb[0].mxu0
  %9554 = vmatprep.mubr.f32.mxu0 0.0
  %9555 = vmatmul.mubr.f32.gmra.mrb[0].mxu0 %v9221
  %v9556 = vpop.f32.mrb[0].mxu0
  %v9557 = vadd.f32 0.0, %v9556
  %v9558 = vpop.f32.mrb[0].mxu0
  %9559 = vmatprep.mubr.f32.mxu0 0.0
  %9560 = vmatmul.mubr.f32.gmra.mrb[0].mxu0 %v9222
  %v9561 = vpop.f32.mrb[0].mxu0
  %v9562 = vadd.f32 0.0, %v9561
  %v9563 = vpop.f32.mrb[0].mxu0
  %9564 = vmatprep.mubr.f32.mxu0 0.0
  %9565 = vmatmul.mubr.f32.gmra.mrb[0].mxu0 %v9223
  %v9566 = vpop.f32.mrb[0].mxu0
  %v9567 = vadd.f32 0.0, %v9566
  %v9568 = vpop.f32.mrb[0].mxu0
  %9569 = vmatprep.mubr.f32.mxu0 0.0
  %9570 = vmatmul.mubr.f32.gmra.mrb[0].mxu0 %v9224
  %v9571 = vpop.f32.mrb[0].mxu0
  %v9572 = vadd.f32 0.0, %v9571
  %v9573 = vpop.f32.mrb[0].mxu0
  %9574 = vmatprep.mubr.f32.mxu0 0.0
  %9575 = vmatmul.mubr.f32.gmra.mrb[0].mxu0 %v9225
  %v9576 = vpop.f32.mrb[0].mxu0
  %v9577 = vadd.f32 0.0, %v9576
  %v9578 = vpop.f32.mrb[0].mxu0
  %9579 = vmatprep.mubr.f32.mxu0 0.0
  %9580 = vmatmul.mubr.f32.gmra.mrb[0].mxu0 %v9226
  %v9581 = vpop.f32.mrb[0].mxu0
  %v9582 = vadd.f32 0.0, %v9581
  %v9583 = vpop.f32.mrb[0].mxu0
  %9584 = vmatprep.mubr.f32.mxu0 0.0
  %9585 = vmatmul.mubr.f32.gmra.mrb[0].mxu0 %v9227
  %v9586 = vpop.f32.mrb[0].mxu0
  %v9587 = vadd.f32 0.0, %v9586
  %v9588 = vpop.f32.mrb[0].mxu0
  %9589 = vmatprep.mubr.f32.mxu0 0.0
  %9590 = vmatmul.mubr.f32.gmra.mrb[0].mxu0 %v9228
  %v9591 = vpop.f32.mrb[0].mxu0
  %v9592 = vadd.f32 0.0, %v9591
  %v9593 = vpop.f32.mrb[0].mxu0
  %9594 = vmatprep.mubr.f32.mxu0 0.0
  %9595 = vmatmul.mubr.f32.gmra.mrb[0].mxu0 %v9229
  %v9596 = vpop.f32.mrb[0].mxu0
  %v9597 = vadd.f32 0.0, %v9596
  %v9598 = vpop.f32.mrb[0].mxu0
  %9599 = vmatprep.mubr.f32.mxu0 0.0
  %9600 = vmatmul.mubr.f32.gmra.mrb[0].mxu0 %v9230
  %v9601 = vpop.f32.mrb[0].mxu0
  %v9602 = vadd.f32 0.0, %v9601
  %v9603 = vpop.f32.mrb[0].mxu0
  %9604 = vmatprep.mubr.f32.mxu0 0.0
  %9605 = vmatmul.mubr.f32.gmra.mrb[0].mxu0 %v9231
  %v9606 = vpop.f32.mrb[0].mxu0
  %v9607 = vadd.f32 0.0, %v9606
  %v9608 = vpop.f32.mrb[0].mxu0
  %9609 = vmatprep.mubr.f32.mxu0 0.0
  %9610 = vmatmul.mubr.f32.gmra.mrb[0].mxu0 %v9232
  %v9611 = vpop.f32.mrb[0].mxu0
  %v9612 = vadd.f32 0.0, %v9611
  %v9613 = vpop.f32.mrb[0].mxu0
  %9614 = vmatprep.mubr.f32.mxu0 0.0
  %9615 = vmatmul.mubr.f32.gmra.mrb[0].mxu0 %v9233
  %v9616 = vpop.f32.mrb[0].mxu0
  %v9617 = vadd.f32 0.0, %v9616
  %v9618 = vpop.f32.mrb[0].mxu0
  %9619 = vmatprep.mubr.f32.mxu0 0.0
  %9620 = vmatmul.mubr.f32.gmra.mrb[0].mxu0 %v9234
  %v9621 = vpop.f32.mrb[0].mxu0
  %v9622 = vadd.f32 0.0, %v9621
  %v9623 = vpop.f32.mrb[0].mxu0
  %9624 = vmatprep.mubr.f32.mxu0 0.0
  %9625 = vmatmul.mubr.f32.gmra.mrb[0].mxu0 %v9235
  %v9626 = vpop.f32.mrb[0].mxu0
  %v9627 = vadd.f32 0.0, %v9626
  %v9628 = vpop.f32.mrb[0].mxu0
  %9629 = vmatprep.mubr.f32.mxu0 0.0
  %9630 = vmatmul.mubr.f32.gmra.mrb[0].mxu0 %v9236
  %v9631 = vpop.f32.mrb[0].mxu0
  %v9632 = vadd.f32 0.0, %v9631
  %v9633 = vpop.f32.mrb[0].mxu0
  %9634 = vmatprep.mubr.f32.mxu0 0.0
  %9635 = vmatmul.mubr.f32.gmra.mrb[0].mxu0 %v9237
  %v9636 = vpop.f32.mrb[0].mxu0
  %v9637 = vadd.f32 0.0, %v9636
  %v9638 = vpop.f32.mrb[0].mxu0
  %9639 = vdwg.mxu0
  %v9640 = vadd.f32 %v8662, %v9322
  %v9641 = vadd.f32 %v8663, %v9327
  %v9642 = vadd.f32 %v8664, %v9332
  %v9643 = vadd.f32 %v8665, %v9337
  %v9644 = vadd.f32 %v8666, %v9342
  %v9645 = vadd.f32 %v8667, %v9347
  %v9646 = vadd.f32 %v8668, %v9352
  %v9647 = vadd.f32 %v8669, %v9357
  %v9648 = vadd.f32 %v8670, %v9362
  %v9649 = vadd.f32 %v8671, %v9367
  %v9650 = vadd.f32 %v8672, %v9372
  %v9651 = vadd.f32 %v8673, %v9377
  %v9652 = vadd.f32 %v8674, %v9382
  %v9653 = vadd.f32 %v8675, %v9387
  %v9654 = vadd.f32 %v8676, %v9392
  %v9655 = vadd.f32 %v8677, %v9397
  %v9656 = vadd.f32 %v8678, %v9402
  %v9657 = vadd.f32 %v8679, %v9407
  %v9658 = vadd.f32 %v8680, %v9412
  %v9659 = vadd.f32 %v8681, %v9417
  %v9660 = vadd.f32 %v8682, %v9422
  %v9661 = vadd.f32 %v8683, %v9427
  %v9662 = vadd.f32 %v8684, %v9432
  %v9663 = vadd.f32 %v8685, %v9437
  %v9664 = vadd.f32 %v8686, %v9442
  %v9665 = vadd.f32 %v8687, %v9447
  %v9666 = vadd.f32 %v8688, %v9452
  %v9667 = vadd.f32 %v8689, %v9457
  %v9668 = vadd.f32 %v8690, %v9462
  %v9669 = vadd.f32 %v8691, %v9467
  %v9670 = vadd.f32 %v8692, %v9472
  %v9671 = vadd.f32 %v8693, %v9477
  %v9672 = vadd.f32 %v8694, %v9482
  %v9673 = vadd.f32 %v8695, %v9487
  %v9674 = vadd.f32 %v8696, %v9492
  %v9675 = vadd.f32 %v8697, %v9497
  %v9676 = vadd.f32 %v8698, %v9502
  %v9677 = vadd.f32 %v8699, %v9507
  %v9678 = vadd.f32 %v8700, %v9512
  %v9679 = vadd.f32 %v8701, %v9517
  %v9680 = vadd.f32 %v8702, %v9522
  %v9681 = vadd.f32 %v8703, %v9527
  %v9682 = vadd.f32 %v8704, %v9532
  %v9683 = vadd.f32 %v8705, %v9537
  %v9684 = vadd.f32 %v8706, %v9542
  %v9685 = vadd.f32 %v8707, %v9547
  %v9686 = vadd.f32 %v8708, %v9552
  %v9687 = vadd.f32 %v8709, %v9557
  %v9688 = vadd.f32 %v8710, %v9562
  %v9689 = vadd.f32 %v8711, %v9567
  %v9690 = vadd.f32 %v8712, %v9572
  %v9691 = vadd.f32 %v8713, %v9577
  %v9692 = vadd.f32 %v8714, %v9582
  %v9693 = vadd.f32 %v8715, %v9587
  %v9694 = vadd.f32 %v8716, %v9592
  %v9695 = vadd.f32 %v8717, %v9597
  %v9696 = vadd.f32 %v8718, %v9602
  %v9697 = vadd.f32 %v8719, %v9607
  %v9698 = vadd.f32 %v8720, %v9612
  %v9699 = vadd.f32 %v8721, %v9617
  %v9700 = vadd.f32 %v8722, %v9622
  %v9701 = vadd.f32 %v8723, %v9627
  %v9702 = vadd.f32 %v8724, %v9632
  %v9703 = vadd.f32 %v8725, %v9637
  %vm9704 = vmand %vm3964, %vm7620
  %vm9705 = vmand %vm3965, %vm7621
  %vm9706 = vmand %vm3966, %vm7622
  %vm9707 = vmand %vm3967, %vm7623
  %vm9708 = vmand %vm3968, %vm7624
  %vm9709 = vmand %vm3969, %vm7625
  %vm9710 = vmand %vm3970, %vm7626
  %vm9711 = vmand %vm3971, %vm7627
  %vm9712 = vmand %vm3972, %vm7628
  %vm9713 = vmand %vm3973, %vm7629
  %vm9714 = vmand %vm3974, %vm7630
  %vm9715 = vmand %vm3975, %vm7631
  %vm9716 = vmand %vm3976, %vm7632
  %vm9717 = vmand %vm3977, %vm7633
  %vm9718 = vmand %vm3978, %vm7634
  %vm9719 = vmand %vm3979, %vm7635
  %vm9720 = vmand %vm3980, %vm7636
  %vm9721 = vmand %vm3981, %vm7637
  %vm9722 = vmand %vm3982, %vm7638
  %vm9723 = vmand %vm3983, %vm7639
  %vm9724 = vmand %vm3984, %vm7640
  %vm9725 = vmand %vm3985, %vm7641
  %vm9726 = vmand %vm3986, %vm7642
  %vm9727 = vmand %vm3987, %vm7643
  %vm9728 = vmand %vm3988, %vm7644
  %vm9729 = vmand %vm3989, %vm7645
  %vm9730 = vmand %vm3990, %vm7646
  %vm9731 = vmand %vm3991, %vm7647
  %vm9732 = vmand %vm3992, %vm7648
  %vm9733 = vmand %vm3993, %vm7649
  %vm9734 = vmand %vm3994, %vm7650
  %vm9735 = vmand %vm3995, %vm7651
  %vm9736 = vmand %vm3996, %vm7652
  %vm9737 = vmand %vm3997, %vm7653
  %vm9738 = vmand %vm3998, %vm7654
  %vm9739 = vmand %vm3999, %vm7655
  %vm9740 = vmand %vm4000, %vm7656
  %vm9741 = vmand %vm4001, %vm7657
  %vm9742 = vmand %vm4002, %vm7658
  %vm9743 = vmand %vm4003, %vm7659
  %vm9744 = vmand %vm4004, %vm7660
  %vm9745 = vmand %vm4005, %vm7661
  %vm9746 = vmand %vm4006, %vm7662
  %vm9747 = vmand %vm4007, %vm7663
  %vm9748 = vmand %vm4008, %vm7664
  %vm9749 = vmand %vm4009, %vm7665
  %vm9750 = vmand %vm4010, %vm7666
  %vm9751 = vmand %vm4011, %vm7667
  %vm9752 = vmand %vm4012, %vm7668
  %vm9753 = vmand %vm4013, %vm7669
  %vm9754 = vmand %vm4014, %vm7670
  %vm9755 = vmand %vm4015, %vm7671
  %vm9756 = vmand %vm4016, %vm7672
  %vm9757 = vmand %vm4017, %vm7673
  %vm9758 = vmand %vm4018, %vm7674
  %vm9759 = vmand %vm4019, %vm7675
  %vm9760 = vmand %vm4020, %vm7676
  %vm9761 = vmand %vm4021, %vm7677
  %vm9762 = vmand %vm4022, %vm7678
  %vm9763 = vmand %vm4023, %vm7679
  %vm9764 = vmand %vm4024, %vm7680
  %vm9765 = vmand %vm4025, %vm7681
  %vm9766 = vmand %vm4026, %vm7682
  %vm9767 = vmand %vm4027, %vm7683
  %vm9768 = vmand %vm9704, %vm7748
  %vm9769 = vmand %vm9705, %vm7749
  %vm9770 = vmand %vm9706, %vm7750
  %vm9771 = vmand %vm9707, %vm7751
  %vm9772 = vmand %vm9708, %vm7752
  %vm9773 = vmand %vm9709, %vm7753
  %vm9774 = vmand %vm9710, %vm7754
  %vm9775 = vmand %vm9711, %vm7755
  %vm9776 = vmand %vm9712, %vm7756
  %vm9777 = vmand %vm9713, %vm7757
  %vm9778 = vmand %vm9714, %vm7758
  %vm9779 = vmand %vm9715, %vm7759
  %vm9780 = vmand %vm9716, %vm7760
  %vm9781 = vmand %vm9717, %vm7761
  %vm9782 = vmand %vm9718, %vm7762
  %vm9783 = vmand %vm9719, %vm7763
  %vm9784 = vmand %vm9720, %vm7764
  %vm9785 = vmand %vm9721, %vm7765
  %vm9786 = vmand %vm9722, %vm7766
  %vm9787 = vmand %vm9723, %vm7767
  %vm9788 = vmand %vm9724, %vm7768
  %vm9789 = vmand %vm9725, %vm7769
  %vm9790 = vmand %vm9726, %vm7770
  %vm9791 = vmand %vm9727, %vm7771
  %vm9792 = vmand %vm9728, %vm7772
  %vm9793 = vmand %vm9729, %vm7773
  %vm9794 = vmand %vm9730, %vm7774
  %vm9795 = vmand %vm9731, %vm7775
  %vm9796 = vmand %vm9732, %vm7776
  %vm9797 = vmand %vm9733, %vm7777
  %vm9798 = vmand %vm9734, %vm7778
  %vm9799 = vmand %vm9735, %vm7779
  %vm9800 = vmand %vm9736, %vm7780
  %vm9801 = vmand %vm9737, %vm7781
  %vm9802 = vmand %vm9738, %vm7782
  %vm9803 = vmand %vm9739, %vm7783
  %vm9804 = vmand %vm9740, %vm7784
  %vm9805 = vmand %vm9741, %vm7785
  %vm9806 = vmand %vm9742, %vm7786
  %vm9807 = vmand %vm9743, %vm7787
  %vm9808 = vmand %vm9744, %vm7788
  %vm9809 = vmand %vm9745, %vm7789
  %vm9810 = vmand %vm9746, %vm7790
  %vm9811 = vmand %vm9747, %vm7791
  %vm9812 = vmand %vm9748, %vm7792
  %vm9813 = vmand %vm9749, %vm7793
  %vm9814 = vmand %vm9750, %vm7794
  %vm9815 = vmand %vm9751, %vm7795
  %vm9816 = vmand %vm9752, %vm7796
  %vm9817 = vmand %vm9753, %vm7797
  %vm9818 = vmand %vm9754, %vm7798
  %vm9819 = vmand %vm9755, %vm7799
  %vm9820 = vmand %vm9756, %vm7800
  %vm9821 = vmand %vm9757, %vm7801
  %vm9822 = vmand %vm9758, %vm7802
  %vm9823 = vmand %vm9759, %vm7803
  %vm9824 = vmand %vm9760, %vm7804
  %vm9825 = vmand %vm9761, %vm7805
  %vm9826 = vmand %vm9762, %vm7806
  %vm9827 = vmand %vm9763, %vm7807
  %vm9828 = vmand %vm9764, %vm7808
  %vm9829 = vmand %vm9765, %vm7809
  %vm9830 = vmand %vm9766, %vm7810
  %vm9831 = vmand %vm9767, %vm7811
  %v9832 = vsel %vm9768, 1, 0
  %v9833 = vsel %vm9769, 1, 0
  %v9834 = vsel %vm9770, 1, 0
  %v9835 = vsel %vm9771, 1, 0
  %v9836 = vsel %vm9772, 1, 0
  %v9837 = vsel %vm9773, 1, 0
  %v9838 = vsel %vm9774, 1, 0
  %v9839 = vsel %vm9775, 1, 0
  %v9840 = vsel %vm9776, 1, 0
  %v9841 = vsel %vm9777, 1, 0
  %v9842 = vsel %vm9778, 1, 0
  %v9843 = vsel %vm9779, 1, 0
  %v9844 = vsel %vm9780, 1, 0
  %v9845 = vsel %vm9781, 1, 0
  %v9846 = vsel %vm9782, 1, 0
  %v9847 = vsel %vm9783, 1, 0
  %v9848 = vsel %vm9784, 1, 0
  %v9849 = vsel %vm9785, 1, 0
  %v9850 = vsel %vm9786, 1, 0
  %v9851 = vsel %vm9787, 1, 0
  %v9852 = vsel %vm9788, 1, 0
  %v9853 = vsel %vm9789, 1, 0
  %v9854 = vsel %vm9790, 1, 0
  %v9855 = vsel %vm9791, 1, 0
  %v9856 = vsel %vm9792, 1, 0
  %v9857 = vsel %vm9793, 1, 0
  %v9858 = vsel %vm9794, 1, 0
  %v9859 = vsel %vm9795, 1, 0
  %v9860 = vsel %vm9796, 1, 0
  %v9861 = vsel %vm9797, 1, 0
  %v9862 = vsel %vm9798, 1, 0
  %v9863 = vsel %vm9799, 1, 0
  %v9864 = vsel %vm9800, 1, 0
  %v9865 = vsel %vm9801, 1, 0
  %v9866 = vsel %vm9802, 1, 0
  %v9867 = vsel %vm9803, 1, 0
  %v9868 = vsel %vm9804, 1, 0
  %v9869 = vsel %vm9805, 1, 0
  %v9870 = vsel %vm9806, 1, 0
  %v9871 = vsel %vm9807, 1, 0
  %v9872 = vsel %vm9808, 1, 0
  %v9873 = vsel %vm9809, 1, 0
  %v9874 = vsel %vm9810, 1, 0
  %v9875 = vsel %vm9811, 1, 0
  %v9876 = vsel %vm9812, 1, 0
  %v9877 = vsel %vm9813, 1, 0
  %v9878 = vsel %vm9814, 1, 0
  %v9879 = vsel %vm9815, 1, 0
  %v9880 = vsel %vm9816, 1, 0
  %v9881 = vsel %vm9817, 1, 0
  %v9882 = vsel %vm9818, 1, 0
  %v9883 = vsel %vm9819, 1, 0
  %v9884 = vsel %vm9820, 1, 0
  %v9885 = vsel %vm9821, 1, 0
  %v9886 = vsel %vm9822, 1, 0
  %v9887 = vsel %vm9823, 1, 0
  %v9888 = vsel %vm9824, 1, 0
  %v9889 = vsel %vm9825, 1, 0
  %v9890 = vsel %vm9826, 1, 0
  %v9891 = vsel %vm9827, 1, 0
  %v9892 = vsel %vm9828, 1, 0
  %v9893 = vsel %vm9829, 1, 0
  %v9894 = vsel %vm9830, 1, 0
  %v9895 = vsel %vm9831, 1, 0
  %9896 = vset.pattern.permute.xlu0 0
  %9897 = vperm.xlu0 %9896, %v9832
  %v9898 = vpop.permute.xlu0 %9897
  %9899 = vset.pattern.permute.xlu0 0
  %9900 = vperm.xlu0 %9899, %v9833
  %v9901 = vpop.permute.xlu0 %9900
  %9902 = vset.pattern.permute.xlu0 0
  %9903 = vperm.xlu0 %9902, %v9834
  %v9904 = vpop.permute.xlu0 %9903
  %9905 = vset.pattern.permute.xlu0 0
  %9906 = vperm.xlu0 %9905, %v9835
  %v9907 = vpop.permute.xlu0 %9906
  %9908 = vset.pattern.permute.xlu0 0
  %9909 = vperm.xlu0 %9908, %v9836
  %v9910 = vpop.permute.xlu0 %9909
  %9911 = vset.pattern.permute.xlu0 0
  %9912 = vperm.xlu0 %9911, %v9837
  %v9913 = vpop.permute.xlu0 %9912
  %9914 = vset.pattern.permute.xlu0 0
  %9915 = vperm.xlu0 %9914, %v9838
  %v9916 = vpop.permute.xlu0 %9915
  %9917 = vset.pattern.permute.xlu0 0
  %9918 = vperm.xlu0 %9917, %v9839
  %v9919 = vpop.permute.xlu0 %9918
  %9920 = vset.pattern.permute.xlu0 0
  %9921 = vperm.xlu0 %9920, %v9840
  %v9922 = vpop.permute.xlu0 %9921
  %9923 = vset.pattern.permute.xlu0 0
  %9924 = vperm.xlu0 %9923, %v9841
  %v9925 = vpop.permute.xlu0 %9924
  %9926 = vset.pattern.permute.xlu0 0
  %9927 = vperm.xlu0 %9926, %v9842
  %v9928 = vpop.permute.xlu0 %9927
  %9929 = vset.pattern.permute.xlu0 0
  %9930 = vperm.xlu0 %9929, %v9843
  %v9931 = vpop.permute.xlu0 %9930
  %9932 = vset.pattern.permute.xlu0 0
  %9933 = vperm.xlu0 %9932, %v9844
  %v9934 = vpop.permute.xlu0 %9933
  %9935 = vset.pattern.permute.xlu0 0
  %9936 = vperm.xlu0 %9935, %v9845
  %v9937 = vpop.permute.xlu0 %9936
  %9938 = vset.pattern.permute.xlu0 0
  %9939 = vperm.xlu0 %9938, %v9846
  %v9940 = vpop.permute.xlu0 %9939
  %9941 = vset.pattern.permute.xlu0 0
  %9942 = vperm.xlu0 %9941, %v9847
  %v9943 = vpop.permute.xlu0 %9942
  %9944 = vset.pattern.permute.xlu0 0
  %9945 = vperm.xlu0 %9944, %v9848
  %v9946 = vpop.permute.xlu0 %9945
  %9947 = vset.pattern.permute.xlu0 0
  %9948 = vperm.xlu0 %9947, %v9849
  %v9949 = vpop.permute.xlu0 %9948
  %9950 = vset.pattern.permute.xlu0 0
  %9951 = vperm.xlu0 %9950, %v9850
  %v9952 = vpop.permute.xlu0 %9951
  %9953 = vset.pattern.permute.xlu0 0
  %9954 = vperm.xlu0 %9953, %v9851
  %v9955 = vpop.permute.xlu0 %9954
  %9956 = vset.pattern.permute.xlu0 0
  %9957 = vperm.xlu0 %9956, %v9852
  %v9958 = vpop.permute.xlu0 %9957
  %9959 = vset.pattern.permute.xlu0 0
  %9960 = vperm.xlu0 %9959, %v9853
  %v9961 = vpop.permute.xlu0 %9960
  %9962 = vset.pattern.permute.xlu0 0
  %9963 = vperm.xlu0 %9962, %v9854
  %v9964 = vpop.permute.xlu0 %9963
  %9965 = vset.pattern.permute.xlu0 0
  %9966 = vperm.xlu0 %9965, %v9855
  %v9967 = vpop.permute.xlu0 %9966
  %9968 = vset.pattern.permute.xlu0 0
  %9969 = vperm.xlu0 %9968, %v9856
  %v9970 = vpop.permute.xlu0 %9969
  %9971 = vset.pattern.permute.xlu0 0
  %9972 = vperm.xlu0 %9971, %v9857
  %v9973 = vpop.permute.xlu0 %9972
  %9974 = vset.pattern.permute.xlu0 0
  %9975 = vperm.xlu0 %9974, %v9858
  %v9976 = vpop.permute.xlu0 %9975
  %9977 = vset.pattern.permute.xlu0 0
  %9978 = vperm.xlu0 %9977, %v9859
  %v9979 = vpop.permute.xlu0 %9978
  %9980 = vset.pattern.permute.xlu0 0
  %9981 = vperm.xlu0 %9980, %v9860
  %v9982 = vpop.permute.xlu0 %9981
  %9983 = vset.pattern.permute.xlu0 0
  %9984 = vperm.xlu0 %9983, %v9861
  %v9985 = vpop.permute.xlu0 %9984
  %9986 = vset.pattern.permute.xlu0 0
  %9987 = vperm.xlu0 %9986, %v9862
  %v9988 = vpop.permute.xlu0 %9987
  %9989 = vset.pattern.permute.xlu0 0
  %9990 = vperm.xlu0 %9989, %v9863
  %v9991 = vpop.permute.xlu0 %9990
  %9992 = vset.pattern.permute.xlu0 0
  %9993 = vperm.xlu0 %9992, %v9864
  %v9994 = vpop.permute.xlu0 %9993
  %9995 = vset.pattern.permute.xlu0 0
  %9996 = vperm.xlu0 %9995, %v9865
  %v9997 = vpop.permute.xlu0 %9996
  %9998 = vset.pattern.permute.xlu0 0
  %9999 = vperm.xlu0 %9998, %v9866
  %v10000 = vpop.permute.xlu0 %9999
  %10001 = vset.pattern.permute.xlu0 0
  %10002 = vperm.xlu0 %10001, %v9867
  %v10003 = vpop.permute.xlu0 %10002
  %10004 = vset.pattern.permute.xlu0 0
  %10005 = vperm.xlu0 %10004, %v9868
  %v10006 = vpop.permute.xlu0 %10005
  %10007 = vset.pattern.permute.xlu0 0
  %10008 = vperm.xlu0 %10007, %v9869
  %v10009 = vpop.permute.xlu0 %10008
  %10010 = vset.pattern.permute.xlu0 0
  %10011 = vperm.xlu0 %10010, %v9870
  %v10012 = vpop.permute.xlu0 %10011
  %10013 = vset.pattern.permute.xlu0 0
  %10014 = vperm.xlu0 %10013, %v9871
  %v10015 = vpop.permute.xlu0 %10014
  %10016 = vset.pattern.permute.xlu0 0
  %10017 = vperm.xlu0 %10016, %v9872
  %v10018 = vpop.permute.xlu0 %10017
  %10019 = vset.pattern.permute.xlu0 0
  %10020 = vperm.xlu0 %10019, %v9873
  %v10021 = vpop.permute.xlu0 %10020
  %10022 = vset.pattern.permute.xlu0 0
  %10023 = vperm.xlu0 %10022, %v9874
  %v10024 = vpop.permute.xlu0 %10023
  %10025 = vset.pattern.permute.xlu0 0
  %10026 = vperm.xlu0 %10025, %v9875
  %v10027 = vpop.permute.xlu0 %10026
  %10028 = vset.pattern.permute.xlu0 0
  %10029 = vperm.xlu0 %10028, %v9876
  %v10030 = vpop.permute.xlu0 %10029
  %10031 = vset.pattern.permute.xlu0 0
  %10032 = vperm.xlu0 %10031, %v9877
  %v10033 = vpop.permute.xlu0 %10032
  %10034 = vset.pattern.permute.xlu0 0
  %10035 = vperm.xlu0 %10034, %v9878
  %v10036 = vpop.permute.xlu0 %10035
  %10037 = vset.pattern.permute.xlu0 0
  %10038 = vperm.xlu0 %10037, %v9879
  %v10039 = vpop.permute.xlu0 %10038
  %10040 = vset.pattern.permute.xlu0 0
  %10041 = vperm.xlu0 %10040, %v9880
  %v10042 = vpop.permute.xlu0 %10041
  %10043 = vset.pattern.permute.xlu0 0
  %10044 = vperm.xlu0 %10043, %v9881
  %v10045 = vpop.permute.xlu0 %10044
  %10046 = vset.pattern.permute.xlu0 0
  %10047 = vperm.xlu0 %10046, %v9882
  %v10048 = vpop.permute.xlu0 %10047
  %10049 = vset.pattern.permute.xlu0 0
  %10050 = vperm.xlu0 %10049, %v9883
  %v10051 = vpop.permute.xlu0 %10050
  %10052 = vset.pattern.permute.xlu0 0
  %10053 = vperm.xlu0 %10052, %v9884
  %v10054 = vpop.permute.xlu0 %10053
  %10055 = vset.pattern.permute.xlu0 0
  %10056 = vperm.xlu0 %10055, %v9885
  %v10057 = vpop.permute.xlu0 %10056
  %10058 = vset.pattern.permute.xlu0 0
  %10059 = vperm.xlu0 %10058, %v9886
  %v10060 = vpop.permute.xlu0 %10059
  %10061 = vset.pattern.permute.xlu0 0
  %10062 = vperm.xlu0 %10061, %v9887
  %v10063 = vpop.permute.xlu0 %10062
  %10064 = vset.pattern.permute.xlu0 0
  %10065 = vperm.xlu0 %10064, %v9888
  %v10066 = vpop.permute.xlu0 %10065
  %10067 = vset.pattern.permute.xlu0 0
  %10068 = vperm.xlu0 %10067, %v9889
  %v10069 = vpop.permute.xlu0 %10068
  %10070 = vset.pattern.permute.xlu0 0
  %10071 = vperm.xlu0 %10070, %v9890
  %v10072 = vpop.permute.xlu0 %10071
  %10073 = vset.pattern.permute.xlu0 0
  %10074 = vperm.xlu0 %10073, %v9891
  %v10075 = vpop.permute.xlu0 %10074
  %10076 = vset.pattern.permute.xlu0 0
  %10077 = vperm.xlu0 %10076, %v9892
  %v10078 = vpop.permute.xlu0 %10077
  %10079 = vset.pattern.permute.xlu0 0
  %10080 = vperm.xlu0 %10079, %v9893
  %v10081 = vpop.permute.xlu0 %10080
  %10082 = vset.pattern.permute.xlu0 0
  %10083 = vperm.xlu0 %10082, %v9894
  %v10084 = vpop.permute.xlu0 %10083
  %10085 = vset.pattern.permute.xlu0 0
  %10086 = vperm.xlu0 %10085, %v9895
  %v10087 = vpop.permute.xlu0 %10086
  %vm10088 = vcmp.eq.s32.totalorder %v9898, 1
  %vm10089 = vcmp.eq.s32.totalorder %v9901, 1
  %vm10090 = vcmp.eq.s32.totalorder %v9904, 1
  %vm10091 = vcmp.eq.s32.totalorder %v9907, 1
  %vm10092 = vcmp.eq.s32.totalorder %v9910, 1
  %vm10093 = vcmp.eq.s32.totalorder %v9913, 1
  %vm10094 = vcmp.eq.s32.totalorder %v9916, 1
  %vm10095 = vcmp.eq.s32.totalorder %v9919, 1
  %vm10096 = vcmp.eq.s32.totalorder %v9922, 1
  %vm10097 = vcmp.eq.s32.totalorder %v9925, 1
  %vm10098 = vcmp.eq.s32.totalorder %v9928, 1
  %vm10099 = vcmp.eq.s32.totalorder %v9931, 1
  %vm10100 = vcmp.eq.s32.totalorder %v9934, 1
  %vm10101 = vcmp.eq.s32.totalorder %v9937, 1
  %vm10102 = vcmp.eq.s32.totalorder %v9940, 1
  %vm10103 = vcmp.eq.s32.totalorder %v9943, 1
  %vm10104 = vcmp.eq.s32.totalorder %v9946, 1
  %vm10105 = vcmp.eq.s32.totalorder %v9949, 1
  %vm10106 = vcmp.eq.s32.totalorder %v9952, 1
  %vm10107 = vcmp.eq.s32.totalorder %v9955, 1
  %vm10108 = vcmp.eq.s32.totalorder %v9958, 1
  %vm10109 = vcmp.eq.s32.totalorder %v9961, 1
  %vm10110 = vcmp.eq.s32.totalorder %v9964, 1
  %vm10111 = vcmp.eq.s32.totalorder %v9967, 1
  %vm10112 = vcmp.eq.s32.totalorder %v9970, 1
  %vm10113 = vcmp.eq.s32.totalorder %v9973, 1
  %vm10114 = vcmp.eq.s32.totalorder %v9976, 1
  %vm10115 = vcmp.eq.s32.totalorder %v9979, 1
  %vm10116 = vcmp.eq.s32.totalorder %v9982, 1
  %vm10117 = vcmp.eq.s32.totalorder %v9985, 1
  %vm10118 = vcmp.eq.s32.totalorder %v9988, 1
  %vm10119 = vcmp.eq.s32.totalorder %v9991, 1
  %vm10120 = vcmp.eq.s32.totalorder %v9994, 1
  %vm10121 = vcmp.eq.s32.totalorder %v9997, 1
  %vm10122 = vcmp.eq.s32.totalorder %v10000, 1
  %vm10123 = vcmp.eq.s32.totalorder %v10003, 1
  %vm10124 = vcmp.eq.s32.totalorder %v10006, 1
  %vm10125 = vcmp.eq.s32.totalorder %v10009, 1
  %vm10126 = vcmp.eq.s32.totalorder %v10012, 1
  %vm10127 = vcmp.eq.s32.totalorder %v10015, 1
  %vm10128 = vcmp.eq.s32.totalorder %v10018, 1
  %vm10129 = vcmp.eq.s32.totalorder %v10021, 1
  %vm10130 = vcmp.eq.s32.totalorder %v10024, 1
  %vm10131 = vcmp.eq.s32.totalorder %v10027, 1
  %vm10132 = vcmp.eq.s32.totalorder %v10030, 1
  %vm10133 = vcmp.eq.s32.totalorder %v10033, 1
  %vm10134 = vcmp.eq.s32.totalorder %v10036, 1
  %vm10135 = vcmp.eq.s32.totalorder %v10039, 1
  %vm10136 = vcmp.eq.s32.totalorder %v10042, 1
  %vm10137 = vcmp.eq.s32.totalorder %v10045, 1
  %vm10138 = vcmp.eq.s32.totalorder %v10048, 1
  %vm10139 = vcmp.eq.s32.totalorder %v10051, 1
  %vm10140 = vcmp.eq.s32.totalorder %v10054, 1
  %vm10141 = vcmp.eq.s32.totalorder %v10057, 1
  %vm10142 = vcmp.eq.s32.totalorder %v10060, 1
  %vm10143 = vcmp.eq.s32.totalorder %v10063, 1
  %vm10144 = vcmp.eq.s32.totalorder %v10066, 1
  %vm10145 = vcmp.eq.s32.totalorder %v10069, 1
  %vm10146 = vcmp.eq.s32.totalorder %v10072, 1
  %vm10147 = vcmp.eq.s32.totalorder %v10075, 1
  %vm10148 = vcmp.eq.s32.totalorder %v10078, 1
  %vm10149 = vcmp.eq.s32.totalorder %v10081, 1
  %vm10150 = vcmp.eq.s32.totalorder %v10084, 1
  %vm10151 = vcmp.eq.s32.totalorder %v10087, 1
  %v10152 = vsel %vm10088, %v3768, 0.0
  %v10153 = vsel %vm10089, %v3767, 0.0
  %v10154 = vsel %vm10090, %v3766, 0.0
  %v10155 = vsel %vm10091, %v3765, 0.0
  %v10156 = vsel %vm10092, %v3764, 0.0
  %v10157 = vsel %vm10093, %v3763, 0.0
  %v10158 = vsel %vm10094, %v3762, 0.0
  %v10159 = vsel %vm10095, %v3761, 0.0
  %v10160 = vsel %vm10096, %v3760, 0.0
  %v10161 = vsel %vm10097, %v3759, 0.0
  %v10162 = vsel %vm10098, %v3758, 0.0
  %v10163 = vsel %vm10099, %v3757, 0.0
  %v10164 = vsel %vm10100, %v3756, 0.0
  %v10165 = vsel %vm10101, %v3755, 0.0
  %v10166 = vsel %vm10102, %v3754, 0.0
  %v10167 = vsel %vm10103, %v3753, 0.0
  %v10168 = vsel %vm10104, %v3752, 0.0
  %v10169 = vsel %vm10105, %v3751, 0.0
  %v10170 = vsel %vm10106, %v3750, 0.0
  %v10171 = vsel %vm10107, %v3749, 0.0
  %v10172 = vsel %vm10108, %v3748, 0.0
  %v10173 = vsel %vm10109, %v3747, 0.0
  %v10174 = vsel %vm10110, %v3746, 0.0
  %v10175 = vsel %vm10111, %v3745, 0.0
  %v10176 = vsel %vm10112, %v3744, 0.0
  %v10177 = vsel %vm10113, %v3743, 0.0
  %v10178 = vsel %vm10114, %v3742, 0.0
  %v10179 = vsel %vm10115, %v3741, 0.0
  %v10180 = vsel %vm10116, %v3740, 0.0
  %v10181 = vsel %vm10117, %v3739, 0.0
  %v10182 = vsel %vm10118, %v3738, 0.0
  %v10183 = vsel %vm10119, %v3737, 0.0
  %v10184 = vsel %vm10120, %v3736, 0.0
  %v10185 = vsel %vm10121, %v3735, 0.0
  %v10186 = vsel %vm10122, %v3734, 0.0
  %v10187 = vsel %vm10123, %v3733, 0.0
  %v10188 = vsel %vm10124, %v3732, 0.0
  %v10189 = vsel %vm10125, %v3731, 0.0
  %v10190 = vsel %vm10126, %v3730, 0.0
  %v10191 = vsel %vm10127, %v3729, 0.0
  %v10192 = vsel %vm10128, %v3728, 0.0
  %v10193 = vsel %vm10129, %v3727, 0.0
  %v10194 = vsel %vm10130, %v3726, 0.0
  %v10195 = vsel %vm10131, %v3725, 0.0
  %v10196 = vsel %vm10132, %v3724, 0.0
  %v10197 = vsel %vm10133, %v3723, 0.0
  %v10198 = vsel %vm10134, %v3722, 0.0
  %v10199 = vsel %vm10135, %v3721, 0.0
  %v10200 = vsel %vm10136, %v3720, 0.0
  %v10201 = vsel %vm10137, %v3719, 0.0
  %v10202 = vsel %vm10138, %v3718, 0.0
  %v10203 = vsel %vm10139, %v3717, 0.0
  %v10204 = vsel %vm10140, %v3716, 0.0
  %v10205 = vsel %vm10141, %v3715, 0.0
  %v10206 = vsel %vm10142, %v3714, 0.0
  %v10207 = vsel %vm10143, %v3713, 0.0
  %v10208 = vsel %vm10144, %v3712, 0.0
  %v10209 = vsel %vm10145, %v3711, 0.0
  %v10210 = vsel %vm10146, %v3710, 0.0
  %v10211 = vsel %vm10147, %v3709, 0.0
  %v10212 = vsel %vm10148, %v3708, 0.0
  %v10213 = vsel %vm10149, %v3771, 0.0
  %v10214 = vsel %vm10150, %v3770, 0.0
  %v10215 = vsel %vm10151, %v3769, 0.0
  %s10216 = scalar_lea.vmem %s5, 1024
  %v10217 = vld [vmem:[%s10216] sm:$0xff]
  %v10218 = vld [vmem:[%s10216 + $0x8] sm:$0xff]
  %v10219 = vld [vmem:[%s10216 + $0x10] sm:$0xff]
  %v10220 = vld [vmem:[%s10216 + $0x18] sm:$0xff]
  %v10221 = vld [vmem:[%s10216 + $0x20] sm:$0xff]
  %v10222 = vld [vmem:[%s10216 + $0x28] sm:$0xff]
  %v10223 = vld [vmem:[%s10216 + $0x30] sm:$0xff]
  %v10224 = vld [vmem:[%s10216 + $0x38] sm:$0xff]
  %v10225 = vld [vmem:[%s10216 + $0x40] sm:$0xff]
  %v10226 = vld [vmem:[%s10216 + $0x48] sm:$0xff]
  %v10227 = vld [vmem:[%s10216 + $0x50] sm:$0xff]
  %v10228 = vld [vmem:[%s10216 + $0x58] sm:$0xff]
  %v10229 = vld [vmem:[%s10216 + $0x60] sm:$0xff]
  %v10230 = vld [vmem:[%s10216 + $0x68] sm:$0xff]
  %v10231 = vld [vmem:[%s10216 + $0x70] sm:$0xff]
  %v10232 = vld [vmem:[%s10216 + $0x78] sm:$0xff]
  %10233 = vmatprep.subr.mxu0 0.0
  %10234 = vmatpush1.msra.mxu0 %v10217
  %10235 = vmatprep.subr.mxu0 0.0
  %10236 = vmatpush1.msra.mxu0 %v10218
  %10237 = vmatprep.subr.mxu0 0.0
  %10238 = vmatpush1.msra.mxu0 %v10219
  %10239 = vmatprep.subr.mxu0 0.0
  %10240 = vmatpush1.msra.mxu0 %v10220
  %10241 = vmatprep.subr.mxu0 0.0
  %10242 = vmatpush1.msra.mxu0 %v10221
  %10243 = vmatprep.subr.mxu0 0.0
  %10244 = vmatpush1.msra.mxu0 %v10222
  %10245 = vmatprep.subr.mxu0 0.0
  %10246 = vmatpush1.msra.mxu0 %v10223
  %10247 = vmatprep.subr.mxu0 0.0
  %10248 = vmatpush1.msra.mxu0 %v10224
  %10249 = vmatprep.subr.mxu0 0.0
  %10250 = vmatpush1.msra.mxu0 %v10225
  %10251 = vmatprep.subr.mxu0 0.0
  %10252 = vmatpush1.msra.mxu0 %v10226
  %10253 = vmatprep.subr.mxu0 0.0
  %10254 = vmatpush1.msra.mxu0 %v10227
  %10255 = vmatprep.subr.mxu0 0.0
  %10256 = vmatpush1.msra.mxu0 %v10228
  %10257 = vmatprep.subr.mxu0 0.0
  %10258 = vmatpush1.msra.mxu0 %v10229
  %10259 = vmatprep.subr.mxu0 0.0
  %10260 = vmatpush1.msra.mxu0 %v10230
  %10261 = vmatprep.subr.mxu0 0.0
  %10262 = vmatpush1.msra.mxu0 %v10231
  %10263 = vmatprep.subr.mxu0 0.0
  %10264 = vmatpush1.msra.mxu0 %v10232
  %10265 = vmatprep.subr.mxu0 0.0
  %10266 = vmatpush1.msra.mxu0 0.0
  %10267 = vmatprep.subr.mxu0 0.0
  %10268 = vmatpush1.msra.mxu0 0.0
  %10269 = vmatprep.subr.mxu0 0.0
  %10270 = vmatpush1.msra.mxu0 0.0
  %10271 = vmatprep.subr.mxu0 0.0
  %10272 = vmatpush1.msra.mxu0 0.0
  %10273 = vmatprep.subr.mxu0 0.0
  %10274 = vmatpush1.msra.mxu0 0.0
  %10275 = vmatprep.subr.mxu0 0.0
  %10276 = vmatpush1.msra.mxu0 0.0
  %10277 = vmatprep.subr.mxu0 0.0
  %10278 = vmatpush1.msra.mxu0 0.0
  %10279 = vmatprep.subr.mxu0 0.0
  %10280 = vmatpush1.msra.mxu0 0.0
  %10281 = vmatprep.subr.mxu0 0.0
  %10282 = vmatpush1.msra.mxu0 0.0
  %10283 = vmatprep.subr.mxu0 0.0
  %10284 = vmatpush1.msra.mxu0 0.0
  %10285 = vmatprep.subr.mxu0 0.0
  %10286 = vmatpush1.msra.mxu0 0.0
  %10287 = vmatprep.subr.mxu0 0.0
  %10288 = vmatpush1.msra.mxu0 0.0
  %10289 = vmatprep.subr.mxu0 0.0
  %10290 = vmatpush1.msra.mxu0 0.0
  %10291 = vmatprep.subr.mxu0 0.0
  %10292 = vmatpush1.msra.mxu0 0.0
  %10293 = vmatprep.subr.mxu0 0.0
  %10294 = vmatpush1.msra.mxu0 0.0
  %10295 = vmatprep.subr.mxu0 0.0
  %10296 = vmatpush1.msra.mxu0 0.0
  %10297 = vmatprep.mubr.f32.mxu0 0.0
  %10298 = vmatmul.mubr.f32.gmra.mrb[0].mxu0 %v10152
  %v10299 = vpop.f32.mrb[0].mxu0
  %v10300 = vadd.f32 0.0, %v10299
  %v10301 = vpop.f32.mrb[0].mxu0
  %10302 = vmatprep.mubr.f32.mxu0 0.0
  %10303 = vmatmul.mubr.f32.gmra.mrb[0].mxu0 %v10153
  %v10304 = vpop.f32.mrb[0].mxu0
  %v10305 = vadd.f32 0.0, %v10304
  %v10306 = vpop.f32.mrb[0].mxu0
  %10307 = vmatprep.mubr.f32.mxu0 0.0
  %10308 = vmatmul.mubr.f32.gmra.mrb[0].mxu0 %v10154
  %v10309 = vpop.f32.mrb[0].mxu0
  %v10310 = vadd.f32 0.0, %v10309
  %v10311 = vpop.f32.mrb[0].mxu0
  %10312 = vmatprep.mubr.f32.mxu0 0.0
  %10313 = vmatmul.mubr.f32.gmra.mrb[0].mxu0 %v10155
  %v10314 = vpop.f32.mrb[0].mxu0
  %v10315 = vadd.f32 0.0, %v10314
  %v10316 = vpop.f32.mrb[0].mxu0
  %10317 = vmatprep.mubr.f32.mxu0 0.0
  %10318 = vmatmul.mubr.f32.gmra.mrb[0].mxu0 %v10156
  %v10319 = vpop.f32.mrb[0].mxu0
  %v10320 = vadd.f32 0.0, %v10319
  %v10321 = vpop.f32.mrb[0].mxu0
  %10322 = vmatprep.mubr.f32.mxu0 0.0
  %10323 = vmatmul.mubr.f32.gmra.mrb[0].mxu0 %v10157
  %v10324 = vpop.f32.mrb[0].mxu0
  %v10325 = vadd.f32 0.0, %v10324
  %v10326 = vpop.f32.mrb[0].mxu0
  %10327 = vmatprep.mubr.f32.mxu0 0.0
  %10328 = vmatmul.mubr.f32.gmra.mrb[0].mxu0 %v10158
  %v10329 = vpop.f32.mrb[0].mxu0
  %v10330 = vadd.f32 0.0, %v10329
  %v10331 = vpop.f32.mrb[0].mxu0
  %10332 = vmatprep.mubr.f32.mxu0 0.0
  %10333 = vmatmul.mubr.f32.gmra.mrb[0].mxu0 %v10159
  %v10334 = vpop.f32.mrb[0].mxu0
  %v10335 = vadd.f32 0.0, %v10334
  %v10336 = vpop.f32.mrb[0].mxu0
  %10337 = vmatprep.mubr.f32.mxu0 0.0
  %10338 = vmatmul.mubr.f32.gmra.mrb[0].mxu0 %v10160
  %v10339 = vpop.f32.mrb[0].mxu0
  %v10340 = vadd.f32 0.0, %v10339
  %v10341 = vpop.f32.mrb[0].mxu0
  %10342 = vmatprep.mubr.f32.mxu0 0.0
  %10343 = vmatmul.mubr.f32.gmra.mrb[0].mxu0 %v10161
  %v10344 = vpop.f32.mrb[0].mxu0
  %v10345 = vadd.f32 0.0, %v10344
  %v10346 = vpop.f32.mrb[0].mxu0
  %10347 = vmatprep.mubr.f32.mxu0 0.0
  %10348 = vmatmul.mubr.f32.gmra.mrb[0].mxu0 %v10162
  %v10349 = vpop.f32.mrb[0].mxu0
  %v10350 = vadd.f32 0.0, %v10349
  %v10351 = vpop.f32.mrb[0].mxu0
  %10352 = vmatprep.mubr.f32.mxu0 0.0
  %10353 = vmatmul.mubr.f32.gmra.mrb[0].mxu0 %v10163
  %v10354 = vpop.f32.mrb[0].mxu0
  %v10355 = vadd.f32 0.0, %v10354
  %v10356 = vpop.f32.mrb[0].mxu0
  %10357 = vmatprep.mubr.f32.mxu0 0.0
  %10358 = vmatmul.mubr.f32.gmra.mrb[0].mxu0 %v10164
  %v10359 = vpop.f32.mrb[0].mxu0
  %v10360 = vadd.f32 0.0, %v10359
  %v10361 = vpop.f32.mrb[0].mxu0
  %10362 = vmatprep.mubr.f32.mxu0 0.0
  %10363 = vmatmul.mubr.f32.gmra.mrb[0].mxu0 %v10165
  %v10364 = vpop.f32.mrb[0].mxu0
  %v10365 = vadd.f32 0.0, %v10364
  %v10366 = vpop.f32.mrb[0].mxu0
  %10367 = vmatprep.mubr.f32.mxu0 0.0
  %10368 = vmatmul.mubr.f32.gmra.mrb[0].mxu0 %v10166
  %v10369 = vpop.f32.mrb[0].mxu0
  %v10370 = vadd.f32 0.0, %v10369
  %v10371 = vpop.f32.mrb[0].mxu0
  %10372 = vmatprep.mubr.f32.mxu0 0.0
  %10373 = vmatmul.mubr.f32.gmra.mrb[0].mxu0 %v10167
  %v10374 = vpop.f32.mrb[0].mxu0
  %v10375 = vadd.f32 0.0, %v10374
  %v10376 = vpop.f32.mrb[0].mxu0
  %10377 = vmatprep.mubr.f32.mxu0 0.0
  %10378 = vmatmul.mubr.f32.gmra.mrb[0].mxu0 %v10168
  %v10379 = vpop.f32.mrb[0].mxu0
  %v10380 = vadd.f32 0.0, %v10379
  %v10381 = vpop.f32.mrb[0].mxu0
  %10382 = vmatprep.mubr.f32.mxu0 0.0
  %10383 = vmatmul.mubr.f32.gmra.mrb[0].mxu0 %v10169
  %v10384 = vpop.f32.mrb[0].mxu0
  %v10385 = vadd.f32 0.0, %v10384
  %v10386 = vpop.f32.mrb[0].mxu0
  %10387 = vmatprep.mubr.f32.mxu0 0.0
  %10388 = vmatmul.mubr.f32.gmra.mrb[0].mxu0 %v10170
  %v10389 = vpop.f32.mrb[0].mxu0
  %v10390 = vadd.f32 0.0, %v10389
  %v10391 = vpop.f32.mrb[0].mxu0
  %10392 = vmatprep.mubr.f32.mxu0 0.0
  %10393 = vmatmul.mubr.f32.gmra.mrb[0].mxu0 %v10171
  %v10394 = vpop.f32.mrb[0].mxu0
  %v10395 = vadd.f32 0.0, %v10394
  %v10396 = vpop.f32.mrb[0].mxu0
  %10397 = vmatprep.mubr.f32.mxu0 0.0
  %10398 = vmatmul.mubr.f32.gmra.mrb[0].mxu0 %v10172
  %v10399 = vpop.f32.mrb[0].mxu0
  %v10400 = vadd.f32 0.0, %v10399
  %v10401 = vpop.f32.mrb[0].mxu0
  %10402 = vmatprep.mubr.f32.mxu0 0.0
  %10403 = vmatmul.mubr.f32.gmra.mrb[0].mxu0 %v10173
  %v10404 = vpop.f32.mrb[0].mxu0
  %v10405 = vadd.f32 0.0, %v10404
  %v10406 = vpop.f32.mrb[0].mxu0
  %10407 = vmatprep.mubr.f32.mxu0 0.0
  %10408 = vmatmul.mubr.f32.gmra.mrb[0].mxu0 %v10174
  %v10409 = vpop.f32.mrb[0].mxu0
  %v10410 = vadd.f32 0.0, %v10409
  %v10411 = vpop.f32.mrb[0].mxu0
  %10412 = vmatprep.mubr.f32.mxu0 0.0
  %10413 = vmatmul.mubr.f32.gmra.mrb[0].mxu0 %v10175
  %v10414 = vpop.f32.mrb[0].mxu0
  %v10415 = vadd.f32 0.0, %v10414
  %v10416 = vpop.f32.mrb[0].mxu0
  %10417 = vmatprep.mubr.f32.mxu0 0.0
  %10418 = vmatmul.mubr.f32.gmra.mrb[0].mxu0 %v10176
  %v10419 = vpop.f32.mrb[0].mxu0
  %v10420 = vadd.f32 0.0, %v10419
  %v10421 = vpop.f32.mrb[0].mxu0
  %10422 = vmatprep.mubr.f32.mxu0 0.0
  %10423 = vmatmul.mubr.f32.gmra.mrb[0].mxu0 %v10177
  %v10424 = vpop.f32.mrb[0].mxu0
  %v10425 = vadd.f32 0.0, %v10424
  %v10426 = vpop.f32.mrb[0].mxu0
  %10427 = vmatprep.mubr.f32.mxu0 0.0
  %10428 = vmatmul.mubr.f32.gmra.mrb[0].mxu0 %v10178
  %v10429 = vpop.f32.mrb[0].mxu0
  %v10430 = vadd.f32 0.0, %v10429
  %v10431 = vpop.f32.mrb[0].mxu0
  %10432 = vmatprep.mubr.f32.mxu0 0.0
  %10433 = vmatmul.mubr.f32.gmra.mrb[0].mxu0 %v10179
  %v10434 = vpop.f32.mrb[0].mxu0
  %v10435 = vadd.f32 0.0, %v10434
  %v10436 = vpop.f32.mrb[0].mxu0
  %10437 = vmatprep.mubr.f32.mxu0 0.0
  %10438 = vmatmul.mubr.f32.gmra.mrb[0].mxu0 %v10180
  %v10439 = vpop.f32.mrb[0].mxu0
  %v10440 = vadd.f32 0.0, %v10439
  %v10441 = vpop.f32.mrb[0].mxu0
  %10442 = vmatprep.mubr.f32.mxu0 0.0
  %10443 = vmatmul.mubr.f32.gmra.mrb[0].mxu0 %v10181
  %v10444 = vpop.f32.mrb[0].mxu0
  %v10445 = vadd.f32 0.0, %v10444
  %v10446 = vpop.f32.mrb[0].mxu0
  %10447 = vmatprep.mubr.f32.mxu0 0.0
  %10448 = vmatmul.mubr.f32.gmra.mrb[0].mxu0 %v10182
  %v10449 = vpop.f32.mrb[0].mxu0
  %v10450 = vadd.f32 0.0, %v10449
  %v10451 = vpop.f32.mrb[0].mxu0
  %10452 = vmatprep.mubr.f32.mxu0 0.0
  %10453 = vmatmul.mubr.f32.gmra.mrb[0].mxu0 %v10183
  %v10454 = vpop.f32.mrb[0].mxu0
  %v10455 = vadd.f32 0.0, %v10454
  %v10456 = vpop.f32.mrb[0].mxu0
  %10457 = vmatprep.mubr.f32.mxu0 0.0
  %10458 = vmatmul.mubr.f32.gmra.mrb[0].mxu0 %v10184
  %v10459 = vpop.f32.mrb[0].mxu0
  %v10460 = vadd.f32 0.0, %v10459
  %v10461 = vpop.f32.mrb[0].mxu0
  %10462 = vmatprep.mubr.f32.mxu0 0.0
  %10463 = vmatmul.mubr.f32.gmra.mrb[0].mxu0 %v10185
  %v10464 = vpop.f32.mrb[0].mxu0
  %v10465 = vadd.f32 0.0, %v10464
  %v10466 = vpop.f32.mrb[0].mxu0
  %10467 = vmatprep.mubr.f32.mxu0 0.0
  %10468 = vmatmul.mubr.f32.gmra.mrb[0].mxu0 %v10186
  %v10469 = vpop.f32.mrb[0].mxu0
  %v10470 = vadd.f32 0.0, %v10469
  %v10471 = vpop.f32.mrb[0].mxu0
  %10472 = vmatprep.mubr.f32.mxu0 0.0
  %10473 = vmatmul.mubr.f32.gmra.mrb[0].mxu0 %v10187
  %v10474 = vpop.f32.mrb[0].mxu0
  %v10475 = vadd.f32 0.0, %v10474
  %v10476 = vpop.f32.mrb[0].mxu0
  %10477 = vmatprep.mubr.f32.mxu0 0.0
  %10478 = vmatmul.mubr.f32.gmra.mrb[0].mxu0 %v10188
  %v10479 = vpop.f32.mrb[0].mxu0
  %v10480 = vadd.f32 0.0, %v10479
  %v10481 = vpop.f32.mrb[0].mxu0
  %10482 = vmatprep.mubr.f32.mxu0 0.0
  %10483 = vmatmul.mubr.f32.gmra.mrb[0].mxu0 %v10189
  %v10484 = vpop.f32.mrb[0].mxu0
  %v10485 = vadd.f32 0.0, %v10484
  %v10486 = vpop.f32.mrb[0].mxu0
  %10487 = vmatprep.mubr.f32.mxu0 0.0
  %10488 = vmatmul.mubr.f32.gmra.mrb[0].mxu0 %v10190
  %v10489 = vpop.f32.mrb[0].mxu0
  %v10490 = vadd.f32 0.0, %v10489
  %v10491 = vpop.f32.mrb[0].mxu0
  %10492 = vmatprep.mubr.f32.mxu0 0.0
  %10493 = vmatmul.mubr.f32.gmra.mrb[0].mxu0 %v10191
  %v10494 = vpop.f32.mrb[0].mxu0
  %v10495 = vadd.f32 0.0, %v10494
  %v10496 = vpop.f32.mrb[0].mxu0
  %10497 = vmatprep.mubr.f32.mxu0 0.0
  %10498 = vmatmul.mubr.f32.gmra.mrb[0].mxu0 %v10192
  %v10499 = vpop.f32.mrb[0].mxu0
  %v10500 = vadd.f32 0.0, %v10499
  %v10501 = vpop.f32.mrb[0].mxu0
  %10502 = vmatprep.mubr.f32.mxu0 0.0
  %10503 = vmatmul.mubr.f32.gmra.mrb[0].mxu0 %v10193
  %v10504 = vpop.f32.mrb[0].mxu0
  %v10505 = vadd.f32 0.0, %v10504
  %v10506 = vpop.f32.mrb[0].mxu0
  %10507 = vmatprep.mubr.f32.mxu0 0.0
  %10508 = vmatmul.mubr.f32.gmra.mrb[0].mxu0 %v10194
  %v10509 = vpop.f32.mrb[0].mxu0
  %v10510 = vadd.f32 0.0, %v10509
  %v10511 = vpop.f32.mrb[0].mxu0
  %10512 = vmatprep.mubr.f32.mxu0 0.0
  %10513 = vmatmul.mubr.f32.gmra.mrb[0].mxu0 %v10195
  %v10514 = vpop.f32.mrb[0].mxu0
  %v10515 = vadd.f32 0.0, %v10514
  %v10516 = vpop.f32.mrb[0].mxu0
  %10517 = vmatprep.mubr.f32.mxu0 0.0
  %10518 = vmatmul.mubr.f32.gmra.mrb[0].mxu0 %v10196
  %v10519 = vpop.f32.mrb[0].mxu0
  %v10520 = vadd.f32 0.0, %v10519
  %v10521 = vpop.f32.mrb[0].mxu0
  %10522 = vmatprep.mubr.f32.mxu0 0.0
  %10523 = vmatmul.mubr.f32.gmra.mrb[0].mxu0 %v10197
  %v10524 = vpop.f32.mrb[0].mxu0
  %v10525 = vadd.f32 0.0, %v10524
  %v10526 = vpop.f32.mrb[0].mxu0
  %10527 = vmatprep.mubr.f32.mxu0 0.0
  %10528 = vmatmul.mubr.f32.gmra.mrb[0].mxu0 %v10198
  %v10529 = vpop.f32.mrb[0].mxu0
  %v10530 = vadd.f32 0.0, %v10529
  %v10531 = vpop.f32.mrb[0].mxu0
  %10532 = vmatprep.mubr.f32.mxu0 0.0
  %10533 = vmatmul.mubr.f32.gmra.mrb[0].mxu0 %v10199
  %v10534 = vpop.f32.mrb[0].mxu0
  %v10535 = vadd.f32 0.0, %v10534
  %v10536 = vpop.f32.mrb[0].mxu0
  %10537 = vmatprep.mubr.f32.mxu0 0.0
  %10538 = vmatmul.mubr.f32.gmra.mrb[0].mxu0 %v10200
  %v10539 = vpop.f32.mrb[0].mxu0
  %v10540 = vadd.f32 0.0, %v10539
  %v10541 = vpop.f32.mrb[0].mxu0
  %10542 = vmatprep.mubr.f32.mxu0 0.0
  %10543 = vmatmul.mubr.f32.gmra.mrb[0].mxu0 %v10201
  %v10544 = vpop.f32.mrb[0].mxu0
  %v10545 = vadd.f32 0.0, %v10544
  %v10546 = vpop.f32.mrb[0].mxu0
  %10547 = vmatprep.mubr.f32.mxu0 0.0
  %10548 = vmatmul.mubr.f32.gmra.mrb[0].mxu0 %v10202
  %v10549 = vpop.f32.mrb[0].mxu0
  %v10550 = vadd.f32 0.0, %v10549
  %v10551 = vpop.f32.mrb[0].mxu0
  %10552 = vmatprep.mubr.f32.mxu0 0.0
  %10553 = vmatmul.mubr.f32.gmra.mrb[0].mxu0 %v10203
  %v10554 = vpop.f32.mrb[0].mxu0
  %v10555 = vadd.f32 0.0, %v10554
  %v10556 = vpop.f32.mrb[0].mxu0
  %10557 = vmatprep.mubr.f32.mxu0 0.0
  %10558 = vmatmul.mubr.f32.gmra.mrb[0].mxu0 %v10204
  %v10559 = vpop.f32.mrb[0].mxu0
  %v10560 = vadd.f32 0.0, %v10559
  %v10561 = vpop.f32.mrb[0].mxu0
  %10562 = vmatprep.mubr.f32.mxu0 0.0
  %10563 = vmatmul.mubr.f32.gmra.mrb[0].mxu0 %v10205
  %v10564 = vpop.f32.mrb[0].mxu0
  %v10565 = vadd.f32 0.0, %v10564
  %v10566 = vpop.f32.mrb[0].mxu0
  %10567 = vmatprep.mubr.f32.mxu0 0.0
  %10568 = vmatmul.mubr.f32.gmra.mrb[0].mxu0 %v10206
  %v10569 = vpop.f32.mrb[0].mxu0
  %v10570 = vadd.f32 0.0, %v10569
  %v10571 = vpop.f32.mrb[0].mxu0
  %10572 = vmatprep.mubr.f32.mxu0 0.0
  %10573 = vmatmul.mubr.f32.gmra.mrb[0].mxu0 %v10207
  %v10574 = vpop.f32.mrb[0].mxu0
  %v10575 = vadd.f32 0.0, %v10574
  %v10576 = vpop.f32.mrb[0].mxu0
  %10577 = vmatprep.mubr.f32.mxu0 0.0
  %10578 = vmatmul.mubr.f32.gmra.mrb[0].mxu0 %v10208
  %v10579 = vpop.f32.mrb[0].mxu0
  %v10580 = vadd.f32 0.0, %v10579
  %v10581 = vpop.f32.mrb[0].mxu0
  %10582 = vmatprep.mubr.f32.mxu0 0.0
  %10583 = vmatmul.mubr.f32.gmra.mrb[0].mxu0 %v10209
  %v10584 = vpop.f32.mrb[0].mxu0
  %v10585 = vadd.f32 0.0, %v10584
  %v10586 = vpop.f32.mrb[0].mxu0
  %10587 = vmatprep.mubr.f32.mxu0 0.0
  %10588 = vmatmul.mubr.f32.gmra.mrb[0].mxu0 %v10210
  %v10589 = vpop.f32.mrb[0].mxu0
  %v10590 = vadd.f32 0.0, %v10589
  %v10591 = vpop.f32.mrb[0].mxu0
  %10592 = vmatprep.mubr.f32.mxu0 0.0
  %10593 = vmatmul.mubr.f32.gmra.mrb[0].mxu0 %v10211
  %v10594 = vpop.f32.mrb[0].mxu0
  %v10595 = vadd.f32 0.0, %v10594
  %v10596 = vpop.f32.mrb[0].mxu0
  %10597 = vmatprep.mubr.f32.mxu0 0.0
  %10598 = vmatmul.mubr.f32.gmra.mrb[0].mxu0 %v10212
  %v10599 = vpop.f32.mrb[0].mxu0
  %v10600 = vadd.f32 0.0, %v10599
  %v10601 = vpop.f32.mrb[0].mxu0
  %10602 = vmatprep.mubr.f32.mxu0 0.0
  %10603 = vmatmul.mubr.f32.gmra.mrb[0].mxu0 %v10213
  %v10604 = vpop.f32.mrb[0].mxu0
  %v10605 = vadd.f32 0.0, %v10604
  %v10606 = vpop.f32.mrb[0].mxu0
  %10607 = vmatprep.mubr.f32.mxu0 0.0
  %10608 = vmatmul.mubr.f32.gmra.mrb[0].mxu0 %v10214
  %v10609 = vpop.f32.mrb[0].mxu0
  %v10610 = vadd.f32 0.0, %v10609
  %v10611 = vpop.f32.mrb[0].mxu0
  %10612 = vmatprep.mubr.f32.mxu0 0.0
  %10613 = vmatmul.mubr.f32.gmra.mrb[0].mxu0 %v10215
  %v10614 = vpop.f32.mrb[0].mxu0
  %v10615 = vadd.f32 0.0, %v10614
  %v10616 = vpop.f32.mrb[0].mxu0
  %10617 = vdwg.mxu0
  %v10618 = vadd.f32 %v9640, %v10300
  %v10619 = vadd.f32 %v9641, %v10305
  %v10620 = vadd.f32 %v9642, %v10310
  %v10621 = vadd.f32 %v9643, %v10315
  %v10622 = vadd.f32 %v9644, %v10320
  %v10623 = vadd.f32 %v9645, %v10325
  %v10624 = vadd.f32 %v9646, %v10330
  %v10625 = vadd.f32 %v9647, %v10335
  %v10626 = vadd.f32 %v9648, %v10340
  %v10627 = vadd.f32 %v9649, %v10345
  %v10628 = vadd.f32 %v9650, %v10350
  %v10629 = vadd.f32 %v9651, %v10355
  %v10630 = vadd.f32 %v9652, %v10360
  %v10631 = vadd.f32 %v9653, %v10365
  %v10632 = vadd.f32 %v9654, %v10370
  %v10633 = vadd.f32 %v9655, %v10375
  %v10634 = vadd.f32 %v9656, %v10380
  %v10635 = vadd.f32 %v9657, %v10385
  %v10636 = vadd.f32 %v9658, %v10390
  %v10637 = vadd.f32 %v9659, %v10395
  %v10638 = vadd.f32 %v9660, %v10400
  %v10639 = vadd.f32 %v9661, %v10405
  %v10640 = vadd.f32 %v9662, %v10410
  %v10641 = vadd.f32 %v9663, %v10415
  %v10642 = vadd.f32 %v9664, %v10420
  %v10643 = vadd.f32 %v9665, %v10425
  %v10644 = vadd.f32 %v9666, %v10430
  %v10645 = vadd.f32 %v9667, %v10435
  %v10646 = vadd.f32 %v9668, %v10440
  %v10647 = vadd.f32 %v9669, %v10445
  %v10648 = vadd.f32 %v9670, %v10450
  %v10649 = vadd.f32 %v9671, %v10455
  %v10650 = vadd.f32 %v9672, %v10460
  %v10651 = vadd.f32 %v9673, %v10465
  %v10652 = vadd.f32 %v9674, %v10470
  %v10653 = vadd.f32 %v9675, %v10475
  %v10654 = vadd.f32 %v9676, %v10480
  %v10655 = vadd.f32 %v9677, %v10485
  %v10656 = vadd.f32 %v9678, %v10490
  %v10657 = vadd.f32 %v9679, %v10495
  %v10658 = vadd.f32 %v9680, %v10500
  %v10659 = vadd.f32 %v9681, %v10505
  %v10660 = vadd.f32 %v9682, %v10510
  %v10661 = vadd.f32 %v9683, %v10515
  %v10662 = vadd.f32 %v9684, %v10520
  %v10663 = vadd.f32 %v9685, %v10525
  %v10664 = vadd.f32 %v9686, %v10530
  %v10665 = vadd.f32 %v9687, %v10535
  %v10666 = vadd.f32 %v9688, %v10540
  %v10667 = vadd.f32 %v9689, %v10545
  %v10668 = vadd.f32 %v9690, %v10550
  %v10669 = vadd.f32 %v9691, %v10555
  %v10670 = vadd.f32 %v9692, %v10560
  %v10671 = vadd.f32 %v9693, %v10565
  %v10672 = vadd.f32 %v9694, %v10570
  %v10673 = vadd.f32 %v9695, %v10575
  %v10674 = vadd.f32 %v9696, %v10580
  %v10675 = vadd.f32 %v9697, %v10585
  %v10676 = vadd.f32 %v9698, %v10590
  %v10677 = vadd.f32 %v9699, %v10595
  %v10678 = vadd.f32 %v9700, %v10600
  %v10679 = vadd.f32 %v9701, %v10605
  %v10680 = vadd.f32 %v9702, %v10610
  %v10681 = vadd.f32 %v9703, %v10615
  %v10682 = vadd.f32 %v10618, %v10619
  %v10683 = vadd.f32 %v10682, %v10620
  %v10684 = vadd.f32 %v10683, %v10621
  %v10685 = vadd.f32 %v10684, %v10622
  %v10686 = vadd.f32 %v10685, %v10623
  %v10687 = vadd.f32 %v10686, %v10624
  %v10688 = vadd.f32 %v10687, %v10625
  %v10689 = vadd.f32 %v10688, %v10626
  %v10690 = vadd.f32 %v10689, %v10627
  %v10691 = vadd.f32 %v10690, %v10628
  %v10692 = vadd.f32 %v10691, %v10629
  %v10693 = vadd.f32 %v10692, %v10630
  %v10694 = vadd.f32 %v10693, %v10631
  %v10695 = vadd.f32 %v10694, %v10632
  %v10696 = vadd.f32 %v10695, %v10633
  %v10697 = vadd.f32 %v10696, %v10634
  %v10698 = vadd.f32 %v10697, %v10635
  %v10699 = vadd.f32 %v10698, %v10636
  %v10700 = vadd.f32 %v10699, %v10637
  %v10701 = vadd.f32 %v10700, %v10638
  %v10702 = vadd.f32 %v10701, %v10639
  %v10703 = vadd.f32 %v10702, %v10640
  %v10704 = vadd.f32 %v10703, %v10641
  %v10705 = vadd.f32 %v10704, %v10642
  %v10706 = vadd.f32 %v10705, %v10643
  %v10707 = vadd.f32 %v10706, %v10644
  %v10708 = vadd.f32 %v10707, %v10645
  %v10709 = vadd.f32 %v10708, %v10646
  %v10710 = vadd.f32 %v10709, %v10647
  %v10711 = vadd.f32 %v10710, %v10648
  %v10712 = vadd.f32 %v10711, %v10649
  %v10713 = vadd.f32 %v10712, %v10650
  %v10714 = vadd.f32 %v10713, %v10651
  %v10715 = vadd.f32 %v10714, %v10652
  %v10716 = vadd.f32 %v10715, %v10653
  %v10717 = vadd.f32 %v10716, %v10654
  %v10718 = vadd.f32 %v10717, %v10655
  %v10719 = vadd.f32 %v10718, %v10656
  %v10720 = vadd.f32 %v10719, %v10657
  %v10721 = vadd.f32 %v10720, %v10658
  %v10722 = vadd.f32 %v10721, %v10659
  %v10723 = vadd.f32 %v10722, %v10660
  %v10724 = vadd.f32 %v10723, %v10661
  %v10725 = vadd.f32 %v10724, %v10662
  %v10726 = vadd.f32 %v10725, %v10663
  %v10727 = vadd.f32 %v10726, %v10664
  %v10728 = vadd.f32 %v10727, %v10665
  %v10729 = vadd.f32 %v10728, %v10666
  %v10730 = vadd.f32 %v10729, %v10667
  %v10731 = vadd.f32 %v10730, %v10668
  %v10732 = vadd.f32 %v10731, %v10669
  %v10733 = vadd.f32 %v10732, %v10670
  %v10734 = vadd.f32 %v10733, %v10671
  %v10735 = vadd.f32 %v10734, %v10672
  %v10736 = vadd.f32 %v10735, %v10673
  %v10737 = vadd.f32 %v10736, %v10674
  %v10738 = vadd.f32 %v10737, %v10675
  %v10739 = vadd.f32 %v10738, %v10676
  %v10740 = vadd.f32 %v10739, %v10677
  %v10741 = vadd.f32 %v10740, %v10678
  %v10742 = vadd.f32 %v10741, %v10679
  %v10743 = vadd.f32 %v10742, %v10680
  %v10744 = vadd.f32 %v10743, %v10681
  %v10745 = vrot.slane %v10744, 4
  %v10746 = vadd.f32 %v10744, %v10745
  %v10747 = vrot.slane %v10746, 2
  %v10748 = vadd.f32 %v10746, %v10747
  %v10749 = vrot.slane %v10748, 1
  %v10750 = vadd.f32 %v10748, %v10749
  %v10751 = vmul.f32 %v10618, %v10618
  %v10752 = vmul.f32 %v10619, %v10619
  %v10753 = vmul.f32 %v10620, %v10620
  %v10754 = vmul.f32 %v10621, %v10621
  %v10755 = vmul.f32 %v10622, %v10622
  %v10756 = vmul.f32 %v10623, %v10623
  %v10757 = vmul.f32 %v10624, %v10624
  %v10758 = vmul.f32 %v10625, %v10625
  %v10759 = vmul.f32 %v10626, %v10626
  %v10760 = vmul.f32 %v10627, %v10627
  %v10761 = vmul.f32 %v10628, %v10628
  %v10762 = vmul.f32 %v10629, %v10629
  %v10763 = vmul.f32 %v10630, %v10630
  %v10764 = vmul.f32 %v10631, %v10631
  %v10765 = vmul.f32 %v10632, %v10632
  %v10766 = vmul.f32 %v10633, %v10633
  %v10767 = vmul.f32 %v10634, %v10634
  %v10768 = vmul.f32 %v10635, %v10635
  %v10769 = vmul.f32 %v10636, %v10636
  %v10770 = vmul.f32 %v10637, %v10637
  %v10771 = vmul.f32 %v10638, %v10638
  %v10772 = vmul.f32 %v10639, %v10639
  %v10773 = vmul.f32 %v10640, %v10640
  %v10774 = vmul.f32 %v10641, %v10641
  %v10775 = vmul.f32 %v10642, %v10642
  %v10776 = vmul.f32 %v10643, %v10643
  %v10777 = vmul.f32 %v10644, %v10644
  %v10778 = vmul.f32 %v10645, %v10645
  %v10779 = vmul.f32 %v10646, %v10646
  %v10780 = vmul.f32 %v10647, %v10647
  %v10781 = vmul.f32 %v10648, %v10648
  %v10782 = vmul.f32 %v10649, %v10649
  %v10783 = vmul.f32 %v10650, %v10650
  %v10784 = vmul.f32 %v10651, %v10651
  %v10785 = vmul.f32 %v10652, %v10652
  %v10786 = vmul.f32 %v10653, %v10653
  %v10787 = vmul.f32 %v10654, %v10654
  %v10788 = vmul.f32 %v10655, %v10655
  %v10789 = vmul.f32 %v10656, %v10656
  %v10790 = vmul.f32 %v10657, %v10657
  %v10791 = vmul.f32 %v10658, %v10658
  %v10792 = vmul.f32 %v10659, %v10659
  %v10793 = vmul.f32 %v10660, %v10660
  %v10794 = vmul.f32 %v10661, %v10661
  %v10795 = vmul.f32 %v10662, %v10662
  %v10796 = vmul.f32 %v10663, %v10663
  %v10797 = vmul.f32 %v10664, %v10664
  %v10798 = vmul.f32 %v10665, %v10665
  %v10799 = vmul.f32 %v10666, %v10666
  %v10800 = vmul.f32 %v10667, %v10667
  %v10801 = vmul.f32 %v10668, %v10668
  %v10802 = vmul.f32 %v10669, %v10669
  %v10803 = vmul.f32 %v10670, %v10670
  %v10804 = vmul.f32 %v10671, %v10671
  %v10805 = vmul.f32 %v10672, %v10672
  %v10806 = vmul.f32 %v10673, %v10673
  %v10807 = vmul.f32 %v10674, %v10674
  %v10808 = vmul.f32 %v10675, %v10675
  %v10809 = vmul.f32 %v10676, %v10676
  %v10810 = vmul.f32 %v10677, %v10677
  %v10811 = vmul.f32 %v10678, %v10678
  %v10812 = vmul.f32 %v10679, %v10679
  %v10813 = vmul.f32 %v10680, %v10680
  %v10814 = vmul.f32 %v10681, %v10681
  %v10815 = vadd.f32 %v10751, %v10752
  %v10816 = vadd.f32 %v10815, %v10753
  %v10817 = vadd.f32 %v10816, %v10754
  %v10818 = vadd.f32 %v10817, %v10755
  %v10819 = vadd.f32 %v10818, %v10756
  %v10820 = vadd.f32 %v10819, %v10757
  %v10821 = vadd.f32 %v10820, %v10758
  %v10822 = vadd.f32 %v10821, %v10759
  %v10823 = vadd.f32 %v10822, %v10760
  %v10824 = vadd.f32 %v10823, %v10761
  %v10825 = vadd.f32 %v10824, %v10762
  %v10826 = vadd.f32 %v10825, %v10763
  %v10827 = vadd.f32 %v10826, %v10764
  %v10828 = vadd.f32 %v10827, %v10765
  %v10829 = vadd.f32 %v10828, %v10766
  %v10830 = vadd.f32 %v10829, %v10767
  %v10831 = vadd.f32 %v10830, %v10768
  %v10832 = vadd.f32 %v10831, %v10769
  %v10833 = vadd.f32 %v10832, %v10770
  %v10834 = vadd.f32 %v10833, %v10771
  %v10835 = vadd.f32 %v10834, %v10772
  %v10836 = vadd.f32 %v10835, %v10773
  %v10837 = vadd.f32 %v10836, %v10774
  %v10838 = vadd.f32 %v10837, %v10775
  %v10839 = vadd.f32 %v10838, %v10776
  %v10840 = vadd.f32 %v10839, %v10777
  %v10841 = vadd.f32 %v10840, %v10778
  %v10842 = vadd.f32 %v10841, %v10779
  %v10843 = vadd.f32 %v10842, %v10780
  %v10844 = vadd.f32 %v10843, %v10781
  %v10845 = vadd.f32 %v10844, %v10782
  %v10846 = vadd.f32 %v10845, %v10783
  %v10847 = vadd.f32 %v10846, %v10784
  %v10848 = vadd.f32 %v10847, %v10785
  %v10849 = vadd.f32 %v10848, %v10786
  %v10850 = vadd.f32 %v10849, %v10787
  %v10851 = vadd.f32 %v10850, %v10788
  %v10852 = vadd.f32 %v10851, %v10789
  %v10853 = vadd.f32 %v10852, %v10790
  %v10854 = vadd.f32 %v10853, %v10791
  %v10855 = vadd.f32 %v10854, %v10792
  %v10856 = vadd.f32 %v10855, %v10793
  %v10857 = vadd.f32 %v10856, %v10794
  %v10858 = vadd.f32 %v10857, %v10795
  %v10859 = vadd.f32 %v10858, %v10796
  %v10860 = vadd.f32 %v10859, %v10797
  %v10861 = vadd.f32 %v10860, %v10798
  %v10862 = vadd.f32 %v10861, %v10799
  %v10863 = vadd.f32 %v10862, %v10800
  %v10864 = vadd.f32 %v10863, %v10801
  %v10865 = vadd.f32 %v10864, %v10802
  %v10866 = vadd.f32 %v10865, %v10803
  %v10867 = vadd.f32 %v10866, %v10804
  %v10868 = vadd.f32 %v10867, %v10805
  %v10869 = vadd.f32 %v10868, %v10806
  %v10870 = vadd.f32 %v10869, %v10807
  %v10871 = vadd.f32 %v10870, %v10808
  %v10872 = vadd.f32 %v10871, %v10809
  %v10873 = vadd.f32 %v10872, %v10810
  %v10874 = vadd.f32 %v10873, %v10811
  %v10875 = vadd.f32 %v10874, %v10812
  %v10876 = vadd.f32 %v10875, %v10813
  %v10877 = vadd.f32 %v10876, %v10814
  %v10878 = vrot.slane %v10877, 4
  %v10879 = vadd.f32 %v10877, %v10878
  %v10880 = vrot.slane %v10879, 2
  %v10881 = vadd.f32 %v10879, %v10880
  %v10882 = vrot.slane %v10881, 1
  %v10883 = vadd.f32 %v10881, %v10882
  %v10884 = vmul.f32 %v10750, 0.001953125
  %v10885 = vmul.f32 %v10883, 0.001953125
  %v10886 = vmul.f32 %v10884, %v10884
  %v10887 = vsub.f32 %v10885, %v10886
  %v10888 = vld [vmem:[%s8] sm:$0x1]
  %v10889 = vadd.f32 %v10887, 1e-05
  %v10890 = vrsqrt.pop %v10889
  %v10891 = vmul.f32 %v10888, %v10890
  %v10892 = vld [vmem:[%s9] sm:$0x1]
  %v10893 = vmul.f32 %v10884, %v10891
  %v10894 = vsub.f32 %v10892, %v10893
  %v10896 = vlaneseq
  %v10897 = vshrl.u32 %v10896, 7
  %v10898 = vsub.s32 0, %v10897
  %v10899 = vrot.slane %v10891, %v10898
  %v10901 = vmul.f32 %v10618, %v10899
  %v10902 = vmul.f32 %v10619, %v10899
  %v10903 = vmul.f32 %v10620, %v10899
  %v10904 = vmul.f32 %v10621, %v10899
  %v10905 = vmul.f32 %v10622, %v10899
  %v10906 = vmul.f32 %v10623, %v10899
  %v10907 = vmul.f32 %v10624, %v10899
  %v10908 = vmul.f32 %v10625, %v10899
  %v10909 = vmul.f32 %v10626, %v10899
  %v10910 = vmul.f32 %v10627, %v10899
  %v10911 = vmul.f32 %v10628, %v10899
  %v10912 = vmul.f32 %v10629, %v10899
  %v10913 = vmul.f32 %v10630, %v10899
  %v10914 = vmul.f32 %v10631, %v10899
  %v10915 = vmul.f32 %v10632, %v10899
  %v10916 = vmul.f32 %v10633, %v10899
  %v10917 = vmul.f32 %v10634, %v10899
  %v10918 = vmul.f32 %v10635, %v10899
  %v10919 = vmul.f32 %v10636, %v10899
  %v10920 = vmul.f32 %v10637, %v10899
  %v10921 = vmul.f32 %v10638, %v10899
  %v10922 = vmul.f32 %v10639, %v10899
  %v10923 = vmul.f32 %v10640, %v10899
  %v10924 = vmul.f32 %v10641, %v10899
  %v10925 = vmul.f32 %v10642, %v10899
  %v10926 = vmul.f32 %v10643, %v10899
  %v10927 = vmul.f32 %v10644, %v10899
  %v10928 = vmul.f32 %v10645, %v10899
  %v10929 = vmul.f32 %v10646, %v10899
  %v10930 = vmul.f32 %v10647, %v10899
  %v10931 = vmul.f32 %v10648, %v10899
  %v10932 = vmul.f32 %v10649, %v10899
  %v10933 = vmul.f32 %v10650, %v10899
  %v10934 = vmul.f32 %v10651, %v10899
  %v10935 = vmul.f32 %v10652, %v10899
  %v10936 = vmul.f32 %v10653, %v10899
  %v10937 = vmul.f32 %v10654, %v10899
  %v10938 = vmul.f32 %v10655, %v10899
  %v10939 = vmul.f32 %v10656, %v10899
  %v10940 = vmul.f32 %v10657, %v10899
  %v10941 = vmul.f32 %v10658, %v10899
  %v10942 = vmul.f32 %v10659, %v10899
  %v10943 = vmul.f32 %v10660, %v10899
  %v10944 = vmul.f32 %v10661, %v10899
  %v10945 = vmul.f32 %v10662, %v10899
  %v10946 = vmul.f32 %v10663, %v10899
  %v10947 = vmul.f32 %v10664, %v10899
  %v10948 = vmul.f32 %v10665, %v10899
  %v10949 = vmul.f32 %v10666, %v10899
  %v10950 = vmul.f32 %v10667, %v10899
  %v10951 = vmul.f32 %v10668, %v10899
  %v10952 = vmul.f32 %v10669, %v10899
  %v10953 = vmul.f32 %v10670, %v10899
  %v10954 = vmul.f32 %v10671, %v10899
  %v10955 = vmul.f32 %v10672, %v10899
  %v10956 = vmul.f32 %v10673, %v10899
  %v10957 = vmul.f32 %v10674, %v10899
  %v10958 = vmul.f32 %v10675, %v10899
  %v10959 = vmul.f32 %v10676, %v10899
  %v10960 = vmul.f32 %v10677, %v10899
  %v10961 = vmul.f32 %v10678, %v10899
  %v10962 = vmul.f32 %v10679, %v10899
  %v10963 = vmul.f32 %v10680, %v10899
  %v10964 = vmul.f32 %v10681, %v10899
  %v10966 = vlaneseq
  %v10967 = vshrl.u32 %v10966, 7
  %v10968 = vsub.s32 0, %v10967
  %v10969 = vrot.slane %v10894, %v10968
  %v10971 = vadd.f32 %v10901, %v10969
  %v10972 = vadd.f32 %v10902, %v10969
  %v10973 = vadd.f32 %v10903, %v10969
  %v10974 = vadd.f32 %v10904, %v10969
  %v10975 = vadd.f32 %v10905, %v10969
  %v10976 = vadd.f32 %v10906, %v10969
  %v10977 = vadd.f32 %v10907, %v10969
  %v10978 = vadd.f32 %v10908, %v10969
  %v10979 = vadd.f32 %v10909, %v10969
  %v10980 = vadd.f32 %v10910, %v10969
  %v10981 = vadd.f32 %v10911, %v10969
  %v10982 = vadd.f32 %v10912, %v10969
  %v10983 = vadd.f32 %v10913, %v10969
  %v10984 = vadd.f32 %v10914, %v10969
  %v10985 = vadd.f32 %v10915, %v10969
  %v10986 = vadd.f32 %v10916, %v10969
  %v10987 = vadd.f32 %v10917, %v10969
  %v10988 = vadd.f32 %v10918, %v10969
  %v10989 = vadd.f32 %v10919, %v10969
  %v10990 = vadd.f32 %v10920, %v10969
  %v10991 = vadd.f32 %v10921, %v10969
  %v10992 = vadd.f32 %v10922, %v10969
  %v10993 = vadd.f32 %v10923, %v10969
  %v10994 = vadd.f32 %v10924, %v10969
  %v10995 = vadd.f32 %v10925, %v10969
  %v10996 = vadd.f32 %v10926, %v10969
  %v10997 = vadd.f32 %v10927, %v10969
  %v10998 = vadd.f32 %v10928, %v10969
  %v10999 = vadd.f32 %v10929, %v10969
  %v11000 = vadd.f32 %v10930, %v10969
  %v11001 = vadd.f32 %v10931, %v10969
  %v11002 = vadd.f32 %v10932, %v10969
  %v11003 = vadd.f32 %v10933, %v10969
  %v11004 = vadd.f32 %v10934, %v10969
  %v11005 = vadd.f32 %v10935, %v10969
  %v11006 = vadd.f32 %v10936, %v10969
  %v11007 = vadd.f32 %v10937, %v10969
  %v11008 = vadd.f32 %v10938, %v10969
  %v11009 = vadd.f32 %v10939, %v10969
  %v11010 = vadd.f32 %v10940, %v10969
  %v11011 = vadd.f32 %v10941, %v10969
  %v11012 = vadd.f32 %v10942, %v10969
  %v11013 = vadd.f32 %v10943, %v10969
  %v11014 = vadd.f32 %v10944, %v10969
  %v11015 = vadd.f32 %v10945, %v10969
  %v11016 = vadd.f32 %v10946, %v10969
  %v11017 = vadd.f32 %v10947, %v10969
  %v11018 = vadd.f32 %v10948, %v10969
  %v11019 = vadd.f32 %v10949, %v10969
  %v11020 = vadd.f32 %v10950, %v10969
  %v11021 = vadd.f32 %v10951, %v10969
  %v11022 = vadd.f32 %v10952, %v10969
  %v11023 = vadd.f32 %v10953, %v10969
  %v11024 = vadd.f32 %v10954, %v10969
  %v11025 = vadd.f32 %v10955, %v10969
  %v11026 = vadd.f32 %v10956, %v10969
  %v11027 = vadd.f32 %v10957, %v10969
  %v11028 = vadd.f32 %v10958, %v10969
  %v11029 = vadd.f32 %v10959, %v10969
  %v11030 = vadd.f32 %v10960, %v10969
  %v11031 = vadd.f32 %v10961, %v10969
  %v11032 = vadd.f32 %v10962, %v10969
  %v11033 = vadd.f32 %v10963, %v10969
  %v11034 = vadd.f32 %v10964, %v10969
  %v11035 = vld [vmem:[%s1] sm:$0xff]
  %v11036 = vld [vmem:[%s1 + $0x8] sm:$0xff]
  %v11037 = vld [vmem:[%s1 + $0x10] sm:$0xff]
  %v11038 = vld [vmem:[%s1 + $0x18] sm:$0xff]
  %v11039 = vld [vmem:[%s1 + $0x20] sm:$0xff]
  %v11040 = vld [vmem:[%s1 + $0x28] sm:$0xff]
  %v11041 = vld [vmem:[%s1 + $0x30] sm:$0xff]
  %v11042 = vld [vmem:[%s1 + $0x38] sm:$0xff]
  %v11043 = vld [vmem:[%s1 + $0x40] sm:$0xff]
  %v11044 = vld [vmem:[%s1 + $0x48] sm:$0xff]
  %v11045 = vld [vmem:[%s1 + $0x50] sm:$0xff]
  %v11046 = vld [vmem:[%s1 + $0x58] sm:$0xff]
  %v11047 = vld [vmem:[%s1 + $0x60] sm:$0xff]
  %v11048 = vld [vmem:[%s1 + $0x68] sm:$0xff]
  %v11049 = vld [vmem:[%s1 + $0x70] sm:$0xff]
  %v11050 = vld [vmem:[%s1 + $0x78] sm:$0xff]
  %v11051 = vld [vmem:[%s1 + $0x80] sm:$0xff]
  %v11052 = vld [vmem:[%s1 + $0x88] sm:$0xff]
  %v11053 = vld [vmem:[%s1 + $0x90] sm:$0xff]
  %v11054 = vld [vmem:[%s1 + $0x98] sm:$0xff]
  %v11055 = vld [vmem:[%s1 + $0xa0] sm:$0xff]
  %v11056 = vld [vmem:[%s1 + $0xa8] sm:$0xff]
  %v11057 = vld [vmem:[%s1 + $0xb0] sm:$0xff]
  %v11058 = vld [vmem:[%s1 + $0xb8] sm:$0xff]
  %v11059 = vld [vmem:[%s1 + $0xc0] sm:$0xff]
  %v11060 = vld [vmem:[%s1 + $0xc8] sm:$0xff]
  %v11061 = vld [vmem:[%s1 + $0xd0] sm:$0xff]
  %v11062 = vld [vmem:[%s1 + $0xd8] sm:$0xff]
  %v11063 = vld [vmem:[%s1 + $0xe0] sm:$0xff]
  %v11064 = vld [vmem:[%s1 + $0xe8] sm:$0xff]
  %v11065 = vld [vmem:[%s1 + $0xf0] sm:$0xff]
  %v11066 = vld [vmem:[%s1 + $0xf8] sm:$0xff]
  %v11067 = vld [vmem:[%s1 + $0x100] sm:$0xff]
  %v11068 = vld [vmem:[%s1 + $0x108] sm:$0xff]
  %v11069 = vld [vmem:[%s1 + $0x110] sm:$0xff]
  %v11070 = vld [vmem:[%s1 + $0x118] sm:$0xff]
  %v11071 = vld [vmem:[%s1 + $0x120] sm:$0xff]
  %v11072 = vld [vmem:[%s1 + $0x128] sm:$0xff]
  %v11073 = vld [vmem:[%s1 + $0x130] sm:$0xff]
  %v11074 = vld [vmem:[%s1 + $0x138] sm:$0xff]
  %v11075 = vld [vmem:[%s1 + $0x140] sm:$0xff]
  %v11076 = vld [vmem:[%s1 + $0x148] sm:$0xff]
  %v11077 = vld [vmem:[%s1 + $0x150] sm:$0xff]
  %v11078 = vld [vmem:[%s1 + $0x158] sm:$0xff]
  %v11079 = vld [vmem:[%s1 + $0x160] sm:$0xff]
  %v11080 = vld [vmem:[%s1 + $0x168] sm:$0xff]
  %v11081 = vld [vmem:[%s1 + $0x170] sm:$0xff]
  %v11082 = vld [vmem:[%s1 + $0x178] sm:$0xff]
  %v11083 = vld [vmem:[%s1 + $0x180] sm:$0xff]
  %v11084 = vld [vmem:[%s1 + $0x188] sm:$0xff]
  %v11085 = vld [vmem:[%s1 + $0x190] sm:$0xff]
  %v11086 = vld [vmem:[%s1 + $0x198] sm:$0xff]
  %v11087 = vld [vmem:[%s1 + $0x1a0] sm:$0xff]
  %v11088 = vld [vmem:[%s1 + $0x1a8] sm:$0xff]
  %v11089 = vld [vmem:[%s1 + $0x1b0] sm:$0xff]
  %v11090 = vld [vmem:[%s1 + $0x1b8] sm:$0xff]
  %v11091 = vld [vmem:[%s1 + $0x1c0] sm:$0xff]
  %v11092 = vld [vmem:[%s1 + $0x1c8] sm:$0xff]
  %v11093 = vld [vmem:[%s1 + $0x1d0] sm:$0xff]
  %v11094 = vld [vmem:[%s1 + $0x1d8] sm:$0xff]
  %v11095 = vld [vmem:[%s1 + $0x1e0] sm:$0xff]
  %v11096 = vld [vmem:[%s1 + $0x1e8] sm:$0xff]
  %v11097 = vld [vmem:[%s1 + $0x1f0] sm:$0xff]
  %v11098 = vld [vmem:[%s1 + $0x1f8] sm:$0xff]
  %v11099 = vadd.f32 %v10971, %v11035
  %v11100 = vadd.f32 %v10972, %v11036
  %v11101 = vadd.f32 %v10973, %v11037
  %v11102 = vadd.f32 %v10974, %v11038
  %v11103 = vadd.f32 %v10975, %v11039
  %v11104 = vadd.f32 %v10976, %v11040
  %v11105 = vadd.f32 %v10977, %v11041
  %v11106 = vadd.f32 %v10978, %v11042
  %v11107 = vadd.f32 %v10979, %v11043
  %v11108 = vadd.f32 %v10980, %v11044
  %v11109 = vadd.f32 %v10981, %v11045
  %v11110 = vadd.f32 %v10982, %v11046
  %v11111 = vadd.f32 %v10983, %v11047
  %v11112 = vadd.f32 %v10984, %v11048
  %v11113 = vadd.f32 %v10985, %v11049
  %v11114 = vadd.f32 %v10986, %v11050
  %v11115 = vadd.f32 %v10987, %v11051
  %v11116 = vadd.f32 %v10988, %v11052
  %v11117 = vadd.f32 %v10989, %v11053
  %v11118 = vadd.f32 %v10990, %v11054
  %v11119 = vadd.f32 %v10991, %v11055
  %v11120 = vadd.f32 %v10992, %v11056
  %v11121 = vadd.f32 %v10993, %v11057
  %v11122 = vadd.f32 %v10994, %v11058
  %v11123 = vadd.f32 %v10995, %v11059
  %v11124 = vadd.f32 %v10996, %v11060
  %v11125 = vadd.f32 %v10997, %v11061
  %v11126 = vadd.f32 %v10998, %v11062
  %v11127 = vadd.f32 %v10999, %v11063
  %v11128 = vadd.f32 %v11000, %v11064
  %v11129 = vadd.f32 %v11001, %v11065
  %v11130 = vadd.f32 %v11002, %v11066
  %v11131 = vadd.f32 %v11003, %v11067
  %v11132 = vadd.f32 %v11004, %v11068
  %v11133 = vadd.f32 %v11005, %v11069
  %v11134 = vadd.f32 %v11006, %v11070
  %v11135 = vadd.f32 %v11007, %v11071
  %v11136 = vadd.f32 %v11008, %v11072
  %v11137 = vadd.f32 %v11009, %v11073
  %v11138 = vadd.f32 %v11010, %v11074
  %v11139 = vadd.f32 %v11011, %v11075
  %v11140 = vadd.f32 %v11012, %v11076
  %v11141 = vadd.f32 %v11013, %v11077
  %v11142 = vadd.f32 %v11014, %v11078
  %v11143 = vadd.f32 %v11015, %v11079
  %v11144 = vadd.f32 %v11016, %v11080
  %v11145 = vadd.f32 %v11017, %v11081
  %v11146 = vadd.f32 %v11018, %v11082
  %v11147 = vadd.f32 %v11019, %v11083
  %v11148 = vadd.f32 %v11020, %v11084
  %v11149 = vadd.f32 %v11021, %v11085
  %v11150 = vadd.f32 %v11022, %v11086
  %v11151 = vadd.f32 %v11023, %v11087
  %v11152 = vadd.f32 %v11024, %v11088
  %v11153 = vadd.f32 %v11025, %v11089
  %v11154 = vadd.f32 %v11026, %v11090
  %v11155 = vadd.f32 %v11027, %v11091
  %v11156 = vadd.f32 %v11028, %v11092
  %v11157 = vadd.f32 %v11029, %v11093
  %v11158 = vadd.f32 %v11030, %v11094
  %v11159 = vadd.f32 %v11031, %v11095
  %v11160 = vadd.f32 %v11032, %v11096
  %v11161 = vadd.f32 %v11033, %v11097
  %v11162 = vadd.f32 %v11034, %v11098
  %v11163 = vmax.f32 %v11099, 0.0
  %v11164 = vmax.f32 %v11100, 0.0
  %v11165 = vmax.f32 %v11101, 0.0
  %v11166 = vmax.f32 %v11102, 0.0
  %v11167 = vmax.f32 %v11103, 0.0
  %v11168 = vmax.f32 %v11104, 0.0
  %v11169 = vmax.f32 %v11105, 0.0
  %v11170 = vmax.f32 %v11106, 0.0
  %v11171 = vmax.f32 %v11107, 0.0
  %v11172 = vmax.f32 %v11108, 0.0
  %v11173 = vmax.f32 %v11109, 0.0
  %v11174 = vmax.f32 %v11110, 0.0
  %v11175 = vmax.f32 %v11111, 0.0
  %v11176 = vmax.f32 %v11112, 0.0
  %v11177 = vmax.f32 %v11113, 0.0
  %v11178 = vmax.f32 %v11114, 0.0
  %v11179 = vmax.f32 %v11115, 0.0
  %v11180 = vmax.f32 %v11116, 0.0
  %v11181 = vmax.f32 %v11117, 0.0
  %v11182 = vmax.f32 %v11118, 0.0
  %v11183 = vmax.f32 %v11119, 0.0
  %v11184 = vmax.f32 %v11120, 0.0
  %v11185 = vmax.f32 %v11121, 0.0
  %v11186 = vmax.f32 %v11122, 0.0
  %v11187 = vmax.f32 %v11123, 0.0
  %v11188 = vmax.f32 %v11124, 0.0
  %v11189 = vmax.f32 %v11125, 0.0
  %v11190 = vmax.f32 %v11126, 0.0
  %v11191 = vmax.f32 %v11127, 0.0
  %v11192 = vmax.f32 %v11128, 0.0
  %v11193 = vmax.f32 %v11129, 0.0
  %v11194 = vmax.f32 %v11130, 0.0
  %v11195 = vmax.f32 %v11131, 0.0
  %v11196 = vmax.f32 %v11132, 0.0
  %v11197 = vmax.f32 %v11133, 0.0
  %v11198 = vmax.f32 %v11134, 0.0
  %v11199 = vmax.f32 %v11135, 0.0
  %v11200 = vmax.f32 %v11136, 0.0
  %v11201 = vmax.f32 %v11137, 0.0
  %v11202 = vmax.f32 %v11138, 0.0
  %v11203 = vmax.f32 %v11139, 0.0
  %v11204 = vmax.f32 %v11140, 0.0
  %v11205 = vmax.f32 %v11141, 0.0
  %v11206 = vmax.f32 %v11142, 0.0
  %v11207 = vmax.f32 %v11143, 0.0
  %v11208 = vmax.f32 %v11144, 0.0
  %v11209 = vmax.f32 %v11145, 0.0
  %v11210 = vmax.f32 %v11146, 0.0
  %v11211 = vmax.f32 %v11147, 0.0
  %v11212 = vmax.f32 %v11148, 0.0
  %v11213 = vmax.f32 %v11149, 0.0
  %v11214 = vmax.f32 %v11150, 0.0
  %v11215 = vmax.f32 %v11151, 0.0
  %v11216 = vmax.f32 %v11152, 0.0
  %v11217 = vmax.f32 %v11153, 0.0
  %v11218 = vmax.f32 %v11154, 0.0
  %v11219 = vmax.f32 %v11155, 0.0
  %v11220 = vmax.f32 %v11156, 0.0
  %v11221 = vmax.f32 %v11157, 0.0
  %v11222 = vmax.f32 %v11158, 0.0
  %v11223 = vmax.f32 %v11159, 0.0
  %v11224 = vmax.f32 %v11160, 0.0
  %v11225 = vmax.f32 %v11161, 0.0
  %v11226 = vmax.f32 %v11162, 0.0
  %11227 = vst [vmem:[%s10] sm:$0xff] %v11163
  %11228 = vst [vmem:[%s10 + $0x8] sm:$0xff] %v11164
  %11229 = vst [vmem:[%s10 + $0x10] sm:$0xff] %v11165
  %11230 = vst [vmem:[%s10 + $0x18] sm:$0xff] %v11166
  %11231 = vst [vmem:[%s10 + $0x20] sm:$0xff] %v11167
  %11232 = vst [vmem:[%s10 + $0x28] sm:$0xff] %v11168
  %11233 = vst [vmem:[%s10 + $0x30] sm:$0xff] %v11169
  %11234 = vst [vmem:[%s10 + $0x38] sm:$0xff] %v11170
  %11235 = vst [vmem:[%s10 + $0x40] sm:$0xff] %v11171
  %11236 = vst [vmem:[%s10 + $0x48] sm:$0xff] %v11172
  %11237 = vst [vmem:[%s10 + $0x50] sm:$0xff] %v11173
  %11238 = vst [vmem:[%s10 + $0x58] sm:$0xff] %v11174
  %11239 = vst [vmem:[%s10 + $0x60] sm:$0xff] %v11175
  %11240 = vst [vmem:[%s10 + $0x68] sm:$0xff] %v11176
  %11241 = vst [vmem:[%s10 + $0x70] sm:$0xff] %v11177
  %11242 = vst [vmem:[%s10 + $0x78] sm:$0xff] %v11178
  %11243 = vst [vmem:[%s10 + $0x80] sm:$0xff] %v11179
  %11244 = vst [vmem:[%s10 + $0x88] sm:$0xff] %v11180
  %11245 = vst [vmem:[%s10 + $0x90] sm:$0xff] %v11181
  %11246 = vst [vmem:[%s10 + $0x98] sm:$0xff] %v11182
  %11247 = vst [vmem:[%s10 + $0xa0] sm:$0xff] %v11183
  %11248 = vst [vmem:[%s10 + $0xa8] sm:$0xff] %v11184
  %11249 = vst [vmem:[%s10 + $0xb0] sm:$0xff] %v11185
  %11250 = vst [vmem:[%s10 + $0xb8] sm:$0xff] %v11186
  %11251 = vst [vmem:[%s10 + $0xc0] sm:$0xff] %v11187
  %11252 = vst [vmem:[%s10 + $0xc8] sm:$0xff] %v11188
  %11253 = vst [vmem:[%s10 + $0xd0] sm:$0xff] %v11189
  %11254 = vst [vmem:[%s10 + $0xd8] sm:$0xff] %v11190
  %11255 = vst [vmem:[%s10 + $0xe0] sm:$0xff] %v11191
  %11256 = vst [vmem:[%s10 + $0xe8] sm:$0xff] %v11192
  %11257 = vst [vmem:[%s10 + $0xf0] sm:$0xff] %v11193
  %11258 = vst [vmem:[%s10 + $0xf8] sm:$0xff] %v11194
  %11259 = vst [vmem:[%s10 + $0x100] sm:$0xff] %v11195
  %11260 = vst [vmem:[%s10 + $0x108] sm:$0xff] %v11196
  %11261 = vst [vmem:[%s10 + $0x110] sm:$0xff] %v11197
  %11262 = vst [vmem:[%s10 + $0x118] sm:$0xff] %v11198
  %11263 = vst [vmem:[%s10 + $0x120] sm:$0xff] %v11199
  %11264 = vst [vmem:[%s10 + $0x128] sm:$0xff] %v11200
  %11265 = vst [vmem:[%s10 + $0x130] sm:$0xff] %v11201
  %11266 = vst [vmem:[%s10 + $0x138] sm:$0xff] %v11202
  %11267 = vst [vmem:[%s10 + $0x140] sm:$0xff] %v11203
  %11268 = vst [vmem:[%s10 + $0x148] sm:$0xff] %v11204
  %11269 = vst [vmem:[%s10 + $0x150] sm:$0xff] %v11205
  %11270 = vst [vmem:[%s10 + $0x158] sm:$0xff] %v11206
  %11271 = vst [vmem:[%s10 + $0x160] sm:$0xff] %v11207
  %11272 = vst [vmem:[%s10 + $0x168] sm:$0xff] %v11208
  %11273 = vst [vmem:[%s10 + $0x170] sm:$0xff] %v11209
  %11274 = vst [vmem:[%s10 + $0x178] sm:$0xff] %v11210
  %11275 = vst [vmem:[%s10 + $0x180] sm:$0xff] %v11211
  %11276 = vst [vmem:[%s10 + $0x188] sm:$0xff] %v11212
  %11277 = vst [vmem:[%s10 + $0x190] sm:$0xff] %v11213
  %11278 = vst [vmem:[%s10 + $0x198] sm:$0xff] %v11214
  %11279 = vst [vmem:[%s10 + $0x1a0] sm:$0xff] %v11215
  %11280 = vst [vmem:[%s10 + $0x1a8] sm:$0xff] %v11216
  %11281 = vst [vmem:[%s10 + $0x1b0] sm:$0xff] %v11217
  %11282 = vst [vmem:[%s10 + $0x1b8] sm:$0xff] %v11218
  %11283 = vst [vmem:[%s10 + $0x1c0] sm:$0xff] %v11219
  %11284 = vst [vmem:[%s10 + $0x1c8] sm:$0xff] %v11220
  %11285 = vst [vmem:[%s10 + $0x1d0] sm:$0xff] %v11221
  %11286 = vst [vmem:[%s10 + $0x1d8] sm:$0xff] %v11222
  %11287 = vst [vmem:[%s10 + $0x1e0] sm:$0xff] %v11223
  %11288 = vst [vmem:[%s10 + $0x1e8] sm:$0xff] %v11224
  %11289 = vst [vmem:[%s10 + $0x1f0] sm:$0xff] %v11225
  %11290 = vst [vmem:[%s10 + $0x1f8] sm:$0xff] %v11226
  // Predicated region
  $region42: #{basic_block_forward.1} parent=0 // pred_check
    _
  $region43: #{basic_block_forward.1} parent=0 // pred_check_branch
    %11292 = sbr.rel (0) target = $region45
  $region44: #{basic_block_forward.1} parent=0 // pred_region
    _
  $region45: #{basic_block_forward.1} parent=0 // pred_fallthru
    _
  // Predicated region
  $region46: #{basic_block_forward.1} parent=0 // pred_check
    _
  $region47: #{basic_block_forward.1} parent=0 // pred_check_branch
    %11294 = sbr.rel (0) target = $region49
  $region48: #{basic_block_forward.1} parent=0 // pred_region
    _
  $region49: #{basic_block_forward.1} parent=0 // pred_fallthru
    _

</llo_original>
